<compile_context>
chip_gen: v7x
topology: tpu7x:2x2x1
jax: 0.10.0
libtpu: 0.0.40
codegen_flags: <defaults>
</compile_context>

<pallas_src>
import functools

import jax
import jax.numpy as jnp
from jax import lax
from jax.experimental import pallas as pl
from jax.experimental.pallas import tpu as pltpu

_COL0 = 8  # sublane-aligned column at which the conv-pad interior starts (cols 0.._COL0-2 are dead)


# ------------------------- fused Pallas kernel -------------------------

def _inception_cbam_kernel(
    x_ref,                       # (1, H, W, Cin)  NHWC input block
    wA_ref, bA_ref,              # merged 1x1 convs on x: (Cin, ch1+ch3r+ch5r), (1, ch1+ch3r+ch5r)
    wP_ref, bP_ref,              # 1x1 conv on maxpooled x: (Cin, poolp), (1, poolp)
    w23_ref, b23_ref,            # merged (block-diag) 3x3 convs: (9*cin23, ch3+ch5), (1, ch3+ch5)
    mw1_ref, mb1_ref,            # CBAM MLP: (C, hid), (1, hid)
    mw2_ref, mb2_ref,            # CBAM MLP: (hid, C), (1, C)
    wsp_ref,                     # spatial 7x7 gate, pre-splatted rows: (2*ksp*ksp + 1, W)
    o_ref,                       # (1, C, H*W)  NCHW-flat output block (lane dense)
    pad_ref, col_ref, xcat_ref, pst_ref,   # VMEM scratch
    *, H, W, ch1, cin23, cout23, ksp):
    f32 = jnp.float32
    HW = H * W
    C = o_ref.shape[1]
    c0 = _COL0 - 1               # scratch column holding conceptual padded column 0 (pad = 1)
    P = (ksp - 1) // 2

    x = x_ref[0]                                        # (H, W, Cin)
    x2d = x.reshape(HW, -1)

    # ---------- branch4 pre-step: 3x3 / stride 1 / pad 1 max-pool via edge-clamped shifts ----------
    left = jnp.concatenate([x[:, :1, :], x[:, :W - 1, :]], axis=1)
    right = jnp.concatenate([x[:, 1:, :], x[:, W - 1:, :]], axis=1)
    rowm = jnp.maximum(jnp.maximum(left, x), right)
    up = jnp.concatenate([rowm[:1], rowm[:H - 1]], axis=0)
    down = jnp.concatenate([rowm[1:], rowm[H - 1:]], axis=0)
    mp2d = jnp.maximum(jnp.maximum(up, rowm), down).reshape(HW, -1)

    # ---------- merged 1x1 convs on x: [branch1 | branch2-reduce | branch3-reduce], and branch4 ----------
    hA = jnp.maximum(jnp.dot(x2d, wA_ref[...], preferred_element_type=f32) + bA_ref[...], 0.0)
    b4 = jnp.maximum(jnp.dot(mp2d, wP_ref[...], preferred_element_type=f32) + bP_ref[...], 0.0)

    # ---------- merged 3x3 convs: zero-halo padded scratch (halo strips only) + single im2col matmul ----------
    zrow = jnp.zeros((1, W + 2, cin23), f32)
    pad_ref[0:1, c0:c0 + W + 2, :] = zrow
    pad_ref[H + 1:H + 2, c0:c0 + W + 2, :] = zrow
    zcol = jnp.zeros((H, 1, cin23), f32)
    pad_ref[1:1 + H, c0:c0 + 1, :] = zcol
    pad_ref[1:1 + H, c0 + W + 1:c0 + W + 2, :] = zcol
    pad_ref[1:1 + H, _COL0:_COL0 + W, :] = hA[:, ch1:ch1 + cin23].reshape(H, W, cin23)

    for kh in range(3):
        for kw in range(3):
            t = kh * 3 + kw
            col_ref[:, t * cin23:(t + 1) * cin23] = (
                pad_ref[kh:kh + H, c0 + kw:c0 + kw + W, :].reshape(HW, cin23))
    h23 = jnp.maximum(
        jnp.dot(col_ref[...], w23_ref[...], preferred_element_type=f32) + b23_ref[...], 0.0)

    # ---------- assemble x_cat = [b1 | b2 | b3 | b4] by slice-stores into one VMEM accumulator ----------
    xcat_ref[:, 0:ch1] = hA[:, 0:ch1]
    xcat_ref[:, ch1:ch1 + cout23] = h23
    xcat_ref[:, ch1 + cout23:C] = b4
    xc = xcat_ref[...]                                   # (HW, C)

    # ---------- CBAM channel gate ----------
    pooled = jnp.concatenate([jnp.mean(xc, axis=0, keepdims=True),
                              jnp.max(xc, axis=0, keepdims=True)], axis=0)      # (2, C)
    hmlp = jnp.maximum(jnp.dot(pooled, mw1_ref[...], preferred_element_type=f32) + mb1_ref[...], 0.0)
    logits = jnp.dot(hmlp, mw2_ref[...], preferred_element_type=f32) + mb2_ref[...]
    ca = jax.nn.sigmoid(logits[0:1, :] + logits[1:2, :])                        # (1, C)

    # ---------- channel gate + (HW,C)->(C,HW) transpose in ONE MXU matmul: diag(ca) @ xcat^T ----------
    rows_i = lax.broadcasted_iota(jnp.int32, (C, C), 0)
    cols_i = lax.broadcasted_iota(jnp.int32, (C, C), 1)
    diag_ca = jnp.where(rows_i == cols_i, jnp.broadcast_to(ca, (C, C)), jnp.zeros((C, C), f32))
    yT = lax.dot_general(diag_ca, xc, (((1,), (1,)), ((), ())),
                         preferred_element_type=f32)                             # (C, HW)

    # ---------- CBAM spatial gate: channel stats (lane-dense), 7x7 conv in channel-leading layout ----------
    cmax = jnp.max(yT, axis=0, keepdims=True)                                    # (1, HW)
    cmean = jnp.sum(yT, axis=0, keepdims=True) * (1.0 / C)                       # (1, HW)

    pst_ref[...] = jnp.zeros(pst_ref.shape, f32)   # tiny (2, H+2P, W+2P) buffer; refill each step

    def to2d(v):                                   # (1, HW) -> (H, W) via per-row lane slices
        return jnp.concatenate([v[:, i * W:(i + 1) * W] for i in range(H)], axis=0)

    pst_ref[0:1, P:P + H, P:P + W] = to2d(cmax).reshape(1, H, W)
    pst_ref[1:2, P:P + H, P:P + W] = to2d(cmean).reshape(1, H, W)

    wsp = wsp_ref[...]                              # (2*ksp*ksp + 1, W); rows pre-splatted in wrapper
    acc = jnp.zeros((H, W), f32)
    for kh in range(ksp):
        for kw in range(ksp):
            t = kh * ksp + kw
            acc = (acc
                   + pst_ref[0, kh:kh + H, kw:kw + W] * wsp[t:t + 1, :]
                   + pst_ref[1, kh:kh + H, kw:kw + W] * wsp[ksp * ksp + t:ksp * ksp + t + 1, :])
    acc = acc + wsp[2 * ksp * ksp:2 * ksp * ksp + 1, :]                          # folded BN bias
    sa_row = jax.nn.sigmoid(
        jnp.concatenate([acc[i:i + 1, :] for i in range(H)], axis=1))            # (1, HW)

    # ---------- out = diag(ca) @ xcat^T, scaled by the spatial gate; single lane-dense store ----------
    o_ref[0] = (yT * sa_row).astype(o_ref.dtype)


# ------------------------- parameter packing (plain JAX glue) -------------------------

def _prepare_params(params):
    """Fold inference-mode BN scale into conv weights and pack for the kernel."""
    def fold(p):
        w, s, b = p                                            # w: (Cout, Cin, kh, kw), PyTorch layout
        wf = jnp.transpose(w, (2, 3, 1, 0)) * s.reshape(1, 1, 1, -1)   # (kh, kw, Cin, Cout), BN-scaled
        return wf.astype(jnp.float32), b.astype(jnp.float32)

    w1, b1 = fold(params["b1"])
    w2a, b2a = fold(params["b2a"])
    w3a, b3a = fold(params["b3a"])
    w4, b4 = fold(params["b4"])
    w2b, b2b = fold(params["b2b"])
    w3b, b3b = fold(params["b3b"])
    wspf, bsp = fold(params["sp"])                             # (7, 7, 2, 1), (1,)

    wA = jnp.concatenate([w1[0, 0], w2a[0, 0], w3a[0, 0]], axis=1)   # (Cin, ch1+ch3r+ch5r)
    bA = jnp.concatenate([b1, b2a, b3a]).reshape(1, -1)
    wP = w4[0, 0]
    bP = b4.reshape(1, -1)

    ch3r, ch3 = w2b.shape[2], w2b.shape[3]
    ch5r, ch5 = w3b.shape[2], w3b.shape[3]
    cin23, cout23 = ch3r + ch5r, ch3 + ch5
    # Block-diagonal merge of the two 3x3 convs: one K = 9*cin23 im2col matmul produces [b2 | b3].
    w23 = jnp.zeros((9, cin23, cout23), jnp.float32)
    w23 = w23.at[:, :ch3r, :ch3].set(w2b.reshape(9, ch3r, ch3))
    w23 = w23.at[:, ch3r:, ch3:].set(w3b.reshape(9, ch5r, ch5))
    w23 = w23.reshape(9 * cin23, cout23)
    b23 = jnp.concatenate([b2b, b3b]).reshape(1, -1)

    ksp = wspf.shape[0]
    w_t = wspf[:, :, :, 0].reshape(ksp * ksp, 2)               # row t = [w_max, w_mean] for tap t
    wsp_rows = jnp.concatenate([w_t[:, 0], w_t[:, 1], bsp], axis=0).astype(jnp.float32)  # (2*ksp*ksp+1,)

    mw1 = params["mlp_w1"].astype(jnp.float32)
    mb1 = params["mlp_b1"].reshape(1, -1).astype(jnp.float32)
    mw2 = params["mlp_w2"].astype(jnp.float32)
    mb2 = params["mlp_b2"].reshape(1, -1).astype(jnp.float32)
    return (wA, bA, wP, bP, w23, b23, mw1, mb1, mw2, mb2, wsp_rows), ksp, cin23, cout23


# ------------------------- public wrapper -------------------------

def inception_cbam_forward(x_nchw, params):
    x = jnp.transpose(x_nchw, (0, 2, 3, 1)).astype(jnp.float32)      # NCHW -> NHWC (input side only)
    N, H, W, Cin = x.shape
    (wA, bA, wP, bP, w23, b23, mw1, mb1, mw2, mb2, wsp_rows), ksp, cin23, cout23 = _prepare_params(params)

    ch1 = params["b1"][0].shape[0]
    poolp = params["b4"][0].shape[0]
    C = ch1 + cout23 + poolp
    hid = mw1.shape[1]
    P = (ksp - 1) // 2
    cA = ch1 + cin23

    # Pre-splat the 7x7 spatial-gate weights (+ bias) to (1, W) rows so the in-kernel tap loop has
    # no broadcast ops: rows 0..48 = w_max, 49..97 = w_mean, 98 = folded BN bias.
    wsp_splat = jnp.tile(wsp_rows.reshape(-1, 1), (1, W))

    kernel = functools.partial(
        _inception_cbam_kernel,
        H=H, W=W, ch1=ch1, cin23=cin23, cout23=cout23, ksp=ksp)

    def _const(arr):
        nd = arr.ndim
        return pl.BlockSpec(arr.shape, lambda n, _nd=nd: (0,) * _nd)

    flops = N * (2 * H * W * (Cin * cA + Cin * poolp + 9 * cin23 * cout23 + C * C + 2 * ksp * ksp)
                 + 8 * C * hid)
    cost = pl.CostEstimate(
        flops=int(flops),
        transcendentals=int(N * (H * W + 2 * C)),
        bytes_accessed=int(4 * (x.size + N * C * H * W + wA.size + wP.size + w23.size
                                + mw1.size + mw2.size + wsp_splat.size)))

    try:
        vmem_cap = int(pltpu.get_tpu_info().vmem_capacity_bytes)
    except Exception:
        vmem_cap = 128 * 1024 * 1024
    vmem_limit = min(96 * 1024 * 1024, (vmem_cap * 3) // 4)

    out = pl.pallas_call(
        kernel,
        out_shape=jax.ShapeDtypeStruct((N, C, H * W), jnp.float32),
        grid=(N,),
        in_specs=[
            pl.BlockSpec((1, H, W, Cin), lambda n: (n, 0, 0, 0)),
            _const(wA), _const(bA),
            _const(wP), _const(bP),
            _const(w23), _const(b23),
            _const(mw1), _const(mb1),
            _const(mw2), _const(mb2),
            _const(wsp_splat),
        ],
        out_specs=pl.BlockSpec((1, C, H * W), lambda n: (n, 0, 0)),
        scratch_shapes=[
            pltpu.VMEM((H + 2, _COL0 + W + 1, cin23), jnp.float32),   # zero-halo padded [b2a|b3a]
            pltpu.VMEM((H * W, 9 * cin23), jnp.float32),              # im2col matrix
            pltpu.VMEM((H * W, C), jnp.float32),                      # concatenated branch outputs
            pltpu.VMEM((2, H + 2 * P, W + 2 * P), jnp.float32),       # channel-leading [max_c, mean_c]
        ],
        compiler_params=pltpu.CompilerParams(
            dimension_semantics=("parallel",),
            vmem_limit_bytes=int(vmem_limit)),
        cost_estimate=cost,
    )(x, wA, bA, wP, bP, w23, b23, mw1, mb1, mw2, mb2, wsp_splat)

    return out.reshape(N, C, H, W)                                    # already NCHW, just unflatten


# ------------------------- parameters -------------------------

def _fold_bn(gamma, beta, mean, var, eps):
    scale = gamma / jnp.sqrt(var + eps)
    return scale, beta - mean * scale


def _make_conv_bn(key, cin, cout, k, eps=1e-3):
    k1, k2, k3, k4, k5 = jax.random.split(key, 5)
    w = jax.random.normal(k1, (cout, cin, k, k), jnp.float32) / jnp.sqrt(cin * k * k)
    gamma = jax.random.uniform(k2, (cout,), minval=0.5, maxval=1.5)
    beta = jax.random.normal(k3, (cout,)) * 0.1
    mean = jax.random.normal(k4, (cout,)) * 0.1
    var = jax.random.uniform(k5, (cout,), minval=0.5, maxval=1.5)
    s, b = _fold_bn(gamma, beta, mean, var, eps)
    return (w, s, b)


def init_params(key, cin, ch1, ch3r, ch3, ch5r, ch5, poolp, reduction=16):
    keys = jax.random.split(key, 11)
    p = {
        "b1": _make_conv_bn(keys[0], cin, ch1, 1),
        "b2a": _make_conv_bn(keys[1], cin, ch3r, 1),
        "b2b": _make_conv_bn(keys[2], ch3r, ch3, 3),
        "b3a": _make_conv_bn(keys[3], cin, ch5r, 1),
        "b3b": _make_conv_bn(keys[4], ch5r, ch5, 3),
        "b4": _make_conv_bn(keys[5], cin, poolp, 1),
    }
    C = ch1 + ch3 + ch5 + poolp
    hidden = max(C // reduction, 1)
    p["mlp_w1"] = jax.random.normal(keys[6], (C, hidden)) / jnp.sqrt(C)
    p["mlp_b1"] = jax.random.normal(keys[7], (hidden,)) * 0.1
    p["mlp_w2"] = jax.random.normal(keys[8], (hidden, C)) / jnp.sqrt(hidden)
    p["mlp_b2"] = jax.random.normal(keys[9], (C,)) * 0.1
    p["sp"] = _make_conv_bn(keys[10], 2, 1, 7, eps=1e-5)
    return p


# ------------------------- plain-JAX reference -------------------------

def ref_forward(x_nchw, params):
    x = jnp.transpose(x_nchw, (0, 2, 3, 1)).astype(jnp.float32)

    def cba(xx, p, pad, act="relu"):
        w, s, b = p
        y = lax.conv_general_dilated(
            xx, jnp.transpose(w, (2, 3, 1, 0)), (1, 1),
            [(pad, pad), (pad, pad)],
            dimension_numbers=("NHWC", "HWIO", "NHWC"))
        y = y * s.reshape(1, 1, 1, -1) + b.reshape(1, 1, 1, -1)
        return jnp.maximum(y, 0.0) if act == "relu" else jax.nn.sigmoid(y)

    b1 = cba(x, params["b1"], 0)
    b2 = cba(cba(x, params["b2a"], 0), params["b2b"], 1)
    b3 = cba(cba(x, params["b3a"], 0), params["b3b"], 1)
    mp = lax.reduce_window(x, -jnp.inf, lax.max, (1, 3, 3, 1), (1, 1, 1, 1),
                           [(0, 0), (1, 1), (1, 1), (0, 0)])
    b4 = cba(mp, params["b4"], 0)
    xcat = jnp.concatenate([b1, b2, b3, b4], -1)

    avg = jnp.mean(xcat, axis=(1, 2))
    mx = jnp.max(xcat, axis=(1, 2))

    def mlp(v):
        h = jnp.maximum(v @ params["mlp_w1"] + params["mlp_b1"], 0.0)
        return h @ params["mlp_w2"] + params["mlp_b2"]

    ca = jax.nn.sigmoid(mlp(avg) + mlp(mx))
    y = xcat * ca[:, None, None, :]
    st = jnp.concatenate([jnp.max(y, -1, keepdims=True),
                          jnp.mean(y, -1, keepdims=True)], -1)
    sa = cba(st, params["sp"], 3, act="sigmoid")
    return jnp.transpose(y * sa, (0, 3, 1, 2))


# ------------------------- main -------------------------

if __name__ == "__main__":
    key = jax.random.PRNGKey(0)
    kx, kp = jax.random.split(key)

    # in_channels=4, ch1x1=8, ch3x3red=4, ch3x3=8, ch5x5red=4, ch5x5=8, pool_proj=8
    x = jax.random.normal(kx, (2, 4, 16, 16), jnp.float32)   # NCHW, like PyTorch
    params = init_params(kp, cin=4, ch1=8, ch3r=4, ch3=8, ch5r=4, ch5=8, poolp=8)

    fwd = jax.jit(lambda xx: inception_cbam_forward(xx, params))
    out = jax.block_until_ready(fwd(x))

    ref = ref_forward(x, params)
    assert out.shape == (2, 32, 16, 16), out.shape
    max_err = float(jnp.max(jnp.abs(out - ref)))
    assert jnp.allclose(out, ref, atol=3e-4, rtol=3e-4), f"max abs err = {max_err}"

    print("KERNEL_OK")
</pallas_src>

<mosaic_0001>
module attributes {stable_mosaic.version = 11 : i64} {
  func.func @_inception_cbam_kernel(%arg0: i32, %arg1: memref<1x16x16x4xf32, #tpu.memory_space<vmem>>, %arg2: memref<4x16xf32, #tpu.memory_space<vmem>>, %arg3: memref<1x16xf32, #tpu.memory_space<vmem>>, %arg4: memref<4x8xf32, #tpu.memory_space<vmem>>, %arg5: memref<1x8xf32, #tpu.memory_space<vmem>>, %arg6: memref<72x16xf32, #tpu.memory_space<vmem>>, %arg7: memref<1x16xf32, #tpu.memory_space<vmem>>, %arg8: memref<32x2xf32, #tpu.memory_space<vmem>>, %arg9: memref<1x2xf32, #tpu.memory_space<vmem>>, %arg10: memref<2x32xf32, #tpu.memory_space<vmem>>, %arg11: memref<1x32xf32, #tpu.memory_space<vmem>>, %arg12: memref<99x16xf32, #tpu.memory_space<vmem>>, %arg13: memref<1x32x256xf32, #tpu.memory_space<vmem>>, %arg14: memref<18x25x8xf32, #tpu.memory_space<vmem>>, %arg15: memref<256x72xf32, #tpu.memory_space<vmem>>, %arg16: memref<256x32xf32, #tpu.memory_space<vmem>>, %arg17: memref<2x22x22xf32, #tpu.memory_space<vmem>>) attributes {dimension_semantics = [#tpu.dimension_semantics<parallel>], iteration_bounds = array<i64: 2>, scalar_prefetch = 0 : i64, scratch_operands = 4 : i64, tpu.core_type = #tpu.core_type<tc>, window_params = [{transform_indices = @transform_0, window_bounds = array<i64: 1, 16, 16, 4>}, {pipeline_mode = #tpu.pipeline_mode<synchronous>, transform_indices = @transform_1, window_bounds = array<i64: 4, 16>}, {pipeline_mode = #tpu.pipeline_mode<synchronous>, transform_indices = @transform_2, window_bounds = array<i64: 1, 16>}, {pipeline_mode = #tpu.pipeline_mode<synchronous>, transform_indices = @transform_3, window_bounds = array<i64: 4, 8>}, {pipeline_mode = #tpu.pipeline_mode<synchronous>, transform_indices = @transform_4, window_bounds = array<i64: 1, 8>}, {pipeline_mode = #tpu.pipeline_mode<synchronous>, transform_indices = @transform_5, window_bounds = array<i64: 72, 16>}, {pipeline_mode = #tpu.pipeline_mode<synchronous>, transform_indices = @transform_6, window_bounds = array<i64: 1, 16>}, {pipeline_mode = #tpu.pipeline_mode<synchronous>, transform_indices = @transform_7, window_bounds = array<i64: 32, 2>}, {pipeline_mode = #tpu.pipeline_mode<synchronous>, transform_indices = @transform_8, window_bounds = array<i64: 1, 2>}, {pipeline_mode = #tpu.pipeline_mode<synchronous>, transform_indices = @transform_9, window_bounds = array<i64: 2, 32>}, {pipeline_mode = #tpu.pipeline_mode<synchronous>, transform_indices = @transform_10, window_bounds = array<i64: 1, 32>}, {pipeline_mode = #tpu.pipeline_mode<synchronous>, transform_indices = @transform_11, window_bounds = array<i64: 99, 16>}, {transform_indices = @transform_12, window_bounds = array<i64: 1, 32, 256>}]} {
    %c0 = arith.constant 0 : index
    %c0_0 = arith.constant 0 : index
    %c0_1 = arith.constant 0 : index
    %c0_2 = arith.constant 0 : index
    %0 = vector.load %arg1[%c0, %c0_0, %c0_1, %c0_2] : memref<1x16x16x4xf32, #tpu.memory_space<vmem>>, vector<1x16x16x4xf32>
    %1 = vector.shape_cast %0 : vector<1x16x16x4xf32> to vector<16x16x4xf32>
    %2 = vector.shape_cast %1 : vector<16x16x4xf32> to vector<256x4xf32>
    %3 = vector.extract_strided_slice %1 {offsets = [0, 0, 0], sizes = [16, 1, 4], strides = [1, 1, 1]} : vector<16x16x4xf32> to vector<16x1x4xf32>
    %4 = vector.extract_strided_slice %1 {offsets = [0, 0, 0], sizes = [16, 15, 4], strides = [1, 1, 1]} : vector<16x16x4xf32> to vector<16x15x4xf32>
    %5 = tpu.concatenate %3, %4 in 1 : vector<16x1x4xf32>, vector<16x15x4xf32> -> vector<16x16x4xf32>
    %6 = vector.extract_strided_slice %1 {offsets = [0, 1, 0], sizes = [16, 15, 4], strides = [1, 1, 1]} : vector<16x16x4xf32> to vector<16x15x4xf32>
    %7 = vector.extract_strided_slice %1 {offsets = [0, 15, 0], sizes = [16, 1, 4], strides = [1, 1, 1]} : vector<16x16x4xf32> to vector<16x1x4xf32>
    %8 = tpu.concatenate %6, %7 in 1 : vector<16x15x4xf32>, vector<16x1x4xf32> -> vector<16x16x4xf32>
    %9 = arith.maximumf %5, %1 : vector<16x16x4xf32>
    %10 = arith.maximumf %9, %8 : vector<16x16x4xf32>
    %11 = vector.extract_strided_slice %10 {offsets = [0, 0, 0], sizes = [1, 16, 4], strides = [1, 1, 1]} : vector<16x16x4xf32> to vector<1x16x4xf32>
    %12 = vector.extract_strided_slice %10 {offsets = [0, 0, 0], sizes = [15, 16, 4], strides = [1, 1, 1]} : vector<16x16x4xf32> to vector<15x16x4xf32>
    %13 = tpu.concatenate %11, %12 in 0 : vector<1x16x4xf32>, vector<15x16x4xf32> -> vector<16x16x4xf32>
    %14 = vector.extract_strided_slice %10 {offsets = [1, 0, 0], sizes = [15, 16, 4], strides = [1, 1, 1]} : vector<16x16x4xf32> to vector<15x16x4xf32>
    %15 = vector.extract_strided_slice %10 {offsets = [15, 0, 0], sizes = [1, 16, 4], strides = [1, 1, 1]} : vector<16x16x4xf32> to vector<1x16x4xf32>
    %16 = tpu.concatenate %14, %15 in 0 : vector<15x16x4xf32>, vector<1x16x4xf32> -> vector<16x16x4xf32>
    %17 = arith.maximumf %13, %10 : vector<16x16x4xf32>
    %18 = arith.maximumf %17, %16 : vector<16x16x4xf32>
    %19 = vector.shape_cast %18 : vector<16x16x4xf32> to vector<256x4xf32>
    %c0_3 = arith.constant 0 : index
    %c0_4 = arith.constant 0 : index
    %20 = vector.load %arg2[%c0_3, %c0_4] : memref<4x16xf32, #tpu.memory_space<vmem>>, vector<4x16xf32>
    %cst = arith.constant dense<0.000000e+00> : vector<256x16xf32>
    %21 = tpu.matmul %2, %20, %cst {dimension_numbers = #tpu.dot_dimension_numbers<[1], [0], [0], [1], [0, 0, 1, 1], [], []>} : vector<256x4xf32>, vector<4x16xf32>, vector<256x16xf32> -> vector<256x16xf32>
    %c0_5 = arith.constant 0 : index
    %c0_6 = arith.constant 0 : index
    %22 = vector.load %arg3[%c0_5, %c0_6] : memref<1x16xf32, #tpu.memory_space<vmem>>, vector<1x16xf32>
    %23 = vector.broadcast %22 : vector<1x16xf32> to vector<256x16xf32>
    %24 = arith.addf %21, %23 : vector<256x16xf32>
    %cst_7 = arith.constant 0.000000e+00 : f32
    %25 = vector.broadcast %cst_7 : f32 to vector<256x16xf32>
    %26 = arith.maximumf %24, %25 : vector<256x16xf32>
    %c0_8 = arith.constant 0 : index
    %c0_9 = arith.constant 0 : index
    %27 = vector.load %arg4[%c0_8, %c0_9] : memref<4x8xf32, #tpu.memory_space<vmem>>, vector<4x8xf32>
    %cst_10 = arith.constant dense<0.000000e+00> : vector<256x8xf32>
    %28 = tpu.matmul %19, %27, %cst_10 {dimension_numbers = #tpu.dot_dimension_numbers<[1], [0], [0], [1], [0, 0, 1, 1], [], []>} : vector<256x4xf32>, vector<4x8xf32>, vector<256x8xf32> -> vector<256x8xf32>
    %c0_11 = arith.constant 0 : index
    %c0_12 = arith.constant 0 : index
    %29 = vector.load %arg5[%c0_11, %c0_12] : memref<1x8xf32, #tpu.memory_space<vmem>>, vector<1x8xf32>
    %30 = vector.broadcast %29 : vector<1x8xf32> to vector<256x8xf32>
    %31 = arith.addf %28, %30 : vector<256x8xf32>
    %cst_13 = arith.constant 0.000000e+00 : f32
    %32 = vector.broadcast %cst_13 : f32 to vector<256x8xf32>
    %33 = arith.maximumf %31, %32 : vector<256x8xf32>
    %cst_14 = arith.constant 0.000000e+00 : f32
    %34 = vector.broadcast %cst_14 : f32 to vector<1x18x8xf32>
    %c0_15 = arith.constant 0 : index
    %c7 = arith.constant 7 : index
    %c0_16 = arith.constant 0 : index
    %35 = vector.load %arg14[%c0_15, %c7, %c0_16] : memref<18x25x8xf32, #tpu.memory_space<vmem>>, vector<1x18x8xf32>
    tpu.vector_store %arg14[%c0_15, %c7, %c0_16], %34 {strides = array<i32>} : memref<18x25x8xf32, #tpu.memory_space<vmem>>, vector<1x18x8xf32>,
    %c17 = arith.constant 17 : index
    %c7_17 = arith.constant 7 : index
    %c0_18 = arith.constant 0 : index
    %36 = vector.load %arg14[%c17, %c7_17, %c0_18] : memref<18x25x8xf32, #tpu.memory_space<vmem>>, vector<1x18x8xf32>
    tpu.vector_store %arg14[%c17, %c7_17, %c0_18], %34 {strides = array<i32>} : memref<18x25x8xf32, #tpu.memory_space<vmem>>, vector<1x18x8xf32>,
    %cst_19 = arith.constant 0.000000e+00 : f32
    %37 = vector.broadcast %cst_19 : f32 to vector<16x1x8xf32>
    %c1 = arith.constant 1 : index
    %c7_20 = arith.constant 7 : index
    %c0_21 = arith.constant 0 : index
    %38 = vector.load %arg14[%c1, %c7_20, %c0_21] : memref<18x25x8xf32, #tpu.memory_space<vmem>>, vector<16x1x8xf32>
    tpu.vector_store %arg14[%c1, %c7_20, %c0_21], %37 {strides = array<i32>} : memref<18x25x8xf32, #tpu.memory_space<vmem>>, vector<16x1x8xf32>,
    %c1_22 = arith.constant 1 : index
    %c24 = arith.constant 24 : index
    %c0_23 = arith.constant 0 : index
    %39 = vector.load %arg14[%c1_22, %c24, %c0_23] : memref<18x25x8xf32, #tpu.memory_space<vmem>>, vector<16x1x8xf32>
    tpu.vector_store %arg14[%c1_22, %c24, %c0_23], %37 {strides = array<i32>} : memref<18x25x8xf32, #tpu.memory_space<vmem>>, vector<16x1x8xf32>,
    %40 = vector.extract_strided_slice %26 {offsets = [0, 8], sizes = [256, 8], strides = [1, 1]} : vector<256x16xf32> to vector<256x8xf32>
    %41 = vector.shape_cast %40 : vector<256x8xf32> to vector<16x16x8xf32>
    %c1_24 = arith.constant 1 : index
    %c8 = arith.constant 8 : index
    %c0_25 = arith.constant 0 : index
    %42 = vector.load %arg14[%c1_24, %c8, %c0_25] : memref<18x25x8xf32, #tpu.memory_space<vmem>>, vector<16x16x8xf32>
    tpu.vector_store %arg14[%c1_24, %c8, %c0_25], %41 {strides = array<i32>} : memref<18x25x8xf32, #tpu.memory_space<vmem>>, vector<16x16x8xf32>,
    %c0_26 = arith.constant 0 : index
    %c7_27 = arith.constant 7 : index
    %c0_28 = arith.constant 0 : index
    %43 = vector.load %arg14[%c0_26, %c7_27, %c0_28] : memref<18x25x8xf32, #tpu.memory_space<vmem>>, vector<16x16x8xf32>
    %44 = vector.shape_cast %43 : vector<16x16x8xf32> to vector<256x8xf32>
    %c0_29 = arith.constant 0 : index
    %c0_30 = arith.constant 0 : index
    %45 = vector.load %arg15[%c0_29, %c0_30] : memref<256x72xf32, #tpu.memory_space<vmem>>, vector<256x8xf32>
    tpu.vector_store %arg15[%c0_29, %c0_30], %44 {strides = array<i32>} : memref<256x72xf32, #tpu.memory_space<vmem>>, vector<256x8xf32>,
    %c0_31 = arith.constant 0 : index
    %c8_32 = arith.constant 8 : index
    %c0_33 = arith.constant 0 : index
    %46 = vector.load %arg14[%c0_31, %c8_32, %c0_33] : memref<18x25x8xf32, #tpu.memory_space<vmem>>, vector<16x16x8xf32>
    %47 = vector.shape_cast %46 : vector<16x16x8xf32> to vector<256x8xf32>
    %c0_34 = arith.constant 0 : index
    %c8_35 = arith.constant 8 : index
    %48 = vector.load %arg15[%c0_34, %c8_35] : memref<256x72xf32, #tpu.memory_space<vmem>>, vector<256x8xf32>
    tpu.vector_store %arg15[%c0_34, %c8_35], %47 {strides = array<i32>} : memref<256x72xf32, #tpu.memory_space<vmem>>, vector<256x8xf32>,
    %c0_36 = arith.constant 0 : index
    %c9 = arith.constant 9 : index
    %c0_37 = arith.constant 0 : index
    %49 = vector.load %arg14[%c0_36, %c9, %c0_37] : memref<18x25x8xf32, #tpu.memory_space<vmem>>, vector<16x16x8xf32>
    %50 = vector.shape_cast %49 : vector<16x16x8xf32> to vector<256x8xf32>
    %c0_38 = arith.constant 0 : index
    %c16 = arith.constant 16 : index
    %51 = vector.load %arg15[%c0_38, %c16] : memref<256x72xf32, #tpu.memory_space<vmem>>, vector<256x8xf32>
    tpu.vector_store %arg15[%c0_38, %c16], %50 {strides = array<i32>} : memref<256x72xf32, #tpu.memory_space<vmem>>, vector<256x8xf32>,
    %c1_39 = arith.constant 1 : index
    %c7_40 = arith.constant 7 : index
    %c0_41 = arith.constant 0 : index
    %52 = vector.load %arg14[%c1_39, %c7_40, %c0_41] : memref<18x25x8xf32, #tpu.memory_space<vmem>>, vector<16x16x8xf32>
    %53 = vector.shape_cast %52 : vector<16x16x8xf32> to vector<256x8xf32>
    %c0_42 = arith.constant 0 : index
    %c24_43 = arith.constant 24 : index
    %54 = vector.load %arg15[%c0_42, %c24_43] : memref<256x72xf32, #tpu.memory_space<vmem>>, vector<256x8xf32>
    tpu.vector_store %arg15[%c0_42, %c24_43], %53 {strides = array<i32>} : memref<256x72xf32, #tpu.memory_space<vmem>>, vector<256x8xf32>,
    %c1_44 = arith.constant 1 : index
    %c8_45 = arith.constant 8 : index
    %c0_46 = arith.constant 0 : index
    %55 = vector.load %arg14[%c1_44, %c8_45, %c0_46] : memref<18x25x8xf32, #tpu.memory_space<vmem>>, vector<16x16x8xf32>
    %56 = vector.shape_cast %55 : vector<16x16x8xf32> to vector<256x8xf32>
    %c0_47 = arith.constant 0 : index
    %c32 = arith.constant 32 : index
    %57 = vector.load %arg15[%c0_47, %c32] : memref<256x72xf32, #tpu.memory_space<vmem>>, vector<256x8xf32>
    tpu.vector_store %arg15[%c0_47, %c32], %56 {strides = array<i32>} : memref<256x72xf32, #tpu.memory_space<vmem>>, vector<256x8xf32>,
    %c1_48 = arith.constant 1 : index
    %c9_49 = arith.constant 9 : index
    %c0_50 = arith.constant 0 : index
    %58 = vector.load %arg14[%c1_48, %c9_49, %c0_50] : memref<18x25x8xf32, #tpu.memory_space<vmem>>, vector<16x16x8xf32>
    %59 = vector.shape_cast %58 : vector<16x16x8xf32> to vector<256x8xf32>
    %c0_51 = arith.constant 0 : index
    %c40 = arith.constant 40 : index
    %60 = vector.load %arg15[%c0_51, %c40] : memref<256x72xf32, #tpu.memory_space<vmem>>, vector<256x8xf32>
    tpu.vector_store %arg15[%c0_51, %c40], %59 {strides = array<i32>} : memref<256x72xf32, #tpu.memory_space<vmem>>, vector<256x8xf32>,
    %c2 = arith.constant 2 : index
    %c7_52 = arith.constant 7 : index
    %c0_53 = arith.constant 0 : index
    %61 = vector.load %arg14[%c2, %c7_52, %c0_53] : memref<18x25x8xf32, #tpu.memory_space<vmem>>, vector<16x16x8xf32>
    %62 = vector.shape_cast %61 : vector<16x16x8xf32> to vector<256x8xf32>
    %c0_54 = arith.constant 0 : index
    %c48 = arith.constant 48 : index
    %63 = vector.load %arg15[%c0_54, %c48] : memref<256x72xf32, #tpu.memory_space<vmem>>, vector<256x8xf32>
    tpu.vector_store %arg15[%c0_54, %c48], %62 {strides = array<i32>} : memref<256x72xf32, #tpu.memory_space<vmem>>, vector<256x8xf32>,
    %c2_55 = arith.constant 2 : index
    %c8_56 = arith.constant 8 : index
    %c0_57 = arith.constant 0 : index
    %64 = vector.load %arg14[%c2_55, %c8_56, %c0_57] : memref<18x25x8xf32, #tpu.memory_space<vmem>>, vector<16x16x8xf32>
    %65 = vector.shape_cast %64 : vector<16x16x8xf32> to vector<256x8xf32>
    %c0_58 = arith.constant 0 : index
    %c56 = arith.constant 56 : index
    %66 = vector.load %arg15[%c0_58, %c56] : memref<256x72xf32, #tpu.memory_space<vmem>>, vector<256x8xf32>
    tpu.vector_store %arg15[%c0_58, %c56], %65 {strides = array<i32>} : memref<256x72xf32, #tpu.memory_space<vmem>>, vector<256x8xf32>,
    %c2_59 = arith.constant 2 : index
    %c9_60 = arith.constant 9 : index
    %c0_61 = arith.constant 0 : index
    %67 = vector.load %arg14[%c2_59, %c9_60, %c0_61] : memref<18x25x8xf32, #tpu.memory_space<vmem>>, vector<16x16x8xf32>
    %68 = vector.shape_cast %67 : vector<16x16x8xf32> to vector<256x8xf32>
    %c0_62 = arith.constant 0 : index
    %c64 = arith.constant 64 : index
    %69 = vector.load %arg15[%c0_62, %c64] : memref<256x72xf32, #tpu.memory_space<vmem>>, vector<256x8xf32>
    tpu.vector_store %arg15[%c0_62, %c64], %68 {strides = array<i32>} : memref<256x72xf32, #tpu.memory_space<vmem>>, vector<256x8xf32>,
    %c0_63 = arith.constant 0 : index
    %c0_64 = arith.constant 0 : index
    %70 = vector.load %arg15[%c0_63, %c0_64] : memref<256x72xf32, #tpu.memory_space<vmem>>, vector<256x72xf32>
    %c0_65 = arith.constant 0 : index
    %c0_66 = arith.constant 0 : index
    %71 = vector.load %arg6[%c0_65, %c0_66] : memref<72x16xf32, #tpu.memory_space<vmem>>, vector<72x16xf32>
    %cst_67 = arith.constant dense<0.000000e+00> : vector<256x16xf32>
    %72 = tpu.matmul %70, %71, %cst_67 {dimension_numbers = #tpu.dot_dimension_numbers<[1], [0], [0], [1], [0, 0, 1, 1], [], []>} : vector<256x72xf32>, vector<72x16xf32>, vector<256x16xf32> -> vector<256x16xf32>
    %c0_68 = arith.constant 0 : index
    %c0_69 = arith.constant 0 : index
    %73 = vector.load %arg7[%c0_68, %c0_69] : memref<1x16xf32, #tpu.memory_space<vmem>>, vector<1x16xf32>
    %74 = vector.broadcast %73 : vector<1x16xf32> to vector<256x16xf32>
    %75 = arith.addf %72, %74 : vector<256x16xf32>
    %cst_70 = arith.constant 0.000000e+00 : f32
    %76 = vector.broadcast %cst_70 : f32 to vector<256x16xf32>
    %77 = arith.maximumf %75, %76 : vector<256x16xf32>
    %78 = vector.extract_strided_slice %26 {offsets = [0, 0], sizes = [256, 8], strides = [1, 1]} : vector<256x16xf32> to vector<256x8xf32>
    %c0_71 = arith.constant 0 : index
    %c0_72 = arith.constant 0 : index
    %79 = vector.load %arg16[%c0_71, %c0_72] : memref<256x32xf32, #tpu.memory_space<vmem>>, vector<256x8xf32>
    tpu.vector_store %arg16[%c0_71, %c0_72], %78 {strides = array<i32>} : memref<256x32xf32, #tpu.memory_space<vmem>>, vector<256x8xf32>,
    %c0_73 = arith.constant 0 : index
    %c8_74 = arith.constant 8 : index
    %80 = vector.load %arg16[%c0_73, %c8_74] : memref<256x32xf32, #tpu.memory_space<vmem>>, vector<256x16xf32>
    tpu.vector_store %arg16[%c0_73, %c8_74], %77 {strides = array<i32>} : memref<256x32xf32, #tpu.memory_space<vmem>>, vector<256x16xf32>,
    %c0_75 = arith.constant 0 : index
    %c24_76 = arith.constant 24 : index
    %81 = vector.load %arg16[%c0_75, %c24_76] : memref<256x32xf32, #tpu.memory_space<vmem>>, vector<256x8xf32>
    tpu.vector_store %arg16[%c0_75, %c24_76], %33 {strides = array<i32>} : memref<256x32xf32, #tpu.memory_space<vmem>>, vector<256x8xf32>,
    %c0_77 = arith.constant 0 : index
    %c0_78 = arith.constant 0 : index
    %82 = vector.load %arg16[%c0_77, %c0_78] : memref<256x32xf32, #tpu.memory_space<vmem>>, vector<256x32xf32>
    %cst_79 = arith.constant dense<0.000000e+00> : vector<32xf32>
    %83 = vector.multi_reduction <add>, %82, %cst_79 [0] : vector<256x32xf32> to vector<32xf32>
    %84 = vector.shape_cast %83 : vector<32xf32> to vector<1x32xf32>
    %cst_80 = arith.constant 2.560000e+02 : f32
    %85 = vector.broadcast %cst_80 : f32 to vector<1x32xf32>
    %86 = arith.divf %84, %85 : vector<1x32xf32>
    %cst_81 = arith.constant dense<0xFF800000> : vector<32xf32>
    %87 = vector.multi_reduction <maximumf>, %82, %cst_81 [0] : vector<256x32xf32> to vector<32xf32>
    %88 = vector.shape_cast %87 : vector<32xf32> to vector<1x32xf32>
    %89 = tpu.concatenate %86, %88 in 0 : vector<1x32xf32>, vector<1x32xf32> -> vector<2x32xf32>
    %c0_82 = arith.constant 0 : index
    %c0_83 = arith.constant 0 : index
    %90 = vector.load %arg8[%c0_82, %c0_83] : memref<32x2xf32, #tpu.memory_space<vmem>>, vector<32x2xf32>
    %cst_84 = arith.constant dense<0.000000e+00> : vector<2x2xf32>
    %91 = tpu.matmul %89, %90, %cst_84 {dimension_numbers = #tpu.dot_dimension_numbers<[1], [0], [0], [1], [0, 0, 1, 1], [], []>} : vector<2x32xf32>, vector<32x2xf32>, vector<2x2xf32> -> vector<2x2xf32>
    %c0_85 = arith.constant 0 : index
    %c0_86 = arith.constant 0 : index
    %92 = vector.load %arg9[%c0_85, %c0_86] : memref<1x2xf32, #tpu.memory_space<vmem>>, vector<1x2xf32>
    %93 = vector.broadcast %92 : vector<1x2xf32> to vector<2x2xf32>
    %94 = arith.addf %91, %93 : vector<2x2xf32>
    %cst_87 = arith.constant 0.000000e+00 : f32
    %95 = vector.broadcast %cst_87 : f32 to vector<2x2xf32>
    %96 = arith.maximumf %94, %95 : vector<2x2xf32>
    %c0_88 = arith.constant 0 : index
    %c0_89 = arith.constant 0 : index
    %97 = vector.load %arg10[%c0_88, %c0_89] : memref<2x32xf32, #tpu.memory_space<vmem>>, vector<2x32xf32>
    %cst_90 = arith.constant dense<0.000000e+00> : vector<2x32xf32>
    %98 = tpu.matmul %96, %97, %cst_90 {dimension_numbers = #tpu.dot_dimension_numbers<[1], [0], [0], [1], [0, 0, 1, 1], [], []>} : vector<2x2xf32>, vector<2x32xf32>, vector<2x32xf32> -> vector<2x32xf32>
    %c0_91 = arith.constant 0 : index
    %c0_92 = arith.constant 0 : index
    %99 = vector.load %arg11[%c0_91, %c0_92] : memref<1x32xf32, #tpu.memory_space<vmem>>, vector<1x32xf32>
    %100 = vector.broadcast %99 : vector<1x32xf32> to vector<2x32xf32>
    %101 = arith.addf %98, %100 : vector<2x32xf32>
    %102 = vector.extract_strided_slice %101 {offsets = [0, 0], sizes = [1, 32], strides = [1, 1]} : vector<2x32xf32> to vector<1x32xf32>
    %103 = vector.extract_strided_slice %101 {offsets = [1, 0], sizes = [1, 32], strides = [1, 1]} : vector<2x32xf32> to vector<1x32xf32>
    %104 = arith.addf %102, %103 : vector<1x32xf32>
    %105 = arith.negf %104 : vector<1x32xf32>
    %106 = math.exp %105 : vector<1x32xf32>
    %cst_93 = arith.constant 1.000000e+00 : f32
    %107 = vector.broadcast %cst_93 : f32 to vector<1x32xf32>
    %108 = arith.addf %107, %106 : vector<1x32xf32>
    %109 = arith.divf %107, %108 : vector<1x32xf32>
    %110 = tpu.iota {dimensions = array<i32: 0>} : vector<32x32xi32>
    %111 = tpu.iota {dimensions = array<i32: 1>} : vector<32x32xi32>
    %112 = arith.cmpi eq, %110, %111 : vector<32x32xi32>
    %113 = vector.shape_cast %109 : vector<1x32xf32> to vector<1x32xf32>
    %114 = vector.broadcast %113 : vector<1x32xf32> to vector<32x32xf32>
    %cst_94 = arith.constant 0.000000e+00 : f32
    %115 = vector.broadcast %cst_94 : f32 to vector<32x32xf32>
    %116 = arith.select %112, %114, %115 : vector<32x32xi1>, vector<32x32xf32>
    %cst_95 = arith.constant dense<0.000000e+00> : vector<32x256xf32>
    %117 = tpu.matmul %116, %82, %cst_95 {dimension_numbers = #tpu.dot_dimension_numbers<[1], [1], [0], [0], [0, 0, 1, 0], [], []>} : vector<32x32xf32>, vector<256x32xf32>, vector<32x256xf32> -> vector<32x256xf32>
    %cst_96 = arith.constant dense<0xFF800000> : vector<256xf32>
    %118 = vector.multi_reduction <maximumf>, %117, %cst_96 [0] : vector<32x256xf32> to vector<256xf32>
    %119 = vector.shape_cast %118 : vector<256xf32> to vector<1x256xf32>
    %cst_97 = arith.constant dense<0.000000e+00> : vector<256xf32>
    %120 = vector.multi_reduction <add>, %117, %cst_97 [0] : vector<32x256xf32> to vector<256xf32>
    %121 = vector.shape_cast %120 : vector<256xf32> to vector<1x256xf32>
    %cst_98 = arith.constant 3.125000e-02 : f32
    %122 = vector.broadcast %cst_98 : f32 to vector<1x256xf32>
    %123 = arith.mulf %121, %122 : vector<1x256xf32>
    %cst_99 = arith.constant 0.000000e+00 : f32
    %124 = vector.broadcast %cst_99 : f32 to vector<2x22x22xf32>
    %c0_100 = arith.constant 0 : index
    %c0_101 = arith.constant 0 : index
    %c0_102 = arith.constant 0 : index
    %125 = vector.load %arg17[%c0_100, %c0_101, %c0_102] : memref<2x22x22xf32, #tpu.memory_space<vmem>>, vector<2x22x22xf32>
    tpu.vector_store %arg17[%c0_100, %c0_101, %c0_102], %124 {strides = array<i32>} : memref<2x22x22xf32, #tpu.memory_space<vmem>>, vector<2x22x22xf32>,
    %126 = vector.extract_strided_slice %119 {offsets = [0, 0], sizes = [1, 16], strides = [1, 1]} : vector<1x256xf32> to vector<1x16xf32>
    %127 = vector.extract_strided_slice %119 {offsets = [0, 16], sizes = [1, 16], strides = [1, 1]} : vector<1x256xf32> to vector<1x16xf32>
    %128 = vector.extract_strided_slice %119 {offsets = [0, 32], sizes = [1, 16], strides = [1, 1]} : vector<1x256xf32> to vector<1x16xf32>
    %129 = vector.extract_strided_slice %119 {offsets = [0, 48], sizes = [1, 16], strides = [1, 1]} : vector<1x256xf32> to vector<1x16xf32>
    %130 = vector.extract_strided_slice %119 {offsets = [0, 64], sizes = [1, 16], strides = [1, 1]} : vector<1x256xf32> to vector<1x16xf32>
    %131 = vector.extract_strided_slice %119 {offsets = [0, 80], sizes = [1, 16], strides = [1, 1]} : vector<1x256xf32> to vector<1x16xf32>
    %132 = vector.extract_strided_slice %119 {offsets = [0, 96], sizes = [1, 16], strides = [1, 1]} : vector<1x256xf32> to vector<1x16xf32>
    %133 = vector.extract_strided_slice %119 {offsets = [0, 112], sizes = [1, 16], strides = [1, 1]} : vector<1x256xf32> to vector<1x16xf32>
    %134 = vector.extract_strided_slice %119 {offsets = [0, 128], sizes = [1, 16], strides = [1, 1]} : vector<1x256xf32> to vector<1x16xf32>
    %135 = vector.extract_strided_slice %119 {offsets = [0, 144], sizes = [1, 16], strides = [1, 1]} : vector<1x256xf32> to vector<1x16xf32>
    %136 = vector.extract_strided_slice %119 {offsets = [0, 160], sizes = [1, 16], strides = [1, 1]} : vector<1x256xf32> to vector<1x16xf32>
    %137 = vector.extract_strided_slice %119 {offsets = [0, 176], sizes = [1, 16], strides = [1, 1]} : vector<1x256xf32> to vector<1x16xf32>
    %138 = vector.extract_strided_slice %119 {offsets = [0, 192], sizes = [1, 16], strides = [1, 1]} : vector<1x256xf32> to vector<1x16xf32>
    %139 = vector.extract_strided_slice %119 {offsets = [0, 208], sizes = [1, 16], strides = [1, 1]} : vector<1x256xf32> to vector<1x16xf32>
    %140 = vector.extract_strided_slice %119 {offsets = [0, 224], sizes = [1, 16], strides = [1, 1]} : vector<1x256xf32> to vector<1x16xf32>
    %141 = vector.extract_strided_slice %119 {offsets = [0, 240], sizes = [1, 16], strides = [1, 1]} : vector<1x256xf32> to vector<1x16xf32>
    %142 = tpu.concatenate %126, %127, %128, %129, %130, %131, %132, %133, %134, %135, %136, %137, %138, %139, %140, %141 in 0 : vector<1x16xf32>, vector<1x16xf32>, vector<1x16xf32>, vector<1x16xf32>, vector<1x16xf32>, vector<1x16xf32>, vector<1x16xf32>, vector<1x16xf32>, vector<1x16xf32>, vector<1x16xf32>, vector<1x16xf32>, vector<1x16xf32>, vector<1x16xf32>, vector<1x16xf32>, vector<1x16xf32>, vector<1x16xf32> -> vector<16x16xf32>
    %143 = vector.shape_cast %142 : vector<16x16xf32> to vector<1x16x16xf32>
    %c0_103 = arith.constant 0 : index
    %c3 = arith.constant 3 : index
    %c3_104 = arith.constant 3 : index
    %144 = vector.load %arg17[%c0_103, %c3, %c3_104] : memref<2x22x22xf32, #tpu.memory_space<vmem>>, vector<1x16x16xf32>
    tpu.vector_store %arg17[%c0_103, %c3, %c3_104], %143 {strides = array<i32>} : memref<2x22x22xf32, #tpu.memory_space<vmem>>, vector<1x16x16xf32>,
    %145 = vector.extract_strided_slice %123 {offsets = [0, 0], sizes = [1, 16], strides = [1, 1]} : vector<1x256xf32> to vector<1x16xf32>
    %146 = vector.extract_strided_slice %123 {offsets = [0, 16], sizes = [1, 16], strides = [1, 1]} : vector<1x256xf32> to vector<1x16xf32>
    %147 = vector.extract_strided_slice %123 {offsets = [0, 32], sizes = [1, 16], strides = [1, 1]} : vector<1x256xf32> to vector<1x16xf32>
    %148 = vector.extract_strided_slice %123 {offsets = [0, 48], sizes = [1, 16], strides = [1, 1]} : vector<1x256xf32> to vector<1x16xf32>
    %149 = vector.extract_strided_slice %123 {offsets = [0, 64], sizes = [1, 16], strides = [1, 1]} : vector<1x256xf32> to vector<1x16xf32>
    %150 = vector.extract_strided_slice %123 {offsets = [0, 80], sizes = [1, 16], strides = [1, 1]} : vector<1x256xf32> to vector<1x16xf32>
    %151 = vector.extract_strided_slice %123 {offsets = [0, 96], sizes = [1, 16], strides = [1, 1]} : vector<1x256xf32> to vector<1x16xf32>
    %152 = vector.extract_strided_slice %123 {offsets = [0, 112], sizes = [1, 16], strides = [1, 1]} : vector<1x256xf32> to vector<1x16xf32>
    %153 = vector.extract_strided_slice %123 {offsets = [0, 128], sizes = [1, 16], strides = [1, 1]} : vector<1x256xf32> to vector<1x16xf32>
    %154 = vector.extract_strided_slice %123 {offsets = [0, 144], sizes = [1, 16], strides = [1, 1]} : vector<1x256xf32> to vector<1x16xf32>
    %155 = vector.extract_strided_slice %123 {offsets = [0, 160], sizes = [1, 16], strides = [1, 1]} : vector<1x256xf32> to vector<1x16xf32>
    %156 = vector.extract_strided_slice %123 {offsets = [0, 176], sizes = [1, 16], strides = [1, 1]} : vector<1x256xf32> to vector<1x16xf32>
    %157 = vector.extract_strided_slice %123 {offsets = [0, 192], sizes = [1, 16], strides = [1, 1]} : vector<1x256xf32> to vector<1x16xf32>
    %158 = vector.extract_strided_slice %123 {offsets = [0, 208], sizes = [1, 16], strides = [1, 1]} : vector<1x256xf32> to vector<1x16xf32>
    %159 = vector.extract_strided_slice %123 {offsets = [0, 224], sizes = [1, 16], strides = [1, 1]} : vector<1x256xf32> to vector<1x16xf32>
    %160 = vector.extract_strided_slice %123 {offsets = [0, 240], sizes = [1, 16], strides = [1, 1]} : vector<1x256xf32> to vector<1x16xf32>
    %161 = tpu.concatenate %145, %146, %147, %148, %149, %150, %151, %152, %153, %154, %155, %156, %157, %158, %159, %160 in 0 : vector<1x16xf32>, vector<1x16xf32>, vector<1x16xf32>, vector<1x16xf32>, vector<1x16xf32>, vector<1x16xf32>, vector<1x16xf32>, vector<1x16xf32>, vector<1x16xf32>, vector<1x16xf32>, vector<1x16xf32>, vector<1x16xf32>, vector<1x16xf32>, vector<1x16xf32>, vector<1x16xf32>, vector<1x16xf32> -> vector<16x16xf32>
    %162 = vector.shape_cast %161 : vector<16x16xf32> to vector<1x16x16xf32>
    %c1_105 = arith.constant 1 : index
    %c3_106 = arith.constant 3 : index
    %c3_107 = arith.constant 3 : index
    %163 = vector.load %arg17[%c1_105, %c3_106, %c3_107] : memref<2x22x22xf32, #tpu.memory_space<vmem>>, vector<1x16x16xf32>
    tpu.vector_store %arg17[%c1_105, %c3_106, %c3_107], %162 {strides = array<i32>} : memref<2x22x22xf32, #tpu.memory_space<vmem>>, vector<1x16x16xf32>,
    %c0_108 = arith.constant 0 : index
    %c0_109 = arith.constant 0 : index
    %164 = vector.load %arg12[%c0_108, %c0_109] : memref<99x16xf32, #tpu.memory_space<vmem>>, vector<99x16xf32>
    %cst_110 = arith.constant 0.000000e+00 : f32
    %165 = vector.broadcast %cst_110 : f32 to vector<16x16xf32>
    %c0_111 = arith.constant 0 : index
    %c0_112 = arith.constant 0 : index
    %c0_113 = arith.constant 0 : index
    %166 = vector.load %arg17[%c0_111, %c0_112, %c0_113] : memref<2x22x22xf32, #tpu.memory_space<vmem>>, vector<1x16x16xf32>
    %167 = vector.shape_cast %166 : vector<1x16x16xf32> to vector<16x16xf32>
    %168 = vector.extract_strided_slice %164 {offsets = [0, 0], sizes = [1, 16], strides = [1, 1]} : vector<99x16xf32> to vector<1x16xf32>
    %169 = vector.broadcast %168 : vector<1x16xf32> to vector<16x16xf32>
    %170 = arith.mulf %167, %169 : vector<16x16xf32>
    %171 = arith.addf %165, %170 : vector<16x16xf32>
    %c1_114 = arith.constant 1 : index
    %c0_115 = arith.constant 0 : index
    %c0_116 = arith.constant 0 : index
    %172 = vector.load %arg17[%c1_114, %c0_115, %c0_116] : memref<2x22x22xf32, #tpu.memory_space<vmem>>, vector<1x16x16xf32>
    %173 = vector.shape_cast %172 : vector<1x16x16xf32> to vector<16x16xf32>
    %174 = vector.extract_strided_slice %164 {offsets = [49, 0], sizes = [1, 16], strides = [1, 1]} : vector<99x16xf32> to vector<1x16xf32>
    %175 = vector.broadcast %174 : vector<1x16xf32> to vector<16x16xf32>
    %176 = arith.mulf %173, %175 : vector<16x16xf32>
    %177 = arith.addf %171, %176 : vector<16x16xf32>
    %c0_117 = arith.constant 0 : index
    %c0_118 = arith.constant 0 : index
    %c1_119 = arith.constant 1 : index
    %178 = vector.load %arg17[%c0_117, %c0_118, %c1_119] : memref<2x22x22xf32, #tpu.memory_space<vmem>>, vector<1x16x16xf32>
    %179 = vector.shape_cast %178 : vector<1x16x16xf32> to vector<16x16xf32>
    %180 = vector.extract_strided_slice %164 {offsets = [1, 0], sizes = [1, 16], strides = [1, 1]} : vector<99x16xf32> to vector<1x16xf32>
    %181 = vector.broadcast %180 : vector<1x16xf32> to vector<16x16xf32>
    %182 = arith.mulf %179, %181 : vector<16x16xf32>
    %183 = arith.addf %177, %182 : vector<16x16xf32>
    %c1_120 = arith.constant 1 : index
    %c0_121 = arith.constant 0 : index
    %c1_122 = arith.constant 1 : index
    %184 = vector.load %arg17[%c1_120, %c0_121, %c1_122] : memref<2x22x22xf32, #tpu.memory_space<vmem>>, vector<1x16x16xf32>
    %185 = vector.shape_cast %184 : vector<1x16x16xf32> to vector<16x16xf32>
    %186 = vector.extract_strided_slice %164 {offsets = [50, 0], sizes = [1, 16], strides = [1, 1]} : vector<99x16xf32> to vector<1x16xf32>
    %187 = vector.broadcast %186 : vector<1x16xf32> to vector<16x16xf32>
    %188 = arith.mulf %185, %187 : vector<16x16xf32>
    %189 = arith.addf %183, %188 : vector<16x16xf32>
    %c0_123 = arith.constant 0 : index
    %c0_124 = arith.constant 0 : index
    %c2_125 = arith.constant 2 : index
    %190 = vector.load %arg17[%c0_123, %c0_124, %c2_125] : memref<2x22x22xf32, #tpu.memory_space<vmem>>, vector<1x16x16xf32>
    %191 = vector.shape_cast %190 : vector<1x16x16xf32> to vector<16x16xf32>
    %192 = vector.extract_strided_slice %164 {offsets = [2, 0], sizes = [1, 16], strides = [1, 1]} : vector<99x16xf32> to vector<1x16xf32>
    %193 = vector.broadcast %192 : vector<1x16xf32> to vector<16x16xf32>
    %194 = arith.mulf %191, %193 : vector<16x16xf32>
    %195 = arith.addf %189, %194 : vector<16x16xf32>
    %c1_126 = arith.constant 1 : index
    %c0_127 = arith.constant 0 : index
    %c2_128 = arith.constant 2 : index
    %196 = vector.load %arg17[%c1_126, %c0_127, %c2_128] : memref<2x22x22xf32, #tpu.memory_space<vmem>>, vector<1x16x16xf32>
    %197 = vector.shape_cast %196 : vector<1x16x16xf32> to vector<16x16xf32>
    %198 = vector.extract_strided_slice %164 {offsets = [51, 0], sizes = [1, 16], strides = [1, 1]} : vector<99x16xf32> to vector<1x16xf32>
    %199 = vector.broadcast %198 : vector<1x16xf32> to vector<16x16xf32>
    %200 = arith.mulf %197, %199 : vector<16x16xf32>
    %201 = arith.addf %195, %200 : vector<16x16xf32>
    %c0_129 = arith.constant 0 : index
    %c0_130 = arith.constant 0 : index
    %c3_131 = arith.constant 3 : index
    %202 = vector.load %arg17[%c0_129, %c0_130, %c3_131] : memref<2x22x22xf32, #tpu.memory_space<vmem>>, vector<1x16x16xf32>
    %203 = vector.shape_cast %202 : vector<1x16x16xf32> to vector<16x16xf32>
    %204 = vector.extract_strided_slice %164 {offsets = [3, 0], sizes = [1, 16], strides = [1, 1]} : vector<99x16xf32> to vector<1x16xf32>
    %205 = vector.broadcast %204 : vector<1x16xf32> to vector<16x16xf32>
    %206 = arith.mulf %203, %205 : vector<16x16xf32>
    %207 = arith.addf %201, %206 : vector<16x16xf32>
    %c1_132 = arith.constant 1 : index
    %c0_133 = arith.constant 0 : index
    %c3_134 = arith.constant 3 : index
    %208 = vector.load %arg17[%c1_132, %c0_133, %c3_134] : memref<2x22x22xf32, #tpu.memory_space<vmem>>, vector<1x16x16xf32>
    %209 = vector.shape_cast %208 : vector<1x16x16xf32> to vector<16x16xf32>
    %210 = vector.extract_strided_slice %164 {offsets = [52, 0], sizes = [1, 16], strides = [1, 1]} : vector<99x16xf32> to vector<1x16xf32>
    %211 = vector.broadcast %210 : vector<1x16xf32> to vector<16x16xf32>
    %212 = arith.mulf %209, %211 : vector<16x16xf32>
    %213 = arith.addf %207, %212 : vector<16x16xf32>
    %c0_135 = arith.constant 0 : index
    %c0_136 = arith.constant 0 : index
    %c4 = arith.constant 4 : index
    %214 = vector.load %arg17[%c0_135, %c0_136, %c4] : memref<2x22x22xf32, #tpu.memory_space<vmem>>, vector<1x16x16xf32>
    %215 = vector.shape_cast %214 : vector<1x16x16xf32> to vector<16x16xf32>
    %216 = vector.extract_strided_slice %164 {offsets = [4, 0], sizes = [1, 16], strides = [1, 1]} : vector<99x16xf32> to vector<1x16xf32>
    %217 = vector.broadcast %216 : vector<1x16xf32> to vector<16x16xf32>
    %218 = arith.mulf %215, %217 : vector<16x16xf32>
    %219 = arith.addf %213, %218 : vector<16x16xf32>
    %c1_137 = arith.constant 1 : index
    %c0_138 = arith.constant 0 : index
    %c4_139 = arith.constant 4 : index
    %220 = vector.load %arg17[%c1_137, %c0_138, %c4_139] : memref<2x22x22xf32, #tpu.memory_space<vmem>>, vector<1x16x16xf32>
    %221 = vector.shape_cast %220 : vector<1x16x16xf32> to vector<16x16xf32>
    %222 = vector.extract_strided_slice %164 {offsets = [53, 0], sizes = [1, 16], strides = [1, 1]} : vector<99x16xf32> to vector<1x16xf32>
    %223 = vector.broadcast %222 : vector<1x16xf32> to vector<16x16xf32>
    %224 = arith.mulf %221, %223 : vector<16x16xf32>
    %225 = arith.addf %219, %224 : vector<16x16xf32>
    %c0_140 = arith.constant 0 : index
    %c0_141 = arith.constant 0 : index
    %c5 = arith.constant 5 : index
    %226 = vector.load %arg17[%c0_140, %c0_141, %c5] : memref<2x22x22xf32, #tpu.memory_space<vmem>>, vector<1x16x16xf32>
    %227 = vector.shape_cast %226 : vector<1x16x16xf32> to vector<16x16xf32>
    %228 = vector.extract_strided_slice %164 {offsets = [5, 0], sizes = [1, 16], strides = [1, 1]} : vector<99x16xf32> to vector<1x16xf32>
    %229 = vector.broadcast %228 : vector<1x16xf32> to vector<16x16xf32>
    %230 = arith.mulf %227, %229 : vector<16x16xf32>
    %231 = arith.addf %225, %230 : vector<16x16xf32>
    %c1_142 = arith.constant 1 : index
    %c0_143 = arith.constant 0 : index
    %c5_144 = arith.constant 5 : index
    %232 = vector.load %arg17[%c1_142, %c0_143, %c5_144] : memref<2x22x22xf32, #tpu.memory_space<vmem>>, vector<1x16x16xf32>
    %233 = vector.shape_cast %232 : vector<1x16x16xf32> to vector<16x16xf32>
    %234 = vector.extract_strided_slice %164 {offsets = [54, 0], sizes = [1, 16], strides = [1, 1]} : vector<99x16xf32> to vector<1x16xf32>
    %235 = vector.broadcast %234 : vector<1x16xf32> to vector<16x16xf32>
    %236 = arith.mulf %233, %235 : vector<16x16xf32>
    %237 = arith.addf %231, %236 : vector<16x16xf32>
    %c0_145 = arith.constant 0 : index
    %c0_146 = arith.constant 0 : index
    %c6 = arith.constant 6 : index
    %238 = vector.load %arg17[%c0_145, %c0_146, %c6] : memref<2x22x22xf32, #tpu.memory_space<vmem>>, vector<1x16x16xf32>
    %239 = vector.shape_cast %238 : vector<1x16x16xf32> to vector<16x16xf32>
    %240 = vector.extract_strided_slice %164 {offsets = [6, 0], sizes = [1, 16], strides = [1, 1]} : vector<99x16xf32> to vector<1x16xf32>
    %241 = vector.broadcast %240 : vector<1x16xf32> to vector<16x16xf32>
    %242 = arith.mulf %239, %241 : vector<16x16xf32>
    %243 = arith.addf %237, %242 : vector<16x16xf32>
    %c1_147 = arith.constant 1 : index
    %c0_148 = arith.constant 0 : index
    %c6_149 = arith.constant 6 : index
    %244 = vector.load %arg17[%c1_147, %c0_148, %c6_149] : memref<2x22x22xf32, #tpu.memory_space<vmem>>, vector<1x16x16xf32>
    %245 = vector.shape_cast %244 : vector<1x16x16xf32> to vector<16x16xf32>
    %246 = vector.extract_strided_slice %164 {offsets = [55, 0], sizes = [1, 16], strides = [1, 1]} : vector<99x16xf32> to vector<1x16xf32>
    %247 = vector.broadcast %246 : vector<1x16xf32> to vector<16x16xf32>
    %248 = arith.mulf %245, %247 : vector<16x16xf32>
    %249 = arith.addf %243, %248 : vector<16x16xf32>
    %c0_150 = arith.constant 0 : index
    %c1_151 = arith.constant 1 : index
    %c0_152 = arith.constant 0 : index
    %250 = vector.load %arg17[%c0_150, %c1_151, %c0_152] : memref<2x22x22xf32, #tpu.memory_space<vmem>>, vector<1x16x16xf32>
    %251 = vector.shape_cast %250 : vector<1x16x16xf32> to vector<16x16xf32>
    %252 = vector.extract_strided_slice %164 {offsets = [7, 0], sizes = [1, 16], strides = [1, 1]} : vector<99x16xf32> to vector<1x16xf32>
    %253 = vector.broadcast %252 : vector<1x16xf32> to vector<16x16xf32>
    %254 = arith.mulf %251, %253 : vector<16x16xf32>
    %255 = arith.addf %249, %254 : vector<16x16xf32>
    %c1_153 = arith.constant 1 : index
    %c1_154 = arith.constant 1 : index
    %c0_155 = arith.constant 0 : index
    %256 = vector.load %arg17[%c1_153, %c1_154, %c0_155] : memref<2x22x22xf32, #tpu.memory_space<vmem>>, vector<1x16x16xf32>
    %257 = vector.shape_cast %256 : vector<1x16x16xf32> to vector<16x16xf32>
    %258 = vector.extract_strided_slice %164 {offsets = [56, 0], sizes = [1, 16], strides = [1, 1]} : vector<99x16xf32> to vector<1x16xf32>
    %259 = vector.broadcast %258 : vector<1x16xf32> to vector<16x16xf32>
    %260 = arith.mulf %257, %259 : vector<16x16xf32>
    %261 = arith.addf %255, %260 : vector<16x16xf32>
    %c0_156 = arith.constant 0 : index
    %c1_157 = arith.constant 1 : index
    %c1_158 = arith.constant 1 : index
    %262 = vector.load %arg17[%c0_156, %c1_157, %c1_158] : memref<2x22x22xf32, #tpu.memory_space<vmem>>, vector<1x16x16xf32>
    %263 = vector.shape_cast %262 : vector<1x16x16xf32> to vector<16x16xf32>
    %264 = vector.extract_strided_slice %164 {offsets = [8, 0], sizes = [1, 16], strides = [1, 1]} : vector<99x16xf32> to vector<1x16xf32>
    %265 = vector.broadcast %264 : vector<1x16xf32> to vector<16x16xf32>
    %266 = arith.mulf %263, %265 : vector<16x16xf32>
    %267 = arith.addf %261, %266 : vector<16x16xf32>
    %c1_159 = arith.constant 1 : index
    %c1_160 = arith.constant 1 : index
    %c1_161 = arith.constant 1 : index
    %268 = vector.load %arg17[%c1_159, %c1_160, %c1_161] : memref<2x22x22xf32, #tpu.memory_space<vmem>>, vector<1x16x16xf32>
    %269 = vector.shape_cast %268 : vector<1x16x16xf32> to vector<16x16xf32>
    %270 = vector.extract_strided_slice %164 {offsets = [57, 0], sizes = [1, 16], strides = [1, 1]} : vector<99x16xf32> to vector<1x16xf32>
    %271 = vector.broadcast %270 : vector<1x16xf32> to vector<16x16xf32>
    %272 = arith.mulf %269, %271 : vector<16x16xf32>
    %273 = arith.addf %267, %272 : vector<16x16xf32>
    %c0_162 = arith.constant 0 : index
    %c1_163 = arith.constant 1 : index
    %c2_164 = arith.constant 2 : index
    %274 = vector.load %arg17[%c0_162, %c1_163, %c2_164] : memref<2x22x22xf32, #tpu.memory_space<vmem>>, vector<1x16x16xf32>
    %275 = vector.shape_cast %274 : vector<1x16x16xf32> to vector<16x16xf32>
    %276 = vector.extract_strided_slice %164 {offsets = [9, 0], sizes = [1, 16], strides = [1, 1]} : vector<99x16xf32> to vector<1x16xf32>
    %277 = vector.broadcast %276 : vector<1x16xf32> to vector<16x16xf32>
    %278 = arith.mulf %275, %277 : vector<16x16xf32>
    %279 = arith.addf %273, %278 : vector<16x16xf32>
    %c1_165 = arith.constant 1 : index
    %c1_166 = arith.constant 1 : index
    %c2_167 = arith.constant 2 : index
    %280 = vector.load %arg17[%c1_165, %c1_166, %c2_167] : memref<2x22x22xf32, #tpu.memory_space<vmem>>, vector<1x16x16xf32>
    %281 = vector.shape_cast %280 : vector<1x16x16xf32> to vector<16x16xf32>
    %282 = vector.extract_strided_slice %164 {offsets = [58, 0], sizes = [1, 16], strides = [1, 1]} : vector<99x16xf32> to vector<1x16xf32>
    %283 = vector.broadcast %282 : vector<1x16xf32> to vector<16x16xf32>
    %284 = arith.mulf %281, %283 : vector<16x16xf32>
    %285 = arith.addf %279, %284 : vector<16x16xf32>
    %c0_168 = arith.constant 0 : index
    %c1_169 = arith.constant 1 : index
    %c3_170 = arith.constant 3 : index
    %286 = vector.load %arg17[%c0_168, %c1_169, %c3_170] : memref<2x22x22xf32, #tpu.memory_space<vmem>>, vector<1x16x16xf32>
    %287 = vector.shape_cast %286 : vector<1x16x16xf32> to vector<16x16xf32>
    %288 = vector.extract_strided_slice %164 {offsets = [10, 0], sizes = [1, 16], strides = [1, 1]} : vector<99x16xf32> to vector<1x16xf32>
    %289 = vector.broadcast %288 : vector<1x16xf32> to vector<16x16xf32>
    %290 = arith.mulf %287, %289 : vector<16x16xf32>
    %291 = arith.addf %285, %290 : vector<16x16xf32>
    %c1_171 = arith.constant 1 : index
    %c1_172 = arith.constant 1 : index
    %c3_173 = arith.constant 3 : index
    %292 = vector.load %arg17[%c1_171, %c1_172, %c3_173] : memref<2x22x22xf32, #tpu.memory_space<vmem>>, vector<1x16x16xf32>
    %293 = vector.shape_cast %292 : vector<1x16x16xf32> to vector<16x16xf32>
    %294 = vector.extract_strided_slice %164 {offsets = [59, 0], sizes = [1, 16], strides = [1, 1]} : vector<99x16xf32> to vector<1x16xf32>
    %295 = vector.broadcast %294 : vector<1x16xf32> to vector<16x16xf32>
    %296 = arith.mulf %293, %295 : vector<16x16xf32>
    %297 = arith.addf %291, %296 : vector<16x16xf32>
    %c0_174 = arith.constant 0 : index
    %c1_175 = arith.constant 1 : index
    %c4_176 = arith.constant 4 : index
    %298 = vector.load %arg17[%c0_174, %c1_175, %c4_176] : memref<2x22x22xf32, #tpu.memory_space<vmem>>, vector<1x16x16xf32>
    %299 = vector.shape_cast %298 : vector<1x16x16xf32> to vector<16x16xf32>
    %300 = vector.extract_strided_slice %164 {offsets = [11, 0], sizes = [1, 16], strides = [1, 1]} : vector<99x16xf32> to vector<1x16xf32>
    %301 = vector.broadcast %300 : vector<1x16xf32> to vector<16x16xf32>
    %302 = arith.mulf %299, %301 : vector<16x16xf32>
    %303 = arith.addf %297, %302 : vector<16x16xf32>
    %c1_177 = arith.constant 1 : index
    %c1_178 = arith.constant 1 : index
    %c4_179 = arith.constant 4 : index
    %304 = vector.load %arg17[%c1_177, %c1_178, %c4_179] : memref<2x22x22xf32, #tpu.memory_space<vmem>>, vector<1x16x16xf32>
    %305 = vector.shape_cast %304 : vector<1x16x16xf32> to vector<16x16xf32>
    %306 = vector.extract_strided_slice %164 {offsets = [60, 0], sizes = [1, 16], strides = [1, 1]} : vector<99x16xf32> to vector<1x16xf32>
    %307 = vector.broadcast %306 : vector<1x16xf32> to vector<16x16xf32>
    %308 = arith.mulf %305, %307 : vector<16x16xf32>
    %309 = arith.addf %303, %308 : vector<16x16xf32>
    %c0_180 = arith.constant 0 : index
    %c1_181 = arith.constant 1 : index
    %c5_182 = arith.constant 5 : index
    %310 = vector.load %arg17[%c0_180, %c1_181, %c5_182] : memref<2x22x22xf32, #tpu.memory_space<vmem>>, vector<1x16x16xf32>
    %311 = vector.shape_cast %310 : vector<1x16x16xf32> to vector<16x16xf32>
    %312 = vector.extract_strided_slice %164 {offsets = [12, 0], sizes = [1, 16], strides = [1, 1]} : vector<99x16xf32> to vector<1x16xf32>
    %313 = vector.broadcast %312 : vector<1x16xf32> to vector<16x16xf32>
    %314 = arith.mulf %311, %313 : vector<16x16xf32>
    %315 = arith.addf %309, %314 : vector<16x16xf32>
    %c1_183 = arith.constant 1 : index
    %c1_184 = arith.constant 1 : index
    %c5_185 = arith.constant 5 : index
    %316 = vector.load %arg17[%c1_183, %c1_184, %c5_185] : memref<2x22x22xf32, #tpu.memory_space<vmem>>, vector<1x16x16xf32>
    %317 = vector.shape_cast %316 : vector<1x16x16xf32> to vector<16x16xf32>
    %318 = vector.extract_strided_slice %164 {offsets = [61, 0], sizes = [1, 16], strides = [1, 1]} : vector<99x16xf32> to vector<1x16xf32>
    %319 = vector.broadcast %318 : vector<1x16xf32> to vector<16x16xf32>
    %320 = arith.mulf %317, %319 : vector<16x16xf32>
    %321 = arith.addf %315, %320 : vector<16x16xf32>
    %c0_186 = arith.constant 0 : index
    %c1_187 = arith.constant 1 : index
    %c6_188 = arith.constant 6 : index
    %322 = vector.load %arg17[%c0_186, %c1_187, %c6_188] : memref<2x22x22xf32, #tpu.memory_space<vmem>>, vector<1x16x16xf32>
    %323 = vector.shape_cast %322 : vector<1x16x16xf32> to vector<16x16xf32>
    %324 = vector.extract_strided_slice %164 {offsets = [13, 0], sizes = [1, 16], strides = [1, 1]} : vector<99x16xf32> to vector<1x16xf32>
    %325 = vector.broadcast %324 : vector<1x16xf32> to vector<16x16xf32>
    %326 = arith.mulf %323, %325 : vector<16x16xf32>
    %327 = arith.addf %321, %326 : vector<16x16xf32>
    %c1_189 = arith.constant 1 : index
    %c1_190 = arith.constant 1 : index
    %c6_191 = arith.constant 6 : index
    %328 = vector.load %arg17[%c1_189, %c1_190, %c6_191] : memref<2x22x22xf32, #tpu.memory_space<vmem>>, vector<1x16x16xf32>
    %329 = vector.shape_cast %328 : vector<1x16x16xf32> to vector<16x16xf32>
    %330 = vector.extract_strided_slice %164 {offsets = [62, 0], sizes = [1, 16], strides = [1, 1]} : vector<99x16xf32> to vector<1x16xf32>
    %331 = vector.broadcast %330 : vector<1x16xf32> to vector<16x16xf32>
    %332 = arith.mulf %329, %331 : vector<16x16xf32>
    %333 = arith.addf %327, %332 : vector<16x16xf32>
    %c0_192 = arith.constant 0 : index
    %c2_193 = arith.constant 2 : index
    %c0_194 = arith.constant 0 : index
    %334 = vector.load %arg17[%c0_192, %c2_193, %c0_194] : memref<2x22x22xf32, #tpu.memory_space<vmem>>, vector<1x16x16xf32>
    %335 = vector.shape_cast %334 : vector<1x16x16xf32> to vector<16x16xf32>
    %336 = vector.extract_strided_slice %164 {offsets = [14, 0], sizes = [1, 16], strides = [1, 1]} : vector<99x16xf32> to vector<1x16xf32>
    %337 = vector.broadcast %336 : vector<1x16xf32> to vector<16x16xf32>
    %338 = arith.mulf %335, %337 : vector<16x16xf32>
    %339 = arith.addf %333, %338 : vector<16x16xf32>
    %c1_195 = arith.constant 1 : index
    %c2_196 = arith.constant 2 : index
    %c0_197 = arith.constant 0 : index
    %340 = vector.load %arg17[%c1_195, %c2_196, %c0_197] : memref<2x22x22xf32, #tpu.memory_space<vmem>>, vector<1x16x16xf32>
    %341 = vector.shape_cast %340 : vector<1x16x16xf32> to vector<16x16xf32>
    %342 = vector.extract_strided_slice %164 {offsets = [63, 0], sizes = [1, 16], strides = [1, 1]} : vector<99x16xf32> to vector<1x16xf32>
    %343 = vector.broadcast %342 : vector<1x16xf32> to vector<16x16xf32>
    %344 = arith.mulf %341, %343 : vector<16x16xf32>
    %345 = arith.addf %339, %344 : vector<16x16xf32>
    %c0_198 = arith.constant 0 : index
    %c2_199 = arith.constant 2 : index
    %c1_200 = arith.constant 1 : index
    %346 = vector.load %arg17[%c0_198, %c2_199, %c1_200] : memref<2x22x22xf32, #tpu.memory_space<vmem>>, vector<1x16x16xf32>
    %347 = vector.shape_cast %346 : vector<1x16x16xf32> to vector<16x16xf32>
    %348 = vector.extract_strided_slice %164 {offsets = [15, 0], sizes = [1, 16], strides = [1, 1]} : vector<99x16xf32> to vector<1x16xf32>
    %349 = vector.broadcast %348 : vector<1x16xf32> to vector<16x16xf32>
    %350 = arith.mulf %347, %349 : vector<16x16xf32>
    %351 = arith.addf %345, %350 : vector<16x16xf32>
    %c1_201 = arith.constant 1 : index
    %c2_202 = arith.constant 2 : index
    %c1_203 = arith.constant 1 : index
    %352 = vector.load %arg17[%c1_201, %c2_202, %c1_203] : memref<2x22x22xf32, #tpu.memory_space<vmem>>, vector<1x16x16xf32>
    %353 = vector.shape_cast %352 : vector<1x16x16xf32> to vector<16x16xf32>
    %354 = vector.extract_strided_slice %164 {offsets = [64, 0], sizes = [1, 16], strides = [1, 1]} : vector<99x16xf32> to vector<1x16xf32>
    %355 = vector.broadcast %354 : vector<1x16xf32> to vector<16x16xf32>
    %356 = arith.mulf %353, %355 : vector<16x16xf32>
    %357 = arith.addf %351, %356 : vector<16x16xf32>
    %c0_204 = arith.constant 0 : index
    %c2_205 = arith.constant 2 : index
    %c2_206 = arith.constant 2 : index
    %358 = vector.load %arg17[%c0_204, %c2_205, %c2_206] : memref<2x22x22xf32, #tpu.memory_space<vmem>>, vector<1x16x16xf32>
    %359 = vector.shape_cast %358 : vector<1x16x16xf32> to vector<16x16xf32>
    %360 = vector.extract_strided_slice %164 {offsets = [16, 0], sizes = [1, 16], strides = [1, 1]} : vector<99x16xf32> to vector<1x16xf32>
    %361 = vector.broadcast %360 : vector<1x16xf32> to vector<16x16xf32>
    %362 = arith.mulf %359, %361 : vector<16x16xf32>
    %363 = arith.addf %357, %362 : vector<16x16xf32>
    %c1_207 = arith.constant 1 : index
    %c2_208 = arith.constant 2 : index
    %c2_209 = arith.constant 2 : index
    %364 = vector.load %arg17[%c1_207, %c2_208, %c2_209] : memref<2x22x22xf32, #tpu.memory_space<vmem>>, vector<1x16x16xf32>
    %365 = vector.shape_cast %364 : vector<1x16x16xf32> to vector<16x16xf32>
    %366 = vector.extract_strided_slice %164 {offsets = [65, 0], sizes = [1, 16], strides = [1, 1]} : vector<99x16xf32> to vector<1x16xf32>
    %367 = vector.broadcast %366 : vector<1x16xf32> to vector<16x16xf32>
    %368 = arith.mulf %365, %367 : vector<16x16xf32>
    %369 = arith.addf %363, %368 : vector<16x16xf32>
    %c0_210 = arith.constant 0 : index
    %c2_211 = arith.constant 2 : index
    %c3_212 = arith.constant 3 : index
    %370 = vector.load %arg17[%c0_210, %c2_211, %c3_212] : memref<2x22x22xf32, #tpu.memory_space<vmem>>, vector<1x16x16xf32>
    %371 = vector.shape_cast %370 : vector<1x16x16xf32> to vector<16x16xf32>
    %372 = vector.extract_strided_slice %164 {offsets = [17, 0], sizes = [1, 16], strides = [1, 1]} : vector<99x16xf32> to vector<1x16xf32>
    %373 = vector.broadcast %372 : vector<1x16xf32> to vector<16x16xf32>
    %374 = arith.mulf %371, %373 : vector<16x16xf32>
    %375 = arith.addf %369, %374 : vector<16x16xf32>
    %c1_213 = arith.constant 1 : index
    %c2_214 = arith.constant 2 : index
    %c3_215 = arith.constant 3 : index
    %376 = vector.load %arg17[%c1_213, %c2_214, %c3_215] : memref<2x22x22xf32, #tpu.memory_space<vmem>>, vector<1x16x16xf32>
    %377 = vector.shape_cast %376 : vector<1x16x16xf32> to vector<16x16xf32>
    %378 = vector.extract_strided_slice %164 {offsets = [66, 0], sizes = [1, 16], strides = [1, 1]} : vector<99x16xf32> to vector<1x16xf32>
    %379 = vector.broadcast %378 : vector<1x16xf32> to vector<16x16xf32>
    %380 = arith.mulf %377, %379 : vector<16x16xf32>
    %381 = arith.addf %375, %380 : vector<16x16xf32>
    %c0_216 = arith.constant 0 : index
    %c2_217 = arith.constant 2 : index
    %c4_218 = arith.constant 4 : index
    %382 = vector.load %arg17[%c0_216, %c2_217, %c4_218] : memref<2x22x22xf32, #tpu.memory_space<vmem>>, vector<1x16x16xf32>
    %383 = vector.shape_cast %382 : vector<1x16x16xf32> to vector<16x16xf32>
    %384 = vector.extract_strided_slice %164 {offsets = [18, 0], sizes = [1, 16], strides = [1, 1]} : vector<99x16xf32> to vector<1x16xf32>
    %385 = vector.broadcast %384 : vector<1x16xf32> to vector<16x16xf32>
    %386 = arith.mulf %383, %385 : vector<16x16xf32>
    %387 = arith.addf %381, %386 : vector<16x16xf32>
    %c1_219 = arith.constant 1 : index
    %c2_220 = arith.constant 2 : index
    %c4_221 = arith.constant 4 : index
    %388 = vector.load %arg17[%c1_219, %c2_220, %c4_221] : memref<2x22x22xf32, #tpu.memory_space<vmem>>, vector<1x16x16xf32>
    %389 = vector.shape_cast %388 : vector<1x16x16xf32> to vector<16x16xf32>
    %390 = vector.extract_strided_slice %164 {offsets = [67, 0], sizes = [1, 16], strides = [1, 1]} : vector<99x16xf32> to vector<1x16xf32>
    %391 = vector.broadcast %390 : vector<1x16xf32> to vector<16x16xf32>
    %392 = arith.mulf %389, %391 : vector<16x16xf32>
    %393 = arith.addf %387, %392 : vector<16x16xf32>
    %c0_222 = arith.constant 0 : index
    %c2_223 = arith.constant 2 : index
    %c5_224 = arith.constant 5 : index
    %394 = vector.load %arg17[%c0_222, %c2_223, %c5_224] : memref<2x22x22xf32, #tpu.memory_space<vmem>>, vector<1x16x16xf32>
    %395 = vector.shape_cast %394 : vector<1x16x16xf32> to vector<16x16xf32>
    %396 = vector.extract_strided_slice %164 {offsets = [19, 0], sizes = [1, 16], strides = [1, 1]} : vector<99x16xf32> to vector<1x16xf32>
    %397 = vector.broadcast %396 : vector<1x16xf32> to vector<16x16xf32>
    %398 = arith.mulf %395, %397 : vector<16x16xf32>
    %399 = arith.addf %393, %398 : vector<16x16xf32>
    %c1_225 = arith.constant 1 : index
    %c2_226 = arith.constant 2 : index
    %c5_227 = arith.constant 5 : index
    %400 = vector.load %arg17[%c1_225, %c2_226, %c5_227] : memref<2x22x22xf32, #tpu.memory_space<vmem>>, vector<1x16x16xf32>
    %401 = vector.shape_cast %400 : vector<1x16x16xf32> to vector<16x16xf32>
    %402 = vector.extract_strided_slice %164 {offsets = [68, 0], sizes = [1, 16], strides = [1, 1]} : vector<99x16xf32> to vector<1x16xf32>
    %403 = vector.broadcast %402 : vector<1x16xf32> to vector<16x16xf32>
    %404 = arith.mulf %401, %403 : vector<16x16xf32>
    %405 = arith.addf %399, %404 : vector<16x16xf32>
    %c0_228 = arith.constant 0 : index
    %c2_229 = arith.constant 2 : index
    %c6_230 = arith.constant 6 : index
    %406 = vector.load %arg17[%c0_228, %c2_229, %c6_230] : memref<2x22x22xf32, #tpu.memory_space<vmem>>, vector<1x16x16xf32>
    %407 = vector.shape_cast %406 : vector<1x16x16xf32> to vector<16x16xf32>
    %408 = vector.extract_strided_slice %164 {offsets = [20, 0], sizes = [1, 16], strides = [1, 1]} : vector<99x16xf32> to vector<1x16xf32>
    %409 = vector.broadcast %408 : vector<1x16xf32> to vector<16x16xf32>
    %410 = arith.mulf %407, %409 : vector<16x16xf32>
    %411 = arith.addf %405, %410 : vector<16x16xf32>
    %c1_231 = arith.constant 1 : index
    %c2_232 = arith.constant 2 : index
    %c6_233 = arith.constant 6 : index
    %412 = vector.load %arg17[%c1_231, %c2_232, %c6_233] : memref<2x22x22xf32, #tpu.memory_space<vmem>>, vector<1x16x16xf32>
    %413 = vector.shape_cast %412 : vector<1x16x16xf32> to vector<16x16xf32>
    %414 = vector.extract_strided_slice %164 {offsets = [69, 0], sizes = [1, 16], strides = [1, 1]} : vector<99x16xf32> to vector<1x16xf32>
    %415 = vector.broadcast %414 : vector<1x16xf32> to vector<16x16xf32>
    %416 = arith.mulf %413, %415 : vector<16x16xf32>
    %417 = arith.addf %411, %416 : vector<16x16xf32>
    %c0_234 = arith.constant 0 : index
    %c3_235 = arith.constant 3 : index
    %c0_236 = arith.constant 0 : index
    %418 = vector.load %arg17[%c0_234, %c3_235, %c0_236] : memref<2x22x22xf32, #tpu.memory_space<vmem>>, vector<1x16x16xf32>
    %419 = vector.shape_cast %418 : vector<1x16x16xf32> to vector<16x16xf32>
    %420 = vector.extract_strided_slice %164 {offsets = [21, 0], sizes = [1, 16], strides = [1, 1]} : vector<99x16xf32> to vector<1x16xf32>
    %421 = vector.broadcast %420 : vector<1x16xf32> to vector<16x16xf32>
    %422 = arith.mulf %419, %421 : vector<16x16xf32>
    %423 = arith.addf %417, %422 : vector<16x16xf32>
    %c1_237 = arith.constant 1 : index
    %c3_238 = arith.constant 3 : index
    %c0_239 = arith.constant 0 : index
    %424 = vector.load %arg17[%c1_237, %c3_238, %c0_239] : memref<2x22x22xf32, #tpu.memory_space<vmem>>, vector<1x16x16xf32>
    %425 = vector.shape_cast %424 : vector<1x16x16xf32> to vector<16x16xf32>
    %426 = vector.extract_strided_slice %164 {offsets = [70, 0], sizes = [1, 16], strides = [1, 1]} : vector<99x16xf32> to vector<1x16xf32>
    %427 = vector.broadcast %426 : vector<1x16xf32> to vector<16x16xf32>
    %428 = arith.mulf %425, %427 : vector<16x16xf32>
    %429 = arith.addf %423, %428 : vector<16x16xf32>
    %c0_240 = arith.constant 0 : index
    %c3_241 = arith.constant 3 : index
    %c1_242 = arith.constant 1 : index
    %430 = vector.load %arg17[%c0_240, %c3_241, %c1_242] : memref<2x22x22xf32, #tpu.memory_space<vmem>>, vector<1x16x16xf32>
    %431 = vector.shape_cast %430 : vector<1x16x16xf32> to vector<16x16xf32>
    %432 = vector.extract_strided_slice %164 {offsets = [22, 0], sizes = [1, 16], strides = [1, 1]} : vector<99x16xf32> to vector<1x16xf32>
    %433 = vector.broadcast %432 : vector<1x16xf32> to vector<16x16xf32>
    %434 = arith.mulf %431, %433 : vector<16x16xf32>
    %435 = arith.addf %429, %434 : vector<16x16xf32>
    %c1_243 = arith.constant 1 : index
    %c3_244 = arith.constant 3 : index
    %c1_245 = arith.constant 1 : index
    %436 = vector.load %arg17[%c1_243, %c3_244, %c1_245] : memref<2x22x22xf32, #tpu.memory_space<vmem>>, vector<1x16x16xf32>
    %437 = vector.shape_cast %436 : vector<1x16x16xf32> to vector<16x16xf32>
    %438 = vector.extract_strided_slice %164 {offsets = [71, 0], sizes = [1, 16], strides = [1, 1]} : vector<99x16xf32> to vector<1x16xf32>
    %439 = vector.broadcast %438 : vector<1x16xf32> to vector<16x16xf32>
    %440 = arith.mulf %437, %439 : vector<16x16xf32>
    %441 = arith.addf %435, %440 : vector<16x16xf32>
    %c0_246 = arith.constant 0 : index
    %c3_247 = arith.constant 3 : index
    %c2_248 = arith.constant 2 : index
    %442 = vector.load %arg17[%c0_246, %c3_247, %c2_248] : memref<2x22x22xf32, #tpu.memory_space<vmem>>, vector<1x16x16xf32>
    %443 = vector.shape_cast %442 : vector<1x16x16xf32> to vector<16x16xf32>
    %444 = vector.extract_strided_slice %164 {offsets = [23, 0], sizes = [1, 16], strides = [1, 1]} : vector<99x16xf32> to vector<1x16xf32>
    %445 = vector.broadcast %444 : vector<1x16xf32> to vector<16x16xf32>
    %446 = arith.mulf %443, %445 : vector<16x16xf32>
    %447 = arith.addf %441, %446 : vector<16x16xf32>
    %c1_249 = arith.constant 1 : index
    %c3_250 = arith.constant 3 : index
    %c2_251 = arith.constant 2 : index
    %448 = vector.load %arg17[%c1_249, %c3_250, %c2_251] : memref<2x22x22xf32, #tpu.memory_space<vmem>>, vector<1x16x16xf32>
    %449 = vector.shape_cast %448 : vector<1x16x16xf32> to vector<16x16xf32>
    %450 = vector.extract_strided_slice %164 {offsets = [72, 0], sizes = [1, 16], strides = [1, 1]} : vector<99x16xf32> to vector<1x16xf32>
    %451 = vector.broadcast %450 : vector<1x16xf32> to vector<16x16xf32>
    %452 = arith.mulf %449, %451 : vector<16x16xf32>
    %453 = arith.addf %447, %452 : vector<16x16xf32>
    %c0_252 = arith.constant 0 : index
    %c3_253 = arith.constant 3 : index
    %c3_254 = arith.constant 3 : index
    %454 = vector.load %arg17[%c0_252, %c3_253, %c3_254] : memref<2x22x22xf32, #tpu.memory_space<vmem>>, vector<1x16x16xf32>
    %455 = vector.shape_cast %454 : vector<1x16x16xf32> to vector<16x16xf32>
    %456 = vector.extract_strided_slice %164 {offsets = [24, 0], sizes = [1, 16], strides = [1, 1]} : vector<99x16xf32> to vector<1x16xf32>
    %457 = vector.broadcast %456 : vector<1x16xf32> to vector<16x16xf32>
    %458 = arith.mulf %455, %457 : vector<16x16xf32>
    %459 = arith.addf %453, %458 : vector<16x16xf32>
    %c1_255 = arith.constant 1 : index
    %c3_256 = arith.constant 3 : index
    %c3_257 = arith.constant 3 : index
    %460 = vector.load %arg17[%c1_255, %c3_256, %c3_257] : memref<2x22x22xf32, #tpu.memory_space<vmem>>, vector<1x16x16xf32>
    %461 = vector.shape_cast %460 : vector<1x16x16xf32> to vector<16x16xf32>
    %462 = vector.extract_strided_slice %164 {offsets = [73, 0], sizes = [1, 16], strides = [1, 1]} : vector<99x16xf32> to vector<1x16xf32>
    %463 = vector.broadcast %462 : vector<1x16xf32> to vector<16x16xf32>
    %464 = arith.mulf %461, %463 : vector<16x16xf32>
    %465 = arith.addf %459, %464 : vector<16x16xf32>
    %c0_258 = arith.constant 0 : index
    %c3_259 = arith.constant 3 : index
    %c4_260 = arith.constant 4 : index
    %466 = vector.load %arg17[%c0_258, %c3_259, %c4_260] : memref<2x22x22xf32, #tpu.memory_space<vmem>>, vector<1x16x16xf32>
    %467 = vector.shape_cast %466 : vector<1x16x16xf32> to vector<16x16xf32>
    %468 = vector.extract_strided_slice %164 {offsets = [25, 0], sizes = [1, 16], strides = [1, 1]} : vector<99x16xf32> to vector<1x16xf32>
    %469 = vector.broadcast %468 : vector<1x16xf32> to vector<16x16xf32>
    %470 = arith.mulf %467, %469 : vector<16x16xf32>
    %471 = arith.addf %465, %470 : vector<16x16xf32>
    %c1_261 = arith.constant 1 : index
    %c3_262 = arith.constant 3 : index
    %c4_263 = arith.constant 4 : index
    %472 = vector.load %arg17[%c1_261, %c3_262, %c4_263] : memref<2x22x22xf32, #tpu.memory_space<vmem>>, vector<1x16x16xf32>
    %473 = vector.shape_cast %472 : vector<1x16x16xf32> to vector<16x16xf32>
    %474 = vector.extract_strided_slice %164 {offsets = [74, 0], sizes = [1, 16], strides = [1, 1]} : vector<99x16xf32> to vector<1x16xf32>
    %475 = vector.broadcast %474 : vector<1x16xf32> to vector<16x16xf32>
    %476 = arith.mulf %473, %475 : vector<16x16xf32>
    %477 = arith.addf %471, %476 : vector<16x16xf32>
    %c0_264 = arith.constant 0 : index
    %c3_265 = arith.constant 3 : index
    %c5_266 = arith.constant 5 : index
    %478 = vector.load %arg17[%c0_264, %c3_265, %c5_266] : memref<2x22x22xf32, #tpu.memory_space<vmem>>, vector<1x16x16xf32>
    %479 = vector.shape_cast %478 : vector<1x16x16xf32> to vector<16x16xf32>
    %480 = vector.extract_strided_slice %164 {offsets = [26, 0], sizes = [1, 16], strides = [1, 1]} : vector<99x16xf32> to vector<1x16xf32>
    %481 = vector.broadcast %480 : vector<1x16xf32> to vector<16x16xf32>
    %482 = arith.mulf %479, %481 : vector<16x16xf32>
    %483 = arith.addf %477, %482 : vector<16x16xf32>
    %c1_267 = arith.constant 1 : index
    %c3_268 = arith.constant 3 : index
    %c5_269 = arith.constant 5 : index
    %484 = vector.load %arg17[%c1_267, %c3_268, %c5_269] : memref<2x22x22xf32, #tpu.memory_space<vmem>>, vector<1x16x16xf32>
    %485 = vector.shape_cast %484 : vector<1x16x16xf32> to vector<16x16xf32>
    %486 = vector.extract_strided_slice %164 {offsets = [75, 0], sizes = [1, 16], strides = [1, 1]} : vector<99x16xf32> to vector<1x16xf32>
    %487 = vector.broadcast %486 : vector<1x16xf32> to vector<16x16xf32>
    %488 = arith.mulf %485, %487 : vector<16x16xf32>
    %489 = arith.addf %483, %488 : vector<16x16xf32>
    %c0_270 = arith.constant 0 : index
    %c3_271 = arith.constant 3 : index
    %c6_272 = arith.constant 6 : index
    %490 = vector.load %arg17[%c0_270, %c3_271, %c6_272] : memref<2x22x22xf32, #tpu.memory_space<vmem>>, vector<1x16x16xf32>
    %491 = vector.shape_cast %490 : vector<1x16x16xf32> to vector<16x16xf32>
    %492 = vector.extract_strided_slice %164 {offsets = [27, 0], sizes = [1, 16], strides = [1, 1]} : vector<99x16xf32> to vector<1x16xf32>
    %493 = vector.broadcast %492 : vector<1x16xf32> to vector<16x16xf32>
    %494 = arith.mulf %491, %493 : vector<16x16xf32>
    %495 = arith.addf %489, %494 : vector<16x16xf32>
    %c1_273 = arith.constant 1 : index
    %c3_274 = arith.constant 3 : index
    %c6_275 = arith.constant 6 : index
    %496 = vector.load %arg17[%c1_273, %c3_274, %c6_275] : memref<2x22x22xf32, #tpu.memory_space<vmem>>, vector<1x16x16xf32>
    %497 = vector.shape_cast %496 : vector<1x16x16xf32> to vector<16x16xf32>
    %498 = vector.extract_strided_slice %164 {offsets = [76, 0], sizes = [1, 16], strides = [1, 1]} : vector<99x16xf32> to vector<1x16xf32>
    %499 = vector.broadcast %498 : vector<1x16xf32> to vector<16x16xf32>
    %500 = arith.mulf %497, %499 : vector<16x16xf32>
    %501 = arith.addf %495, %500 : vector<16x16xf32>
    %c0_276 = arith.constant 0 : index
    %c4_277 = arith.constant 4 : index
    %c0_278 = arith.constant 0 : index
    %502 = vector.load %arg17[%c0_276, %c4_277, %c0_278] : memref<2x22x22xf32, #tpu.memory_space<vmem>>, vector<1x16x16xf32>
    %503 = vector.shape_cast %502 : vector<1x16x16xf32> to vector<16x16xf32>
    %504 = vector.extract_strided_slice %164 {offsets = [28, 0], sizes = [1, 16], strides = [1, 1]} : vector<99x16xf32> to vector<1x16xf32>
    %505 = vector.broadcast %504 : vector<1x16xf32> to vector<16x16xf32>
    %506 = arith.mulf %503, %505 : vector<16x16xf32>
    %507 = arith.addf %501, %506 : vector<16x16xf32>
    %c1_279 = arith.constant 1 : index
    %c4_280 = arith.constant 4 : index
    %c0_281 = arith.constant 0 : index
    %508 = vector.load %arg17[%c1_279, %c4_280, %c0_281] : memref<2x22x22xf32, #tpu.memory_space<vmem>>, vector<1x16x16xf32>
    %509 = vector.shape_cast %508 : vector<1x16x16xf32> to vector<16x16xf32>
    %510 = vector.extract_strided_slice %164 {offsets = [77, 0], sizes = [1, 16], strides = [1, 1]} : vector<99x16xf32> to vector<1x16xf32>
    %511 = vector.broadcast %510 : vector<1x16xf32> to vector<16x16xf32>
    %512 = arith.mulf %509, %511 : vector<16x16xf32>
    %513 = arith.addf %507, %512 : vector<16x16xf32>
    %c0_282 = arith.constant 0 : index
    %c4_283 = arith.constant 4 : index
    %c1_284 = arith.constant 1 : index
    %514 = vector.load %arg17[%c0_282, %c4_283, %c1_284] : memref<2x22x22xf32, #tpu.memory_space<vmem>>, vector<1x16x16xf32>
    %515 = vector.shape_cast %514 : vector<1x16x16xf32> to vector<16x16xf32>
    %516 = vector.extract_strided_slice %164 {offsets = [29, 0], sizes = [1, 16], strides = [1, 1]} : vector<99x16xf32> to vector<1x16xf32>
    %517 = vector.broadcast %516 : vector<1x16xf32> to vector<16x16xf32>
    %518 = arith.mulf %515, %517 : vector<16x16xf32>
    %519 = arith.addf %513, %518 : vector<16x16xf32>
    %c1_285 = arith.constant 1 : index
    %c4_286 = arith.constant 4 : index
    %c1_287 = arith.constant 1 : index
    %520 = vector.load %arg17[%c1_285, %c4_286, %c1_287] : memref<2x22x22xf32, #tpu.memory_space<vmem>>, vector<1x16x16xf32>
    %521 = vector.shape_cast %520 : vector<1x16x16xf32> to vector<16x16xf32>
    %522 = vector.extract_strided_slice %164 {offsets = [78, 0], sizes = [1, 16], strides = [1, 1]} : vector<99x16xf32> to vector<1x16xf32>
    %523 = vector.broadcast %522 : vector<1x16xf32> to vector<16x16xf32>
    %524 = arith.mulf %521, %523 : vector<16x16xf32>
    %525 = arith.addf %519, %524 : vector<16x16xf32>
    %c0_288 = arith.constant 0 : index
    %c4_289 = arith.constant 4 : index
    %c2_290 = arith.constant 2 : index
    %526 = vector.load %arg17[%c0_288, %c4_289, %c2_290] : memref<2x22x22xf32, #tpu.memory_space<vmem>>, vector<1x16x16xf32>
    %527 = vector.shape_cast %526 : vector<1x16x16xf32> to vector<16x16xf32>
    %528 = vector.extract_strided_slice %164 {offsets = [30, 0], sizes = [1, 16], strides = [1, 1]} : vector<99x16xf32> to vector<1x16xf32>
    %529 = vector.broadcast %528 : vector<1x16xf32> to vector<16x16xf32>
    %530 = arith.mulf %527, %529 : vector<16x16xf32>
    %531 = arith.addf %525, %530 : vector<16x16xf32>
    %c1_291 = arith.constant 1 : index
    %c4_292 = arith.constant 4 : index
    %c2_293 = arith.constant 2 : index
    %532 = vector.load %arg17[%c1_291, %c4_292, %c2_293] : memref<2x22x22xf32, #tpu.memory_space<vmem>>, vector<1x16x16xf32>
    %533 = vector.shape_cast %532 : vector<1x16x16xf32> to vector<16x16xf32>
    %534 = vector.extract_strided_slice %164 {offsets = [79, 0], sizes = [1, 16], strides = [1, 1]} : vector<99x16xf32> to vector<1x16xf32>
    %535 = vector.broadcast %534 : vector<1x16xf32> to vector<16x16xf32>
    %536 = arith.mulf %533, %535 : vector<16x16xf32>
    %537 = arith.addf %531, %536 : vector<16x16xf32>
    %c0_294 = arith.constant 0 : index
    %c4_295 = arith.constant 4 : index
    %c3_296 = arith.constant 3 : index
    %538 = vector.load %arg17[%c0_294, %c4_295, %c3_296] : memref<2x22x22xf32, #tpu.memory_space<vmem>>, vector<1x16x16xf32>
    %539 = vector.shape_cast %538 : vector<1x16x16xf32> to vector<16x16xf32>
    %540 = vector.extract_strided_slice %164 {offsets = [31, 0], sizes = [1, 16], strides = [1, 1]} : vector<99x16xf32> to vector<1x16xf32>
    %541 = vector.broadcast %540 : vector<1x16xf32> to vector<16x16xf32>
    %542 = arith.mulf %539, %541 : vector<16x16xf32>
    %543 = arith.addf %537, %542 : vector<16x16xf32>
    %c1_297 = arith.constant 1 : index
    %c4_298 = arith.constant 4 : index
    %c3_299 = arith.constant 3 : index
    %544 = vector.load %arg17[%c1_297, %c4_298, %c3_299] : memref<2x22x22xf32, #tpu.memory_space<vmem>>, vector<1x16x16xf32>
    %545 = vector.shape_cast %544 : vector<1x16x16xf32> to vector<16x16xf32>
    %546 = vector.extract_strided_slice %164 {offsets = [80, 0], sizes = [1, 16], strides = [1, 1]} : vector<99x16xf32> to vector<1x16xf32>
    %547 = vector.broadcast %546 : vector<1x16xf32> to vector<16x16xf32>
    %548 = arith.mulf %545, %547 : vector<16x16xf32>
    %549 = arith.addf %543, %548 : vector<16x16xf32>
    %c0_300 = arith.constant 0 : index
    %c4_301 = arith.constant 4 : index
    %c4_302 = arith.constant 4 : index
    %550 = vector.load %arg17[%c0_300, %c4_301, %c4_302] : memref<2x22x22xf32, #tpu.memory_space<vmem>>, vector<1x16x16xf32>
    %551 = vector.shape_cast %550 : vector<1x16x16xf32> to vector<16x16xf32>
    %552 = vector.extract_strided_slice %164 {offsets = [32, 0], sizes = [1, 16], strides = [1, 1]} : vector<99x16xf32> to vector<1x16xf32>
    %553 = vector.broadcast %552 : vector<1x16xf32> to vector<16x16xf32>
    %554 = arith.mulf %551, %553 : vector<16x16xf32>
    %555 = arith.addf %549, %554 : vector<16x16xf32>
    %c1_303 = arith.constant 1 : index
    %c4_304 = arith.constant 4 : index
    %c4_305 = arith.constant 4 : index
    %556 = vector.load %arg17[%c1_303, %c4_304, %c4_305] : memref<2x22x22xf32, #tpu.memory_space<vmem>>, vector<1x16x16xf32>
    %557 = vector.shape_cast %556 : vector<1x16x16xf32> to vector<16x16xf32>
    %558 = vector.extract_strided_slice %164 {offsets = [81, 0], sizes = [1, 16], strides = [1, 1]} : vector<99x16xf32> to vector<1x16xf32>
    %559 = vector.broadcast %558 : vector<1x16xf32> to vector<16x16xf32>
    %560 = arith.mulf %557, %559 : vector<16x16xf32>
    %561 = arith.addf %555, %560 : vector<16x16xf32>
    %c0_306 = arith.constant 0 : index
    %c4_307 = arith.constant 4 : index
    %c5_308 = arith.constant 5 : index
    %562 = vector.load %arg17[%c0_306, %c4_307, %c5_308] : memref<2x22x22xf32, #tpu.memory_space<vmem>>, vector<1x16x16xf32>
    %563 = vector.shape_cast %562 : vector<1x16x16xf32> to vector<16x16xf32>
    %564 = vector.extract_strided_slice %164 {offsets = [33, 0], sizes = [1, 16], strides = [1, 1]} : vector<99x16xf32> to vector<1x16xf32>
    %565 = vector.broadcast %564 : vector<1x16xf32> to vector<16x16xf32>
    %566 = arith.mulf %563, %565 : vector<16x16xf32>
    %567 = arith.addf %561, %566 : vector<16x16xf32>
    %c1_309 = arith.constant 1 : index
    %c4_310 = arith.constant 4 : index
    %c5_311 = arith.constant 5 : index
    %568 = vector.load %arg17[%c1_309, %c4_310, %c5_311] : memref<2x22x22xf32, #tpu.memory_space<vmem>>, vector<1x16x16xf32>
    %569 = vector.shape_cast %568 : vector<1x16x16xf32> to vector<16x16xf32>
    %570 = vector.extract_strided_slice %164 {offsets = [82, 0], sizes = [1, 16], strides = [1, 1]} : vector<99x16xf32> to vector<1x16xf32>
    %571 = vector.broadcast %570 : vector<1x16xf32> to vector<16x16xf32>
    %572 = arith.mulf %569, %571 : vector<16x16xf32>
    %573 = arith.addf %567, %572 : vector<16x16xf32>
    %c0_312 = arith.constant 0 : index
    %c4_313 = arith.constant 4 : index
    %c6_314 = arith.constant 6 : index
    %574 = vector.load %arg17[%c0_312, %c4_313, %c6_314] : memref<2x22x22xf32, #tpu.memory_space<vmem>>, vector<1x16x16xf32>
    %575 = vector.shape_cast %574 : vector<1x16x16xf32> to vector<16x16xf32>
    %576 = vector.extract_strided_slice %164 {offsets = [34, 0], sizes = [1, 16], strides = [1, 1]} : vector<99x16xf32> to vector<1x16xf32>
    %577 = vector.broadcast %576 : vector<1x16xf32> to vector<16x16xf32>
    %578 = arith.mulf %575, %577 : vector<16x16xf32>
    %579 = arith.addf %573, %578 : vector<16x16xf32>
    %c1_315 = arith.constant 1 : index
    %c4_316 = arith.constant 4 : index
    %c6_317 = arith.constant 6 : index
    %580 = vector.load %arg17[%c1_315, %c4_316, %c6_317] : memref<2x22x22xf32, #tpu.memory_space<vmem>>, vector<1x16x16xf32>
    %581 = vector.shape_cast %580 : vector<1x16x16xf32> to vector<16x16xf32>
    %582 = vector.extract_strided_slice %164 {offsets = [83, 0], sizes = [1, 16], strides = [1, 1]} : vector<99x16xf32> to vector<1x16xf32>
    %583 = vector.broadcast %582 : vector<1x16xf32> to vector<16x16xf32>
    %584 = arith.mulf %581, %583 : vector<16x16xf32>
    %585 = arith.addf %579, %584 : vector<16x16xf32>
    %c0_318 = arith.constant 0 : index
    %c5_319 = arith.constant 5 : index
    %c0_320 = arith.constant 0 : index
    %586 = vector.load %arg17[%c0_318, %c5_319, %c0_320] : memref<2x22x22xf32, #tpu.memory_space<vmem>>, vector<1x16x16xf32>
    %587 = vector.shape_cast %586 : vector<1x16x16xf32> to vector<16x16xf32>
    %588 = vector.extract_strided_slice %164 {offsets = [35, 0], sizes = [1, 16], strides = [1, 1]} : vector<99x16xf32> to vector<1x16xf32>
    %589 = vector.broadcast %588 : vector<1x16xf32> to vector<16x16xf32>
    %590 = arith.mulf %587, %589 : vector<16x16xf32>
    %591 = arith.addf %585, %590 : vector<16x16xf32>
    %c1_321 = arith.constant 1 : index
    %c5_322 = arith.constant 5 : index
    %c0_323 = arith.constant 0 : index
    %592 = vector.load %arg17[%c1_321, %c5_322, %c0_323] : memref<2x22x22xf32, #tpu.memory_space<vmem>>, vector<1x16x16xf32>
    %593 = vector.shape_cast %592 : vector<1x16x16xf32> to vector<16x16xf32>
    %594 = vector.extract_strided_slice %164 {offsets = [84, 0], sizes = [1, 16], strides = [1, 1]} : vector<99x16xf32> to vector<1x16xf32>
    %595 = vector.broadcast %594 : vector<1x16xf32> to vector<16x16xf32>
    %596 = arith.mulf %593, %595 : vector<16x16xf32>
    %597 = arith.addf %591, %596 : vector<16x16xf32>
    %c0_324 = arith.constant 0 : index
    %c5_325 = arith.constant 5 : index
    %c1_326 = arith.constant 1 : index
    %598 = vector.load %arg17[%c0_324, %c5_325, %c1_326] : memref<2x22x22xf32, #tpu.memory_space<vmem>>, vector<1x16x16xf32>
    %599 = vector.shape_cast %598 : vector<1x16x16xf32> to vector<16x16xf32>
    %600 = vector.extract_strided_slice %164 {offsets = [36, 0], sizes = [1, 16], strides = [1, 1]} : vector<99x16xf32> to vector<1x16xf32>
    %601 = vector.broadcast %600 : vector<1x16xf32> to vector<16x16xf32>
    %602 = arith.mulf %599, %601 : vector<16x16xf32>
    %603 = arith.addf %597, %602 : vector<16x16xf32>
    %c1_327 = arith.constant 1 : index
    %c5_328 = arith.constant 5 : index
    %c1_329 = arith.constant 1 : index
    %604 = vector.load %arg17[%c1_327, %c5_328, %c1_329] : memref<2x22x22xf32, #tpu.memory_space<vmem>>, vector<1x16x16xf32>
    %605 = vector.shape_cast %604 : vector<1x16x16xf32> to vector<16x16xf32>
    %606 = vector.extract_strided_slice %164 {offsets = [85, 0], sizes = [1, 16], strides = [1, 1]} : vector<99x16xf32> to vector<1x16xf32>
    %607 = vector.broadcast %606 : vector<1x16xf32> to vector<16x16xf32>
    %608 = arith.mulf %605, %607 : vector<16x16xf32>
    %609 = arith.addf %603, %608 : vector<16x16xf32>
    %c0_330 = arith.constant 0 : index
    %c5_331 = arith.constant 5 : index
    %c2_332 = arith.constant 2 : index
    %610 = vector.load %arg17[%c0_330, %c5_331, %c2_332] : memref<2x22x22xf32, #tpu.memory_space<vmem>>, vector<1x16x16xf32>
    %611 = vector.shape_cast %610 : vector<1x16x16xf32> to vector<16x16xf32>
    %612 = vector.extract_strided_slice %164 {offsets = [37, 0], sizes = [1, 16], strides = [1, 1]} : vector<99x16xf32> to vector<1x16xf32>
    %613 = vector.broadcast %612 : vector<1x16xf32> to vector<16x16xf32>
    %614 = arith.mulf %611, %613 : vector<16x16xf32>
    %615 = arith.addf %609, %614 : vector<16x16xf32>
    %c1_333 = arith.constant 1 : index
    %c5_334 = arith.constant 5 : index
    %c2_335 = arith.constant 2 : index
    %616 = vector.load %arg17[%c1_333, %c5_334, %c2_335] : memref<2x22x22xf32, #tpu.memory_space<vmem>>, vector<1x16x16xf32>
    %617 = vector.shape_cast %616 : vector<1x16x16xf32> to vector<16x16xf32>
    %618 = vector.extract_strided_slice %164 {offsets = [86, 0], sizes = [1, 16], strides = [1, 1]} : vector<99x16xf32> to vector<1x16xf32>
    %619 = vector.broadcast %618 : vector<1x16xf32> to vector<16x16xf32>
    %620 = arith.mulf %617, %619 : vector<16x16xf32>
    %621 = arith.addf %615, %620 : vector<16x16xf32>
    %c0_336 = arith.constant 0 : index
    %c5_337 = arith.constant 5 : index
    %c3_338 = arith.constant 3 : index
    %622 = vector.load %arg17[%c0_336, %c5_337, %c3_338] : memref<2x22x22xf32, #tpu.memory_space<vmem>>, vector<1x16x16xf32>
    %623 = vector.shape_cast %622 : vector<1x16x16xf32> to vector<16x16xf32>
    %624 = vector.extract_strided_slice %164 {offsets = [38, 0], sizes = [1, 16], strides = [1, 1]} : vector<99x16xf32> to vector<1x16xf32>
    %625 = vector.broadcast %624 : vector<1x16xf32> to vector<16x16xf32>
    %626 = arith.mulf %623, %625 : vector<16x16xf32>
    %627 = arith.addf %621, %626 : vector<16x16xf32>
    %c1_339 = arith.constant 1 : index
    %c5_340 = arith.constant 5 : index
    %c3_341 = arith.constant 3 : index
    %628 = vector.load %arg17[%c1_339, %c5_340, %c3_341] : memref<2x22x22xf32, #tpu.memory_space<vmem>>, vector<1x16x16xf32>
    %629 = vector.shape_cast %628 : vector<1x16x16xf32> to vector<16x16xf32>
    %630 = vector.extract_strided_slice %164 {offsets = [87, 0], sizes = [1, 16], strides = [1, 1]} : vector<99x16xf32> to vector<1x16xf32>
    %631 = vector.broadcast %630 : vector<1x16xf32> to vector<16x16xf32>
    %632 = arith.mulf %629, %631 : vector<16x16xf32>
    %633 = arith.addf %627, %632 : vector<16x16xf32>
    %c0_342 = arith.constant 0 : index
    %c5_343 = arith.constant 5 : index
    %c4_344 = arith.constant 4 : index
    %634 = vector.load %arg17[%c0_342, %c5_343, %c4_344] : memref<2x22x22xf32, #tpu.memory_space<vmem>>, vector<1x16x16xf32>
    %635 = vector.shape_cast %634 : vector<1x16x16xf32> to vector<16x16xf32>
    %636 = vector.extract_strided_slice %164 {offsets = [39, 0], sizes = [1, 16], strides = [1, 1]} : vector<99x16xf32> to vector<1x16xf32>
    %637 = vector.broadcast %636 : vector<1x16xf32> to vector<16x16xf32>
    %638 = arith.mulf %635, %637 : vector<16x16xf32>
    %639 = arith.addf %633, %638 : vector<16x16xf32>
    %c1_345 = arith.constant 1 : index
    %c5_346 = arith.constant 5 : index
    %c4_347 = arith.constant 4 : index
    %640 = vector.load %arg17[%c1_345, %c5_346, %c4_347] : memref<2x22x22xf32, #tpu.memory_space<vmem>>, vector<1x16x16xf32>
    %641 = vector.shape_cast %640 : vector<1x16x16xf32> to vector<16x16xf32>
    %642 = vector.extract_strided_slice %164 {offsets = [88, 0], sizes = [1, 16], strides = [1, 1]} : vector<99x16xf32> to vector<1x16xf32>
    %643 = vector.broadcast %642 : vector<1x16xf32> to vector<16x16xf32>
    %644 = arith.mulf %641, %643 : vector<16x16xf32>
    %645 = arith.addf %639, %644 : vector<16x16xf32>
    %c0_348 = arith.constant 0 : index
    %c5_349 = arith.constant 5 : index
    %c5_350 = arith.constant 5 : index
    %646 = vector.load %arg17[%c0_348, %c5_349, %c5_350] : memref<2x22x22xf32, #tpu.memory_space<vmem>>, vector<1x16x16xf32>
    %647 = vector.shape_cast %646 : vector<1x16x16xf32> to vector<16x16xf32>
    %648 = vector.extract_strided_slice %164 {offsets = [40, 0], sizes = [1, 16], strides = [1, 1]} : vector<99x16xf32> to vector<1x16xf32>
    %649 = vector.broadcast %648 : vector<1x16xf32> to vector<16x16xf32>
    %650 = arith.mulf %647, %649 : vector<16x16xf32>
    %651 = arith.addf %645, %650 : vector<16x16xf32>
    %c1_351 = arith.constant 1 : index
    %c5_352 = arith.constant 5 : index
    %c5_353 = arith.constant 5 : index
    %652 = vector.load %arg17[%c1_351, %c5_352, %c5_353] : memref<2x22x22xf32, #tpu.memory_space<vmem>>, vector<1x16x16xf32>
    %653 = vector.shape_cast %652 : vector<1x16x16xf32> to vector<16x16xf32>
    %654 = vector.extract_strided_slice %164 {offsets = [89, 0], sizes = [1, 16], strides = [1, 1]} : vector<99x16xf32> to vector<1x16xf32>
    %655 = vector.broadcast %654 : vector<1x16xf32> to vector<16x16xf32>
    %656 = arith.mulf %653, %655 : vector<16x16xf32>
    %657 = arith.addf %651, %656 : vector<16x16xf32>
    %c0_354 = arith.constant 0 : index
    %c5_355 = arith.constant 5 : index
    %c6_356 = arith.constant 6 : index
    %658 = vector.load %arg17[%c0_354, %c5_355, %c6_356] : memref<2x22x22xf32, #tpu.memory_space<vmem>>, vector<1x16x16xf32>
    %659 = vector.shape_cast %658 : vector<1x16x16xf32> to vector<16x16xf32>
    %660 = vector.extract_strided_slice %164 {offsets = [41, 0], sizes = [1, 16], strides = [1, 1]} : vector<99x16xf32> to vector<1x16xf32>
    %661 = vector.broadcast %660 : vector<1x16xf32> to vector<16x16xf32>
    %662 = arith.mulf %659, %661 : vector<16x16xf32>
    %663 = arith.addf %657, %662 : vector<16x16xf32>
    %c1_357 = arith.constant 1 : index
    %c5_358 = arith.constant 5 : index
    %c6_359 = arith.constant 6 : index
    %664 = vector.load %arg17[%c1_357, %c5_358, %c6_359] : memref<2x22x22xf32, #tpu.memory_space<vmem>>, vector<1x16x16xf32>
    %665 = vector.shape_cast %664 : vector<1x16x16xf32> to vector<16x16xf32>
    %666 = vector.extract_strided_slice %164 {offsets = [90, 0], sizes = [1, 16], strides = [1, 1]} : vector<99x16xf32> to vector<1x16xf32>
    %667 = vector.broadcast %666 : vector<1x16xf32> to vector<16x16xf32>
    %668 = arith.mulf %665, %667 : vector<16x16xf32>
    %669 = arith.addf %663, %668 : vector<16x16xf32>
    %c0_360 = arith.constant 0 : index
    %c6_361 = arith.constant 6 : index
    %c0_362 = arith.constant 0 : index
    %670 = vector.load %arg17[%c0_360, %c6_361, %c0_362] : memref<2x22x22xf32, #tpu.memory_space<vmem>>, vector<1x16x16xf32>
    %671 = vector.shape_cast %670 : vector<1x16x16xf32> to vector<16x16xf32>
    %672 = vector.extract_strided_slice %164 {offsets = [42, 0], sizes = [1, 16], strides = [1, 1]} : vector<99x16xf32> to vector<1x16xf32>
    %673 = vector.broadcast %672 : vector<1x16xf32> to vector<16x16xf32>
    %674 = arith.mulf %671, %673 : vector<16x16xf32>
    %675 = arith.addf %669, %674 : vector<16x16xf32>
    %c1_363 = arith.constant 1 : index
    %c6_364 = arith.constant 6 : index
    %c0_365 = arith.constant 0 : index
    %676 = vector.load %arg17[%c1_363, %c6_364, %c0_365] : memref<2x22x22xf32, #tpu.memory_space<vmem>>, vector<1x16x16xf32>
    %677 = vector.shape_cast %676 : vector<1x16x16xf32> to vector<16x16xf32>
    %678 = vector.extract_strided_slice %164 {offsets = [91, 0], sizes = [1, 16], strides = [1, 1]} : vector<99x16xf32> to vector<1x16xf32>
    %679 = vector.broadcast %678 : vector<1x16xf32> to vector<16x16xf32>
    %680 = arith.mulf %677, %679 : vector<16x16xf32>
    %681 = arith.addf %675, %680 : vector<16x16xf32>
    %c0_366 = arith.constant 0 : index
    %c6_367 = arith.constant 6 : index
    %c1_368 = arith.constant 1 : index
    %682 = vector.load %arg17[%c0_366, %c6_367, %c1_368] : memref<2x22x22xf32, #tpu.memory_space<vmem>>, vector<1x16x16xf32>
    %683 = vector.shape_cast %682 : vector<1x16x16xf32> to vector<16x16xf32>
    %684 = vector.extract_strided_slice %164 {offsets = [43, 0], sizes = [1, 16], strides = [1, 1]} : vector<99x16xf32> to vector<1x16xf32>
    %685 = vector.broadcast %684 : vector<1x16xf32> to vector<16x16xf32>
    %686 = arith.mulf %683, %685 : vector<16x16xf32>
    %687 = arith.addf %681, %686 : vector<16x16xf32>
    %c1_369 = arith.constant 1 : index
    %c6_370 = arith.constant 6 : index
    %c1_371 = arith.constant 1 : index
    %688 = vector.load %arg17[%c1_369, %c6_370, %c1_371] : memref<2x22x22xf32, #tpu.memory_space<vmem>>, vector<1x16x16xf32>
    %689 = vector.shape_cast %688 : vector<1x16x16xf32> to vector<16x16xf32>
    %690 = vector.extract_strided_slice %164 {offsets = [92, 0], sizes = [1, 16], strides = [1, 1]} : vector<99x16xf32> to vector<1x16xf32>
    %691 = vector.broadcast %690 : vector<1x16xf32> to vector<16x16xf32>
    %692 = arith.mulf %689, %691 : vector<16x16xf32>
    %693 = arith.addf %687, %692 : vector<16x16xf32>
    %c0_372 = arith.constant 0 : index
    %c6_373 = arith.constant 6 : index
    %c2_374 = arith.constant 2 : index
    %694 = vector.load %arg17[%c0_372, %c6_373, %c2_374] : memref<2x22x22xf32, #tpu.memory_space<vmem>>, vector<1x16x16xf32>
    %695 = vector.shape_cast %694 : vector<1x16x16xf32> to vector<16x16xf32>
    %696 = vector.extract_strided_slice %164 {offsets = [44, 0], sizes = [1, 16], strides = [1, 1]} : vector<99x16xf32> to vector<1x16xf32>
    %697 = vector.broadcast %696 : vector<1x16xf32> to vector<16x16xf32>
    %698 = arith.mulf %695, %697 : vector<16x16xf32>
    %699 = arith.addf %693, %698 : vector<16x16xf32>
    %c1_375 = arith.constant 1 : index
    %c6_376 = arith.constant 6 : index
    %c2_377 = arith.constant 2 : index
    %700 = vector.load %arg17[%c1_375, %c6_376, %c2_377] : memref<2x22x22xf32, #tpu.memory_space<vmem>>, vector<1x16x16xf32>
    %701 = vector.shape_cast %700 : vector<1x16x16xf32> to vector<16x16xf32>
    %702 = vector.extract_strided_slice %164 {offsets = [93, 0], sizes = [1, 16], strides = [1, 1]} : vector<99x16xf32> to vector<1x16xf32>
    %703 = vector.broadcast %702 : vector<1x16xf32> to vector<16x16xf32>
    %704 = arith.mulf %701, %703 : vector<16x16xf32>
    %705 = arith.addf %699, %704 : vector<16x16xf32>
    %c0_378 = arith.constant 0 : index
    %c6_379 = arith.constant 6 : index
    %c3_380 = arith.constant 3 : index
    %706 = vector.load %arg17[%c0_378, %c6_379, %c3_380] : memref<2x22x22xf32, #tpu.memory_space<vmem>>, vector<1x16x16xf32>
    %707 = vector.shape_cast %706 : vector<1x16x16xf32> to vector<16x16xf32>
    %708 = vector.extract_strided_slice %164 {offsets = [45, 0], sizes = [1, 16], strides = [1, 1]} : vector<99x16xf32> to vector<1x16xf32>
    %709 = vector.broadcast %708 : vector<1x16xf32> to vector<16x16xf32>
    %710 = arith.mulf %707, %709 : vector<16x16xf32>
    %711 = arith.addf %705, %710 : vector<16x16xf32>
    %c1_381 = arith.constant 1 : index
    %c6_382 = arith.constant 6 : index
    %c3_383 = arith.constant 3 : index
    %712 = vector.load %arg17[%c1_381, %c6_382, %c3_383] : memref<2x22x22xf32, #tpu.memory_space<vmem>>, vector<1x16x16xf32>
    %713 = vector.shape_cast %712 : vector<1x16x16xf32> to vector<16x16xf32>
    %714 = vector.extract_strided_slice %164 {offsets = [94, 0], sizes = [1, 16], strides = [1, 1]} : vector<99x16xf32> to vector<1x16xf32>
    %715 = vector.broadcast %714 : vector<1x16xf32> to vector<16x16xf32>
    %716 = arith.mulf %713, %715 : vector<16x16xf32>
    %717 = arith.addf %711, %716 : vector<16x16xf32>
    %c0_384 = arith.constant 0 : index
    %c6_385 = arith.constant 6 : index
    %c4_386 = arith.constant 4 : index
    %718 = vector.load %arg17[%c0_384, %c6_385, %c4_386] : memref<2x22x22xf32, #tpu.memory_space<vmem>>, vector<1x16x16xf32>
    %719 = vector.shape_cast %718 : vector<1x16x16xf32> to vector<16x16xf32>
    %720 = vector.extract_strided_slice %164 {offsets = [46, 0], sizes = [1, 16], strides = [1, 1]} : vector<99x16xf32> to vector<1x16xf32>
    %721 = vector.broadcast %720 : vector<1x16xf32> to vector<16x16xf32>
    %722 = arith.mulf %719, %721 : vector<16x16xf32>
    %723 = arith.addf %717, %722 : vector<16x16xf32>
    %c1_387 = arith.constant 1 : index
    %c6_388 = arith.constant 6 : index
    %c4_389 = arith.constant 4 : index
    %724 = vector.load %arg17[%c1_387, %c6_388, %c4_389] : memref<2x22x22xf32, #tpu.memory_space<vmem>>, vector<1x16x16xf32>
    %725 = vector.shape_cast %724 : vector<1x16x16xf32> to vector<16x16xf32>
    %726 = vector.extract_strided_slice %164 {offsets = [95, 0], sizes = [1, 16], strides = [1, 1]} : vector<99x16xf32> to vector<1x16xf32>
    %727 = vector.broadcast %726 : vector<1x16xf32> to vector<16x16xf32>
    %728 = arith.mulf %725, %727 : vector<16x16xf32>
    %729 = arith.addf %723, %728 : vector<16x16xf32>
    %c0_390 = arith.constant 0 : index
    %c6_391 = arith.constant 6 : index
    %c5_392 = arith.constant 5 : index
    %730 = vector.load %arg17[%c0_390, %c6_391, %c5_392] : memref<2x22x22xf32, #tpu.memory_space<vmem>>, vector<1x16x16xf32>
    %731 = vector.shape_cast %730 : vector<1x16x16xf32> to vector<16x16xf32>
    %732 = vector.extract_strided_slice %164 {offsets = [47, 0], sizes = [1, 16], strides = [1, 1]} : vector<99x16xf32> to vector<1x16xf32>
    %733 = vector.broadcast %732 : vector<1x16xf32> to vector<16x16xf32>
    %734 = arith.mulf %731, %733 : vector<16x16xf32>
    %735 = arith.addf %729, %734 : vector<16x16xf32>
    %c1_393 = arith.constant 1 : index
    %c6_394 = arith.constant 6 : index
    %c5_395 = arith.constant 5 : index
    %736 = vector.load %arg17[%c1_393, %c6_394, %c5_395] : memref<2x22x22xf32, #tpu.memory_space<vmem>>, vector<1x16x16xf32>
    %737 = vector.shape_cast %736 : vector<1x16x16xf32> to vector<16x16xf32>
    %738 = vector.extract_strided_slice %164 {offsets = [96, 0], sizes = [1, 16], strides = [1, 1]} : vector<99x16xf32> to vector<1x16xf32>
    %739 = vector.broadcast %738 : vector<1x16xf32> to vector<16x16xf32>
    %740 = arith.mulf %737, %739 : vector<16x16xf32>
    %741 = arith.addf %735, %740 : vector<16x16xf32>
    %c0_396 = arith.constant 0 : index
    %c6_397 = arith.constant 6 : index
    %c6_398 = arith.constant 6 : index
    %742 = vector.load %arg17[%c0_396, %c6_397, %c6_398] : memref<2x22x22xf32, #tpu.memory_space<vmem>>, vector<1x16x16xf32>
    %743 = vector.shape_cast %742 : vector<1x16x16xf32> to vector<16x16xf32>
    %744 = vector.extract_strided_slice %164 {offsets = [48, 0], sizes = [1, 16], strides = [1, 1]} : vector<99x16xf32> to vector<1x16xf32>
    %745 = vector.broadcast %744 : vector<1x16xf32> to vector<16x16xf32>
    %746 = arith.mulf %743, %745 : vector<16x16xf32>
    %747 = arith.addf %741, %746 : vector<16x16xf32>
    %c1_399 = arith.constant 1 : index
    %c6_400 = arith.constant 6 : index
    %c6_401 = arith.constant 6 : index
    %748 = vector.load %arg17[%c1_399, %c6_400, %c6_401] : memref<2x22x22xf32, #tpu.memory_space<vmem>>, vector<1x16x16xf32>
    %749 = vector.shape_cast %748 : vector<1x16x16xf32> to vector<16x16xf32>
    %750 = vector.extract_strided_slice %164 {offsets = [97, 0], sizes = [1, 16], strides = [1, 1]} : vector<99x16xf32> to vector<1x16xf32>
    %751 = vector.broadcast %750 : vector<1x16xf32> to vector<16x16xf32>
    %752 = arith.mulf %749, %751 : vector<16x16xf32>
    %753 = arith.addf %747, %752 : vector<16x16xf32>
    %754 = vector.extract_strided_slice %164 {offsets = [98, 0], sizes = [1, 16], strides = [1, 1]} : vector<99x16xf32> to vector<1x16xf32>
    %755 = vector.broadcast %754 : vector<1x16xf32> to vector<16x16xf32>
    %756 = arith.addf %753, %755 : vector<16x16xf32>
    %757 = vector.extract_strided_slice %756 {offsets = [0, 0], sizes = [1, 16], strides = [1, 1]} : vector<16x16xf32> to vector<1x16xf32>
    %758 = vector.extract_strided_slice %756 {offsets = [1, 0], sizes = [1, 16], strides = [1, 1]} : vector<16x16xf32> to vector<1x16xf32>
    %759 = vector.extract_strided_slice %756 {offsets = [2, 0], sizes = [1, 16], strides = [1, 1]} : vector<16x16xf32> to vector<1x16xf32>
    %760 = vector.extract_strided_slice %756 {offsets = [3, 0], sizes = [1, 16], strides = [1, 1]} : vector<16x16xf32> to vector<1x16xf32>
    %761 = vector.extract_strided_slice %756 {offsets = [4, 0], sizes = [1, 16], strides = [1, 1]} : vector<16x16xf32> to vector<1x16xf32>
    %762 = vector.extract_strided_slice %756 {offsets = [5, 0], sizes = [1, 16], strides = [1, 1]} : vector<16x16xf32> to vector<1x16xf32>
    %763 = vector.extract_strided_slice %756 {offsets = [6, 0], sizes = [1, 16], strides = [1, 1]} : vector<16x16xf32> to vector<1x16xf32>
    %764 = vector.extract_strided_slice %756 {offsets = [7, 0], sizes = [1, 16], strides = [1, 1]} : vector<16x16xf32> to vector<1x16xf32>
    %765 = vector.extract_strided_slice %756 {offsets = [8, 0], sizes = [1, 16], strides = [1, 1]} : vector<16x16xf32> to vector<1x16xf32>
    %766 = vector.extract_strided_slice %756 {offsets = [9, 0], sizes = [1, 16], strides = [1, 1]} : vector<16x16xf32> to vector<1x16xf32>
    %767 = vector.extract_strided_slice %756 {offsets = [10, 0], sizes = [1, 16], strides = [1, 1]} : vector<16x16xf32> to vector<1x16xf32>
    %768 = vector.extract_strided_slice %756 {offsets = [11, 0], sizes = [1, 16], strides = [1, 1]} : vector<16x16xf32> to vector<1x16xf32>
    %769 = vector.extract_strided_slice %756 {offsets = [12, 0], sizes = [1, 16], strides = [1, 1]} : vector<16x16xf32> to vector<1x16xf32>
    %770 = vector.extract_strided_slice %756 {offsets = [13, 0], sizes = [1, 16], strides = [1, 1]} : vector<16x16xf32> to vector<1x16xf32>
    %771 = vector.extract_strided_slice %756 {offsets = [14, 0], sizes = [1, 16], strides = [1, 1]} : vector<16x16xf32> to vector<1x16xf32>
    %772 = vector.extract_strided_slice %756 {offsets = [15, 0], sizes = [1, 16], strides = [1, 1]} : vector<16x16xf32> to vector<1x16xf32>
    %773 = tpu.concatenate %757, %758, %759, %760, %761, %762, %763, %764, %765, %766, %767, %768, %769, %770, %771, %772 in 1 : vector<1x16xf32>, vector<1x16xf32>, vector<1x16xf32>, vector<1x16xf32>, vector<1x16xf32>, vector<1x16xf32>, vector<1x16xf32>, vector<1x16xf32>, vector<1x16xf32>, vector<1x16xf32>, vector<1x16xf32>, vector<1x16xf32>, vector<1x16xf32>, vector<1x16xf32>, vector<1x16xf32>, vector<1x16xf32> -> vector<1x256xf32>
    %774 = arith.negf %773 : vector<1x256xf32>
    %775 = math.exp %774 : vector<1x256xf32>
    %cst_402 = arith.constant 1.000000e+00 : f32
    %776 = vector.broadcast %cst_402 : f32 to vector<1x256xf32>
    %777 = arith.addf %776, %775 : vector<1x256xf32>
    %778 = arith.divf %776, %777 : vector<1x256xf32>
    %779 = vector.broadcast %778 : vector<1x256xf32> to vector<32x256xf32>
    %780 = arith.mulf %117, %779 : vector<32x256xf32>
    %c0_403 = arith.constant 0 : index
    %c0_404 = arith.constant 0 : index
    %c0_405 = arith.constant 0 : index
    %781 = vector.load %arg13[%c0_403, %c0_404, %c0_405] : memref<1x32x256xf32, #tpu.memory_space<vmem>>, vector<1x32x256xf32>
    %782 = vector.shape_cast %781 : vector<1x32x256xf32> to vector<32x256xf32>
    %783 = vector.shape_cast %780 : vector<32x256xf32> to vector<1x32x256xf32>
    tpu.vector_store %arg13[%c0_403, %c0_404, %c0_405], %783 {strides = array<i32>} : memref<1x32x256xf32, #tpu.memory_space<vmem>>, vector<1x32x256xf32>,
    return
  }
  func.func @transform_0(%arg0: i32) -> (i32, i32, i32, i32) {
    %c0_i32 = arith.constant 0 : i32
    %c0_i32_0 = arith.constant 0 : i32
    %c0_i32_1 = arith.constant 0 : i32
    %c0_i32_2 = arith.constant 0 : i32
    return %arg0, %c0_i32, %c0_i32_0, %c0_i32_1 : i32, i32, i32, i32
  }
  func.func @transform_1(%arg0: i32) -> (i32, i32) {
    %c0_i32 = arith.constant 0 : i32
    %c0_i32_0 = arith.constant 0 : i32
    %c0_i32_1 = arith.constant 0 : i32
    return %c0_i32, %c0_i32_0 : i32, i32
  }
  func.func @transform_2(%arg0: i32) -> (i32, i32) {
    %c0_i32 = arith.constant 0 : i32
    %c0_i32_0 = arith.constant 0 : i32
    %c0_i32_1 = arith.constant 0 : i32
    return %c0_i32, %c0_i32_0 : i32, i32
  }
  func.func @transform_3(%arg0: i32) -> (i32, i32) {
    %c0_i32 = arith.constant 0 : i32
    %c0_i32_0 = arith.constant 0 : i32
    %c0_i32_1 = arith.constant 0 : i32
    return %c0_i32, %c0_i32_0 : i32, i32
  }
  func.func @transform_4(%arg0: i32) -> (i32, i32) {
    %c0_i32 = arith.constant 0 : i32
    %c0_i32_0 = arith.constant 0 : i32
    %c0_i32_1 = arith.constant 0 : i32
    return %c0_i32, %c0_i32_0 : i32, i32
  }
  func.func @transform_5(%arg0: i32) -> (i32, i32) {
    %c0_i32 = arith.constant 0 : i32
    %c0_i32_0 = arith.constant 0 : i32
    %c0_i32_1 = arith.constant 0 : i32
    return %c0_i32, %c0_i32_0 : i32, i32
  }
  func.func @transform_6(%arg0: i32) -> (i32, i32) {
    %c0_i32 = arith.constant 0 : i32
    %c0_i32_0 = arith.constant 0 : i32
    %c0_i32_1 = arith.constant 0 : i32
    return %c0_i32, %c0_i32_0 : i32, i32
  }
  func.func @transform_7(%arg0: i32) -> (i32, i32) {
    %c0_i32 = arith.constant 0 : i32
    %c0_i32_0 = arith.constant 0 : i32
    %c0_i32_1 = arith.constant 0 : i32
    return %c0_i32, %c0_i32_0 : i32, i32
  }
  func.func @transform_8(%arg0: i32) -> (i32, i32) {
    %c0_i32 = arith.constant 0 : i32
    %c0_i32_0 = arith.constant 0 : i32
    %c0_i32_1 = arith.constant 0 : i32
    return %c0_i32, %c0_i32_0 : i32, i32
  }
  func.func @transform_9(%arg0: i32) -> (i32, i32) {
    %c0_i32 = arith.constant 0 : i32
    %c0_i32_0 = arith.constant 0 : i32
    %c0_i32_1 = arith.constant 0 : i32
    return %c0_i32, %c0_i32_0 : i32, i32
  }
  func.func @transform_10(%arg0: i32) -> (i32, i32) {
    %c0_i32 = arith.constant 0 : i32
    %c0_i32_0 = arith.constant 0 : i32
    %c0_i32_1 = arith.constant 0 : i32
    return %c0_i32, %c0_i32_0 : i32, i32
  }
  func.func @transform_11(%arg0: i32) -> (i32, i32) {
    %c0_i32 = arith.constant 0 : i32
    %c0_i32_0 = arith.constant 0 : i32
    %c0_i32_1 = arith.constant 0 : i32
    return %c0_i32, %c0_i32_0 : i32, i32
  }
  func.func @transform_12(%arg0: i32) -> (i32, i32, i32) {
    %c0_i32 = arith.constant 0 : i32
    %c0_i32_0 = arith.constant 0 : i32
    %c0_i32_1 = arith.constant 0 : i32
    return %arg0, %c0_i32, %c0_i32_0 : i32, i32, i32
  }
}

</mosaic_0001>

<llo_original>
// kernel: _lambda_.1
$region0: #{_lambda_.1}
  #allocation0 [shape = 'u32[]', space=smem, size = 0x4, offset = 0x4, fixed_abs, tag = 'smem constant byte address 0x4 - core index']
  #allocation1 [shape = 'u32[144,128]{1,0:T(1,128)}', space=vmem, size = 0x12000, scoped, tag = 'internal scratch']
  #allocation2 [shape = 'f32[18,25,8]{2,1,0:T(8,128)}', space=vmem, size = 0x48000, scoped, tag = 'scratch operand']
  #allocation3 [shape = 'f32[256,72]{1,0:T(8,128)}', space=vmem, size = 0x20000, scoped, tag = 'scratch operand']
  #allocation4 [shape = 'f32[256,32]{1,0:T(8,128)}', space=vmem, size = 0x20000, scoped, tag = 'scratch operand']
  #allocation5 [shape = 'f32[2,22,22]{2,1,0:T(8,128)}', space=vmem, size = 0x6000, scoped, tag = 'scratch operand']
  %s0 = inlined_call_operand.hbm [shape: f32[2,16,16,4], index: 0, kind: input, shape index: {}]
  %s1 = inlined_call_operand.hbm [shape: f32[4,16], index: 1, kind: input, shape index: {}]
  %s2 = inlined_call_operand.hbm [shape: f32[1,16], index: 2, kind: input, shape index: {}]
  %s3 = inlined_call_operand.hbm [shape: f32[4,8], index: 3, kind: input, shape index: {}]
  %s4 = inlined_call_operand.hbm [shape: f32[1,8], index: 4, kind: input, shape index: {}]
  %s5 = inlined_call_operand.hbm [shape: f32[72,16], index: 5, kind: input, shape index: {}]
  %s6 = inlined_call_operand.hbm [shape: f32[1,16], index: 6, kind: input, shape index: {}]
  %s7 = inlined_call_operand.hbm [shape: f32[32,2], index: 7, kind: input, shape index: {}]
  %s8 = inlined_call_operand.hbm [shape: f32[1,2], index: 8, kind: input, shape index: {}]
  %s9 = inlined_call_operand.hbm [shape: f32[2,32], index: 9, kind: input, shape index: {}]
  %s10 = inlined_call_operand.hbm [shape: f32[1,32], index: 10, kind: input, shape index: {}]
  %s11 = inlined_call_operand.hbm [shape: f32[99,16], index: 11, kind: input, shape index: {}]
  %s12 = inlined_call_operand.hbm [shape: f32[2,32,256], index: 12, kind: output, shape index: {}]
  %s13 = sld [smem:[#allocation0]]
  $region129: #{_lambda_.1} parent=0
    _
  %s15 = ssub.s32 1, %s13
  %s16 = scalar_select 0, %s15, %s13
  $region1: #{_lambda_.1} parent=0
    #allocation6 [shape = 'u8[262144]{0}', space=vmem, size = 0x40000, scoped, tag = 'input window, operand 0']
    #allocation7 [shape = 's32[2]{0}', space=sflag, size = 0x8, scoped, tag = 'scoped memory for _lambda_.1']
    #allocation8 [shape = 's32[2]{0}', space=sflag, size = 0x8, scoped, tag = 'scoped memory for _lambda_.1']
    #allocation9 [shape = 'u8[2048]{0}', space=vmem, size = 0x800, scoped, tag = 'input window, operand 1, single buffered']
    #allocation10 [shape = 's32[1]{0}', space=sflag, size = 0x4, scoped, tag = 'scoped memory for _lambda_.1']
    #allocation11 [shape = 'u8[512]{0}', space=vmem, size = 0x400, scoped, tag = 'input window, operand 2, single buffered']
    #allocation12 [shape = 'u8[2048]{0}', space=vmem, size = 0x800, scoped, tag = 'input window, operand 3, single buffered']
    #allocation13 [shape = 's32[1]{0}', space=sflag, size = 0x4, scoped, tag = 'scoped memory for _lambda_.1']
    #allocation14 [shape = 'u8[512]{0}', space=vmem, size = 0x400, scoped, tag = 'input window, operand 4, single buffered']
    #allocation15 [shape = 'u8[36864]{0}', space=vmem, size = 0x9000, scoped, tag = 'input window, operand 5, single buffered']
    #allocation16 [shape = 's32[1]{0}', space=sflag, size = 0x4, scoped, tag = 'scoped memory for _lambda_.1']
    #allocation17 [shape = 'u8[512]{0}', space=vmem, size = 0x400, scoped, tag = 'input window, operand 6, single buffered']
    #allocation18 [shape = 'u8[16384]{0}', space=vmem, size = 0x4000, scoped, tag = 'input window, operand 7, single buffered']
    #allocation19 [shape = 's32[1]{0}', space=sflag, size = 0x4, scoped, tag = 'scoped memory for _lambda_.1']
    #allocation20 [shape = 'u8[512]{0}', space=vmem, size = 0x400, scoped, tag = 'input window, operand 8, single buffered']
    #allocation21 [shape = 'u8[1024]{0}', space=vmem, size = 0x400, scoped, tag = 'input window, operand 9, single buffered']
    #allocation22 [shape = 's32[1]{0}', space=sflag, size = 0x4, scoped, tag = 'scoped memory for _lambda_.1']
    #allocation23 [shape = 'u8[512]{0}', space=vmem, size = 0x400, scoped, tag = 'input window, operand 10, single buffered']
    #allocation24 [shape = 'u8[53248]{0}', space=vmem, size = 0xd000, scoped, tag = 'input window, operand 11, single buffered']
    #allocation25 [shape = 's32[1]{0}', space=sflag, size = 0x4, scoped, tag = 'scoped memory for _lambda_.1']
    #allocation26 [shape = 'u8[65536]{0}', space=vmem, size = 0x10000, scoped, tag = 'output window, operand 0']
    %17 = vsyncpa [#allocation7], 0
    %s18 = scalar_lea.sflag [#allocation7], 1
    %19 = vsyncpa %s18, 0
    %20 = vsyncpa [#allocation10], 0
    %21 = vsyncpa [#allocation13], 0
    %22 = vsyncpa [#allocation16], 0
    %23 = vsyncpa [#allocation19], 0
    %24 = vsyncpa [#allocation22], 0
    %25 = vsyncpa [#allocation25], 0
    %26 = vsyncpa [#allocation8], 0
    %s27 = scalar_lea.sflag [#allocation8], 1
    %28 = vsyncpa %s27, 0
    loop: start=0, step=1, limit=4
    $region2: #{_lambda_.1} parent=1 // loop_pre_header
      _
    $region3: #{_lambda_.1} parent=1 // loop_header
      %s30 = sphi 0, %s34
      %p31 = scmp.ge.s32.totalorder %s30, 4
      %s40 = sphi 0, %s42
      %s43 = sphi 0, %s40
      %s44 = sphi 0, %s43
      %s60 = sphi 0, %s44
      %s64 = sphi 0, %s64
      %s66 = sphi 0, %s64
      %s67 = sphi 0, %s66
      %s81 = sphi 0, %s67
      %s85 = sphi 0, %s85
      %s87 = sphi 0, %s85
      %s88 = sphi 0, %s87
      %s102 = sphi 0, %s88
      %s106 = sphi 0, %s106
      %s108 = sphi 0, %s106
      %s109 = sphi 0, %s108
      %s123 = sphi 0, %s109
      %s127 = sphi 0, %s127
      %s129 = sphi 0, %s127
      %s130 = sphi 0, %s129
      %s144 = sphi 0, %s130
      %s148 = sphi 0, %s148
      %s150 = sphi 0, %s148
      %s151 = sphi 0, %s150
      %s165 = sphi 0, %s151
      %s169 = sphi 0, %s169
      %s171 = sphi 0, %s169
      %s172 = sphi 0, %s171
      %s186 = sphi 0, %s172
      %s190 = sphi 0, %s190
      %s192 = sphi 0, %s190
      %s193 = sphi 0, %s192
      %s207 = sphi 0, %s193
      %s211 = sphi 0, %s211
      %s213 = sphi 0, %s211
      %s214 = sphi 0, %s213
      %s228 = sphi 0, %s214
      %s232 = sphi 0, %s232
      %s234 = sphi 0, %s232
      %s235 = sphi 0, %s234
      %s249 = sphi 0, %s235
      %s253 = sphi 0, %s253
      %s255 = sphi 0, %s253
      %s256 = sphi 0, %s255
      %s270 = sphi 0, %s256
      %s274 = sphi 0, %s274
      %s276 = sphi 0, %s274
      %s277 = sphi 0, %s276
      %s291 = sphi 0, %s277
      %s297 = sphi 0, %s299
      %s300 = sphi 0, %s297
      %s301 = sphi 0, %s300
      %s317 = sphi 0, %s301
    $region4: #{_lambda_.1} parent=1 // loop_header_branch
      %33 = sbr.rel (%p31) target = $region8
    $region5: #{_lambda_.1} parent=1 // loop_body
      %s35 = ssub.s32 %s30, 1
      %s36 = ssub.s32 %s30, 2
      %s37 = sadd.s32 %s30, 1
      %s38 = ssub.s32 %s30, %s37
      %p39 = scmp.eq.s32.totalorder %s38, 0
      %s41 = sadd.s32 %s40, 1
      %s42 = scalar_select %p39, %s40, %s41
      %p45 = pneg %p39
      %p46 = scmp.eq.s32.totalorder %s30, 1
      %p47 = por %p45, %p46
      %p48 = scmp.ne.s32.totalorder %s40, %s43
      %p49 = scmp.eq.s32.totalorder %s30, 0
      %p50 = por %p48, %p49
      %p51 = scmp.ne.s32.totalorder %s40, %s43
      %p52 = scmp.eq.s32.totalorder %s35, 1
      %p53 = por %p51, %p52
      %p54 = scmp.ne.s32.totalorder %s43, %s44
      %p55 = scmp.eq.s32.totalorder %s35, 0
      %p56 = por %p54, %p55
      %p57 = scmp.ne.s32.totalorder %s43, %s44
      %p58 = scmp.eq.s32.totalorder %s36, 1
      %p59 = por %p57, %p58
      %p61 = scmp.ne.s32.totalorder %s44, %s60
      %p62 = scmp.eq.s32.totalorder %s36, 0
      %p63 = por %p61, %p62
      %s65 = sadd.s32 %s64, 1
      %p68 = scmp.eq.s32.totalorder %s30, 1
      %p69 = scmp.ne.s32.totalorder %s64, %s66
      %p70 = scmp.eq.s32.totalorder %s30, 0
      %p71 = por %p69, %p70
      %p72 = scmp.ne.s32.totalorder %s64, %s66
      %p73 = scmp.eq.s32.totalorder %s35, 1
      %p74 = por %p72, %p73
      %p75 = scmp.ne.s32.totalorder %s66, %s67
      %p76 = scmp.eq.s32.totalorder %s35, 0
      %p77 = por %p75, %p76
      %p78 = scmp.ne.s32.totalorder %s66, %s67
      %p79 = scmp.eq.s32.totalorder %s36, 1
      %p80 = por %p78, %p79
      %p82 = scmp.ne.s32.totalorder %s67, %s81
      %p83 = scmp.eq.s32.totalorder %s36, 0
      %p84 = por %p82, %p83
      %s86 = sadd.s32 %s85, 1
      %p89 = scmp.eq.s32.totalorder %s30, 1
      %p90 = scmp.ne.s32.totalorder %s85, %s87
      %p91 = scmp.eq.s32.totalorder %s30, 0
      %p92 = por %p90, %p91
      %p93 = scmp.ne.s32.totalorder %s85, %s87
      %p94 = scmp.eq.s32.totalorder %s35, 1
      %p95 = por %p93, %p94
      %p96 = scmp.ne.s32.totalorder %s87, %s88
      %p97 = scmp.eq.s32.totalorder %s35, 0
      %p98 = por %p96, %p97
      %p99 = scmp.ne.s32.totalorder %s87, %s88
      %p100 = scmp.eq.s32.totalorder %s36, 1
      %p101 = por %p99, %p100
      %p103 = scmp.ne.s32.totalorder %s88, %s102
      %p104 = scmp.eq.s32.totalorder %s36, 0
      %p105 = por %p103, %p104
      %s107 = sadd.s32 %s106, 1
      %p110 = scmp.eq.s32.totalorder %s30, 1
      %p111 = scmp.ne.s32.totalorder %s106, %s108
      %p112 = scmp.eq.s32.totalorder %s30, 0
      %p113 = por %p111, %p112
      %p114 = scmp.ne.s32.totalorder %s106, %s108
      %p115 = scmp.eq.s32.totalorder %s35, 1
      %p116 = por %p114, %p115
      %p117 = scmp.ne.s32.totalorder %s108, %s109
      %p118 = scmp.eq.s32.totalorder %s35, 0
      %p119 = por %p117, %p118
      %p120 = scmp.ne.s32.totalorder %s108, %s109
      %p121 = scmp.eq.s32.totalorder %s36, 1
      %p122 = por %p120, %p121
      %p124 = scmp.ne.s32.totalorder %s109, %s123
      %p125 = scmp.eq.s32.totalorder %s36, 0
      %p126 = por %p124, %p125
      %s128 = sadd.s32 %s127, 1
      %p131 = scmp.eq.s32.totalorder %s30, 1
      %p132 = scmp.ne.s32.totalorder %s127, %s129
      %p133 = scmp.eq.s32.totalorder %s30, 0
      %p134 = por %p132, %p133
      %p135 = scmp.ne.s32.totalorder %s127, %s129
      %p136 = scmp.eq.s32.totalorder %s35, 1
      %p137 = por %p135, %p136
      %p138 = scmp.ne.s32.totalorder %s129, %s130
      %p139 = scmp.eq.s32.totalorder %s35, 0
      %p140 = por %p138, %p139
      %p141 = scmp.ne.s32.totalorder %s129, %s130
      %p142 = scmp.eq.s32.totalorder %s36, 1
      %p143 = por %p141, %p142
      %p145 = scmp.ne.s32.totalorder %s130, %s144
      %p146 = scmp.eq.s32.totalorder %s36, 0
      %p147 = por %p145, %p146
      %s149 = sadd.s32 %s148, 1
      %p152 = scmp.eq.s32.totalorder %s30, 1
      %p153 = scmp.ne.s32.totalorder %s148, %s150
      %p154 = scmp.eq.s32.totalorder %s30, 0
      %p155 = por %p153, %p154
      %p156 = scmp.ne.s32.totalorder %s148, %s150
      %p157 = scmp.eq.s32.totalorder %s35, 1
      %p158 = por %p156, %p157
      %p159 = scmp.ne.s32.totalorder %s150, %s151
      %p160 = scmp.eq.s32.totalorder %s35, 0
      %p161 = por %p159, %p160
      %p162 = scmp.ne.s32.totalorder %s150, %s151
      %p163 = scmp.eq.s32.totalorder %s36, 1
      %p164 = por %p162, %p163
      %p166 = scmp.ne.s32.totalorder %s151, %s165
      %p167 = scmp.eq.s32.totalorder %s36, 0
      %p168 = por %p166, %p167
      %s170 = sadd.s32 %s169, 1
      %p173 = scmp.eq.s32.totalorder %s30, 1
      %p174 = scmp.ne.s32.totalorder %s169, %s171
      %p175 = scmp.eq.s32.totalorder %s30, 0
      %p176 = por %p174, %p175
      %p177 = scmp.ne.s32.totalorder %s169, %s171
      %p178 = scmp.eq.s32.totalorder %s35, 1
      %p179 = por %p177, %p178
      %p180 = scmp.ne.s32.totalorder %s171, %s172
      %p181 = scmp.eq.s32.totalorder %s35, 0
      %p182 = por %p180, %p181
      %p183 = scmp.ne.s32.totalorder %s171, %s172
      %p184 = scmp.eq.s32.totalorder %s36, 1
      %p185 = por %p183, %p184
      %p187 = scmp.ne.s32.totalorder %s172, %s186
      %p188 = scmp.eq.s32.totalorder %s36, 0
      %p189 = por %p187, %p188
      %s191 = sadd.s32 %s190, 1
      %p194 = scmp.eq.s32.totalorder %s30, 1
      %p195 = scmp.ne.s32.totalorder %s190, %s192
      %p196 = scmp.eq.s32.totalorder %s30, 0
      %p197 = por %p195, %p196
      %p198 = scmp.ne.s32.totalorder %s190, %s192
      %p199 = scmp.eq.s32.totalorder %s35, 1
      %p200 = por %p198, %p199
      %p201 = scmp.ne.s32.totalorder %s192, %s193
      %p202 = scmp.eq.s32.totalorder %s35, 0
      %p203 = por %p201, %p202
      %p204 = scmp.ne.s32.totalorder %s192, %s193
      %p205 = scmp.eq.s32.totalorder %s36, 1
      %p206 = por %p204, %p205
      %p208 = scmp.ne.s32.totalorder %s193, %s207
      %p209 = scmp.eq.s32.totalorder %s36, 0
      %p210 = por %p208, %p209
      %s212 = sadd.s32 %s211, 1
      %p215 = scmp.eq.s32.totalorder %s30, 1
      %p216 = scmp.ne.s32.totalorder %s211, %s213
      %p217 = scmp.eq.s32.totalorder %s30, 0
      %p218 = por %p216, %p217
      %p219 = scmp.ne.s32.totalorder %s211, %s213
      %p220 = scmp.eq.s32.totalorder %s35, 1
      %p221 = por %p219, %p220
      %p222 = scmp.ne.s32.totalorder %s213, %s214
      %p223 = scmp.eq.s32.totalorder %s35, 0
      %p224 = por %p222, %p223
      %p225 = scmp.ne.s32.totalorder %s213, %s214
      %p226 = scmp.eq.s32.totalorder %s36, 1
      %p227 = por %p225, %p226
      %p229 = scmp.ne.s32.totalorder %s214, %s228
      %p230 = scmp.eq.s32.totalorder %s36, 0
      %p231 = por %p229, %p230
      %s233 = sadd.s32 %s232, 1
      %p236 = scmp.eq.s32.totalorder %s30, 1
      %p237 = scmp.ne.s32.totalorder %s232, %s234
      %p238 = scmp.eq.s32.totalorder %s30, 0
      %p239 = por %p237, %p238
      %p240 = scmp.ne.s32.totalorder %s232, %s234
      %p241 = scmp.eq.s32.totalorder %s35, 1
      %p242 = por %p240, %p241
      %p243 = scmp.ne.s32.totalorder %s234, %s235
      %p244 = scmp.eq.s32.totalorder %s35, 0
      %p245 = por %p243, %p244
      %p246 = scmp.ne.s32.totalorder %s234, %s235
      %p247 = scmp.eq.s32.totalorder %s36, 1
      %p248 = por %p246, %p247
      %p250 = scmp.ne.s32.totalorder %s235, %s249
      %p251 = scmp.eq.s32.totalorder %s36, 0
      %p252 = por %p250, %p251
      %s254 = sadd.s32 %s253, 1
      %p257 = scmp.eq.s32.totalorder %s30, 1
      %p258 = scmp.ne.s32.totalorder %s253, %s255
      %p259 = scmp.eq.s32.totalorder %s30, 0
      %p260 = por %p258, %p259
      %p261 = scmp.ne.s32.totalorder %s253, %s255
      %p262 = scmp.eq.s32.totalorder %s35, 1
      %p263 = por %p261, %p262
      %p264 = scmp.ne.s32.totalorder %s255, %s256
      %p265 = scmp.eq.s32.totalorder %s35, 0
      %p266 = por %p264, %p265
      %p267 = scmp.ne.s32.totalorder %s255, %s256
      %p268 = scmp.eq.s32.totalorder %s36, 1
      %p269 = por %p267, %p268
      %p271 = scmp.ne.s32.totalorder %s256, %s270
      %p272 = scmp.eq.s32.totalorder %s36, 0
      %p273 = por %p271, %p272
      %s275 = sadd.s32 %s274, 1
      %p278 = scmp.eq.s32.totalorder %s30, 1
      %p279 = scmp.ne.s32.totalorder %s274, %s276
      %p280 = scmp.eq.s32.totalorder %s30, 0
      %p281 = por %p279, %p280
      %p282 = scmp.ne.s32.totalorder %s274, %s276
      %p283 = scmp.eq.s32.totalorder %s35, 1
      %p284 = por %p282, %p283
      %p285 = scmp.ne.s32.totalorder %s276, %s277
      %p286 = scmp.eq.s32.totalorder %s35, 0
      %p287 = por %p285, %p286
      %p288 = scmp.ne.s32.totalorder %s276, %s277
      %p289 = scmp.eq.s32.totalorder %s36, 1
      %p290 = por %p288, %p289
      %p292 = scmp.ne.s32.totalorder %s277, %s291
      %p293 = scmp.eq.s32.totalorder %s36, 0
      %p294 = por %p292, %p293
      %s295 = ssub.s32 %s30, %s37
      %p296 = scmp.eq.s32.totalorder %s295, 0
      %s298 = sadd.s32 %s297, 1
      %s299 = scalar_select %p296, %s297, %s298
      %p302 = pneg %p296
      %p303 = scmp.eq.s32.totalorder %s30, 1
      %p304 = por %p302, %p303
      %p305 = scmp.ne.s32.totalorder %s297, %s300
      %p306 = scmp.eq.s32.totalorder %s30, 0
      %p307 = por %p305, %p306
      %p308 = scmp.ne.s32.totalorder %s297, %s300
      %p309 = scmp.eq.s32.totalorder %s35, 1
      %p310 = por %p308, %p309
      %p311 = scmp.ne.s32.totalorder %s300, %s301
      %p312 = scmp.eq.s32.totalorder %s35, 0
      %p313 = por %p311, %p312
      %p314 = scmp.ne.s32.totalorder %s300, %s301
      %p315 = scmp.eq.s32.totalorder %s36, 1
      %p316 = por %p314, %p315
      %p318 = scmp.ne.s32.totalorder %s301, %s317
      %p319 = scmp.eq.s32.totalorder %s36, 0
      %p320 = por %p318, %p319
      %p321 = scmp.le.s32.totalorder 1, %s30
      %p322 = scmp.lt.s32.totalorder %s30, 3
      %p323 = pnand %p321, %p322
      %p324 = pneg %p323
      // Predicated region
      $region9: #{_lambda_.1} parent=5 // pred_check
        _
      $region10: #{_lambda_.1} parent=5 // pred_check_branch
        %326 = sbr.rel (%p323) target = $region12
      $region11: #{_lambda_.1} parent=5 // pred_region
        %s327 = ssub.s32 %s30, 1
        // Predicated region
        $region13: #{_lambda_.1} parent=11 // pred_check
          %p328 = pneg %p77
        $region14: #{_lambda_.1} parent=11 // pred_check_branch
          %330 = sbr.rel (%p328) target = $region16
        $region15: #{_lambda_.1} parent=11 // pred_region
          %s332 = ssub.s32 64, 64
          %333 = vsyncadd [#allocation10], %s332
          %s335 = sshll.u32 [#allocation9], 4
          %s336 = int_to_ptr.vmem [resolvable:$true] %s335
          %338 = dma.hbm_to_vmem [thread:$0]  %s1, 64, %s336, [#allocation10]
        $region16: #{_lambda_.1} parent=11 // pred_fallthru
          _
        // Predicated region
        $region17: #{_lambda_.1} parent=11 // pred_check
          %p339 = pneg %p98
        $region18: #{_lambda_.1} parent=11 // pred_check_branch
          %341 = sbr.rel (%p339) target = $region20
        $region19: #{_lambda_.1} parent=11 // pred_region
          %s343 = ssub.s32 16, 16
          %344 = vsyncadd [#allocation10], %s343
          %s346 = sshll.u32 [#allocation11], 4
          %s347 = int_to_ptr.vmem [resolvable:$true] %s346
          %349 = dma.hbm_to_vmem [thread:$0]  %s2, 16, %s347, [#allocation10]
        $region20: #{_lambda_.1} parent=11 // pred_fallthru
          _
        // Predicated region
        $region21: #{_lambda_.1} parent=11 // pred_check
          %p350 = pneg %p119
        $region22: #{_lambda_.1} parent=11 // pred_check_branch
          %352 = sbr.rel (%p350) target = $region24
        $region23: #{_lambda_.1} parent=11 // pred_region
          %s354 = ssub.s32 64, 64
          %355 = vsyncadd [#allocation13], %s354
          %s357 = sshll.u32 [#allocation12], 4
          %s358 = int_to_ptr.vmem [resolvable:$true] %s357
          %360 = dma.hbm_to_vmem [thread:$0]  %s3, 64, %s358, [#allocation13]
        $region24: #{_lambda_.1} parent=11 // pred_fallthru
          _
        // Predicated region
        $region25: #{_lambda_.1} parent=11 // pred_check
          %p361 = pneg %p140
        $region26: #{_lambda_.1} parent=11 // pred_check_branch
          %363 = sbr.rel (%p361) target = $region28
        $region27: #{_lambda_.1} parent=11 // pred_region
          %s365 = ssub.s32 16, 16
          %366 = vsyncadd [#allocation13], %s365
          %s368 = sshll.u32 [#allocation14], 4
          %s369 = int_to_ptr.vmem [resolvable:$true] %s368
          %371 = dma.hbm_to_vmem [thread:$0]  %s4, 16, %s369, [#allocation13]
        $region28: #{_lambda_.1} parent=11 // pred_fallthru
          _
        // Predicated region
        $region29: #{_lambda_.1} parent=11 // pred_check
          %p372 = pneg %p161
        $region30: #{_lambda_.1} parent=11 // pred_check_branch
          %374 = sbr.rel (%p372) target = $region32
        $region31: #{_lambda_.1} parent=11 // pred_region
          %s376 = ssub.s32 1152, 1152
          %377 = vsyncadd [#allocation16], %s376
          %s378 = sshll.u32 [#allocation15], 4
          %s379 = int_to_ptr.vmem [resolvable:$true] %s378
          %384 = dma.hbm_to_vmem [thread:$0]  %s5, 1152, %s379, [#allocation16], 128, 128, 8
        $region32: #{_lambda_.1} parent=11 // pred_fallthru
          _
        // Predicated region
        $region33: #{_lambda_.1} parent=11 // pred_check
          %p385 = pneg %p182
        $region34: #{_lambda_.1} parent=11 // pred_check_branch
          %387 = sbr.rel (%p385) target = $region36
        $region35: #{_lambda_.1} parent=11 // pred_region
          %s389 = ssub.s32 16, 16
          %390 = vsyncadd [#allocation16], %s389
          %s392 = sshll.u32 [#allocation17], 4
          %s393 = int_to_ptr.vmem [resolvable:$true] %s392
          %395 = dma.hbm_to_vmem [thread:$0]  %s6, 16, %s393, [#allocation16]
        $region36: #{_lambda_.1} parent=11 // pred_fallthru
          _
        // Predicated region
        $region37: #{_lambda_.1} parent=11 // pred_check
          %p396 = pneg %p203
        $region38: #{_lambda_.1} parent=11 // pred_check_branch
          %398 = sbr.rel (%p396) target = $region40
        $region39: #{_lambda_.1} parent=11 // pred_region
          %s400 = ssub.s32 512, 512
          %401 = vsyncadd [#allocation19], %s400
          %s402 = sshll.u32 [#allocation18], 4
          %s403 = int_to_ptr.vmem [resolvable:$true] %s402
          %408 = dma.hbm_to_vmem [thread:$0]  %s7, 512, %s403, [#allocation19], 128, 128, 8
        $region40: #{_lambda_.1} parent=11 // pred_fallthru
          _
        // Predicated region
        $region41: #{_lambda_.1} parent=11 // pred_check
          %p409 = pneg %p224
        $region42: #{_lambda_.1} parent=11 // pred_check_branch
          %411 = sbr.rel (%p409) target = $region44
        $region43: #{_lambda_.1} parent=11 // pred_region
          %s413 = ssub.s32 16, 16
          %414 = vsyncadd [#allocation19], %s413
          %s416 = sshll.u32 [#allocation20], 4
          %s417 = int_to_ptr.vmem [resolvable:$true] %s416
          %419 = dma.hbm_to_vmem [thread:$0]  %s8, 16, %s417, [#allocation19]
        $region44: #{_lambda_.1} parent=11 // pred_fallthru
          _
        // Predicated region
        $region45: #{_lambda_.1} parent=11 // pred_check
          %p420 = pneg %p245
        $region46: #{_lambda_.1} parent=11 // pred_check_branch
          %422 = sbr.rel (%p420) target = $region48
        $region47: #{_lambda_.1} parent=11 // pred_region
          %s424 = ssub.s32 32, 32
          %425 = vsyncadd [#allocation22], %s424
          %s427 = sshll.u32 [#allocation21], 4
          %s428 = int_to_ptr.vmem [resolvable:$true] %s427
          %430 = dma.hbm_to_vmem [thread:$0]  %s9, 32, %s428, [#allocation22]
        $region48: #{_lambda_.1} parent=11 // pred_fallthru
          _
        // Predicated region
        $region49: #{_lambda_.1} parent=11 // pred_check
          %p431 = pneg %p266
        $region50: #{_lambda_.1} parent=11 // pred_check_branch
          %433 = sbr.rel (%p431) target = $region52
        $region51: #{_lambda_.1} parent=11 // pred_region
          %s435 = ssub.s32 16, 16
          %436 = vsyncadd [#allocation22], %s435
          %s438 = sshll.u32 [#allocation23], 4
          %s439 = int_to_ptr.vmem [resolvable:$true] %s438
          %441 = dma.hbm_to_vmem [thread:$0]  %s10, 16, %s439, [#allocation22]
        $region52: #{_lambda_.1} parent=11 // pred_fallthru
          _
        // Predicated region
        $region53: #{_lambda_.1} parent=11 // pred_check
          %p442 = pneg %p287
        $region54: #{_lambda_.1} parent=11 // pred_check_branch
          %444 = sbr.rel (%p442) target = $region56
        $region55: #{_lambda_.1} parent=11 // pred_region
          %s446 = ssub.s32 1664, 1664
          %447 = vsyncadd [#allocation25], %s446
          %s448 = sshll.u32 [#allocation24], 4
          %s449 = int_to_ptr.vmem [resolvable:$true] %s448
          %454 = dma.hbm_to_vmem [thread:$0]  %s11, 1664, %s449, [#allocation25], 128, 128, 8
        $region56: #{_lambda_.1} parent=11 // pred_fallthru
          _
      $region12: #{_lambda_.1} parent=5 // pred_fallthru
        _
      %p455 = scmp.lt.s32.totalorder %s30, 2
      // Predicated region
      $region57: #{_lambda_.1} parent=5 // pred_check
        %p456 = pneg %p455
      $region58: #{_lambda_.1} parent=5 // pred_check_branch
        %458 = sbr.rel (%p456) target = $region60
      $region59: #{_lambda_.1} parent=5 // pred_region
        // Predicated region
        $region61: #{_lambda_.1} parent=59 // pred_check
          %p459 = pneg %p50
        $region62: #{_lambda_.1} parent=59 // pred_check_branch
          %461 = sbr.rel (%p459) target = $region64
        $region63: #{_lambda_.1} parent=59 // pred_region
          %s462 = sand.u32 %s40, 1
          %s463 = scalar_lea.sflag [#allocation7], %s462
          %s464 = sand.u32 %s40, 1
          %s465 = smul.addr %s464, 256
          %s466 = scalar_lea.vmem [#allocation6], %s465
          %s468 = ssub.s32 4096, 4096
          %469 = vsyncadd %s463, %s468
          %s470 = smul.addr %s30, 32
          %s471 = smul.addr %s470, 128
          %s472 = scalar_lea.hbm %s0, %s471
          %s473 = sshll.u32 %s466, 4
          %s474 = int_to_ptr.vmem [resolvable:$true] %s473
          %479 = dma.hbm_to_vmem [thread:$0]  %s472, 4096, %s474, %s463, 128, 128, 8
        $region64: #{_lambda_.1} parent=59 // pred_fallthru
          _
      $region60: #{_lambda_.1} parent=5 // pred_fallthru
        _
      %p480 = scmp.le.s32.totalorder 1, %s30
      %p481 = scmp.lt.s32.totalorder %s30, 3
      %p482 = pnand %p480, %p481
      %p483 = pneg %p482
      // Predicated region
      $region65: #{_lambda_.1} parent=5 // pred_check
        _
      $region66: #{_lambda_.1} parent=5 // pred_check_branch
        %485 = sbr.rel (%p482) target = $region68
      $region67: #{_lambda_.1} parent=5 // pred_region
        %s486 = ssub.s32 %s30, 1
        %s487 = sand.u32 %s43, 1
        %s488 = scalar_lea.sflag [#allocation7], %s487
        %s489 = sand.u32 %s43, 1
        %s490 = smul.addr %s489, 256
        %s491 = scalar_lea.vmem [#allocation6], %s490
        // Predicated region
        $region69: #{_lambda_.1} parent=67 // pred_check
          %p492 = pneg %p56
        $region70: #{_lambda_.1} parent=67 // pred_check_branch
          %494 = sbr.rel (%p492) target = $region72
        $region71: #{_lambda_.1} parent=67 // pred_region
          %495 = dma.done %s488, 4096
        $region72: #{_lambda_.1} parent=67 // pred_fallthru
          _
        // Predicated region
        $region73: #{_lambda_.1} parent=67 // pred_check
          %p496 = pneg %p77
        $region74: #{_lambda_.1} parent=67 // pred_check_branch
          %498 = sbr.rel (%p496) target = $region76
        $region75: #{_lambda_.1} parent=67 // pred_region
          %499 = dma.done [#allocation10], 64
        $region76: #{_lambda_.1} parent=67 // pred_fallthru
          _
        // Predicated region
        $region77: #{_lambda_.1} parent=67 // pred_check
          %p500 = pneg %p98
        $region78: #{_lambda_.1} parent=67 // pred_check_branch
          %502 = sbr.rel (%p500) target = $region80
        $region79: #{_lambda_.1} parent=67 // pred_region
          %503 = dma.done [#allocation10], 16
        $region80: #{_lambda_.1} parent=67 // pred_fallthru
          _
        // Predicated region
        $region81: #{_lambda_.1} parent=67 // pred_check
          %p504 = pneg %p119
        $region82: #{_lambda_.1} parent=67 // pred_check_branch
          %506 = sbr.rel (%p504) target = $region84
        $region83: #{_lambda_.1} parent=67 // pred_region
          %507 = dma.done [#allocation13], 64
        $region84: #{_lambda_.1} parent=67 // pred_fallthru
          _
        // Predicated region
        $region85: #{_lambda_.1} parent=67 // pred_check
          %p508 = pneg %p140
        $region86: #{_lambda_.1} parent=67 // pred_check_branch
          %510 = sbr.rel (%p508) target = $region88
        $region87: #{_lambda_.1} parent=67 // pred_region
          %511 = dma.done [#allocation13], 16
        $region88: #{_lambda_.1} parent=67 // pred_fallthru
          _
        // Predicated region
        $region89: #{_lambda_.1} parent=67 // pred_check
          %p512 = pneg %p161
        $region90: #{_lambda_.1} parent=67 // pred_check_branch
          %514 = sbr.rel (%p512) target = $region92
        $region91: #{_lambda_.1} parent=67 // pred_region
          %515 = dma.done [#allocation16], 1152
        $region92: #{_lambda_.1} parent=67 // pred_fallthru
          _
        // Predicated region
        $region93: #{_lambda_.1} parent=67 // pred_check
          %p516 = pneg %p182
        $region94: #{_lambda_.1} parent=67 // pred_check_branch
          %518 = sbr.rel (%p516) target = $region96
        $region95: #{_lambda_.1} parent=67 // pred_region
          %519 = dma.done [#allocation16], 16
        $region96: #{_lambda_.1} parent=67 // pred_fallthru
          _
        // Predicated region
        $region97: #{_lambda_.1} parent=67 // pred_check
          %p520 = pneg %p203
        $region98: #{_lambda_.1} parent=67 // pred_check_branch
          %522 = sbr.rel (%p520) target = $region100
        $region99: #{_lambda_.1} parent=67 // pred_region
          %523 = dma.done [#allocation19], 512
        $region100: #{_lambda_.1} parent=67 // pred_fallthru
          _
        // Predicated region
        $region101: #{_lambda_.1} parent=67 // pred_check
          %p524 = pneg %p224
        $region102: #{_lambda_.1} parent=67 // pred_check_branch
          %526 = sbr.rel (%p524) target = $region104
        $region103: #{_lambda_.1} parent=67 // pred_region
          %527 = dma.done [#allocation19], 16
        $region104: #{_lambda_.1} parent=67 // pred_fallthru
          _
        // Predicated region
        $region105: #{_lambda_.1} parent=67 // pred_check
          %p528 = pneg %p245
        $region106: #{_lambda_.1} parent=67 // pred_check_branch
          %530 = sbr.rel (%p528) target = $region108
        $region107: #{_lambda_.1} parent=67 // pred_region
          %531 = dma.done [#allocation22], 32
        $region108: #{_lambda_.1} parent=67 // pred_fallthru
          _
        // Predicated region
        $region109: #{_lambda_.1} parent=67 // pred_check
          %p532 = pneg %p266
        $region110: #{_lambda_.1} parent=67 // pred_check_branch
          %534 = sbr.rel (%p532) target = $region112
        $region111: #{_lambda_.1} parent=67 // pred_region
          %535 = dma.done [#allocation22], 16
        $region112: #{_lambda_.1} parent=67 // pred_fallthru
          _
        // Predicated region
        $region113: #{_lambda_.1} parent=67 // pred_check
          %p536 = pneg %p287
        $region114: #{_lambda_.1} parent=67 // pred_check_branch
          %538 = sbr.rel (%p536) target = $region116
        $region115: #{_lambda_.1} parent=67 // pred_region
          %539 = dma.done [#allocation25], 1664
        $region116: #{_lambda_.1} parent=67 // pred_fallthru
          _
        %s540 = sand.u32 %s43, 1
        %s541 = scalar_lea.sflag [#allocation7], %s540
        %s542 = sand.u32 %s43, 1
        %s543 = smul.addr %s542, 256
        %s544 = scalar_lea.vmem [#allocation6], %s543
        %p545 = pneg %p56
        %p546 = pneg %p53
        %p547 = pneg %p77
        %p548 = pneg %p74
        %p549 = pneg %p98
        %p550 = pneg %p95
        %p551 = pneg %p119
        %p552 = pneg %p116
        %p553 = pneg %p140
        %p554 = pneg %p137
        %p555 = pneg %p161
        %p556 = pneg %p158
        %p557 = pneg %p182
        %p558 = pneg %p179
        %p559 = pneg %p203
        %p560 = pneg %p200
        %p561 = pneg %p224
        %p562 = pneg %p221
        %p563 = pneg %p245
        %p564 = pneg %p242
        %p565 = pneg %p266
        %p566 = pneg %p263
        %p567 = pneg %p287
        %p568 = pneg %p284
        %p569 = pneg %p313
        %p570 = pneg %p310
        %s571 = sand.u32 %s300, 1
        %s572 = scalar_lea.sflag [#allocation8], %s571
        %s573 = sand.u32 %s300, 1
        %s574 = smul.addr %s573, 64
        %s575 = scalar_lea.vmem [#allocation26], %s574
        %v576 = vld [vmem:[%s491] sm:$0xff]
        %v577 = vld [vmem:[%s491 + $0x8] sm:$0xff]
        %v578 = vld [vmem:[%s491 + $0x10] sm:$0xff]
        %v579 = vld [vmem:[%s491 + $0x18] sm:$0xff]
        %v580 = vld [vmem:[%s491 + $0x20] sm:$0xff]
        %v581 = vld [vmem:[%s491 + $0x28] sm:$0xff]
        %v582 = vld [vmem:[%s491 + $0x30] sm:$0xff]
        %v583 = vld [vmem:[%s491 + $0x38] sm:$0xff]
        %v584 = vld [vmem:[%s491 + $0x40] sm:$0xff]
        %v585 = vld [vmem:[%s491 + $0x48] sm:$0xff]
        %v586 = vld [vmem:[%s491 + $0x50] sm:$0xff]
        %v587 = vld [vmem:[%s491 + $0x58] sm:$0xff]
        %v588 = vld [vmem:[%s491 + $0x60] sm:$0xff]
        %v589 = vld [vmem:[%s491 + $0x68] sm:$0xff]
        %v590 = vld [vmem:[%s491 + $0x70] sm:$0xff]
        %v591 = vld [vmem:[%s491 + $0x78] sm:$0xff]
        %v592 = vld [vmem:[%s491 + $0x80] sm:$0xff]
        %v593 = vld [vmem:[%s491 + $0x88] sm:$0xff]
        %v594 = vld [vmem:[%s491 + $0x90] sm:$0xff]
        %v595 = vld [vmem:[%s491 + $0x98] sm:$0xff]
        %v596 = vld [vmem:[%s491 + $0xa0] sm:$0xff]
        %v597 = vld [vmem:[%s491 + $0xa8] sm:$0xff]
        %v598 = vld [vmem:[%s491 + $0xb0] sm:$0xff]
        %v599 = vld [vmem:[%s491 + $0xb8] sm:$0xff]
        %v600 = vld [vmem:[%s491 + $0xc0] sm:$0xff]
        %v601 = vld [vmem:[%s491 + $0xc8] sm:$0xff]
        %v602 = vld [vmem:[%s491 + $0xd0] sm:$0xff]
        %v603 = vld [vmem:[%s491 + $0xd8] sm:$0xff]
        %v604 = vld [vmem:[%s491 + $0xe0] sm:$0xff]
        %v605 = vld [vmem:[%s491 + $0xe8] sm:$0xff]
        %v606 = vld [vmem:[%s491 + $0xf0] sm:$0xff]
        %v607 = vld [vmem:[%s491 + $0xf8] sm:$0xff]
        %vm640 = vcmask 1040384
        %v641 = vrot.slane %v576, 7
        %v642 = vrot.slane %v577, 7
        %v643 = vsel %vm640, %v641, %v642
        %v644 = vrot.slane %v578, 7
        %v645 = vrot.slane %v579, 7
        %v646 = vsel %vm640, %v644, %v645
        %v647 = vrot.slane %v580, 7
        %v648 = vrot.slane %v581, 7
        %v649 = vsel %vm640, %v647, %v648
        %v650 = vrot.slane %v582, 7
        %v651 = vrot.slane %v583, 7
        %v652 = vsel %vm640, %v650, %v651
        %v653 = vrot.slane %v584, 7
        %v654 = vrot.slane %v585, 7
        %v655 = vsel %vm640, %v653, %v654
        %v656 = vrot.slane %v586, 7
        %v657 = vrot.slane %v587, 7
        %v658 = vsel %vm640, %v656, %v657
        %v659 = vrot.slane %v588, 7
        %v660 = vrot.slane %v589, 7
        %v661 = vsel %vm640, %v659, %v660
        %v662 = vrot.slane %v590, 7
        %v663 = vrot.slane %v591, 7
        %v664 = vsel %vm640, %v662, %v663
        %v665 = vrot.slane %v592, 7
        %v666 = vrot.slane %v593, 7
        %v667 = vsel %vm640, %v665, %v666
        %v668 = vrot.slane %v594, 7
        %v669 = vrot.slane %v595, 7
        %v670 = vsel %vm640, %v668, %v669
        %v671 = vrot.slane %v596, 7
        %v672 = vrot.slane %v597, 7
        %v673 = vsel %vm640, %v671, %v672
        %v674 = vrot.slane %v598, 7
        %v675 = vrot.slane %v599, 7
        %v676 = vsel %vm640, %v674, %v675
        %v677 = vrot.slane %v600, 7
        %v678 = vrot.slane %v601, 7
        %v679 = vsel %vm640, %v677, %v678
        %v680 = vrot.slane %v602, 7
        %v681 = vrot.slane %v603, 7
        %v682 = vsel %vm640, %v680, %v681
        %v683 = vrot.slane %v604, 7
        %v684 = vrot.slane %v605, 7
        %v685 = vsel %vm640, %v683, %v684
        %v686 = vrot.slane %v606, 7
        %v687 = vrot.slane %v607, 7
        %v688 = vsel %vm640, %v686, %v687
        %v721 = vsel %vm640, %v576, %v641
        %v722 = vsel %vm640, %v578, %v644
        %v723 = vsel %vm640, %v580, %v647
        %v724 = vsel %vm640, %v582, %v650
        %v725 = vsel %vm640, %v584, %v653
        %v726 = vsel %vm640, %v586, %v656
        %v727 = vsel %vm640, %v588, %v659
        %v728 = vsel %vm640, %v590, %v662
        %v729 = vsel %vm640, %v592, %v665
        %v730 = vsel %vm640, %v594, %v668
        %v731 = vsel %vm640, %v596, %v671
        %v732 = vsel %vm640, %v598, %v674
        %v733 = vsel %vm640, %v600, %v677
        %v734 = vsel %vm640, %v602, %v680
        %v735 = vsel %vm640, %v604, %v683
        %v736 = vsel %vm640, %v606, %v686
        %vm737 = vcmask 1046528
        %v738 = vrot.slane %v576, 1
        %v739 = vrot.slane %v577, 1
        %v740 = vsel %vm737, %v738, %v739
        %v741 = vrot.slane %v578, 1
        %v742 = vrot.slane %v579, 1
        %v743 = vsel %vm737, %v741, %v742
        %v744 = vrot.slane %v580, 1
        %v745 = vrot.slane %v581, 1
        %v746 = vsel %vm737, %v744, %v745
        %v747 = vrot.slane %v582, 1
        %v748 = vrot.slane %v583, 1
        %v749 = vsel %vm737, %v747, %v748
        %v750 = vrot.slane %v584, 1
        %v751 = vrot.slane %v585, 1
        %v752 = vsel %vm737, %v750, %v751
        %v753 = vrot.slane %v586, 1
        %v754 = vrot.slane %v587, 1
        %v755 = vsel %vm737, %v753, %v754
        %v756 = vrot.slane %v588, 1
        %v757 = vrot.slane %v589, 1
        %v758 = vsel %vm737, %v756, %v757
        %v759 = vrot.slane %v590, 1
        %v760 = vrot.slane %v591, 1
        %v761 = vsel %vm737, %v759, %v760
        %v762 = vrot.slane %v592, 1
        %v763 = vrot.slane %v593, 1
        %v764 = vsel %vm737, %v762, %v763
        %v765 = vrot.slane %v594, 1
        %v766 = vrot.slane %v595, 1
        %v767 = vsel %vm737, %v765, %v766
        %v768 = vrot.slane %v596, 1
        %v769 = vrot.slane %v597, 1
        %v770 = vsel %vm737, %v768, %v769
        %v771 = vrot.slane %v598, 1
        %v772 = vrot.slane %v599, 1
        %v773 = vsel %vm737, %v771, %v772
        %v774 = vrot.slane %v600, 1
        %v775 = vrot.slane %v601, 1
        %v776 = vsel %vm737, %v774, %v775
        %v777 = vrot.slane %v602, 1
        %v778 = vrot.slane %v603, 1
        %v779 = vsel %vm737, %v777, %v778
        %v780 = vrot.slane %v604, 1
        %v781 = vrot.slane %v605, 1
        %v782 = vsel %vm737, %v780, %v781
        %v783 = vrot.slane %v606, 1
        %v784 = vrot.slane %v607, 1
        %v785 = vsel %vm737, %v783, %v784
        %v818 = vsel %vm737, %v739, %v577
        %v819 = vsel %vm737, %v742, %v579
        %v820 = vsel %vm737, %v745, %v581
        %v821 = vsel %vm737, %v748, %v583
        %v822 = vsel %vm737, %v751, %v585
        %v823 = vsel %vm737, %v754, %v587
        %v824 = vsel %vm737, %v757, %v589
        %v825 = vsel %vm737, %v760, %v591
        %v826 = vsel %vm737, %v763, %v593
        %v827 = vsel %vm737, %v766, %v595
        %v828 = vsel %vm737, %v769, %v597
        %v829 = vsel %vm737, %v772, %v599
        %v830 = vsel %vm737, %v775, %v601
        %v831 = vsel %vm737, %v778, %v603
        %v832 = vsel %vm737, %v781, %v605
        %v833 = vsel %vm737, %v784, %v607
        %v834 = vmax.f32 %v721, %v576
        %v835 = vmax.f32 %v643, %v577
        %v836 = vmax.f32 %v722, %v578
        %v837 = vmax.f32 %v646, %v579
        %v838 = vmax.f32 %v723, %v580
        %v839 = vmax.f32 %v649, %v581
        %v840 = vmax.f32 %v724, %v582
        %v841 = vmax.f32 %v652, %v583
        %v842 = vmax.f32 %v725, %v584
        %v843 = vmax.f32 %v655, %v585
        %v844 = vmax.f32 %v726, %v586
        %v845 = vmax.f32 %v658, %v587
        %v846 = vmax.f32 %v727, %v588
        %v847 = vmax.f32 %v661, %v589
        %v848 = vmax.f32 %v728, %v590
        %v849 = vmax.f32 %v664, %v591
        %v850 = vmax.f32 %v729, %v592
        %v851 = vmax.f32 %v667, %v593
        %v852 = vmax.f32 %v730, %v594
        %v853 = vmax.f32 %v670, %v595
        %v854 = vmax.f32 %v731, %v596
        %v855 = vmax.f32 %v673, %v597
        %v856 = vmax.f32 %v732, %v598
        %v857 = vmax.f32 %v676, %v599
        %v858 = vmax.f32 %v733, %v600
        %v859 = vmax.f32 %v679, %v601
        %v860 = vmax.f32 %v734, %v602
        %v861 = vmax.f32 %v682, %v603
        %v862 = vmax.f32 %v735, %v604
        %v863 = vmax.f32 %v685, %v605
        %v864 = vmax.f32 %v736, %v606
        %v865 = vmax.f32 %v688, %v607
        %v866 = vmax.f32 %v834, %v740
        %v867 = vmax.f32 %v835, %v818
        %v868 = vmax.f32 %v836, %v743
        %v869 = vmax.f32 %v837, %v819
        %v870 = vmax.f32 %v838, %v746
        %v871 = vmax.f32 %v839, %v820
        %v872 = vmax.f32 %v840, %v749
        %v873 = vmax.f32 %v841, %v821
        %v874 = vmax.f32 %v842, %v752
        %v875 = vmax.f32 %v843, %v822
        %v876 = vmax.f32 %v844, %v755
        %v877 = vmax.f32 %v845, %v823
        %v878 = vmax.f32 %v846, %v758
        %v879 = vmax.f32 %v847, %v824
        %v880 = vmax.f32 %v848, %v761
        %v881 = vmax.f32 %v849, %v825
        %v882 = vmax.f32 %v850, %v764
        %v883 = vmax.f32 %v851, %v826
        %v884 = vmax.f32 %v852, %v767
        %v885 = vmax.f32 %v853, %v827
        %v886 = vmax.f32 %v854, %v770
        %v887 = vmax.f32 %v855, %v828
        %v888 = vmax.f32 %v856, %v773
        %v889 = vmax.f32 %v857, %v829
        %v890 = vmax.f32 %v858, %v776
        %v891 = vmax.f32 %v859, %v830
        %v892 = vmax.f32 %v860, %v779
        %v893 = vmax.f32 %v861, %v831
        %v894 = vmax.f32 %v862, %v782
        %v895 = vmax.f32 %v863, %v832
        %v896 = vmax.f32 %v864, %v785
        %v897 = vmax.f32 %v865, %v833
        %v898 = vmax.f32 %v866, %v868
        %v899 = vmax.f32 %v867, %v869
        %v900 = vmax.f32 %v868, %v870
        %v901 = vmax.f32 %v869, %v871
        %v902 = vmax.f32 %v870, %v872
        %v903 = vmax.f32 %v871, %v873
        %v904 = vmax.f32 %v872, %v874
        %v905 = vmax.f32 %v873, %v875
        %v906 = vmax.f32 %v874, %v876
        %v907 = vmax.f32 %v875, %v877
        %v908 = vmax.f32 %v876, %v878
        %v909 = vmax.f32 %v877, %v879
        %v910 = vmax.f32 %v878, %v880
        %v911 = vmax.f32 %v879, %v881
        %v912 = vmax.f32 %v880, %v882
        %v913 = vmax.f32 %v881, %v883
        %v914 = vmax.f32 %v882, %v884
        %v915 = vmax.f32 %v883, %v885
        %v916 = vmax.f32 %v884, %v886
        %v917 = vmax.f32 %v885, %v887
        %v918 = vmax.f32 %v886, %v888
        %v919 = vmax.f32 %v887, %v889
        %v920 = vmax.f32 %v888, %v890
        %v921 = vmax.f32 %v889, %v891
        %v922 = vmax.f32 %v890, %v892
        %v923 = vmax.f32 %v891, %v893
        %v924 = vmax.f32 %v892, %v894
        %v925 = vmax.f32 %v893, %v895
        %v926 = vmax.f32 %v894, %v896
        %v927 = vmax.f32 %v895, %v897
        %v928 = vmax.f32 %v898, %v870
        %v929 = vmax.f32 %v899, %v871
        %v930 = vmax.f32 %v900, %v872
        %v931 = vmax.f32 %v901, %v873
        %v932 = vmax.f32 %v902, %v874
        %v933 = vmax.f32 %v903, %v875
        %v934 = vmax.f32 %v904, %v876
        %v935 = vmax.f32 %v905, %v877
        %v936 = vmax.f32 %v906, %v878
        %v937 = vmax.f32 %v907, %v879
        %v938 = vmax.f32 %v908, %v880
        %v939 = vmax.f32 %v909, %v881
        %v940 = vmax.f32 %v910, %v882
        %v941 = vmax.f32 %v911, %v883
        %v942 = vmax.f32 %v912, %v884
        %v943 = vmax.f32 %v913, %v885
        %v944 = vmax.f32 %v914, %v886
        %v945 = vmax.f32 %v915, %v887
        %v946 = vmax.f32 %v916, %v888
        %v947 = vmax.f32 %v917, %v889
        %v948 = vmax.f32 %v918, %v890
        %v949 = vmax.f32 %v919, %v891
        %v950 = vmax.f32 %v920, %v892
        %v951 = vmax.f32 %v921, %v893
        %v952 = vmax.f32 %v922, %v894
        %v953 = vmax.f32 %v923, %v895
        %v954 = vmax.f32 %v924, %v896
        %v955 = vmax.f32 %v925, %v897
        %v956 = vmax.f32 %v926, %v896
        %v957 = vmax.f32 %v927, %v897
        %v958 = vld [vmem:[#allocation9] sm:$0xf]
        %v959 = vld [vmem:[#allocation11] sm:$0x1]
        %v961 = vlaneseq
        %v962 = vshrl.u32 %v961, 7
        %v963 = vsub.s32 0, %v962
        %v964 = vrot.slane %v959, %v963
        %vm966 = vcmask 31744
        %v967 = vsel %vm966, %v576, 0
        %v969 = vsel %vm966, %v577, 0
        %v971 = vsel %vm966, %v578, 0
        %v973 = vsel %vm966, %v579, 0
        %v975 = vsel %vm966, %v580, 0
        %v977 = vsel %vm966, %v581, 0
        %v979 = vsel %vm966, %v582, 0
        %v981 = vsel %vm966, %v583, 0
        %v983 = vsel %vm966, %v584, 0
        %v985 = vsel %vm966, %v585, 0
        %v987 = vsel %vm966, %v586, 0
        %v989 = vsel %vm966, %v587, 0
        %v991 = vsel %vm966, %v588, 0
        %v993 = vsel %vm966, %v589, 0
        %v995 = vsel %vm966, %v590, 0
        %v997 = vsel %vm966, %v591, 0
        %v999 = vsel %vm966, %v592, 0
        %v1001 = vsel %vm966, %v593, 0
        %v1003 = vsel %vm966, %v594, 0
        %v1005 = vsel %vm966, %v595, 0
        %v1007 = vsel %vm966, %v596, 0
        %v1009 = vsel %vm966, %v597, 0
        %v1011 = vsel %vm966, %v598, 0
        %v1013 = vsel %vm966, %v599, 0
        %v1015 = vsel %vm966, %v600, 0
        %v1017 = vsel %vm966, %v601, 0
        %v1019 = vsel %vm966, %v602, 0
        %v1021 = vsel %vm966, %v603, 0
        %v1023 = vsel %vm966, %v604, 0
        %v1025 = vsel %vm966, %v605, 0
        %v1027 = vsel %vm966, %v606, 0
        %v1029 = vsel %vm966, %v607, 0
        %vm1031 = vcmask 1043456
        %v1033 = vsel %vm1031, %v958, 0
        %1035 = vmatprep.subr.mxu0 0.0
        %1036 = vmatpush1.msra.mxu0 %v1033
        %1037 = vmatprep.subr.mxu0 0.0
        %1038 = vmatpush1.msra.mxu0 0.0
        %1039 = vmatprep.subr.mxu0 0.0
        %1040 = vmatpush1.msra.mxu0 0.0
        %1041 = vmatprep.subr.mxu0 0.0
        %1042 = vmatpush1.msra.mxu0 0.0
        %1043 = vmatprep.subr.mxu0 0.0
        %1044 = vmatpush1.msra.mxu0 0.0
        %1045 = vmatprep.subr.mxu0 0.0
        %1046 = vmatpush1.msra.mxu0 0.0
        %1047 = vmatprep.subr.mxu0 0.0
        %1048 = vmatpush1.msra.mxu0 0.0
        %1049 = vmatprep.subr.mxu0 0.0
        %1050 = vmatpush1.msra.mxu0 0.0
        %1051 = vmatprep.subr.mxu0 0.0
        %1052 = vmatpush1.msra.mxu0 0.0
        %1053 = vmatprep.subr.mxu0 0.0
        %1054 = vmatpush1.msra.mxu0 0.0
        %1055 = vmatprep.subr.mxu0 0.0
        %1056 = vmatpush1.msra.mxu0 0.0
        %1057 = vmatprep.subr.mxu0 0.0
        %1058 = vmatpush1.msra.mxu0 0.0
        %1059 = vmatprep.subr.mxu0 0.0
        %1060 = vmatpush1.msra.mxu0 0.0
        %1061 = vmatprep.subr.mxu0 0.0
        %1062 = vmatpush1.msra.mxu0 0.0
        %1063 = vmatprep.subr.mxu0 0.0
        %1064 = vmatpush1.msra.mxu0 0.0
        %1065 = vmatprep.subr.mxu0 0.0
        %1066 = vmatpush1.msra.mxu0 0.0
        %1067 = vmatprep.subr.mxu0 0.0
        %1068 = vmatpush1.msra.mxu0 0.0
        %1069 = vmatprep.subr.mxu0 0.0
        %1070 = vmatpush1.msra.mxu0 0.0
        %1071 = vmatprep.subr.mxu0 0.0
        %1072 = vmatpush1.msra.mxu0 0.0
        %1073 = vmatprep.subr.mxu0 0.0
        %1074 = vmatpush1.msra.mxu0 0.0
        %1075 = vmatprep.subr.mxu0 0.0
        %1076 = vmatpush1.msra.mxu0 0.0
        %1077 = vmatprep.subr.mxu0 0.0
        %1078 = vmatpush1.msra.mxu0 0.0
        %1079 = vmatprep.subr.mxu0 0.0
        %1080 = vmatpush1.msra.mxu0 0.0
        %1081 = vmatprep.subr.mxu0 0.0
        %1082 = vmatpush1.msra.mxu0 0.0
        %1083 = vmatprep.subr.mxu0 0.0
        %1084 = vmatpush1.msra.mxu0 0.0
        %1085 = vmatprep.subr.mxu0 0.0
        %1086 = vmatpush1.msra.mxu0 0.0
        %1087 = vmatprep.subr.mxu0 0.0
        %1088 = vmatpush1.msra.mxu0 0.0
        %1089 = vmatprep.subr.mxu0 0.0
        %1090 = vmatpush1.msra.mxu0 0.0
        %1091 = vmatprep.subr.mxu0 0.0
        %1092 = vmatpush1.msra.mxu0 0.0
        %1093 = vmatprep.subr.mxu0 0.0
        %1094 = vmatpush1.msra.mxu0 0.0
        %1095 = vmatprep.subr.mxu0 0.0
        %1096 = vmatpush1.msra.mxu0 0.0
        %1097 = vmatprep.subr.mxu0 0.0
        %1098 = vmatpush1.msra.mxu0 0.0
        %1099 = vmatprep.mubr.f32.mxu0 0.0
        %1100 = vmatmul.mubr.f32.gmra.mrb[0].mxu0 %v967
        %v1101 = vpop.f32.mrb[0].mxu0
        %v1102 = vadd.f32 %v964, %v1101
        %v1103 = vpop.f32.mrb[0].mxu0
        %1104 = vmatprep.mubr.f32.mxu0 0.0
        %1105 = vmatmul.mubr.f32.gmra.mrb[0].mxu0 %v969
        %v1106 = vpop.f32.mrb[0].mxu0
        %v1107 = vadd.f32 %v964, %v1106
        %v1108 = vpop.f32.mrb[0].mxu0
        %1109 = vmatprep.mubr.f32.mxu0 0.0
        %1110 = vmatmul.mubr.f32.gmra.mrb[0].mxu0 %v971
        %v1111 = vpop.f32.mrb[0].mxu0
        %v1112 = vadd.f32 %v964, %v1111
        %v1113 = vpop.f32.mrb[0].mxu0
        %1114 = vmatprep.mubr.f32.mxu0 0.0
        %1115 = vmatmul.mubr.f32.gmra.mrb[0].mxu0 %v973
        %v1116 = vpop.f32.mrb[0].mxu0
        %v1117 = vadd.f32 %v964, %v1116
        %v1118 = vpop.f32.mrb[0].mxu0
        %1119 = vmatprep.mubr.f32.mxu0 0.0
        %1120 = vmatmul.mubr.f32.gmra.mrb[0].mxu0 %v975
        %v1121 = vpop.f32.mrb[0].mxu0
        %v1122 = vadd.f32 %v964, %v1121
        %v1123 = vpop.f32.mrb[0].mxu0
        %1124 = vmatprep.mubr.f32.mxu0 0.0
        %1125 = vmatmul.mubr.f32.gmra.mrb[0].mxu0 %v977
        %v1126 = vpop.f32.mrb[0].mxu0
        %v1127 = vadd.f32 %v964, %v1126
        %v1128 = vpop.f32.mrb[0].mxu0
        %1129 = vmatprep.mubr.f32.mxu0 0.0
        %1130 = vmatmul.mubr.f32.gmra.mrb[0].mxu0 %v979
        %v1131 = vpop.f32.mrb[0].mxu0
        %v1132 = vadd.f32 %v964, %v1131
        %v1133 = vpop.f32.mrb[0].mxu0
        %1134 = vmatprep.mubr.f32.mxu0 0.0
        %1135 = vmatmul.mubr.f32.gmra.mrb[0].mxu0 %v981
        %v1136 = vpop.f32.mrb[0].mxu0
        %v1137 = vadd.f32 %v964, %v1136
        %v1138 = vpop.f32.mrb[0].mxu0
        %1139 = vmatprep.mubr.f32.mxu0 0.0
        %1140 = vmatmul.mubr.f32.gmra.mrb[0].mxu0 %v983
        %v1141 = vpop.f32.mrb[0].mxu0
        %v1142 = vadd.f32 %v964, %v1141
        %v1143 = vpop.f32.mrb[0].mxu0
        %1144 = vmatprep.mubr.f32.mxu0 0.0
        %1145 = vmatmul.mubr.f32.gmra.mrb[0].mxu0 %v985
        %v1146 = vpop.f32.mrb[0].mxu0
        %v1147 = vadd.f32 %v964, %v1146
        %v1148 = vpop.f32.mrb[0].mxu0
        %1149 = vmatprep.mubr.f32.mxu0 0.0
        %1150 = vmatmul.mubr.f32.gmra.mrb[0].mxu0 %v987
        %v1151 = vpop.f32.mrb[0].mxu0
        %v1152 = vadd.f32 %v964, %v1151
        %v1153 = vpop.f32.mrb[0].mxu0
        %1154 = vmatprep.mubr.f32.mxu0 0.0
        %1155 = vmatmul.mubr.f32.gmra.mrb[0].mxu0 %v989
        %v1156 = vpop.f32.mrb[0].mxu0
        %v1157 = vadd.f32 %v964, %v1156
        %v1158 = vpop.f32.mrb[0].mxu0
        %1159 = vmatprep.mubr.f32.mxu0 0.0
        %1160 = vmatmul.mubr.f32.gmra.mrb[0].mxu0 %v991
        %v1161 = vpop.f32.mrb[0].mxu0
        %v1162 = vadd.f32 %v964, %v1161
        %v1163 = vpop.f32.mrb[0].mxu0
        %1164 = vmatprep.mubr.f32.mxu0 0.0
        %1165 = vmatmul.mubr.f32.gmra.mrb[0].mxu0 %v993
        %v1166 = vpop.f32.mrb[0].mxu0
        %v1167 = vadd.f32 %v964, %v1166
        %v1168 = vpop.f32.mrb[0].mxu0
        %1169 = vmatprep.mubr.f32.mxu0 0.0
        %1170 = vmatmul.mubr.f32.gmra.mrb[0].mxu0 %v995
        %v1171 = vpop.f32.mrb[0].mxu0
        %v1172 = vadd.f32 %v964, %v1171
        %v1173 = vpop.f32.mrb[0].mxu0
        %1174 = vmatprep.mubr.f32.mxu0 0.0
        %1175 = vmatmul.mubr.f32.gmra.mrb[0].mxu0 %v997
        %v1176 = vpop.f32.mrb[0].mxu0
        %v1177 = vadd.f32 %v964, %v1176
        %v1178 = vpop.f32.mrb[0].mxu0
        %1179 = vmatprep.mubr.f32.mxu0 0.0
        %1180 = vmatmul.mubr.f32.gmra.mrb[0].mxu0 %v999
        %v1181 = vpop.f32.mrb[0].mxu0
        %v1182 = vadd.f32 %v964, %v1181
        %v1183 = vpop.f32.mrb[0].mxu0
        %1184 = vmatprep.mubr.f32.mxu0 0.0
        %1185 = vmatmul.mubr.f32.gmra.mrb[0].mxu0 %v1001
        %v1186 = vpop.f32.mrb[0].mxu0
        %v1187 = vadd.f32 %v964, %v1186
        %v1188 = vpop.f32.mrb[0].mxu0
        %1189 = vmatprep.mubr.f32.mxu0 0.0
        %1190 = vmatmul.mubr.f32.gmra.mrb[0].mxu0 %v1003
        %v1191 = vpop.f32.mrb[0].mxu0
        %v1192 = vadd.f32 %v964, %v1191
        %v1193 = vpop.f32.mrb[0].mxu0
        %1194 = vmatprep.mubr.f32.mxu0 0.0
        %1195 = vmatmul.mubr.f32.gmra.mrb[0].mxu0 %v1005
        %v1196 = vpop.f32.mrb[0].mxu0
        %v1197 = vadd.f32 %v964, %v1196
        %v1198 = vpop.f32.mrb[0].mxu0
        %1199 = vmatprep.mubr.f32.mxu0 0.0
        %1200 = vmatmul.mubr.f32.gmra.mrb[0].mxu0 %v1007
        %v1201 = vpop.f32.mrb[0].mxu0
        %v1202 = vadd.f32 %v964, %v1201
        %v1203 = vpop.f32.mrb[0].mxu0
        %1204 = vmatprep.mubr.f32.mxu0 0.0
        %1205 = vmatmul.mubr.f32.gmra.mrb[0].mxu0 %v1009
        %v1206 = vpop.f32.mrb[0].mxu0
        %v1207 = vadd.f32 %v964, %v1206
        %v1208 = vpop.f32.mrb[0].mxu0
        %1209 = vmatprep.mubr.f32.mxu0 0.0
        %1210 = vmatmul.mubr.f32.gmra.mrb[0].mxu0 %v1011
        %v1211 = vpop.f32.mrb[0].mxu0
        %v1212 = vadd.f32 %v964, %v1211
        %v1213 = vpop.f32.mrb[0].mxu0
        %1214 = vmatprep.mubr.f32.mxu0 0.0
        %1215 = vmatmul.mubr.f32.gmra.mrb[0].mxu0 %v1013
        %v1216 = vpop.f32.mrb[0].mxu0
        %v1217 = vadd.f32 %v964, %v1216
        %v1218 = vpop.f32.mrb[0].mxu0
        %1219 = vmatprep.mubr.f32.mxu0 0.0
        %1220 = vmatmul.mubr.f32.gmra.mrb[0].mxu0 %v1015
        %v1221 = vpop.f32.mrb[0].mxu0
        %v1222 = vadd.f32 %v964, %v1221
        %v1223 = vpop.f32.mrb[0].mxu0
        %1224 = vmatprep.mubr.f32.mxu0 0.0
        %1225 = vmatmul.mubr.f32.gmra.mrb[0].mxu0 %v1017
        %v1226 = vpop.f32.mrb[0].mxu0
        %v1227 = vadd.f32 %v964, %v1226
        %v1228 = vpop.f32.mrb[0].mxu0
        %1229 = vmatprep.mubr.f32.mxu0 0.0
        %1230 = vmatmul.mubr.f32.gmra.mrb[0].mxu0 %v1019
        %v1231 = vpop.f32.mrb[0].mxu0
        %v1232 = vadd.f32 %v964, %v1231
        %v1233 = vpop.f32.mrb[0].mxu0
        %1234 = vmatprep.mubr.f32.mxu0 0.0
        %1235 = vmatmul.mubr.f32.gmra.mrb[0].mxu0 %v1021
        %v1236 = vpop.f32.mrb[0].mxu0
        %v1237 = vadd.f32 %v964, %v1236
        %v1238 = vpop.f32.mrb[0].mxu0
        %1239 = vmatprep.mubr.f32.mxu0 0.0
        %1240 = vmatmul.mubr.f32.gmra.mrb[0].mxu0 %v1023
        %v1241 = vpop.f32.mrb[0].mxu0
        %v1242 = vadd.f32 %v964, %v1241
        %v1243 = vpop.f32.mrb[0].mxu0
        %1244 = vmatprep.mubr.f32.mxu0 0.0
        %1245 = vmatmul.mubr.f32.gmra.mrb[0].mxu0 %v1025
        %v1246 = vpop.f32.mrb[0].mxu0
        %v1247 = vadd.f32 %v964, %v1246
        %v1248 = vpop.f32.mrb[0].mxu0
        %1249 = vmatprep.mubr.f32.mxu0 0.0
        %1250 = vmatmul.mubr.f32.gmra.mrb[0].mxu0 %v1027
        %v1251 = vpop.f32.mrb[0].mxu0
        %v1252 = vadd.f32 %v964, %v1251
        %v1253 = vpop.f32.mrb[0].mxu0
        %1254 = vmatprep.mubr.f32.mxu0 0.0
        %1255 = vmatmul.mubr.f32.gmra.mrb[0].mxu0 %v1029
        %v1256 = vpop.f32.mrb[0].mxu0
        %v1257 = vadd.f32 %v964, %v1256
        %v1258 = vpop.f32.mrb[0].mxu0
        %1259 = vdwg.mxu0
        %v1260 = vmax.f32 %v1102, 0.0
        %v1261 = vmax.f32 %v1107, 0.0
        %v1262 = vmax.f32 %v1112, 0.0
        %v1263 = vmax.f32 %v1117, 0.0
        %v1264 = vmax.f32 %v1122, 0.0
        %v1265 = vmax.f32 %v1127, 0.0
        %v1266 = vmax.f32 %v1132, 0.0
        %v1267 = vmax.f32 %v1137, 0.0
        %v1268 = vmax.f32 %v1142, 0.0
        %v1269 = vmax.f32 %v1147, 0.0
        %v1270 = vmax.f32 %v1152, 0.0
        %v1271 = vmax.f32 %v1157, 0.0
        %v1272 = vmax.f32 %v1162, 0.0
        %v1273 = vmax.f32 %v1167, 0.0
        %v1274 = vmax.f32 %v1172, 0.0
        %v1275 = vmax.f32 %v1177, 0.0
        %v1276 = vmax.f32 %v1182, 0.0
        %v1277 = vmax.f32 %v1187, 0.0
        %v1278 = vmax.f32 %v1192, 0.0
        %v1279 = vmax.f32 %v1197, 0.0
        %v1280 = vmax.f32 %v1202, 0.0
        %v1281 = vmax.f32 %v1207, 0.0
        %v1282 = vmax.f32 %v1212, 0.0
        %v1283 = vmax.f32 %v1217, 0.0
        %v1284 = vmax.f32 %v1222, 0.0
        %v1285 = vmax.f32 %v1227, 0.0
        %v1286 = vmax.f32 %v1232, 0.0
        %v1287 = vmax.f32 %v1237, 0.0
        %v1288 = vmax.f32 %v1242, 0.0
        %v1289 = vmax.f32 %v1247, 0.0
        %v1290 = vmax.f32 %v1252, 0.0
        %v1291 = vmax.f32 %v1257, 0.0
        %v1292 = vld [vmem:[#allocation12] sm:$0xf]
        %v1293 = vld [vmem:[#allocation14] sm:$0x1]
        %v1295 = vlaneseq
        %v1296 = vshrl.u32 %v1295, 7
        %v1297 = vsub.s32 0, %v1296
        %v1298 = vrot.slane %v1293, %v1297
        %v1301 = vsel %vm966, %v898, 0
        %v1304 = vsel %vm966, %v899, 0
        %v1307 = vsel %vm966, %v928, 0
        %v1310 = vsel %vm966, %v929, 0
        %v1313 = vsel %vm966, %v930, 0
        %v1316 = vsel %vm966, %v931, 0
        %v1319 = vsel %vm966, %v932, 0
        %v1322 = vsel %vm966, %v933, 0
        %v1325 = vsel %vm966, %v934, 0
        %v1328 = vsel %vm966, %v935, 0
        %v1331 = vsel %vm966, %v936, 0
        %v1334 = vsel %vm966, %v937, 0
        %v1337 = vsel %vm966, %v938, 0
        %v1340 = vsel %vm966, %v939, 0
        %v1343 = vsel %vm966, %v940, 0
        %v1346 = vsel %vm966, %v941, 0
        %v1349 = vsel %vm966, %v942, 0
        %v1352 = vsel %vm966, %v943, 0
        %v1355 = vsel %vm966, %v944, 0
        %v1358 = vsel %vm966, %v945, 0
        %v1361 = vsel %vm966, %v946, 0
        %v1364 = vsel %vm966, %v947, 0
        %v1367 = vsel %vm966, %v948, 0
        %v1370 = vsel %vm966, %v949, 0
        %v1373 = vsel %vm966, %v950, 0
        %v1376 = vsel %vm966, %v951, 0
        %v1379 = vsel %vm966, %v952, 0
        %v1382 = vsel %vm966, %v953, 0
        %v1385 = vsel %vm966, %v954, 0
        %v1388 = vsel %vm966, %v955, 0
        %v1391 = vsel %vm966, %v956, 0
        %v1394 = vsel %vm966, %v957, 0
        %v1397 = vsel %vm1031, %v1292, 0
        %1399 = vmatprep.subr.mxu0 0.0
        %1400 = vmatpush1.msra.mxu0 %v1397
        %1401 = vmatprep.subr.mxu0 0.0
        %1402 = vmatpush1.msra.mxu0 0.0
        %1403 = vmatprep.subr.mxu0 0.0
        %1404 = vmatpush1.msra.mxu0 0.0
        %1405 = vmatprep.subr.mxu0 0.0
        %1406 = vmatpush1.msra.mxu0 0.0
        %1407 = vmatprep.subr.mxu0 0.0
        %1408 = vmatpush1.msra.mxu0 0.0
        %1409 = vmatprep.subr.mxu0 0.0
        %1410 = vmatpush1.msra.mxu0 0.0
        %1411 = vmatprep.subr.mxu0 0.0
        %1412 = vmatpush1.msra.mxu0 0.0
        %1413 = vmatprep.subr.mxu0 0.0
        %1414 = vmatpush1.msra.mxu0 0.0
        %1415 = vmatprep.subr.mxu0 0.0
        %1416 = vmatpush1.msra.mxu0 0.0
        %1417 = vmatprep.subr.mxu0 0.0
        %1418 = vmatpush1.msra.mxu0 0.0
        %1419 = vmatprep.subr.mxu0 0.0
        %1420 = vmatpush1.msra.mxu0 0.0
        %1421 = vmatprep.subr.mxu0 0.0
        %1422 = vmatpush1.msra.mxu0 0.0
        %1423 = vmatprep.subr.mxu0 0.0
        %1424 = vmatpush1.msra.mxu0 0.0
        %1425 = vmatprep.subr.mxu0 0.0
        %1426 = vmatpush1.msra.mxu0 0.0
        %1427 = vmatprep.subr.mxu0 0.0
        %1428 = vmatpush1.msra.mxu0 0.0
        %1429 = vmatprep.subr.mxu0 0.0
        %1430 = vmatpush1.msra.mxu0 0.0
        %1431 = vmatprep.subr.mxu0 0.0
        %1432 = vmatpush1.msra.mxu0 0.0
        %1433 = vmatprep.subr.mxu0 0.0
        %1434 = vmatpush1.msra.mxu0 0.0
        %1435 = vmatprep.subr.mxu0 0.0
        %1436 = vmatpush1.msra.mxu0 0.0
        %1437 = vmatprep.subr.mxu0 0.0
        %1438 = vmatpush1.msra.mxu0 0.0
        %1439 = vmatprep.subr.mxu0 0.0
        %1440 = vmatpush1.msra.mxu0 0.0
        %1441 = vmatprep.subr.mxu0 0.0
        %1442 = vmatpush1.msra.mxu0 0.0
        %1443 = vmatprep.subr.mxu0 0.0
        %1444 = vmatpush1.msra.mxu0 0.0
        %1445 = vmatprep.subr.mxu0 0.0
        %1446 = vmatpush1.msra.mxu0 0.0
        %1447 = vmatprep.subr.mxu0 0.0
        %1448 = vmatpush1.msra.mxu0 0.0
        %1449 = vmatprep.subr.mxu0 0.0
        %1450 = vmatpush1.msra.mxu0 0.0
        %1451 = vmatprep.subr.mxu0 0.0
        %1452 = vmatpush1.msra.mxu0 0.0
        %1453 = vmatprep.subr.mxu0 0.0
        %1454 = vmatpush1.msra.mxu0 0.0
        %1455 = vmatprep.subr.mxu0 0.0
        %1456 = vmatpush1.msra.mxu0 0.0
        %1457 = vmatprep.subr.mxu0 0.0
        %1458 = vmatpush1.msra.mxu0 0.0
        %1459 = vmatprep.subr.mxu0 0.0
        %1460 = vmatpush1.msra.mxu0 0.0
        %1461 = vmatprep.subr.mxu0 0.0
        %1462 = vmatpush1.msra.mxu0 0.0
        %1463 = vmatprep.mubr.f32.mxu0 0.0
        %1464 = vmatmul.mubr.f32.gmra.mrb[0].mxu0 %v1301
        %v1465 = vpop.f32.mrb[0].mxu0
        %v1466 = vadd.f32 %v1298, %v1465
        %v1467 = vpop.f32.mrb[0].mxu0
        %1468 = vmatprep.mubr.f32.mxu0 0.0
        %1469 = vmatmul.mubr.f32.gmra.mrb[0].mxu0 %v1304
        %v1470 = vpop.f32.mrb[0].mxu0
        %v1471 = vadd.f32 %v1298, %v1470
        %v1472 = vpop.f32.mrb[0].mxu0
        %1473 = vmatprep.mubr.f32.mxu0 0.0
        %1474 = vmatmul.mubr.f32.gmra.mrb[0].mxu0 %v1307
        %v1475 = vpop.f32.mrb[0].mxu0
        %v1476 = vadd.f32 %v1298, %v1475
        %v1477 = vpop.f32.mrb[0].mxu0
        %1478 = vmatprep.mubr.f32.mxu0 0.0
        %1479 = vmatmul.mubr.f32.gmra.mrb[0].mxu0 %v1310
        %v1480 = vpop.f32.mrb[0].mxu0
        %v1481 = vadd.f32 %v1298, %v1480
        %v1482 = vpop.f32.mrb[0].mxu0
        %1483 = vmatprep.mubr.f32.mxu0 0.0
        %1484 = vmatmul.mubr.f32.gmra.mrb[0].mxu0 %v1313
        %v1485 = vpop.f32.mrb[0].mxu0
        %v1486 = vadd.f32 %v1298, %v1485
        %v1487 = vpop.f32.mrb[0].mxu0
        %1488 = vmatprep.mubr.f32.mxu0 0.0
        %1489 = vmatmul.mubr.f32.gmra.mrb[0].mxu0 %v1316
        %v1490 = vpop.f32.mrb[0].mxu0
        %v1491 = vadd.f32 %v1298, %v1490
        %v1492 = vpop.f32.mrb[0].mxu0
        %1493 = vmatprep.mubr.f32.mxu0 0.0
        %1494 = vmatmul.mubr.f32.gmra.mrb[0].mxu0 %v1319
        %v1495 = vpop.f32.mrb[0].mxu0
        %v1496 = vadd.f32 %v1298, %v1495
        %v1497 = vpop.f32.mrb[0].mxu0
        %1498 = vmatprep.mubr.f32.mxu0 0.0
        %1499 = vmatmul.mubr.f32.gmra.mrb[0].mxu0 %v1322
        %v1500 = vpop.f32.mrb[0].mxu0
        %v1501 = vadd.f32 %v1298, %v1500
        %v1502 = vpop.f32.mrb[0].mxu0
        %1503 = vmatprep.mubr.f32.mxu0 0.0
        %1504 = vmatmul.mubr.f32.gmra.mrb[0].mxu0 %v1325
        %v1505 = vpop.f32.mrb[0].mxu0
        %v1506 = vadd.f32 %v1298, %v1505
        %v1507 = vpop.f32.mrb[0].mxu0
        %1508 = vmatprep.mubr.f32.mxu0 0.0
        %1509 = vmatmul.mubr.f32.gmra.mrb[0].mxu0 %v1328
        %v1510 = vpop.f32.mrb[0].mxu0
        %v1511 = vadd.f32 %v1298, %v1510
        %v1512 = vpop.f32.mrb[0].mxu0
        %1513 = vmatprep.mubr.f32.mxu0 0.0
        %1514 = vmatmul.mubr.f32.gmra.mrb[0].mxu0 %v1331
        %v1515 = vpop.f32.mrb[0].mxu0
        %v1516 = vadd.f32 %v1298, %v1515
        %v1517 = vpop.f32.mrb[0].mxu0
        %1518 = vmatprep.mubr.f32.mxu0 0.0
        %1519 = vmatmul.mubr.f32.gmra.mrb[0].mxu0 %v1334
        %v1520 = vpop.f32.mrb[0].mxu0
        %v1521 = vadd.f32 %v1298, %v1520
        %v1522 = vpop.f32.mrb[0].mxu0
        %1523 = vmatprep.mubr.f32.mxu0 0.0
        %1524 = vmatmul.mubr.f32.gmra.mrb[0].mxu0 %v1337
        %v1525 = vpop.f32.mrb[0].mxu0
        %v1526 = vadd.f32 %v1298, %v1525
        %v1527 = vpop.f32.mrb[0].mxu0
        %1528 = vmatprep.mubr.f32.mxu0 0.0
        %1529 = vmatmul.mubr.f32.gmra.mrb[0].mxu0 %v1340
        %v1530 = vpop.f32.mrb[0].mxu0
        %v1531 = vadd.f32 %v1298, %v1530
        %v1532 = vpop.f32.mrb[0].mxu0
        %1533 = vmatprep.mubr.f32.mxu0 0.0
        %1534 = vmatmul.mubr.f32.gmra.mrb[0].mxu0 %v1343
        %v1535 = vpop.f32.mrb[0].mxu0
        %v1536 = vadd.f32 %v1298, %v1535
        %v1537 = vpop.f32.mrb[0].mxu0
        %1538 = vmatprep.mubr.f32.mxu0 0.0
        %1539 = vmatmul.mubr.f32.gmra.mrb[0].mxu0 %v1346
        %v1540 = vpop.f32.mrb[0].mxu0
        %v1541 = vadd.f32 %v1298, %v1540
        %v1542 = vpop.f32.mrb[0].mxu0
        %1543 = vmatprep.mubr.f32.mxu0 0.0
        %1544 = vmatmul.mubr.f32.gmra.mrb[0].mxu0 %v1349
        %v1545 = vpop.f32.mrb[0].mxu0
        %v1546 = vadd.f32 %v1298, %v1545
        %v1547 = vpop.f32.mrb[0].mxu0
        %1548 = vmatprep.mubr.f32.mxu0 0.0
        %1549 = vmatmul.mubr.f32.gmra.mrb[0].mxu0 %v1352
        %v1550 = vpop.f32.mrb[0].mxu0
        %v1551 = vadd.f32 %v1298, %v1550
        %v1552 = vpop.f32.mrb[0].mxu0
        %1553 = vmatprep.mubr.f32.mxu0 0.0
        %1554 = vmatmul.mubr.f32.gmra.mrb[0].mxu0 %v1355
        %v1555 = vpop.f32.mrb[0].mxu0
        %v1556 = vadd.f32 %v1298, %v1555
        %v1557 = vpop.f32.mrb[0].mxu0
        %1558 = vmatprep.mubr.f32.mxu0 0.0
        %1559 = vmatmul.mubr.f32.gmra.mrb[0].mxu0 %v1358
        %v1560 = vpop.f32.mrb[0].mxu0
        %v1561 = vadd.f32 %v1298, %v1560
        %v1562 = vpop.f32.mrb[0].mxu0
        %1563 = vmatprep.mubr.f32.mxu0 0.0
        %1564 = vmatmul.mubr.f32.gmra.mrb[0].mxu0 %v1361
        %v1565 = vpop.f32.mrb[0].mxu0
        %v1566 = vadd.f32 %v1298, %v1565
        %v1567 = vpop.f32.mrb[0].mxu0
        %1568 = vmatprep.mubr.f32.mxu0 0.0
        %1569 = vmatmul.mubr.f32.gmra.mrb[0].mxu0 %v1364
        %v1570 = vpop.f32.mrb[0].mxu0
        %v1571 = vadd.f32 %v1298, %v1570
        %v1572 = vpop.f32.mrb[0].mxu0
        %1573 = vmatprep.mubr.f32.mxu0 0.0
        %1574 = vmatmul.mubr.f32.gmra.mrb[0].mxu0 %v1367
        %v1575 = vpop.f32.mrb[0].mxu0
        %v1576 = vadd.f32 %v1298, %v1575
        %v1577 = vpop.f32.mrb[0].mxu0
        %1578 = vmatprep.mubr.f32.mxu0 0.0
        %1579 = vmatmul.mubr.f32.gmra.mrb[0].mxu0 %v1370
        %v1580 = vpop.f32.mrb[0].mxu0
        %v1581 = vadd.f32 %v1298, %v1580
        %v1582 = vpop.f32.mrb[0].mxu0
        %1583 = vmatprep.mubr.f32.mxu0 0.0
        %1584 = vmatmul.mubr.f32.gmra.mrb[0].mxu0 %v1373
        %v1585 = vpop.f32.mrb[0].mxu0
        %v1586 = vadd.f32 %v1298, %v1585
        %v1587 = vpop.f32.mrb[0].mxu0
        %1588 = vmatprep.mubr.f32.mxu0 0.0
        %1589 = vmatmul.mubr.f32.gmra.mrb[0].mxu0 %v1376
        %v1590 = vpop.f32.mrb[0].mxu0
        %v1591 = vadd.f32 %v1298, %v1590
        %v1592 = vpop.f32.mrb[0].mxu0
        %1593 = vmatprep.mubr.f32.mxu0 0.0
        %1594 = vmatmul.mubr.f32.gmra.mrb[0].mxu0 %v1379
        %v1595 = vpop.f32.mrb[0].mxu0
        %v1596 = vadd.f32 %v1298, %v1595
        %v1597 = vpop.f32.mrb[0].mxu0
        %1598 = vmatprep.mubr.f32.mxu0 0.0
        %1599 = vmatmul.mubr.f32.gmra.mrb[0].mxu0 %v1382
        %v1600 = vpop.f32.mrb[0].mxu0
        %v1601 = vadd.f32 %v1298, %v1600
        %v1602 = vpop.f32.mrb[0].mxu0
        %1603 = vmatprep.mubr.f32.mxu0 0.0
        %1604 = vmatmul.mubr.f32.gmra.mrb[0].mxu0 %v1385
        %v1605 = vpop.f32.mrb[0].mxu0
        %v1606 = vadd.f32 %v1298, %v1605
        %v1607 = vpop.f32.mrb[0].mxu0
        %1608 = vmatprep.mubr.f32.mxu0 0.0
        %1609 = vmatmul.mubr.f32.gmra.mrb[0].mxu0 %v1388
        %v1610 = vpop.f32.mrb[0].mxu0
        %v1611 = vadd.f32 %v1298, %v1610
        %v1612 = vpop.f32.mrb[0].mxu0
        %1613 = vmatprep.mubr.f32.mxu0 0.0
        %1614 = vmatmul.mubr.f32.gmra.mrb[0].mxu0 %v1391
        %v1615 = vpop.f32.mrb[0].mxu0
        %v1616 = vadd.f32 %v1298, %v1615
        %v1617 = vpop.f32.mrb[0].mxu0
        %1618 = vmatprep.mubr.f32.mxu0 0.0
        %1619 = vmatmul.mubr.f32.gmra.mrb[0].mxu0 %v1394
        %v1620 = vpop.f32.mrb[0].mxu0
        %v1621 = vadd.f32 %v1298, %v1620
        %v1622 = vpop.f32.mrb[0].mxu0
        %1623 = vdwg.mxu0
        %v1624 = vmax.f32 %v1466, 0.0
        %v1625 = vmax.f32 %v1471, 0.0
        %v1626 = vmax.f32 %v1476, 0.0
        %v1627 = vmax.f32 %v1481, 0.0
        %v1628 = vmax.f32 %v1486, 0.0
        %v1629 = vmax.f32 %v1491, 0.0
        %v1630 = vmax.f32 %v1496, 0.0
        %v1631 = vmax.f32 %v1501, 0.0
        %v1632 = vmax.f32 %v1506, 0.0
        %v1633 = vmax.f32 %v1511, 0.0
        %v1634 = vmax.f32 %v1516, 0.0
        %v1635 = vmax.f32 %v1521, 0.0
        %v1636 = vmax.f32 %v1526, 0.0
        %v1637 = vmax.f32 %v1531, 0.0
        %v1638 = vmax.f32 %v1536, 0.0
        %v1639 = vmax.f32 %v1541, 0.0
        %v1640 = vmax.f32 %v1546, 0.0
        %v1641 = vmax.f32 %v1551, 0.0
        %v1642 = vmax.f32 %v1556, 0.0
        %v1643 = vmax.f32 %v1561, 0.0
        %v1644 = vmax.f32 %v1566, 0.0
        %v1645 = vmax.f32 %v1571, 0.0
        %v1646 = vmax.f32 %v1576, 0.0
        %v1647 = vmax.f32 %v1581, 0.0
        %v1648 = vmax.f32 %v1586, 0.0
        %v1649 = vmax.f32 %v1591, 0.0
        %v1650 = vmax.f32 %v1596, 0.0
        %v1651 = vmax.f32 %v1601, 0.0
        %v1652 = vmax.f32 %v1606, 0.0
        %v1653 = vmax.f32 %v1611, 0.0
        %v1654 = vmax.f32 %v1616, 0.0
        %v1655 = vmax.f32 %v1621, 0.0
        %vm1656 = vcmask 64512
        %1657 = vst.msk [vmem:[#allocation2 + $0x7] sm:$0xff] %vm1656, 0.0
        %1658 = vst.msk [vmem:[#allocation2 + $0xf] sm:$0xff] %vm1656, 0.0
        %vm1659 = vcmask 58368
        %1660 = vst.msk [vmem:[#allocation2 + $0x17] sm:$0x3] %vm1659, 0.0
        %s1661 = scalar_lea.vmem [#allocation2], 544
        %1662 = vst.msk [vmem:[%s1661 + $0x7] sm:$0xff] %vm1656, 0.0
        %1663 = vst.msk [vmem:[%s1661 + $0xf] sm:$0xff] %vm1656, 0.0
        %1664 = vst.msk [vmem:[%s1661 + $0x17] sm:$0x3] %vm1659, 0.0
        %s1665 = scalar_lea.vmem [#allocation2], 32
        %vm1666 = vcmask 57344
        %1667 = vst.msk [vmem:[%s1665 + $0x7] sm:$0x1] %vm1666, 0.0
        %1668 = vst.msk [vmem:[%s1665 + $0x27] sm:$0x1] %vm1666, 0.0
        %1669 = vst.msk [vmem:[%s1665 + $0x47] sm:$0x1] %vm1666, 0.0
        %1670 = vst.msk [vmem:[%s1665 + $0x67] sm:$0x1] %vm1666, 0.0
        %1671 = vst.msk [vmem:[%s1665 + $0x87] sm:$0x1] %vm1666, 0.0
        %1672 = vst.msk [vmem:[%s1665 + $0xa7] sm:$0x1] %vm1666, 0.0
        %1673 = vst.msk [vmem:[%s1665 + $0xc7] sm:$0x1] %vm1666, 0.0
        %1674 = vst.msk [vmem:[%s1665 + $0xe7] sm:$0x1] %vm1666, 0.0
        %1675 = vst.msk [vmem:[%s1665 + $0x107] sm:$0x1] %vm1666, 0.0
        %1676 = vst.msk [vmem:[%s1665 + $0x127] sm:$0x1] %vm1666, 0.0
        %1677 = vst.msk [vmem:[%s1665 + $0x147] sm:$0x1] %vm1666, 0.0
        %1678 = vst.msk [vmem:[%s1665 + $0x167] sm:$0x1] %vm1666, 0.0
        %1679 = vst.msk [vmem:[%s1665 + $0x187] sm:$0x1] %vm1666, 0.0
        %1680 = vst.msk [vmem:[%s1665 + $0x1a7] sm:$0x1] %vm1666, 0.0
        %1681 = vst.msk [vmem:[%s1665 + $0x1c7] sm:$0x1] %vm1666, 0.0
        %1682 = vst.msk [vmem:[%s1665 + $0x1e7] sm:$0x1] %vm1666, 0.0
        %1683 = vst.msk [vmem:[%s1665 + $0x18] sm:$0x1] %vm1666, 0.0
        %1684 = vst.msk [vmem:[%s1665 + $0x38] sm:$0x1] %vm1666, 0.0
        %1685 = vst.msk [vmem:[%s1665 + $0x58] sm:$0x1] %vm1666, 0.0
        %1686 = vst.msk [vmem:[%s1665 + $0x78] sm:$0x1] %vm1666, 0.0
        %1687 = vst.msk [vmem:[%s1665 + $0x98] sm:$0x1] %vm1666, 0.0
        %1688 = vst.msk [vmem:[%s1665 + $0xb8] sm:$0x1] %vm1666, 0.0
        %1689 = vst.msk [vmem:[%s1665 + $0xd8] sm:$0x1] %vm1666, 0.0
        %1690 = vst.msk [vmem:[%s1665 + $0xf8] sm:$0x1] %vm1666, 0.0
        %1691 = vst.msk [vmem:[%s1665 + $0x118] sm:$0x1] %vm1666, 0.0
        %1692 = vst.msk [vmem:[%s1665 + $0x138] sm:$0x1] %vm1666, 0.0
        %1693 = vst.msk [vmem:[%s1665 + $0x158] sm:$0x1] %vm1666, 0.0
        %1694 = vst.msk [vmem:[%s1665 + $0x178] sm:$0x1] %vm1666, 0.0
        %1695 = vst.msk [vmem:[%s1665 + $0x198] sm:$0x1] %vm1666, 0.0
        %1696 = vst.msk [vmem:[%s1665 + $0x1b8] sm:$0x1] %vm1666, 0.0
        %1697 = vst.msk [vmem:[%s1665 + $0x1d8] sm:$0x1] %vm1666, 0.0
        %1698 = vst.msk [vmem:[%s1665 + $0x1f8] sm:$0x1] %vm1666, 0.0
        %1731 = vrot.lane.b32.xlu0 %v1260, 120
        %v1732 = vpop.permute.xlu0 %1731
        %1733 = vrot.lane.b32.xlu0 %v1261, 120
        %v1734 = vpop.permute.xlu0 %1733
        %1735 = vrot.lane.b32.xlu0 %v1262, 120
        %v1736 = vpop.permute.xlu0 %1735
        %1737 = vrot.lane.b32.xlu0 %v1263, 120
        %v1738 = vpop.permute.xlu0 %1737
        %1739 = vrot.lane.b32.xlu0 %v1264, 120
        %v1740 = vpop.permute.xlu0 %1739
        %1741 = vrot.lane.b32.xlu0 %v1265, 120
        %v1742 = vpop.permute.xlu0 %1741
        %1743 = vrot.lane.b32.xlu0 %v1266, 120
        %v1744 = vpop.permute.xlu0 %1743
        %1745 = vrot.lane.b32.xlu0 %v1267, 120
        %v1746 = vpop.permute.xlu0 %1745
        %1747 = vrot.lane.b32.xlu0 %v1268, 120
        %v1748 = vpop.permute.xlu0 %1747
        %1749 = vrot.lane.b32.xlu0 %v1269, 120
        %v1750 = vpop.permute.xlu0 %1749
        %1751 = vrot.lane.b32.xlu0 %v1270, 120
        %v1752 = vpop.permute.xlu0 %1751
        %1753 = vrot.lane.b32.xlu0 %v1271, 120
        %v1754 = vpop.permute.xlu0 %1753
        %1755 = vrot.lane.b32.xlu0 %v1272, 120
        %v1756 = vpop.permute.xlu0 %1755
        %1757 = vrot.lane.b32.xlu0 %v1273, 120
        %v1758 = vpop.permute.xlu0 %1757
        %1759 = vrot.lane.b32.xlu0 %v1274, 120
        %v1760 = vpop.permute.xlu0 %1759
        %1761 = vrot.lane.b32.xlu0 %v1275, 120
        %v1762 = vpop.permute.xlu0 %1761
        %1763 = vrot.lane.b32.xlu0 %v1276, 120
        %v1764 = vpop.permute.xlu0 %1763
        %1765 = vrot.lane.b32.xlu0 %v1277, 120
        %v1766 = vpop.permute.xlu0 %1765
        %1767 = vrot.lane.b32.xlu0 %v1278, 120
        %v1768 = vpop.permute.xlu0 %1767
        %1769 = vrot.lane.b32.xlu0 %v1279, 120
        %v1770 = vpop.permute.xlu0 %1769
        %1771 = vrot.lane.b32.xlu0 %v1280, 120
        %v1772 = vpop.permute.xlu0 %1771
        %1773 = vrot.lane.b32.xlu0 %v1281, 120
        %v1774 = vpop.permute.xlu0 %1773
        %1775 = vrot.lane.b32.xlu0 %v1282, 120
        %v1776 = vpop.permute.xlu0 %1775
        %1777 = vrot.lane.b32.xlu0 %v1283, 120
        %v1778 = vpop.permute.xlu0 %1777
        %1779 = vrot.lane.b32.xlu0 %v1284, 120
        %v1780 = vpop.permute.xlu0 %1779
        %1781 = vrot.lane.b32.xlu0 %v1285, 120
        %v1782 = vpop.permute.xlu0 %1781
        %1783 = vrot.lane.b32.xlu0 %v1286, 120
        %v1784 = vpop.permute.xlu0 %1783
        %1785 = vrot.lane.b32.xlu0 %v1287, 120
        %v1786 = vpop.permute.xlu0 %1785
        %1787 = vrot.lane.b32.xlu0 %v1288, 120
        %v1788 = vpop.permute.xlu0 %1787
        %1789 = vrot.lane.b32.xlu0 %v1289, 120
        %v1790 = vpop.permute.xlu0 %1789
        %1791 = vrot.lane.b32.xlu0 %v1290, 120
        %v1792 = vpop.permute.xlu0 %1791
        %1793 = vrot.lane.b32.xlu0 %v1291, 120
        %v1794 = vpop.permute.xlu0 %1793
        %1827 = vst.msk [vmem:[%s1665 + $0x8] sm:$0xff] %vm1656, %v1732
        %1828 = vst.msk [vmem:[%s1665 + $0x10] sm:$0xff] %vm1656, %v1734
        %1829 = vst.msk [vmem:[%s1665 + $0x28] sm:$0xff] %vm1656, %v1736
        %1830 = vst.msk [vmem:[%s1665 + $0x30] sm:$0xff] %vm1656, %v1738
        %1831 = vst.msk [vmem:[%s1665 + $0x48] sm:$0xff] %vm1656, %v1740
        %1832 = vst.msk [vmem:[%s1665 + $0x50] sm:$0xff] %vm1656, %v1742
        %1833 = vst.msk [vmem:[%s1665 + $0x68] sm:$0xff] %vm1656, %v1744
        %1834 = vst.msk [vmem:[%s1665 + $0x70] sm:$0xff] %vm1656, %v1746
        %1835 = vst.msk [vmem:[%s1665 + $0x88] sm:$0xff] %vm1656, %v1748
        %1836 = vst.msk [vmem:[%s1665 + $0x90] sm:$0xff] %vm1656, %v1750
        %1837 = vst.msk [vmem:[%s1665 + $0xa8] sm:$0xff] %vm1656, %v1752
        %1838 = vst.msk [vmem:[%s1665 + $0xb0] sm:$0xff] %vm1656, %v1754
        %1839 = vst.msk [vmem:[%s1665 + $0xc8] sm:$0xff] %vm1656, %v1756
        %1840 = vst.msk [vmem:[%s1665 + $0xd0] sm:$0xff] %vm1656, %v1758
        %1841 = vst.msk [vmem:[%s1665 + $0xe8] sm:$0xff] %vm1656, %v1760
        %1842 = vst.msk [vmem:[%s1665 + $0xf0] sm:$0xff] %vm1656, %v1762
        %1843 = vst.msk [vmem:[%s1665 + $0x108] sm:$0xff] %vm1656, %v1764
        %1844 = vst.msk [vmem:[%s1665 + $0x110] sm:$0xff] %vm1656, %v1766
        %1845 = vst.msk [vmem:[%s1665 + $0x128] sm:$0xff] %vm1656, %v1768
        %1846 = vst.msk [vmem:[%s1665 + $0x130] sm:$0xff] %vm1656, %v1770
        %1847 = vst.msk [vmem:[%s1665 + $0x148] sm:$0xff] %vm1656, %v1772
        %1848 = vst.msk [vmem:[%s1665 + $0x150] sm:$0xff] %vm1656, %v1774
        %1849 = vst.msk [vmem:[%s1665 + $0x168] sm:$0xff] %vm1656, %v1776
        %1850 = vst.msk [vmem:[%s1665 + $0x170] sm:$0xff] %vm1656, %v1778
        %1851 = vst.msk [vmem:[%s1665 + $0x188] sm:$0xff] %vm1656, %v1780
        %1852 = vst.msk [vmem:[%s1665 + $0x190] sm:$0xff] %vm1656, %v1782
        %1853 = vst.msk [vmem:[%s1665 + $0x1a8] sm:$0xff] %vm1656, %v1784
        %1854 = vst.msk [vmem:[%s1665 + $0x1b0] sm:$0xff] %vm1656, %v1786
        %1855 = vst.msk [vmem:[%s1665 + $0x1c8] sm:$0xff] %vm1656, %v1788
        %1856 = vst.msk [vmem:[%s1665 + $0x1d0] sm:$0xff] %vm1656, %v1790
        %1857 = vst.msk [vmem:[%s1665 + $0x1e8] sm:$0xff] %vm1656, %v1792
        %1858 = vst.msk [vmem:[%s1665 + $0x1f0] sm:$0xff] %vm1656, %v1794
        %v1859 = vld [vmem:[#allocation2 + $0x7] sm:$0xff]
        %v1860 = vld [vmem:[#allocation2 + $0xf] sm:$0xff]
        %v1861 = vld [vmem:[#allocation2 + $0x27] sm:$0xff]
        %v1862 = vld [vmem:[#allocation2 + $0x2f] sm:$0xff]
        %v1863 = vld [vmem:[#allocation2 + $0x47] sm:$0xff]
        %v1864 = vld [vmem:[#allocation2 + $0x4f] sm:$0xff]
        %v1865 = vld [vmem:[#allocation2 + $0x67] sm:$0xff]
        %v1866 = vld [vmem:[#allocation2 + $0x6f] sm:$0xff]
        %v1867 = vld [vmem:[#allocation2 + $0x87] sm:$0xff]
        %v1868 = vld [vmem:[#allocation2 + $0x8f] sm:$0xff]
        %v1869 = vld [vmem:[#allocation2 + $0xa7] sm:$0xff]
        %v1870 = vld [vmem:[#allocation2 + $0xaf] sm:$0xff]
        %v1871 = vld [vmem:[#allocation2 + $0xc7] sm:$0xff]
        %v1872 = vld [vmem:[#allocation2 + $0xcf] sm:$0xff]
        %v1873 = vld [vmem:[#allocation2 + $0xe7] sm:$0xff]
        %v1874 = vld [vmem:[#allocation2 + $0xef] sm:$0xff]
        %v1875 = vld [vmem:[#allocation2 + $0x107] sm:$0xff]
        %v1876 = vld [vmem:[#allocation2 + $0x10f] sm:$0xff]
        %v1877 = vld [vmem:[#allocation2 + $0x127] sm:$0xff]
        %v1878 = vld [vmem:[#allocation2 + $0x12f] sm:$0xff]
        %v1879 = vld [vmem:[#allocation2 + $0x147] sm:$0xff]
        %v1880 = vld [vmem:[#allocation2 + $0x14f] sm:$0xff]
        %v1881 = vld [vmem:[#allocation2 + $0x167] sm:$0xff]
        %v1882 = vld [vmem:[#allocation2 + $0x16f] sm:$0xff]
        %v1883 = vld [vmem:[#allocation2 + $0x187] sm:$0xff]
        %v1884 = vld [vmem:[#allocation2 + $0x18f] sm:$0xff]
        %v1885 = vld [vmem:[#allocation2 + $0x1a7] sm:$0xff]
        %v1886 = vld [vmem:[#allocation2 + $0x1af] sm:$0xff]
        %v1887 = vld [vmem:[#allocation2 + $0x1c7] sm:$0xff]
        %v1888 = vld [vmem:[#allocation2 + $0x1cf] sm:$0xff]
        %v1889 = vld [vmem:[#allocation2 + $0x1e7] sm:$0xff]
        %v1890 = vld [vmem:[#allocation2 + $0x1ef] sm:$0xff]
        %1891 = vst.msk [vmem:[#allocation3] sm:$0xff] %vm1656, %v1859
        %1892 = vst.msk [vmem:[#allocation3 + $0x8] sm:$0xff] %vm1656, %v1860
        %1893 = vst.msk [vmem:[#allocation3 + $0x10] sm:$0xff] %vm1656, %v1861
        %1894 = vst.msk [vmem:[#allocation3 + $0x18] sm:$0xff] %vm1656, %v1862
        %1895 = vst.msk [vmem:[#allocation3 + $0x20] sm:$0xff] %vm1656, %v1863
        %1896 = vst.msk [vmem:[#allocation3 + $0x28] sm:$0xff] %vm1656, %v1864
        %1897 = vst.msk [vmem:[#allocation3 + $0x30] sm:$0xff] %vm1656, %v1865
        %1898 = vst.msk [vmem:[#allocation3 + $0x38] sm:$0xff] %vm1656, %v1866
        %1899 = vst.msk [vmem:[#allocation3 + $0x40] sm:$0xff] %vm1656, %v1867
        %1900 = vst.msk [vmem:[#allocation3 + $0x48] sm:$0xff] %vm1656, %v1868
        %1901 = vst.msk [vmem:[#allocation3 + $0x50] sm:$0xff] %vm1656, %v1869
        %1902 = vst.msk [vmem:[#allocation3 + $0x58] sm:$0xff] %vm1656, %v1870
        %1903 = vst.msk [vmem:[#allocation3 + $0x60] sm:$0xff] %vm1656, %v1871
        %1904 = vst.msk [vmem:[#allocation3 + $0x68] sm:$0xff] %vm1656, %v1872
        %1905 = vst.msk [vmem:[#allocation3 + $0x70] sm:$0xff] %vm1656, %v1873
        %1906 = vst.msk [vmem:[#allocation3 + $0x78] sm:$0xff] %vm1656, %v1874
        %1907 = vst.msk [vmem:[#allocation3 + $0x80] sm:$0xff] %vm1656, %v1875
        %1908 = vst.msk [vmem:[#allocation3 + $0x88] sm:$0xff] %vm1656, %v1876
        %1909 = vst.msk [vmem:[#allocation3 + $0x90] sm:$0xff] %vm1656, %v1877
        %1910 = vst.msk [vmem:[#allocation3 + $0x98] sm:$0xff] %vm1656, %v1878
        %1911 = vst.msk [vmem:[#allocation3 + $0xa0] sm:$0xff] %vm1656, %v1879
        %1912 = vst.msk [vmem:[#allocation3 + $0xa8] sm:$0xff] %vm1656, %v1880
        %1913 = vst.msk [vmem:[#allocation3 + $0xb0] sm:$0xff] %vm1656, %v1881
        %1914 = vst.msk [vmem:[#allocation3 + $0xb8] sm:$0xff] %vm1656, %v1882
        %1915 = vst.msk [vmem:[#allocation3 + $0xc0] sm:$0xff] %vm1656, %v1883
        %1916 = vst.msk [vmem:[#allocation3 + $0xc8] sm:$0xff] %vm1656, %v1884
        %1917 = vst.msk [vmem:[#allocation3 + $0xd0] sm:$0xff] %vm1656, %v1885
        %1918 = vst.msk [vmem:[#allocation3 + $0xd8] sm:$0xff] %vm1656, %v1886
        %1919 = vst.msk [vmem:[#allocation3 + $0xe0] sm:$0xff] %vm1656, %v1887
        %1920 = vst.msk [vmem:[#allocation3 + $0xe8] sm:$0xff] %vm1656, %v1888
        %1921 = vst.msk [vmem:[#allocation3 + $0xf0] sm:$0xff] %vm1656, %v1889
        %1922 = vst.msk [vmem:[#allocation3 + $0xf8] sm:$0xff] %vm1656, %v1890
        %v1923 = vld [vmem:[#allocation2 + $0x8] sm:$0xff]
        %v1924 = vld [vmem:[#allocation2 + $0x10] sm:$0xff]
        %v1925 = vld [vmem:[#allocation2 + $0x28] sm:$0xff]
        %v1926 = vld [vmem:[#allocation2 + $0x30] sm:$0xff]
        %v1927 = vld [vmem:[#allocation2 + $0x48] sm:$0xff]
        %v1928 = vld [vmem:[#allocation2 + $0x50] sm:$0xff]
        %v1929 = vld [vmem:[#allocation2 + $0x68] sm:$0xff]
        %v1930 = vld [vmem:[#allocation2 + $0x70] sm:$0xff]
        %v1931 = vld [vmem:[#allocation2 + $0x88] sm:$0xff]
        %v1932 = vld [vmem:[#allocation2 + $0x90] sm:$0xff]
        %v1933 = vld [vmem:[#allocation2 + $0xa8] sm:$0xff]
        %v1934 = vld [vmem:[#allocation2 + $0xb0] sm:$0xff]
        %v1935 = vld [vmem:[#allocation2 + $0xc8] sm:$0xff]
        %v1936 = vld [vmem:[#allocation2 + $0xd0] sm:$0xff]
        %v1937 = vld [vmem:[#allocation2 + $0xe8] sm:$0xff]
        %v1938 = vld [vmem:[#allocation2 + $0xf0] sm:$0xff]
        %v1939 = vld [vmem:[#allocation2 + $0x108] sm:$0xff]
        %v1940 = vld [vmem:[#allocation2 + $0x110] sm:$0xff]
        %v1941 = vld [vmem:[#allocation2 + $0x128] sm:$0xff]
        %v1942 = vld [vmem:[#allocation2 + $0x130] sm:$0xff]
        %v1943 = vld [vmem:[#allocation2 + $0x148] sm:$0xff]
        %v1944 = vld [vmem:[#allocation2 + $0x150] sm:$0xff]
        %v1945 = vld [vmem:[#allocation2 + $0x168] sm:$0xff]
        %v1946 = vld [vmem:[#allocation2 + $0x170] sm:$0xff]
        %v1947 = vld [vmem:[#allocation2 + $0x188] sm:$0xff]
        %v1948 = vld [vmem:[#allocation2 + $0x190] sm:$0xff]
        %v1949 = vld [vmem:[#allocation2 + $0x1a8] sm:$0xff]
        %v1950 = vld [vmem:[#allocation2 + $0x1b0] sm:$0xff]
        %v1951 = vld [vmem:[#allocation2 + $0x1c8] sm:$0xff]
        %v1952 = vld [vmem:[#allocation2 + $0x1d0] sm:$0xff]
        %v1953 = vld [vmem:[#allocation2 + $0x1e8] sm:$0xff]
        %v1954 = vld [vmem:[#allocation2 + $0x1f0] sm:$0xff]
        %1987 = vrot.lane.b32.xlu0 %v1923, 8
        %v1988 = vpop.permute.xlu0 %1987
        %1989 = vrot.lane.b32.xlu0 %v1924, 8
        %v1990 = vpop.permute.xlu0 %1989
        %1991 = vrot.lane.b32.xlu0 %v1925, 8
        %v1992 = vpop.permute.xlu0 %1991
        %1993 = vrot.lane.b32.xlu0 %v1926, 8
        %v1994 = vpop.permute.xlu0 %1993
        %1995 = vrot.lane.b32.xlu0 %v1927, 8
        %v1996 = vpop.permute.xlu0 %1995
        %1997 = vrot.lane.b32.xlu0 %v1928, 8
        %v1998 = vpop.permute.xlu0 %1997
        %1999 = vrot.lane.b32.xlu0 %v1929, 8
        %v2000 = vpop.permute.xlu0 %1999
        %2001 = vrot.lane.b32.xlu0 %v1930, 8
        %v2002 = vpop.permute.xlu0 %2001
        %2003 = vrot.lane.b32.xlu0 %v1931, 8
        %v2004 = vpop.permute.xlu0 %2003
        %2005 = vrot.lane.b32.xlu0 %v1932, 8
        %v2006 = vpop.permute.xlu0 %2005
        %2007 = vrot.lane.b32.xlu0 %v1933, 8
        %v2008 = vpop.permute.xlu0 %2007
        %2009 = vrot.lane.b32.xlu0 %v1934, 8
        %v2010 = vpop.permute.xlu0 %2009
        %2011 = vrot.lane.b32.xlu0 %v1935, 8
        %v2012 = vpop.permute.xlu0 %2011
        %2013 = vrot.lane.b32.xlu0 %v1936, 8
        %v2014 = vpop.permute.xlu0 %2013
        %2015 = vrot.lane.b32.xlu0 %v1937, 8
        %v2016 = vpop.permute.xlu0 %2015
        %2017 = vrot.lane.b32.xlu0 %v1938, 8
        %v2018 = vpop.permute.xlu0 %2017
        %2019 = vrot.lane.b32.xlu0 %v1939, 8
        %v2020 = vpop.permute.xlu0 %2019
        %2021 = vrot.lane.b32.xlu0 %v1940, 8
        %v2022 = vpop.permute.xlu0 %2021
        %2023 = vrot.lane.b32.xlu0 %v1941, 8
        %v2024 = vpop.permute.xlu0 %2023
        %2025 = vrot.lane.b32.xlu0 %v1942, 8
        %v2026 = vpop.permute.xlu0 %2025
        %2027 = vrot.lane.b32.xlu0 %v1943, 8
        %v2028 = vpop.permute.xlu0 %2027
        %2029 = vrot.lane.b32.xlu0 %v1944, 8
        %v2030 = vpop.permute.xlu0 %2029
        %2031 = vrot.lane.b32.xlu0 %v1945, 8
        %v2032 = vpop.permute.xlu0 %2031
        %2033 = vrot.lane.b32.xlu0 %v1946, 8
        %v2034 = vpop.permute.xlu0 %2033
        %2035 = vrot.lane.b32.xlu0 %v1947, 8
        %v2036 = vpop.permute.xlu0 %2035
        %2037 = vrot.lane.b32.xlu0 %v1948, 8
        %v2038 = vpop.permute.xlu0 %2037
        %2039 = vrot.lane.b32.xlu0 %v1949, 8
        %v2040 = vpop.permute.xlu0 %2039
        %2041 = vrot.lane.b32.xlu0 %v1950, 8
        %v2042 = vpop.permute.xlu0 %2041
        %2043 = vrot.lane.b32.xlu0 %v1951, 8
        %v2044 = vpop.permute.xlu0 %2043
        %2045 = vrot.lane.b32.xlu0 %v1952, 8
        %v2046 = vpop.permute.xlu0 %2045
        %2047 = vrot.lane.b32.xlu0 %v1953, 8
        %v2048 = vpop.permute.xlu0 %2047
        %2049 = vrot.lane.b32.xlu0 %v1954, 8
        %v2050 = vpop.permute.xlu0 %2049
        %vm2083 = vcmask 130112
        %2084 = vst.msk [vmem:[#allocation3] sm:$0xff] %vm2083, %v1988
        %2085 = vst.msk [vmem:[#allocation3 + $0x8] sm:$0xff] %vm2083, %v1990
        %2086 = vst.msk [vmem:[#allocation3 + $0x10] sm:$0xff] %vm2083, %v1992
        %2087 = vst.msk [vmem:[#allocation3 + $0x18] sm:$0xff] %vm2083, %v1994
        %2088 = vst.msk [vmem:[#allocation3 + $0x20] sm:$0xff] %vm2083, %v1996
        %2089 = vst.msk [vmem:[#allocation3 + $0x28] sm:$0xff] %vm2083, %v1998
        %2090 = vst.msk [vmem:[#allocation3 + $0x30] sm:$0xff] %vm2083, %v2000
        %2091 = vst.msk [vmem:[#allocation3 + $0x38] sm:$0xff] %vm2083, %v2002
        %2092 = vst.msk [vmem:[#allocation3 + $0x40] sm:$0xff] %vm2083, %v2004
        %2093 = vst.msk [vmem:[#allocation3 + $0x48] sm:$0xff] %vm2083, %v2006
        %2094 = vst.msk [vmem:[#allocation3 + $0x50] sm:$0xff] %vm2083, %v2008
        %2095 = vst.msk [vmem:[#allocation3 + $0x58] sm:$0xff] %vm2083, %v2010
        %2096 = vst.msk [vmem:[#allocation3 + $0x60] sm:$0xff] %vm2083, %v2012
        %2097 = vst.msk [vmem:[#allocation3 + $0x68] sm:$0xff] %vm2083, %v2014
        %2098 = vst.msk [vmem:[#allocation3 + $0x70] sm:$0xff] %vm2083, %v2016
        %2099 = vst.msk [vmem:[#allocation3 + $0x78] sm:$0xff] %vm2083, %v2018
        %2100 = vst.msk [vmem:[#allocation3 + $0x80] sm:$0xff] %vm2083, %v2020
        %2101 = vst.msk [vmem:[#allocation3 + $0x88] sm:$0xff] %vm2083, %v2022
        %2102 = vst.msk [vmem:[#allocation3 + $0x90] sm:$0xff] %vm2083, %v2024
        %2103 = vst.msk [vmem:[#allocation3 + $0x98] sm:$0xff] %vm2083, %v2026
        %2104 = vst.msk [vmem:[#allocation3 + $0xa0] sm:$0xff] %vm2083, %v2028
        %2105 = vst.msk [vmem:[#allocation3 + $0xa8] sm:$0xff] %vm2083, %v2030
        %2106 = vst.msk [vmem:[#allocation3 + $0xb0] sm:$0xff] %vm2083, %v2032
        %2107 = vst.msk [vmem:[#allocation3 + $0xb8] sm:$0xff] %vm2083, %v2034
        %2108 = vst.msk [vmem:[#allocation3 + $0xc0] sm:$0xff] %vm2083, %v2036
        %2109 = vst.msk [vmem:[#allocation3 + $0xc8] sm:$0xff] %vm2083, %v2038
        %2110 = vst.msk [vmem:[#allocation3 + $0xd0] sm:$0xff] %vm2083, %v2040
        %2111 = vst.msk [vmem:[#allocation3 + $0xd8] sm:$0xff] %vm2083, %v2042
        %2112 = vst.msk [vmem:[#allocation3 + $0xe0] sm:$0xff] %vm2083, %v2044
        %2113 = vst.msk [vmem:[#allocation3 + $0xe8] sm:$0xff] %vm2083, %v2046
        %2114 = vst.msk [vmem:[#allocation3 + $0xf0] sm:$0xff] %vm2083, %v2048
        %2115 = vst.msk [vmem:[#allocation3 + $0xf8] sm:$0xff] %vm2083, %v2050
        %v2116 = vld [vmem:[#allocation2 + $0x9] sm:$0xff]
        %v2117 = vld [vmem:[#allocation2 + $0x11] sm:$0xff]
        %v2118 = vld [vmem:[#allocation2 + $0x29] sm:$0xff]
        %v2119 = vld [vmem:[#allocation2 + $0x31] sm:$0xff]
        %v2120 = vld [vmem:[#allocation2 + $0x49] sm:$0xff]
        %v2121 = vld [vmem:[#allocation2 + $0x51] sm:$0xff]
        %v2122 = vld [vmem:[#allocation2 + $0x69] sm:$0xff]
        %v2123 = vld [vmem:[#allocation2 + $0x71] sm:$0xff]
        %v2124 = vld [vmem:[#allocation2 + $0x89] sm:$0xff]
        %v2125 = vld [vmem:[#allocation2 + $0x91] sm:$0xff]
        %v2126 = vld [vmem:[#allocation2 + $0xa9] sm:$0xff]
        %v2127 = vld [vmem:[#allocation2 + $0xb1] sm:$0xff]
        %v2128 = vld [vmem:[#allocation2 + $0xc9] sm:$0xff]
        %v2129 = vld [vmem:[#allocation2 + $0xd1] sm:$0xff]
        %v2130 = vld [vmem:[#allocation2 + $0xe9] sm:$0xff]
        %v2131 = vld [vmem:[#allocation2 + $0xf1] sm:$0xff]
        %v2132 = vld [vmem:[#allocation2 + $0x109] sm:$0xff]
        %v2133 = vld [vmem:[#allocation2 + $0x111] sm:$0xff]
        %v2134 = vld [vmem:[#allocation2 + $0x129] sm:$0xff]
        %v2135 = vld [vmem:[#allocation2 + $0x131] sm:$0xff]
        %v2136 = vld [vmem:[#allocation2 + $0x149] sm:$0xff]
        %v2137 = vld [vmem:[#allocation2 + $0x151] sm:$0xff]
        %v2138 = vld [vmem:[#allocation2 + $0x169] sm:$0xff]
        %v2139 = vld [vmem:[#allocation2 + $0x171] sm:$0xff]
        %v2140 = vld [vmem:[#allocation2 + $0x189] sm:$0xff]
        %v2141 = vld [vmem:[#allocation2 + $0x191] sm:$0xff]
        %v2142 = vld [vmem:[#allocation2 + $0x1a9] sm:$0xff]
        %v2143 = vld [vmem:[#allocation2 + $0x1b1] sm:$0xff]
        %v2144 = vld [vmem:[#allocation2 + $0x1c9] sm:$0xff]
        %v2145 = vld [vmem:[#allocation2 + $0x1d1] sm:$0xff]
        %v2146 = vld [vmem:[#allocation2 + $0x1e9] sm:$0xff]
        %v2147 = vld [vmem:[#allocation2 + $0x1f1] sm:$0xff]
        %2180 = vrot.lane.b32.xlu0 %v2116, 16
        %v2181 = vpop.permute.xlu0 %2180
        %2182 = vrot.lane.b32.xlu0 %v2117, 16
        %v2183 = vpop.permute.xlu0 %2182
        %2184 = vrot.lane.b32.xlu0 %v2118, 16
        %v2185 = vpop.permute.xlu0 %2184
        %2186 = vrot.lane.b32.xlu0 %v2119, 16
        %v2187 = vpop.permute.xlu0 %2186
        %2188 = vrot.lane.b32.xlu0 %v2120, 16
        %v2189 = vpop.permute.xlu0 %2188
        %2190 = vrot.lane.b32.xlu0 %v2121, 16
        %v2191 = vpop.permute.xlu0 %2190
        %2192 = vrot.lane.b32.xlu0 %v2122, 16
        %v2193 = vpop.permute.xlu0 %2192
        %2194 = vrot.lane.b32.xlu0 %v2123, 16
        %v2195 = vpop.permute.xlu0 %2194
        %2196 = vrot.lane.b32.xlu0 %v2124, 16
        %v2197 = vpop.permute.xlu0 %2196
        %2198 = vrot.lane.b32.xlu0 %v2125, 16
        %v2199 = vpop.permute.xlu0 %2198
        %2200 = vrot.lane.b32.xlu0 %v2126, 16
        %v2201 = vpop.permute.xlu0 %2200
        %2202 = vrot.lane.b32.xlu0 %v2127, 16
        %v2203 = vpop.permute.xlu0 %2202
        %2204 = vrot.lane.b32.xlu0 %v2128, 16
        %v2205 = vpop.permute.xlu0 %2204
        %2206 = vrot.lane.b32.xlu0 %v2129, 16
        %v2207 = vpop.permute.xlu0 %2206
        %2208 = vrot.lane.b32.xlu0 %v2130, 16
        %v2209 = vpop.permute.xlu0 %2208
        %2210 = vrot.lane.b32.xlu0 %v2131, 16
        %v2211 = vpop.permute.xlu0 %2210
        %2212 = vrot.lane.b32.xlu0 %v2132, 16
        %v2213 = vpop.permute.xlu0 %2212
        %2214 = vrot.lane.b32.xlu0 %v2133, 16
        %v2215 = vpop.permute.xlu0 %2214
        %2216 = vrot.lane.b32.xlu0 %v2134, 16
        %v2217 = vpop.permute.xlu0 %2216
        %2218 = vrot.lane.b32.xlu0 %v2135, 16
        %v2219 = vpop.permute.xlu0 %2218
        %2220 = vrot.lane.b32.xlu0 %v2136, 16
        %v2221 = vpop.permute.xlu0 %2220
        %2222 = vrot.lane.b32.xlu0 %v2137, 16
        %v2223 = vpop.permute.xlu0 %2222
        %2224 = vrot.lane.b32.xlu0 %v2138, 16
        %v2225 = vpop.permute.xlu0 %2224
        %2226 = vrot.lane.b32.xlu0 %v2139, 16
        %v2227 = vpop.permute.xlu0 %2226
        %2228 = vrot.lane.b32.xlu0 %v2140, 16
        %v2229 = vpop.permute.xlu0 %2228
        %2230 = vrot.lane.b32.xlu0 %v2141, 16
        %v2231 = vpop.permute.xlu0 %2230
        %2232 = vrot.lane.b32.xlu0 %v2142, 16
        %v2233 = vpop.permute.xlu0 %2232
        %2234 = vrot.lane.b32.xlu0 %v2143, 16
        %v2235 = vpop.permute.xlu0 %2234
        %2236 = vrot.lane.b32.xlu0 %v2144, 16
        %v2237 = vpop.permute.xlu0 %2236
        %2238 = vrot.lane.b32.xlu0 %v2145, 16
        %v2239 = vpop.permute.xlu0 %2238
        %2240 = vrot.lane.b32.xlu0 %v2146, 16
        %v2241 = vpop.permute.xlu0 %2240
        %2242 = vrot.lane.b32.xlu0 %v2147, 16
        %v2243 = vpop.permute.xlu0 %2242
        %vm2276 = vcmask 195712
        %2277 = vst.msk [vmem:[#allocation3] sm:$0xff] %vm2276, %v2181
        %2278 = vst.msk [vmem:[#allocation3 + $0x8] sm:$0xff] %vm2276, %v2183
        %2279 = vst.msk [vmem:[#allocation3 + $0x10] sm:$0xff] %vm2276, %v2185
        %2280 = vst.msk [vmem:[#allocation3 + $0x18] sm:$0xff] %vm2276, %v2187
        %2281 = vst.msk [vmem:[#allocation3 + $0x20] sm:$0xff] %vm2276, %v2189
        %2282 = vst.msk [vmem:[#allocation3 + $0x28] sm:$0xff] %vm2276, %v2191
        %2283 = vst.msk [vmem:[#allocation3 + $0x30] sm:$0xff] %vm2276, %v2193
        %2284 = vst.msk [vmem:[#allocation3 + $0x38] sm:$0xff] %vm2276, %v2195
        %2285 = vst.msk [vmem:[#allocation3 + $0x40] sm:$0xff] %vm2276, %v2197
        %2286 = vst.msk [vmem:[#allocation3 + $0x48] sm:$0xff] %vm2276, %v2199
        %2287 = vst.msk [vmem:[#allocation3 + $0x50] sm:$0xff] %vm2276, %v2201
        %2288 = vst.msk [vmem:[#allocation3 + $0x58] sm:$0xff] %vm2276, %v2203
        %2289 = vst.msk [vmem:[#allocation3 + $0x60] sm:$0xff] %vm2276, %v2205
        %2290 = vst.msk [vmem:[#allocation3 + $0x68] sm:$0xff] %vm2276, %v2207
        %2291 = vst.msk [vmem:[#allocation3 + $0x70] sm:$0xff] %vm2276, %v2209
        %2292 = vst.msk [vmem:[#allocation3 + $0x78] sm:$0xff] %vm2276, %v2211
        %2293 = vst.msk [vmem:[#allocation3 + $0x80] sm:$0xff] %vm2276, %v2213
        %2294 = vst.msk [vmem:[#allocation3 + $0x88] sm:$0xff] %vm2276, %v2215
        %2295 = vst.msk [vmem:[#allocation3 + $0x90] sm:$0xff] %vm2276, %v2217
        %2296 = vst.msk [vmem:[#allocation3 + $0x98] sm:$0xff] %vm2276, %v2219
        %2297 = vst.msk [vmem:[#allocation3 + $0xa0] sm:$0xff] %vm2276, %v2221
        %2298 = vst.msk [vmem:[#allocation3 + $0xa8] sm:$0xff] %vm2276, %v2223
        %2299 = vst.msk [vmem:[#allocation3 + $0xb0] sm:$0xff] %vm2276, %v2225
        %2300 = vst.msk [vmem:[#allocation3 + $0xb8] sm:$0xff] %vm2276, %v2227
        %2301 = vst.msk [vmem:[#allocation3 + $0xc0] sm:$0xff] %vm2276, %v2229
        %2302 = vst.msk [vmem:[#allocation3 + $0xc8] sm:$0xff] %vm2276, %v2231
        %2303 = vst.msk [vmem:[#allocation3 + $0xd0] sm:$0xff] %vm2276, %v2233
        %2304 = vst.msk [vmem:[#allocation3 + $0xd8] sm:$0xff] %vm2276, %v2235
        %2305 = vst.msk [vmem:[#allocation3 + $0xe0] sm:$0xff] %vm2276, %v2237
        %2306 = vst.msk [vmem:[#allocation3 + $0xe8] sm:$0xff] %vm2276, %v2239
        %2307 = vst.msk [vmem:[#allocation3 + $0xf0] sm:$0xff] %vm2276, %v2241
        %2308 = vst.msk [vmem:[#allocation3 + $0xf8] sm:$0xff] %vm2276, %v2243
        %v2309 = vld [vmem:[%s1665 + $0x7] sm:$0xff]
        %v2310 = vld [vmem:[%s1665 + $0xf] sm:$0xff]
        %v2311 = vld [vmem:[%s1665 + $0x27] sm:$0xff]
        %v2312 = vld [vmem:[%s1665 + $0x2f] sm:$0xff]
        %v2313 = vld [vmem:[%s1665 + $0x47] sm:$0xff]
        %v2314 = vld [vmem:[%s1665 + $0x4f] sm:$0xff]
        %v2315 = vld [vmem:[%s1665 + $0x67] sm:$0xff]
        %v2316 = vld [vmem:[%s1665 + $0x6f] sm:$0xff]
        %v2317 = vld [vmem:[%s1665 + $0x87] sm:$0xff]
        %v2318 = vld [vmem:[%s1665 + $0x8f] sm:$0xff]
        %v2319 = vld [vmem:[%s1665 + $0xa7] sm:$0xff]
        %v2320 = vld [vmem:[%s1665 + $0xaf] sm:$0xff]
        %v2321 = vld [vmem:[%s1665 + $0xc7] sm:$0xff]
        %v2322 = vld [vmem:[%s1665 + $0xcf] sm:$0xff]
        %v2323 = vld [vmem:[%s1665 + $0xe7] sm:$0xff]
        %v2324 = vld [vmem:[%s1665 + $0xef] sm:$0xff]
        %v2325 = vld [vmem:[%s1665 + $0x107] sm:$0xff]
        %v2326 = vld [vmem:[%s1665 + $0x10f] sm:$0xff]
        %v2327 = vld [vmem:[%s1665 + $0x127] sm:$0xff]
        %v2328 = vld [vmem:[%s1665 + $0x12f] sm:$0xff]
        %v2329 = vld [vmem:[%s1665 + $0x147] sm:$0xff]
        %v2330 = vld [vmem:[%s1665 + $0x14f] sm:$0xff]
        %v2331 = vld [vmem:[%s1665 + $0x167] sm:$0xff]
        %v2332 = vld [vmem:[%s1665 + $0x16f] sm:$0xff]
        %v2333 = vld [vmem:[%s1665 + $0x187] sm:$0xff]
        %v2334 = vld [vmem:[%s1665 + $0x18f] sm:$0xff]
        %v2335 = vld [vmem:[%s1665 + $0x1a7] sm:$0xff]
        %v2336 = vld [vmem:[%s1665 + $0x1af] sm:$0xff]
        %v2337 = vld [vmem:[%s1665 + $0x1c7] sm:$0xff]
        %v2338 = vld [vmem:[%s1665 + $0x1cf] sm:$0xff]
        %v2339 = vld [vmem:[%s1665 + $0x1e7] sm:$0xff]
        %v2340 = vld [vmem:[%s1665 + $0x1ef] sm:$0xff]
        %2373 = vrot.lane.b32.xlu0 %v2309, 24
        %v2374 = vpop.permute.xlu0 %2373
        %2375 = vrot.lane.b32.xlu0 %v2310, 24
        %v2376 = vpop.permute.xlu0 %2375
        %2377 = vrot.lane.b32.xlu0 %v2311, 24
        %v2378 = vpop.permute.xlu0 %2377
        %2379 = vrot.lane.b32.xlu0 %v2312, 24
        %v2380 = vpop.permute.xlu0 %2379
        %2381 = vrot.lane.b32.xlu0 %v2313, 24
        %v2382 = vpop.permute.xlu0 %2381
        %2383 = vrot.lane.b32.xlu0 %v2314, 24
        %v2384 = vpop.permute.xlu0 %2383
        %2385 = vrot.lane.b32.xlu0 %v2315, 24
        %v2386 = vpop.permute.xlu0 %2385
        %2387 = vrot.lane.b32.xlu0 %v2316, 24
        %v2388 = vpop.permute.xlu0 %2387
        %2389 = vrot.lane.b32.xlu0 %v2317, 24
        %v2390 = vpop.permute.xlu0 %2389
        %2391 = vrot.lane.b32.xlu0 %v2318, 24
        %v2392 = vpop.permute.xlu0 %2391
        %2393 = vrot.lane.b32.xlu0 %v2319, 24
        %v2394 = vpop.permute.xlu0 %2393
        %2395 = vrot.lane.b32.xlu0 %v2320, 24
        %v2396 = vpop.permute.xlu0 %2395
        %2397 = vrot.lane.b32.xlu0 %v2321, 24
        %v2398 = vpop.permute.xlu0 %2397
        %2399 = vrot.lane.b32.xlu0 %v2322, 24
        %v2400 = vpop.permute.xlu0 %2399
        %2401 = vrot.lane.b32.xlu0 %v2323, 24
        %v2402 = vpop.permute.xlu0 %2401
        %2403 = vrot.lane.b32.xlu0 %v2324, 24
        %v2404 = vpop.permute.xlu0 %2403
        %2405 = vrot.lane.b32.xlu0 %v2325, 24
        %v2406 = vpop.permute.xlu0 %2405
        %2407 = vrot.lane.b32.xlu0 %v2326, 24
        %v2408 = vpop.permute.xlu0 %2407
        %2409 = vrot.lane.b32.xlu0 %v2327, 24
        %v2410 = vpop.permute.xlu0 %2409
        %2411 = vrot.lane.b32.xlu0 %v2328, 24
        %v2412 = vpop.permute.xlu0 %2411
        %2413 = vrot.lane.b32.xlu0 %v2329, 24
        %v2414 = vpop.permute.xlu0 %2413
        %2415 = vrot.lane.b32.xlu0 %v2330, 24
        %v2416 = vpop.permute.xlu0 %2415
        %2417 = vrot.lane.b32.xlu0 %v2331, 24
        %v2418 = vpop.permute.xlu0 %2417
        %2419 = vrot.lane.b32.xlu0 %v2332, 24
        %v2420 = vpop.permute.xlu0 %2419
        %2421 = vrot.lane.b32.xlu0 %v2333, 24
        %v2422 = vpop.permute.xlu0 %2421
        %2423 = vrot.lane.b32.xlu0 %v2334, 24
        %v2424 = vpop.permute.xlu0 %2423
        %2425 = vrot.lane.b32.xlu0 %v2335, 24
        %v2426 = vpop.permute.xlu0 %2425
        %2427 = vrot.lane.b32.xlu0 %v2336, 24
        %v2428 = vpop.permute.xlu0 %2427
        %2429 = vrot.lane.b32.xlu0 %v2337, 24
        %v2430 = vpop.permute.xlu0 %2429
        %2431 = vrot.lane.b32.xlu0 %v2338, 24
        %v2432 = vpop.permute.xlu0 %2431
        %2433 = vrot.lane.b32.xlu0 %v2339, 24
        %v2434 = vpop.permute.xlu0 %2433
        %2435 = vrot.lane.b32.xlu0 %v2340, 24
        %v2436 = vpop.permute.xlu0 %2435
        %vm2469 = vcmask 261312
        %2470 = vst.msk [vmem:[#allocation3] sm:$0xff] %vm2469, %v2374
        %2471 = vst.msk [vmem:[#allocation3 + $0x8] sm:$0xff] %vm2469, %v2376
        %2472 = vst.msk [vmem:[#allocation3 + $0x10] sm:$0xff] %vm2469, %v2378
        %2473 = vst.msk [vmem:[#allocation3 + $0x18] sm:$0xff] %vm2469, %v2380
        %2474 = vst.msk [vmem:[#allocation3 + $0x20] sm:$0xff] %vm2469, %v2382
        %2475 = vst.msk [vmem:[#allocation3 + $0x28] sm:$0xff] %vm2469, %v2384
        %2476 = vst.msk [vmem:[#allocation3 + $0x30] sm:$0xff] %vm2469, %v2386
        %2477 = vst.msk [vmem:[#allocation3 + $0x38] sm:$0xff] %vm2469, %v2388
        %2478 = vst.msk [vmem:[#allocation3 + $0x40] sm:$0xff] %vm2469, %v2390
        %2479 = vst.msk [vmem:[#allocation3 + $0x48] sm:$0xff] %vm2469, %v2392
        %2480 = vst.msk [vmem:[#allocation3 + $0x50] sm:$0xff] %vm2469, %v2394
        %2481 = vst.msk [vmem:[#allocation3 + $0x58] sm:$0xff] %vm2469, %v2396
        %2482 = vst.msk [vmem:[#allocation3 + $0x60] sm:$0xff] %vm2469, %v2398
        %2483 = vst.msk [vmem:[#allocation3 + $0x68] sm:$0xff] %vm2469, %v2400
        %2484 = vst.msk [vmem:[#allocation3 + $0x70] sm:$0xff] %vm2469, %v2402
        %2485 = vst.msk [vmem:[#allocation3 + $0x78] sm:$0xff] %vm2469, %v2404
        %2486 = vst.msk [vmem:[#allocation3 + $0x80] sm:$0xff] %vm2469, %v2406
        %2487 = vst.msk [vmem:[#allocation3 + $0x88] sm:$0xff] %vm2469, %v2408
        %2488 = vst.msk [vmem:[#allocation3 + $0x90] sm:$0xff] %vm2469, %v2410
        %2489 = vst.msk [vmem:[#allocation3 + $0x98] sm:$0xff] %vm2469, %v2412
        %2490 = vst.msk [vmem:[#allocation3 + $0xa0] sm:$0xff] %vm2469, %v2414
        %2491 = vst.msk [vmem:[#allocation3 + $0xa8] sm:$0xff] %vm2469, %v2416
        %2492 = vst.msk [vmem:[#allocation3 + $0xb0] sm:$0xff] %vm2469, %v2418
        %2493 = vst.msk [vmem:[#allocation3 + $0xb8] sm:$0xff] %vm2469, %v2420
        %2494 = vst.msk [vmem:[#allocation3 + $0xc0] sm:$0xff] %vm2469, %v2422
        %2495 = vst.msk [vmem:[#allocation3 + $0xc8] sm:$0xff] %vm2469, %v2424
        %2496 = vst.msk [vmem:[#allocation3 + $0xd0] sm:$0xff] %vm2469, %v2426
        %2497 = vst.msk [vmem:[#allocation3 + $0xd8] sm:$0xff] %vm2469, %v2428
        %2498 = vst.msk [vmem:[#allocation3 + $0xe0] sm:$0xff] %vm2469, %v2430
        %2499 = vst.msk [vmem:[#allocation3 + $0xe8] sm:$0xff] %vm2469, %v2432
        %2500 = vst.msk [vmem:[#allocation3 + $0xf0] sm:$0xff] %vm2469, %v2434
        %2501 = vst.msk [vmem:[#allocation3 + $0xf8] sm:$0xff] %vm2469, %v2436
        %v2502 = vld [vmem:[%s1665 + $0x8] sm:$0xff]
        %v2503 = vld [vmem:[%s1665 + $0x10] sm:$0xff]
        %v2504 = vld [vmem:[%s1665 + $0x28] sm:$0xff]
        %v2505 = vld [vmem:[%s1665 + $0x30] sm:$0xff]
        %v2506 = vld [vmem:[%s1665 + $0x48] sm:$0xff]
        %v2507 = vld [vmem:[%s1665 + $0x50] sm:$0xff]
        %v2508 = vld [vmem:[%s1665 + $0x68] sm:$0xff]
        %v2509 = vld [vmem:[%s1665 + $0x70] sm:$0xff]
        %v2510 = vld [vmem:[%s1665 + $0x88] sm:$0xff]
        %v2511 = vld [vmem:[%s1665 + $0x90] sm:$0xff]
        %v2512 = vld [vmem:[%s1665 + $0xa8] sm:$0xff]
        %v2513 = vld [vmem:[%s1665 + $0xb0] sm:$0xff]
        %v2514 = vld [vmem:[%s1665 + $0xc8] sm:$0xff]
        %v2515 = vld [vmem:[%s1665 + $0xd0] sm:$0xff]
        %v2516 = vld [vmem:[%s1665 + $0xe8] sm:$0xff]
        %v2517 = vld [vmem:[%s1665 + $0xf0] sm:$0xff]
        %v2518 = vld [vmem:[%s1665 + $0x108] sm:$0xff]
        %v2519 = vld [vmem:[%s1665 + $0x110] sm:$0xff]
        %v2520 = vld [vmem:[%s1665 + $0x128] sm:$0xff]
        %v2521 = vld [vmem:[%s1665 + $0x130] sm:$0xff]
        %v2522 = vld [vmem:[%s1665 + $0x148] sm:$0xff]
        %v2523 = vld [vmem:[%s1665 + $0x150] sm:$0xff]
        %v2524 = vld [vmem:[%s1665 + $0x168] sm:$0xff]
        %v2525 = vld [vmem:[%s1665 + $0x170] sm:$0xff]
        %v2526 = vld [vmem:[%s1665 + $0x188] sm:$0xff]
        %v2527 = vld [vmem:[%s1665 + $0x190] sm:$0xff]
        %v2528 = vld [vmem:[%s1665 + $0x1a8] sm:$0xff]
        %v2529 = vld [vmem:[%s1665 + $0x1b0] sm:$0xff]
        %v2530 = vld [vmem:[%s1665 + $0x1c8] sm:$0xff]
        %v2531 = vld [vmem:[%s1665 + $0x1d0] sm:$0xff]
        %v2532 = vld [vmem:[%s1665 + $0x1e8] sm:$0xff]
        %v2533 = vld [vmem:[%s1665 + $0x1f0] sm:$0xff]
        %2566 = vrot.lane.b32.xlu0 %v2502, 32
        %v2567 = vpop.permute.xlu0 %2566
        %2568 = vrot.lane.b32.xlu0 %v2503, 32
        %v2569 = vpop.permute.xlu0 %2568
        %2570 = vrot.lane.b32.xlu0 %v2504, 32
        %v2571 = vpop.permute.xlu0 %2570
        %2572 = vrot.lane.b32.xlu0 %v2505, 32
        %v2573 = vpop.permute.xlu0 %2572
        %2574 = vrot.lane.b32.xlu0 %v2506, 32
        %v2575 = vpop.permute.xlu0 %2574
        %2576 = vrot.lane.b32.xlu0 %v2507, 32
        %v2577 = vpop.permute.xlu0 %2576
        %2578 = vrot.lane.b32.xlu0 %v2508, 32
        %v2579 = vpop.permute.xlu0 %2578
        %2580 = vrot.lane.b32.xlu0 %v2509, 32
        %v2581 = vpop.permute.xlu0 %2580
        %2582 = vrot.lane.b32.xlu0 %v2510, 32
        %v2583 = vpop.permute.xlu0 %2582
        %2584 = vrot.lane.b32.xlu0 %v2511, 32
        %v2585 = vpop.permute.xlu0 %2584
        %2586 = vrot.lane.b32.xlu0 %v2512, 32
        %v2587 = vpop.permute.xlu0 %2586
        %2588 = vrot.lane.b32.xlu0 %v2513, 32
        %v2589 = vpop.permute.xlu0 %2588
        %2590 = vrot.lane.b32.xlu0 %v2514, 32
        %v2591 = vpop.permute.xlu0 %2590
        %2592 = vrot.lane.b32.xlu0 %v2515, 32
        %v2593 = vpop.permute.xlu0 %2592
        %2594 = vrot.lane.b32.xlu0 %v2516, 32
        %v2595 = vpop.permute.xlu0 %2594
        %2596 = vrot.lane.b32.xlu0 %v2517, 32
        %v2597 = vpop.permute.xlu0 %2596
        %2598 = vrot.lane.b32.xlu0 %v2518, 32
        %v2599 = vpop.permute.xlu0 %2598
        %2600 = vrot.lane.b32.xlu0 %v2519, 32
        %v2601 = vpop.permute.xlu0 %2600
        %2602 = vrot.lane.b32.xlu0 %v2520, 32
        %v2603 = vpop.permute.xlu0 %2602
        %2604 = vrot.lane.b32.xlu0 %v2521, 32
        %v2605 = vpop.permute.xlu0 %2604
        %2606 = vrot.lane.b32.xlu0 %v2522, 32
        %v2607 = vpop.permute.xlu0 %2606
        %2608 = vrot.lane.b32.xlu0 %v2523, 32
        %v2609 = vpop.permute.xlu0 %2608
        %2610 = vrot.lane.b32.xlu0 %v2524, 32
        %v2611 = vpop.permute.xlu0 %2610
        %2612 = vrot.lane.b32.xlu0 %v2525, 32
        %v2613 = vpop.permute.xlu0 %2612
        %2614 = vrot.lane.b32.xlu0 %v2526, 32
        %v2615 = vpop.permute.xlu0 %2614
        %2616 = vrot.lane.b32.xlu0 %v2527, 32
        %v2617 = vpop.permute.xlu0 %2616
        %2618 = vrot.lane.b32.xlu0 %v2528, 32
        %v2619 = vpop.permute.xlu0 %2618
        %2620 = vrot.lane.b32.xlu0 %v2529, 32
        %v2621 = vpop.permute.xlu0 %2620
        %2622 = vrot.lane.b32.xlu0 %v2530, 32
        %v2623 = vpop.permute.xlu0 %2622
        %2624 = vrot.lane.b32.xlu0 %v2531, 32
        %v2625 = vpop.permute.xlu0 %2624
        %2626 = vrot.lane.b32.xlu0 %v2532, 32
        %v2627 = vpop.permute.xlu0 %2626
        %2628 = vrot.lane.b32.xlu0 %v2533, 32
        %v2629 = vpop.permute.xlu0 %2628
        %vm2662 = vcmask 326912
        %2663 = vst.msk [vmem:[#allocation3] sm:$0xff] %vm2662, %v2567
        %2664 = vst.msk [vmem:[#allocation3 + $0x8] sm:$0xff] %vm2662, %v2569
        %2665 = vst.msk [vmem:[#allocation3 + $0x10] sm:$0xff] %vm2662, %v2571
        %2666 = vst.msk [vmem:[#allocation3 + $0x18] sm:$0xff] %vm2662, %v2573
        %2667 = vst.msk [vmem:[#allocation3 + $0x20] sm:$0xff] %vm2662, %v2575
        %2668 = vst.msk [vmem:[#allocation3 + $0x28] sm:$0xff] %vm2662, %v2577
        %2669 = vst.msk [vmem:[#allocation3 + $0x30] sm:$0xff] %vm2662, %v2579
        %2670 = vst.msk [vmem:[#allocation3 + $0x38] sm:$0xff] %vm2662, %v2581
        %2671 = vst.msk [vmem:[#allocation3 + $0x40] sm:$0xff] %vm2662, %v2583
        %2672 = vst.msk [vmem:[#allocation3 + $0x48] sm:$0xff] %vm2662, %v2585
        %2673 = vst.msk [vmem:[#allocation3 + $0x50] sm:$0xff] %vm2662, %v2587
        %2674 = vst.msk [vmem:[#allocation3 + $0x58] sm:$0xff] %vm2662, %v2589
        %2675 = vst.msk [vmem:[#allocation3 + $0x60] sm:$0xff] %vm2662, %v2591
        %2676 = vst.msk [vmem:[#allocation3 + $0x68] sm:$0xff] %vm2662, %v2593
        %2677 = vst.msk [vmem:[#allocation3 + $0x70] sm:$0xff] %vm2662, %v2595
        %2678 = vst.msk [vmem:[#allocation3 + $0x78] sm:$0xff] %vm2662, %v2597
        %2679 = vst.msk [vmem:[#allocation3 + $0x80] sm:$0xff] %vm2662, %v2599
        %2680 = vst.msk [vmem:[#allocation3 + $0x88] sm:$0xff] %vm2662, %v2601
        %2681 = vst.msk [vmem:[#allocation3 + $0x90] sm:$0xff] %vm2662, %v2603
        %2682 = vst.msk [vmem:[#allocation3 + $0x98] sm:$0xff] %vm2662, %v2605
        %2683 = vst.msk [vmem:[#allocation3 + $0xa0] sm:$0xff] %vm2662, %v2607
        %2684 = vst.msk [vmem:[#allocation3 + $0xa8] sm:$0xff] %vm2662, %v2609
        %2685 = vst.msk [vmem:[#allocation3 + $0xb0] sm:$0xff] %vm2662, %v2611
        %2686 = vst.msk [vmem:[#allocation3 + $0xb8] sm:$0xff] %vm2662, %v2613
        %2687 = vst.msk [vmem:[#allocation3 + $0xc0] sm:$0xff] %vm2662, %v2615
        %2688 = vst.msk [vmem:[#allocation3 + $0xc8] sm:$0xff] %vm2662, %v2617
        %2689 = vst.msk [vmem:[#allocation3 + $0xd0] sm:$0xff] %vm2662, %v2619
        %2690 = vst.msk [vmem:[#allocation3 + $0xd8] sm:$0xff] %vm2662, %v2621
        %2691 = vst.msk [vmem:[#allocation3 + $0xe0] sm:$0xff] %vm2662, %v2623
        %2692 = vst.msk [vmem:[#allocation3 + $0xe8] sm:$0xff] %vm2662, %v2625
        %2693 = vst.msk [vmem:[#allocation3 + $0xf0] sm:$0xff] %vm2662, %v2627
        %2694 = vst.msk [vmem:[#allocation3 + $0xf8] sm:$0xff] %vm2662, %v2629
        %v2695 = vld [vmem:[%s1665 + $0x9] sm:$0xff]
        %v2696 = vld [vmem:[%s1665 + $0x11] sm:$0xff]
        %v2697 = vld [vmem:[%s1665 + $0x29] sm:$0xff]
        %v2698 = vld [vmem:[%s1665 + $0x31] sm:$0xff]
        %v2699 = vld [vmem:[%s1665 + $0x49] sm:$0xff]
        %v2700 = vld [vmem:[%s1665 + $0x51] sm:$0xff]
        %v2701 = vld [vmem:[%s1665 + $0x69] sm:$0xff]
        %v2702 = vld [vmem:[%s1665 + $0x71] sm:$0xff]
        %v2703 = vld [vmem:[%s1665 + $0x89] sm:$0xff]
        %v2704 = vld [vmem:[%s1665 + $0x91] sm:$0xff]
        %v2705 = vld [vmem:[%s1665 + $0xa9] sm:$0xff]
        %v2706 = vld [vmem:[%s1665 + $0xb1] sm:$0xff]
        %v2707 = vld [vmem:[%s1665 + $0xc9] sm:$0xff]
        %v2708 = vld [vmem:[%s1665 + $0xd1] sm:$0xff]
        %v2709 = vld [vmem:[%s1665 + $0xe9] sm:$0xff]
        %v2710 = vld [vmem:[%s1665 + $0xf1] sm:$0xff]
        %v2711 = vld [vmem:[%s1665 + $0x109] sm:$0xff]
        %v2712 = vld [vmem:[%s1665 + $0x111] sm:$0xff]
        %v2713 = vld [vmem:[%s1665 + $0x129] sm:$0xff]
        %v2714 = vld [vmem:[%s1665 + $0x131] sm:$0xff]
        %v2715 = vld [vmem:[%s1665 + $0x149] sm:$0xff]
        %v2716 = vld [vmem:[%s1665 + $0x151] sm:$0xff]
        %v2717 = vld [vmem:[%s1665 + $0x169] sm:$0xff]
        %v2718 = vld [vmem:[%s1665 + $0x171] sm:$0xff]
        %v2719 = vld [vmem:[%s1665 + $0x189] sm:$0xff]
        %v2720 = vld [vmem:[%s1665 + $0x191] sm:$0xff]
        %v2721 = vld [vmem:[%s1665 + $0x1a9] sm:$0xff]
        %v2722 = vld [vmem:[%s1665 + $0x1b1] sm:$0xff]
        %v2723 = vld [vmem:[%s1665 + $0x1c9] sm:$0xff]
        %v2724 = vld [vmem:[%s1665 + $0x1d1] sm:$0xff]
        %v2725 = vld [vmem:[%s1665 + $0x1e9] sm:$0xff]
        %v2726 = vld [vmem:[%s1665 + $0x1f1] sm:$0xff]
        %2759 = vrot.lane.b32.xlu0 %v2695, 40
        %v2760 = vpop.permute.xlu0 %2759
        %2761 = vrot.lane.b32.xlu0 %v2696, 40
        %v2762 = vpop.permute.xlu0 %2761
        %2763 = vrot.lane.b32.xlu0 %v2697, 40
        %v2764 = vpop.permute.xlu0 %2763
        %2765 = vrot.lane.b32.xlu0 %v2698, 40
        %v2766 = vpop.permute.xlu0 %2765
        %2767 = vrot.lane.b32.xlu0 %v2699, 40
        %v2768 = vpop.permute.xlu0 %2767
        %2769 = vrot.lane.b32.xlu0 %v2700, 40
        %v2770 = vpop.permute.xlu0 %2769
        %2771 = vrot.lane.b32.xlu0 %v2701, 40
        %v2772 = vpop.permute.xlu0 %2771
        %2773 = vrot.lane.b32.xlu0 %v2702, 40
        %v2774 = vpop.permute.xlu0 %2773
        %2775 = vrot.lane.b32.xlu0 %v2703, 40
        %v2776 = vpop.permute.xlu0 %2775
        %2777 = vrot.lane.b32.xlu0 %v2704, 40
        %v2778 = vpop.permute.xlu0 %2777
        %2779 = vrot.lane.b32.xlu0 %v2705, 40
        %v2780 = vpop.permute.xlu0 %2779
        %2781 = vrot.lane.b32.xlu0 %v2706, 40
        %v2782 = vpop.permute.xlu0 %2781
        %2783 = vrot.lane.b32.xlu0 %v2707, 40
        %v2784 = vpop.permute.xlu0 %2783
        %2785 = vrot.lane.b32.xlu0 %v2708, 40
        %v2786 = vpop.permute.xlu0 %2785
        %2787 = vrot.lane.b32.xlu0 %v2709, 40
        %v2788 = vpop.permute.xlu0 %2787
        %2789 = vrot.lane.b32.xlu0 %v2710, 40
        %v2790 = vpop.permute.xlu0 %2789
        %2791 = vrot.lane.b32.xlu0 %v2711, 40
        %v2792 = vpop.permute.xlu0 %2791
        %2793 = vrot.lane.b32.xlu0 %v2712, 40
        %v2794 = vpop.permute.xlu0 %2793
        %2795 = vrot.lane.b32.xlu0 %v2713, 40
        %v2796 = vpop.permute.xlu0 %2795
        %2797 = vrot.lane.b32.xlu0 %v2714, 40
        %v2798 = vpop.permute.xlu0 %2797
        %2799 = vrot.lane.b32.xlu0 %v2715, 40
        %v2800 = vpop.permute.xlu0 %2799
        %2801 = vrot.lane.b32.xlu0 %v2716, 40
        %v2802 = vpop.permute.xlu0 %2801
        %2803 = vrot.lane.b32.xlu0 %v2717, 40
        %v2804 = vpop.permute.xlu0 %2803
        %2805 = vrot.lane.b32.xlu0 %v2718, 40
        %v2806 = vpop.permute.xlu0 %2805
        %2807 = vrot.lane.b32.xlu0 %v2719, 40
        %v2808 = vpop.permute.xlu0 %2807
        %2809 = vrot.lane.b32.xlu0 %v2720, 40
        %v2810 = vpop.permute.xlu0 %2809
        %2811 = vrot.lane.b32.xlu0 %v2721, 40
        %v2812 = vpop.permute.xlu0 %2811
        %2813 = vrot.lane.b32.xlu0 %v2722, 40
        %v2814 = vpop.permute.xlu0 %2813
        %2815 = vrot.lane.b32.xlu0 %v2723, 40
        %v2816 = vpop.permute.xlu0 %2815
        %2817 = vrot.lane.b32.xlu0 %v2724, 40
        %v2818 = vpop.permute.xlu0 %2817
        %2819 = vrot.lane.b32.xlu0 %v2725, 40
        %v2820 = vpop.permute.xlu0 %2819
        %2821 = vrot.lane.b32.xlu0 %v2726, 40
        %v2822 = vpop.permute.xlu0 %2821
        %vm2855 = vcmask 392512
        %2856 = vst.msk [vmem:[#allocation3] sm:$0xff] %vm2855, %v2760
        %2857 = vst.msk [vmem:[#allocation3 + $0x8] sm:$0xff] %vm2855, %v2762
        %2858 = vst.msk [vmem:[#allocation3 + $0x10] sm:$0xff] %vm2855, %v2764
        %2859 = vst.msk [vmem:[#allocation3 + $0x18] sm:$0xff] %vm2855, %v2766
        %2860 = vst.msk [vmem:[#allocation3 + $0x20] sm:$0xff] %vm2855, %v2768
        %2861 = vst.msk [vmem:[#allocation3 + $0x28] sm:$0xff] %vm2855, %v2770
        %2862 = vst.msk [vmem:[#allocation3 + $0x30] sm:$0xff] %vm2855, %v2772
        %2863 = vst.msk [vmem:[#allocation3 + $0x38] sm:$0xff] %vm2855, %v2774
        %2864 = vst.msk [vmem:[#allocation3 + $0x40] sm:$0xff] %vm2855, %v2776
        %2865 = vst.msk [vmem:[#allocation3 + $0x48] sm:$0xff] %vm2855, %v2778
        %2866 = vst.msk [vmem:[#allocation3 + $0x50] sm:$0xff] %vm2855, %v2780
        %2867 = vst.msk [vmem:[#allocation3 + $0x58] sm:$0xff] %vm2855, %v2782
        %2868 = vst.msk [vmem:[#allocation3 + $0x60] sm:$0xff] %vm2855, %v2784
        %2869 = vst.msk [vmem:[#allocation3 + $0x68] sm:$0xff] %vm2855, %v2786
        %2870 = vst.msk [vmem:[#allocation3 + $0x70] sm:$0xff] %vm2855, %v2788
        %2871 = vst.msk [vmem:[#allocation3 + $0x78] sm:$0xff] %vm2855, %v2790
        %2872 = vst.msk [vmem:[#allocation3 + $0x80] sm:$0xff] %vm2855, %v2792
        %2873 = vst.msk [vmem:[#allocation3 + $0x88] sm:$0xff] %vm2855, %v2794
        %2874 = vst.msk [vmem:[#allocation3 + $0x90] sm:$0xff] %vm2855, %v2796
        %2875 = vst.msk [vmem:[#allocation3 + $0x98] sm:$0xff] %vm2855, %v2798
        %2876 = vst.msk [vmem:[#allocation3 + $0xa0] sm:$0xff] %vm2855, %v2800
        %2877 = vst.msk [vmem:[#allocation3 + $0xa8] sm:$0xff] %vm2855, %v2802
        %2878 = vst.msk [vmem:[#allocation3 + $0xb0] sm:$0xff] %vm2855, %v2804
        %2879 = vst.msk [vmem:[#allocation3 + $0xb8] sm:$0xff] %vm2855, %v2806
        %2880 = vst.msk [vmem:[#allocation3 + $0xc0] sm:$0xff] %vm2855, %v2808
        %2881 = vst.msk [vmem:[#allocation3 + $0xc8] sm:$0xff] %vm2855, %v2810
        %2882 = vst.msk [vmem:[#allocation3 + $0xd0] sm:$0xff] %vm2855, %v2812
        %2883 = vst.msk [vmem:[#allocation3 + $0xd8] sm:$0xff] %vm2855, %v2814
        %2884 = vst.msk [vmem:[#allocation3 + $0xe0] sm:$0xff] %vm2855, %v2816
        %2885 = vst.msk [vmem:[#allocation3 + $0xe8] sm:$0xff] %vm2855, %v2818
        %2886 = vst.msk [vmem:[#allocation3 + $0xf0] sm:$0xff] %vm2855, %v2820
        %2887 = vst.msk [vmem:[#allocation3 + $0xf8] sm:$0xff] %vm2855, %v2822
        %s2888 = scalar_lea.vmem [#allocation2], 64
        %v2889 = vld [vmem:[%s2888 + $0x7] sm:$0xff]
        %v2890 = vld [vmem:[%s2888 + $0xf] sm:$0xff]
        %v2891 = vld [vmem:[%s2888 + $0x27] sm:$0xff]
        %v2892 = vld [vmem:[%s2888 + $0x2f] sm:$0xff]
        %v2893 = vld [vmem:[%s2888 + $0x47] sm:$0xff]
        %v2894 = vld [vmem:[%s2888 + $0x4f] sm:$0xff]
        %v2895 = vld [vmem:[%s2888 + $0x67] sm:$0xff]
        %v2896 = vld [vmem:[%s2888 + $0x6f] sm:$0xff]
        %v2897 = vld [vmem:[%s2888 + $0x87] sm:$0xff]
        %v2898 = vld [vmem:[%s2888 + $0x8f] sm:$0xff]
        %v2899 = vld [vmem:[%s2888 + $0xa7] sm:$0xff]
        %v2900 = vld [vmem:[%s2888 + $0xaf] sm:$0xff]
        %v2901 = vld [vmem:[%s2888 + $0xc7] sm:$0xff]
        %v2902 = vld [vmem:[%s2888 + $0xcf] sm:$0xff]
        %v2903 = vld [vmem:[%s2888 + $0xe7] sm:$0xff]
        %v2904 = vld [vmem:[%s2888 + $0xef] sm:$0xff]
        %v2905 = vld [vmem:[%s2888 + $0x107] sm:$0xff]
        %v2906 = vld [vmem:[%s2888 + $0x10f] sm:$0xff]
        %v2907 = vld [vmem:[%s2888 + $0x127] sm:$0xff]
        %v2908 = vld [vmem:[%s2888 + $0x12f] sm:$0xff]
        %v2909 = vld [vmem:[%s2888 + $0x147] sm:$0xff]
        %v2910 = vld [vmem:[%s2888 + $0x14f] sm:$0xff]
        %v2911 = vld [vmem:[%s2888 + $0x167] sm:$0xff]
        %v2912 = vld [vmem:[%s2888 + $0x16f] sm:$0xff]
        %v2913 = vld [vmem:[%s2888 + $0x187] sm:$0xff]
        %v2914 = vld [vmem:[%s2888 + $0x18f] sm:$0xff]
        %v2915 = vld [vmem:[%s2888 + $0x1a7] sm:$0xff]
        %v2916 = vld [vmem:[%s2888 + $0x1af] sm:$0xff]
        %v2917 = vld [vmem:[%s2888 + $0x1c7] sm:$0xff]
        %v2918 = vld [vmem:[%s2888 + $0x1cf] sm:$0xff]
        %v2919 = vld [vmem:[%s2888 + $0x1e7] sm:$0xff]
        %v2920 = vld [vmem:[%s2888 + $0x1ef] sm:$0xff]
        %2953 = vrot.lane.b32.xlu0 %v2889, 48
        %v2954 = vpop.permute.xlu0 %2953
        %2955 = vrot.lane.b32.xlu0 %v2890, 48
        %v2956 = vpop.permute.xlu0 %2955
        %2957 = vrot.lane.b32.xlu0 %v2891, 48
        %v2958 = vpop.permute.xlu0 %2957
        %2959 = vrot.lane.b32.xlu0 %v2892, 48
        %v2960 = vpop.permute.xlu0 %2959
        %2961 = vrot.lane.b32.xlu0 %v2893, 48
        %v2962 = vpop.permute.xlu0 %2961
        %2963 = vrot.lane.b32.xlu0 %v2894, 48
        %v2964 = vpop.permute.xlu0 %2963
        %2965 = vrot.lane.b32.xlu0 %v2895, 48
        %v2966 = vpop.permute.xlu0 %2965
        %2967 = vrot.lane.b32.xlu0 %v2896, 48
        %v2968 = vpop.permute.xlu0 %2967
        %2969 = vrot.lane.b32.xlu0 %v2897, 48
        %v2970 = vpop.permute.xlu0 %2969
        %2971 = vrot.lane.b32.xlu0 %v2898, 48
        %v2972 = vpop.permute.xlu0 %2971
        %2973 = vrot.lane.b32.xlu0 %v2899, 48
        %v2974 = vpop.permute.xlu0 %2973
        %2975 = vrot.lane.b32.xlu0 %v2900, 48
        %v2976 = vpop.permute.xlu0 %2975
        %2977 = vrot.lane.b32.xlu0 %v2901, 48
        %v2978 = vpop.permute.xlu0 %2977
        %2979 = vrot.lane.b32.xlu0 %v2902, 48
        %v2980 = vpop.permute.xlu0 %2979
        %2981 = vrot.lane.b32.xlu0 %v2903, 48
        %v2982 = vpop.permute.xlu0 %2981
        %2983 = vrot.lane.b32.xlu0 %v2904, 48
        %v2984 = vpop.permute.xlu0 %2983
        %2985 = vrot.lane.b32.xlu0 %v2905, 48
        %v2986 = vpop.permute.xlu0 %2985
        %2987 = vrot.lane.b32.xlu0 %v2906, 48
        %v2988 = vpop.permute.xlu0 %2987
        %2989 = vrot.lane.b32.xlu0 %v2907, 48
        %v2990 = vpop.permute.xlu0 %2989
        %2991 = vrot.lane.b32.xlu0 %v2908, 48
        %v2992 = vpop.permute.xlu0 %2991
        %2993 = vrot.lane.b32.xlu0 %v2909, 48
        %v2994 = vpop.permute.xlu0 %2993
        %2995 = vrot.lane.b32.xlu0 %v2910, 48
        %v2996 = vpop.permute.xlu0 %2995
        %2997 = vrot.lane.b32.xlu0 %v2911, 48
        %v2998 = vpop.permute.xlu0 %2997
        %2999 = vrot.lane.b32.xlu0 %v2912, 48
        %v3000 = vpop.permute.xlu0 %2999
        %3001 = vrot.lane.b32.xlu0 %v2913, 48
        %v3002 = vpop.permute.xlu0 %3001
        %3003 = vrot.lane.b32.xlu0 %v2914, 48
        %v3004 = vpop.permute.xlu0 %3003
        %3005 = vrot.lane.b32.xlu0 %v2915, 48
        %v3006 = vpop.permute.xlu0 %3005
        %3007 = vrot.lane.b32.xlu0 %v2916, 48
        %v3008 = vpop.permute.xlu0 %3007
        %3009 = vrot.lane.b32.xlu0 %v2917, 48
        %v3010 = vpop.permute.xlu0 %3009
        %3011 = vrot.lane.b32.xlu0 %v2918, 48
        %v3012 = vpop.permute.xlu0 %3011
        %3013 = vrot.lane.b32.xlu0 %v2919, 48
        %v3014 = vpop.permute.xlu0 %3013
        %3015 = vrot.lane.b32.xlu0 %v2920, 48
        %v3016 = vpop.permute.xlu0 %3015
        %vm3049 = vcmask 458112
        %3050 = vst.msk [vmem:[#allocation3] sm:$0xff] %vm3049, %v2954
        %3051 = vst.msk [vmem:[#allocation3 + $0x8] sm:$0xff] %vm3049, %v2956
        %3052 = vst.msk [vmem:[#allocation3 + $0x10] sm:$0xff] %vm3049, %v2958
        %3053 = vst.msk [vmem:[#allocation3 + $0x18] sm:$0xff] %vm3049, %v2960
        %3054 = vst.msk [vmem:[#allocation3 + $0x20] sm:$0xff] %vm3049, %v2962
        %3055 = vst.msk [vmem:[#allocation3 + $0x28] sm:$0xff] %vm3049, %v2964
        %3056 = vst.msk [vmem:[#allocation3 + $0x30] sm:$0xff] %vm3049, %v2966
        %3057 = vst.msk [vmem:[#allocation3 + $0x38] sm:$0xff] %vm3049, %v2968
        %3058 = vst.msk [vmem:[#allocation3 + $0x40] sm:$0xff] %vm3049, %v2970
        %3059 = vst.msk [vmem:[#allocation3 + $0x48] sm:$0xff] %vm3049, %v2972
        %3060 = vst.msk [vmem:[#allocation3 + $0x50] sm:$0xff] %vm3049, %v2974
        %3061 = vst.msk [vmem:[#allocation3 + $0x58] sm:$0xff] %vm3049, %v2976
        %3062 = vst.msk [vmem:[#allocation3 + $0x60] sm:$0xff] %vm3049, %v2978
        %3063 = vst.msk [vmem:[#allocation3 + $0x68] sm:$0xff] %vm3049, %v2980
        %3064 = vst.msk [vmem:[#allocation3 + $0x70] sm:$0xff] %vm3049, %v2982
        %3065 = vst.msk [vmem:[#allocation3 + $0x78] sm:$0xff] %vm3049, %v2984
        %3066 = vst.msk [vmem:[#allocation3 + $0x80] sm:$0xff] %vm3049, %v2986
        %3067 = vst.msk [vmem:[#allocation3 + $0x88] sm:$0xff] %vm3049, %v2988
        %3068 = vst.msk [vmem:[#allocation3 + $0x90] sm:$0xff] %vm3049, %v2990
        %3069 = vst.msk [vmem:[#allocation3 + $0x98] sm:$0xff] %vm3049, %v2992
        %3070 = vst.msk [vmem:[#allocation3 + $0xa0] sm:$0xff] %vm3049, %v2994
        %3071 = vst.msk [vmem:[#allocation3 + $0xa8] sm:$0xff] %vm3049, %v2996
        %3072 = vst.msk [vmem:[#allocation3 + $0xb0] sm:$0xff] %vm3049, %v2998
        %3073 = vst.msk [vmem:[#allocation3 + $0xb8] sm:$0xff] %vm3049, %v3000
        %3074 = vst.msk [vmem:[#allocation3 + $0xc0] sm:$0xff] %vm3049, %v3002
        %3075 = vst.msk [vmem:[#allocation3 + $0xc8] sm:$0xff] %vm3049, %v3004
        %3076 = vst.msk [vmem:[#allocation3 + $0xd0] sm:$0xff] %vm3049, %v3006
        %3077 = vst.msk [vmem:[#allocation3 + $0xd8] sm:$0xff] %vm3049, %v3008
        %3078 = vst.msk [vmem:[#allocation3 + $0xe0] sm:$0xff] %vm3049, %v3010
        %3079 = vst.msk [vmem:[#allocation3 + $0xe8] sm:$0xff] %vm3049, %v3012
        %3080 = vst.msk [vmem:[#allocation3 + $0xf0] sm:$0xff] %vm3049, %v3014
        %3081 = vst.msk [vmem:[#allocation3 + $0xf8] sm:$0xff] %vm3049, %v3016
        %v3082 = vld [vmem:[%s2888 + $0x8] sm:$0xff]
        %v3083 = vld [vmem:[%s2888 + $0x10] sm:$0xff]
        %v3084 = vld [vmem:[%s2888 + $0x28] sm:$0xff]
        %v3085 = vld [vmem:[%s2888 + $0x30] sm:$0xff]
        %v3086 = vld [vmem:[%s2888 + $0x48] sm:$0xff]
        %v3087 = vld [vmem:[%s2888 + $0x50] sm:$0xff]
        %v3088 = vld [vmem:[%s2888 + $0x68] sm:$0xff]
        %v3089 = vld [vmem:[%s2888 + $0x70] sm:$0xff]
        %v3090 = vld [vmem:[%s2888 + $0x88] sm:$0xff]
        %v3091 = vld [vmem:[%s2888 + $0x90] sm:$0xff]
        %v3092 = vld [vmem:[%s2888 + $0xa8] sm:$0xff]
        %v3093 = vld [vmem:[%s2888 + $0xb0] sm:$0xff]
        %v3094 = vld [vmem:[%s2888 + $0xc8] sm:$0xff]
        %v3095 = vld [vmem:[%s2888 + $0xd0] sm:$0xff]
        %v3096 = vld [vmem:[%s2888 + $0xe8] sm:$0xff]
        %v3097 = vld [vmem:[%s2888 + $0xf0] sm:$0xff]
        %v3098 = vld [vmem:[%s2888 + $0x108] sm:$0xff]
        %v3099 = vld [vmem:[%s2888 + $0x110] sm:$0xff]
        %v3100 = vld [vmem:[%s2888 + $0x128] sm:$0xff]
        %v3101 = vld [vmem:[%s2888 + $0x130] sm:$0xff]
        %v3102 = vld [vmem:[%s2888 + $0x148] sm:$0xff]
        %v3103 = vld [vmem:[%s2888 + $0x150] sm:$0xff]
        %v3104 = vld [vmem:[%s2888 + $0x168] sm:$0xff]
        %v3105 = vld [vmem:[%s2888 + $0x170] sm:$0xff]
        %v3106 = vld [vmem:[%s2888 + $0x188] sm:$0xff]
        %v3107 = vld [vmem:[%s2888 + $0x190] sm:$0xff]
        %v3108 = vld [vmem:[%s2888 + $0x1a8] sm:$0xff]
        %v3109 = vld [vmem:[%s2888 + $0x1b0] sm:$0xff]
        %v3110 = vld [vmem:[%s2888 + $0x1c8] sm:$0xff]
        %v3111 = vld [vmem:[%s2888 + $0x1d0] sm:$0xff]
        %v3112 = vld [vmem:[%s2888 + $0x1e8] sm:$0xff]
        %v3113 = vld [vmem:[%s2888 + $0x1f0] sm:$0xff]
        %3146 = vrot.lane.b32.xlu0 %v3082, 56
        %v3147 = vpop.permute.xlu0 %3146
        %3148 = vrot.lane.b32.xlu0 %v3083, 56
        %v3149 = vpop.permute.xlu0 %3148
        %3150 = vrot.lane.b32.xlu0 %v3084, 56
        %v3151 = vpop.permute.xlu0 %3150
        %3152 = vrot.lane.b32.xlu0 %v3085, 56
        %v3153 = vpop.permute.xlu0 %3152
        %3154 = vrot.lane.b32.xlu0 %v3086, 56
        %v3155 = vpop.permute.xlu0 %3154
        %3156 = vrot.lane.b32.xlu0 %v3087, 56
        %v3157 = vpop.permute.xlu0 %3156
        %3158 = vrot.lane.b32.xlu0 %v3088, 56
        %v3159 = vpop.permute.xlu0 %3158
        %3160 = vrot.lane.b32.xlu0 %v3089, 56
        %v3161 = vpop.permute.xlu0 %3160
        %3162 = vrot.lane.b32.xlu0 %v3090, 56
        %v3163 = vpop.permute.xlu0 %3162
        %3164 = vrot.lane.b32.xlu0 %v3091, 56
        %v3165 = vpop.permute.xlu0 %3164
        %3166 = vrot.lane.b32.xlu0 %v3092, 56
        %v3167 = vpop.permute.xlu0 %3166
        %3168 = vrot.lane.b32.xlu0 %v3093, 56
        %v3169 = vpop.permute.xlu0 %3168
        %3170 = vrot.lane.b32.xlu0 %v3094, 56
        %v3171 = vpop.permute.xlu0 %3170
        %3172 = vrot.lane.b32.xlu0 %v3095, 56
        %v3173 = vpop.permute.xlu0 %3172
        %3174 = vrot.lane.b32.xlu0 %v3096, 56
        %v3175 = vpop.permute.xlu0 %3174
        %3176 = vrot.lane.b32.xlu0 %v3097, 56
        %v3177 = vpop.permute.xlu0 %3176
        %3178 = vrot.lane.b32.xlu0 %v3098, 56
        %v3179 = vpop.permute.xlu0 %3178
        %3180 = vrot.lane.b32.xlu0 %v3099, 56
        %v3181 = vpop.permute.xlu0 %3180
        %3182 = vrot.lane.b32.xlu0 %v3100, 56
        %v3183 = vpop.permute.xlu0 %3182
        %3184 = vrot.lane.b32.xlu0 %v3101, 56
        %v3185 = vpop.permute.xlu0 %3184
        %3186 = vrot.lane.b32.xlu0 %v3102, 56
        %v3187 = vpop.permute.xlu0 %3186
        %3188 = vrot.lane.b32.xlu0 %v3103, 56
        %v3189 = vpop.permute.xlu0 %3188
        %3190 = vrot.lane.b32.xlu0 %v3104, 56
        %v3191 = vpop.permute.xlu0 %3190
        %3192 = vrot.lane.b32.xlu0 %v3105, 56
        %v3193 = vpop.permute.xlu0 %3192
        %3194 = vrot.lane.b32.xlu0 %v3106, 56
        %v3195 = vpop.permute.xlu0 %3194
        %3196 = vrot.lane.b32.xlu0 %v3107, 56
        %v3197 = vpop.permute.xlu0 %3196
        %3198 = vrot.lane.b32.xlu0 %v3108, 56
        %v3199 = vpop.permute.xlu0 %3198
        %3200 = vrot.lane.b32.xlu0 %v3109, 56
        %v3201 = vpop.permute.xlu0 %3200
        %3202 = vrot.lane.b32.xlu0 %v3110, 56
        %v3203 = vpop.permute.xlu0 %3202
        %3204 = vrot.lane.b32.xlu0 %v3111, 56
        %v3205 = vpop.permute.xlu0 %3204
        %3206 = vrot.lane.b32.xlu0 %v3112, 56
        %v3207 = vpop.permute.xlu0 %3206
        %3208 = vrot.lane.b32.xlu0 %v3113, 56
        %v3209 = vpop.permute.xlu0 %3208
        %vm3242 = vcmask 523712
        %3243 = vst.msk [vmem:[#allocation3] sm:$0xff] %vm3242, %v3147
        %3244 = vst.msk [vmem:[#allocation3 + $0x8] sm:$0xff] %vm3242, %v3149
        %3245 = vst.msk [vmem:[#allocation3 + $0x10] sm:$0xff] %vm3242, %v3151
        %3246 = vst.msk [vmem:[#allocation3 + $0x18] sm:$0xff] %vm3242, %v3153
        %3247 = vst.msk [vmem:[#allocation3 + $0x20] sm:$0xff] %vm3242, %v3155
        %3248 = vst.msk [vmem:[#allocation3 + $0x28] sm:$0xff] %vm3242, %v3157
        %3249 = vst.msk [vmem:[#allocation3 + $0x30] sm:$0xff] %vm3242, %v3159
        %3250 = vst.msk [vmem:[#allocation3 + $0x38] sm:$0xff] %vm3242, %v3161
        %3251 = vst.msk [vmem:[#allocation3 + $0x40] sm:$0xff] %vm3242, %v3163
        %3252 = vst.msk [vmem:[#allocation3 + $0x48] sm:$0xff] %vm3242, %v3165
        %3253 = vst.msk [vmem:[#allocation3 + $0x50] sm:$0xff] %vm3242, %v3167
        %3254 = vst.msk [vmem:[#allocation3 + $0x58] sm:$0xff] %vm3242, %v3169
        %3255 = vst.msk [vmem:[#allocation3 + $0x60] sm:$0xff] %vm3242, %v3171
        %3256 = vst.msk [vmem:[#allocation3 + $0x68] sm:$0xff] %vm3242, %v3173
        %3257 = vst.msk [vmem:[#allocation3 + $0x70] sm:$0xff] %vm3242, %v3175
        %3258 = vst.msk [vmem:[#allocation3 + $0x78] sm:$0xff] %vm3242, %v3177
        %3259 = vst.msk [vmem:[#allocation3 + $0x80] sm:$0xff] %vm3242, %v3179
        %3260 = vst.msk [vmem:[#allocation3 + $0x88] sm:$0xff] %vm3242, %v3181
        %3261 = vst.msk [vmem:[#allocation3 + $0x90] sm:$0xff] %vm3242, %v3183
        %3262 = vst.msk [vmem:[#allocation3 + $0x98] sm:$0xff] %vm3242, %v3185
        %3263 = vst.msk [vmem:[#allocation3 + $0xa0] sm:$0xff] %vm3242, %v3187
        %3264 = vst.msk [vmem:[#allocation3 + $0xa8] sm:$0xff] %vm3242, %v3189
        %3265 = vst.msk [vmem:[#allocation3 + $0xb0] sm:$0xff] %vm3242, %v3191
        %3266 = vst.msk [vmem:[#allocation3 + $0xb8] sm:$0xff] %vm3242, %v3193
        %3267 = vst.msk [vmem:[#allocation3 + $0xc0] sm:$0xff] %vm3242, %v3195
        %3268 = vst.msk [vmem:[#allocation3 + $0xc8] sm:$0xff] %vm3242, %v3197
        %3269 = vst.msk [vmem:[#allocation3 + $0xd0] sm:$0xff] %vm3242, %v3199
        %3270 = vst.msk [vmem:[#allocation3 + $0xd8] sm:$0xff] %vm3242, %v3201
        %3271 = vst.msk [vmem:[#allocation3 + $0xe0] sm:$0xff] %vm3242, %v3203
        %3272 = vst.msk [vmem:[#allocation3 + $0xe8] sm:$0xff] %vm3242, %v3205
        %3273 = vst.msk [vmem:[#allocation3 + $0xf0] sm:$0xff] %vm3242, %v3207
        %3274 = vst.msk [vmem:[#allocation3 + $0xf8] sm:$0xff] %vm3242, %v3209
        %v3275 = vld [vmem:[%s2888 + $0x9] sm:$0xff]
        %v3276 = vld [vmem:[%s2888 + $0x11] sm:$0xff]
        %v3277 = vld [vmem:[%s2888 + $0x29] sm:$0xff]
        %v3278 = vld [vmem:[%s2888 + $0x31] sm:$0xff]
        %v3279 = vld [vmem:[%s2888 + $0x49] sm:$0xff]
        %v3280 = vld [vmem:[%s2888 + $0x51] sm:$0xff]
        %v3281 = vld [vmem:[%s2888 + $0x69] sm:$0xff]
        %v3282 = vld [vmem:[%s2888 + $0x71] sm:$0xff]
        %v3283 = vld [vmem:[%s2888 + $0x89] sm:$0xff]
        %v3284 = vld [vmem:[%s2888 + $0x91] sm:$0xff]
        %v3285 = vld [vmem:[%s2888 + $0xa9] sm:$0xff]
        %v3286 = vld [vmem:[%s2888 + $0xb1] sm:$0xff]
        %v3287 = vld [vmem:[%s2888 + $0xc9] sm:$0xff]
        %v3288 = vld [vmem:[%s2888 + $0xd1] sm:$0xff]
        %v3289 = vld [vmem:[%s2888 + $0xe9] sm:$0xff]
        %v3290 = vld [vmem:[%s2888 + $0xf1] sm:$0xff]
        %v3291 = vld [vmem:[%s2888 + $0x109] sm:$0xff]
        %v3292 = vld [vmem:[%s2888 + $0x111] sm:$0xff]
        %v3293 = vld [vmem:[%s2888 + $0x129] sm:$0xff]
        %v3294 = vld [vmem:[%s2888 + $0x131] sm:$0xff]
        %v3295 = vld [vmem:[%s2888 + $0x149] sm:$0xff]
        %v3296 = vld [vmem:[%s2888 + $0x151] sm:$0xff]
        %v3297 = vld [vmem:[%s2888 + $0x169] sm:$0xff]
        %v3298 = vld [vmem:[%s2888 + $0x171] sm:$0xff]
        %v3299 = vld [vmem:[%s2888 + $0x189] sm:$0xff]
        %v3300 = vld [vmem:[%s2888 + $0x191] sm:$0xff]
        %v3301 = vld [vmem:[%s2888 + $0x1a9] sm:$0xff]
        %v3302 = vld [vmem:[%s2888 + $0x1b1] sm:$0xff]
        %v3303 = vld [vmem:[%s2888 + $0x1c9] sm:$0xff]
        %v3304 = vld [vmem:[%s2888 + $0x1d1] sm:$0xff]
        %v3305 = vld [vmem:[%s2888 + $0x1e9] sm:$0xff]
        %v3306 = vld [vmem:[%s2888 + $0x1f1] sm:$0xff]
        %3339 = vrot.lane.b32.xlu0 %v3275, 64
        %v3340 = vpop.permute.xlu0 %3339
        %3341 = vrot.lane.b32.xlu0 %v3276, 64
        %v3342 = vpop.permute.xlu0 %3341
        %3343 = vrot.lane.b32.xlu0 %v3277, 64
        %v3344 = vpop.permute.xlu0 %3343
        %3345 = vrot.lane.b32.xlu0 %v3278, 64
        %v3346 = vpop.permute.xlu0 %3345
        %3347 = vrot.lane.b32.xlu0 %v3279, 64
        %v3348 = vpop.permute.xlu0 %3347
        %3349 = vrot.lane.b32.xlu0 %v3280, 64
        %v3350 = vpop.permute.xlu0 %3349
        %3351 = vrot.lane.b32.xlu0 %v3281, 64
        %v3352 = vpop.permute.xlu0 %3351
        %3353 = vrot.lane.b32.xlu0 %v3282, 64
        %v3354 = vpop.permute.xlu0 %3353
        %3355 = vrot.lane.b32.xlu0 %v3283, 64
        %v3356 = vpop.permute.xlu0 %3355
        %3357 = vrot.lane.b32.xlu0 %v3284, 64
        %v3358 = vpop.permute.xlu0 %3357
        %3359 = vrot.lane.b32.xlu0 %v3285, 64
        %v3360 = vpop.permute.xlu0 %3359
        %3361 = vrot.lane.b32.xlu0 %v3286, 64
        %v3362 = vpop.permute.xlu0 %3361
        %3363 = vrot.lane.b32.xlu0 %v3287, 64
        %v3364 = vpop.permute.xlu0 %3363
        %3365 = vrot.lane.b32.xlu0 %v3288, 64
        %v3366 = vpop.permute.xlu0 %3365
        %3367 = vrot.lane.b32.xlu0 %v3289, 64
        %v3368 = vpop.permute.xlu0 %3367
        %3369 = vrot.lane.b32.xlu0 %v3290, 64
        %v3370 = vpop.permute.xlu0 %3369
        %3371 = vrot.lane.b32.xlu0 %v3291, 64
        %v3372 = vpop.permute.xlu0 %3371
        %3373 = vrot.lane.b32.xlu0 %v3292, 64
        %v3374 = vpop.permute.xlu0 %3373
        %3375 = vrot.lane.b32.xlu0 %v3293, 64
        %v3376 = vpop.permute.xlu0 %3375
        %3377 = vrot.lane.b32.xlu0 %v3294, 64
        %v3378 = vpop.permute.xlu0 %3377
        %3379 = vrot.lane.b32.xlu0 %v3295, 64
        %v3380 = vpop.permute.xlu0 %3379
        %3381 = vrot.lane.b32.xlu0 %v3296, 64
        %v3382 = vpop.permute.xlu0 %3381
        %3383 = vrot.lane.b32.xlu0 %v3297, 64
        %v3384 = vpop.permute.xlu0 %3383
        %3385 = vrot.lane.b32.xlu0 %v3298, 64
        %v3386 = vpop.permute.xlu0 %3385
        %3387 = vrot.lane.b32.xlu0 %v3299, 64
        %v3388 = vpop.permute.xlu0 %3387
        %3389 = vrot.lane.b32.xlu0 %v3300, 64
        %v3390 = vpop.permute.xlu0 %3389
        %3391 = vrot.lane.b32.xlu0 %v3301, 64
        %v3392 = vpop.permute.xlu0 %3391
        %3393 = vrot.lane.b32.xlu0 %v3302, 64
        %v3394 = vpop.permute.xlu0 %3393
        %3395 = vrot.lane.b32.xlu0 %v3303, 64
        %v3396 = vpop.permute.xlu0 %3395
        %3397 = vrot.lane.b32.xlu0 %v3304, 64
        %v3398 = vpop.permute.xlu0 %3397
        %3399 = vrot.lane.b32.xlu0 %v3305, 64
        %v3400 = vpop.permute.xlu0 %3399
        %3401 = vrot.lane.b32.xlu0 %v3306, 64
        %v3402 = vpop.permute.xlu0 %3401
        %vm3435 = vcmask 589312
        %3436 = vst.msk [vmem:[#allocation3] sm:$0xff] %vm3435, %v3340
        %3437 = vst.msk [vmem:[#allocation3 + $0x8] sm:$0xff] %vm3435, %v3342
        %3438 = vst.msk [vmem:[#allocation3 + $0x10] sm:$0xff] %vm3435, %v3344
        %3439 = vst.msk [vmem:[#allocation3 + $0x18] sm:$0xff] %vm3435, %v3346
        %3440 = vst.msk [vmem:[#allocation3 + $0x20] sm:$0xff] %vm3435, %v3348
        %3441 = vst.msk [vmem:[#allocation3 + $0x28] sm:$0xff] %vm3435, %v3350
        %3442 = vst.msk [vmem:[#allocation3 + $0x30] sm:$0xff] %vm3435, %v3352
        %3443 = vst.msk [vmem:[#allocation3 + $0x38] sm:$0xff] %vm3435, %v3354
        %3444 = vst.msk [vmem:[#allocation3 + $0x40] sm:$0xff] %vm3435, %v3356
        %3445 = vst.msk [vmem:[#allocation3 + $0x48] sm:$0xff] %vm3435, %v3358
        %3446 = vst.msk [vmem:[#allocation3 + $0x50] sm:$0xff] %vm3435, %v3360
        %3447 = vst.msk [vmem:[#allocation3 + $0x58] sm:$0xff] %vm3435, %v3362
        %3448 = vst.msk [vmem:[#allocation3 + $0x60] sm:$0xff] %vm3435, %v3364
        %3449 = vst.msk [vmem:[#allocation3 + $0x68] sm:$0xff] %vm3435, %v3366
        %3450 = vst.msk [vmem:[#allocation3 + $0x70] sm:$0xff] %vm3435, %v3368
        %3451 = vst.msk [vmem:[#allocation3 + $0x78] sm:$0xff] %vm3435, %v3370
        %3452 = vst.msk [vmem:[#allocation3 + $0x80] sm:$0xff] %vm3435, %v3372
        %3453 = vst.msk [vmem:[#allocation3 + $0x88] sm:$0xff] %vm3435, %v3374
        %3454 = vst.msk [vmem:[#allocation3 + $0x90] sm:$0xff] %vm3435, %v3376
        %3455 = vst.msk [vmem:[#allocation3 + $0x98] sm:$0xff] %vm3435, %v3378
        %3456 = vst.msk [vmem:[#allocation3 + $0xa0] sm:$0xff] %vm3435, %v3380
        %3457 = vst.msk [vmem:[#allocation3 + $0xa8] sm:$0xff] %vm3435, %v3382
        %3458 = vst.msk [vmem:[#allocation3 + $0xb0] sm:$0xff] %vm3435, %v3384
        %3459 = vst.msk [vmem:[#allocation3 + $0xb8] sm:$0xff] %vm3435, %v3386
        %3460 = vst.msk [vmem:[#allocation3 + $0xc0] sm:$0xff] %vm3435, %v3388
        %3461 = vst.msk [vmem:[#allocation3 + $0xc8] sm:$0xff] %vm3435, %v3390
        %3462 = vst.msk [vmem:[#allocation3 + $0xd0] sm:$0xff] %vm3435, %v3392
        %3463 = vst.msk [vmem:[#allocation3 + $0xd8] sm:$0xff] %vm3435, %v3394
        %3464 = vst.msk [vmem:[#allocation3 + $0xe0] sm:$0xff] %vm3435, %v3396
        %3465 = vst.msk [vmem:[#allocation3 + $0xe8] sm:$0xff] %vm3435, %v3398
        %3466 = vst.msk [vmem:[#allocation3 + $0xf0] sm:$0xff] %vm3435, %v3400
        %3467 = vst.msk [vmem:[#allocation3 + $0xf8] sm:$0xff] %vm3435, %v3402
        %v3468 = vld [vmem:[#allocation3] sm:$0xff]
        %v3469 = vld [vmem:[#allocation3 + $0x8] sm:$0xff]
        %v3470 = vld [vmem:[#allocation3 + $0x10] sm:$0xff]
        %v3471 = vld [vmem:[#allocation3 + $0x18] sm:$0xff]
        %v3472 = vld [vmem:[#allocation3 + $0x20] sm:$0xff]
        %v3473 = vld [vmem:[#allocation3 + $0x28] sm:$0xff]
        %v3474 = vld [vmem:[#allocation3 + $0x30] sm:$0xff]
        %v3475 = vld [vmem:[#allocation3 + $0x38] sm:$0xff]
        %v3476 = vld [vmem:[#allocation3 + $0x40] sm:$0xff]
        %v3477 = vld [vmem:[#allocation3 + $0x48] sm:$0xff]
        %v3478 = vld [vmem:[#allocation3 + $0x50] sm:$0xff]
        %v3479 = vld [vmem:[#allocation3 + $0x58] sm:$0xff]
        %v3480 = vld [vmem:[#allocation3 + $0x60] sm:$0xff]
        %v3481 = vld [vmem:[#allocation3 + $0x68] sm:$0xff]
        %v3482 = vld [vmem:[#allocation3 + $0x70] sm:$0xff]
        %v3483 = vld [vmem:[#allocation3 + $0x78] sm:$0xff]
        %v3484 = vld [vmem:[#allocation3 + $0x80] sm:$0xff]
        %v3485 = vld [vmem:[#allocation3 + $0x88] sm:$0xff]
        %v3486 = vld [vmem:[#allocation3 + $0x90] sm:$0xff]
        %v3487 = vld [vmem:[#allocation3 + $0x98] sm:$0xff]
        %v3488 = vld [vmem:[#allocation3 + $0xa0] sm:$0xff]
        %v3489 = vld [vmem:[#allocation3 + $0xa8] sm:$0xff]
        %v3490 = vld [vmem:[#allocation3 + $0xb0] sm:$0xff]
        %v3491 = vld [vmem:[#allocation3 + $0xb8] sm:$0xff]
        %v3492 = vld [vmem:[#allocation3 + $0xc0] sm:$0xff]
        %v3493 = vld [vmem:[#allocation3 + $0xc8] sm:$0xff]
        %v3494 = vld [vmem:[#allocation3 + $0xd0] sm:$0xff]
        %v3495 = vld [vmem:[#allocation3 + $0xd8] sm:$0xff]
        %v3496 = vld [vmem:[#allocation3 + $0xe0] sm:$0xff]
        %v3497 = vld [vmem:[#allocation3 + $0xe8] sm:$0xff]
        %v3498 = vld [vmem:[#allocation3 + $0xf0] sm:$0xff]
        %v3499 = vld [vmem:[#allocation3 + $0xf8] sm:$0xff]
        %v3500 = vld [vmem:[#allocation15] sm:$0xff]
        %v3501 = vld [vmem:[#allocation15 + $0x8] sm:$0xff]
        %v3502 = vld [vmem:[#allocation15 + $0x10] sm:$0xff]
        %v3503 = vld [vmem:[#allocation15 + $0x18] sm:$0xff]
        %v3504 = vld [vmem:[#allocation15 + $0x20] sm:$0xff]
        %v3505 = vld [vmem:[#allocation15 + $0x28] sm:$0xff]
        %v3506 = vld [vmem:[#allocation15 + $0x30] sm:$0xff]
        %v3507 = vld [vmem:[#allocation15 + $0x38] sm:$0xff]
        %v3508 = vld [vmem:[#allocation15 + $0x40] sm:$0xff]
        %v3509 = vld [vmem:[#allocation17] sm:$0x1]
        %v3511 = vlaneseq
        %v3512 = vshrl.u32 %v3511, 7
        %v3513 = vsub.s32 0, %v3512
        %v3514 = vrot.slane %v3509, %v3513
        %vm3516 = vcmask 588800
        %v3518 = vsel %vm3516, %v3468, 0
        %v3521 = vsel %vm3516, %v3469, 0
        %v3524 = vsel %vm3516, %v3470, 0
        %v3527 = vsel %vm3516, %v3471, 0
        %v3530 = vsel %vm3516, %v3472, 0
        %v3533 = vsel %vm3516, %v3473, 0
        %v3536 = vsel %vm3516, %v3474, 0
        %v3539 = vsel %vm3516, %v3475, 0
        %v3542 = vsel %vm3516, %v3476, 0
        %v3545 = vsel %vm3516, %v3477, 0
        %v3548 = vsel %vm3516, %v3478, 0
        %v3551 = vsel %vm3516, %v3479, 0
        %v3554 = vsel %vm3516, %v3480, 0
        %v3557 = vsel %vm3516, %v3481, 0
        %v3560 = vsel %vm3516, %v3482, 0
        %v3563 = vsel %vm3516, %v3483, 0
        %v3566 = vsel %vm3516, %v3484, 0
        %v3569 = vsel %vm3516, %v3485, 0
        %v3572 = vsel %vm3516, %v3486, 0
        %v3575 = vsel %vm3516, %v3487, 0
        %v3578 = vsel %vm3516, %v3488, 0
        %v3581 = vsel %vm3516, %v3489, 0
        %v3584 = vsel %vm3516, %v3490, 0
        %v3587 = vsel %vm3516, %v3491, 0
        %v3590 = vsel %vm3516, %v3492, 0
        %v3593 = vsel %vm3516, %v3493, 0
        %v3596 = vsel %vm3516, %v3494, 0
        %v3599 = vsel %vm3516, %v3495, 0
        %v3602 = vsel %vm3516, %v3496, 0
        %v3605 = vsel %vm3516, %v3497, 0
        %v3608 = vsel %vm3516, %v3498, 0
        %v3611 = vsel %vm3516, %v3499, 0
        %3613 = vmatprep.subr.mxu0 0.0
        %3614 = vmatpush1.msra.mxu0 %v3500
        %3615 = vmatprep.subr.mxu0 0.0
        %3616 = vmatpush1.msra.mxu0 %v3501
        %3617 = vmatprep.subr.mxu0 0.0
        %3618 = vmatpush1.msra.mxu0 %v3502
        %3619 = vmatprep.subr.mxu0 0.0
        %3620 = vmatpush1.msra.mxu0 %v3503
        %3621 = vmatprep.subr.mxu0 0.0
        %3622 = vmatpush1.msra.mxu0 %v3504
        %3623 = vmatprep.subr.mxu0 0.0
        %3624 = vmatpush1.msra.mxu0 %v3505
        %3625 = vmatprep.subr.mxu0 0.0
        %3626 = vmatpush1.msra.mxu0 %v3506
        %3627 = vmatprep.subr.mxu0 0.0
        %3628 = vmatpush1.msra.mxu0 %v3507
        %3629 = vmatprep.subr.mxu0 0.0
        %3630 = vmatpush1.msra.mxu0 %v3508
        %3631 = vmatprep.subr.mxu0 0.0
        %3632 = vmatpush1.msra.mxu0 0.0
        %3633 = vmatprep.subr.mxu0 0.0
        %3634 = vmatpush1.msra.mxu0 0.0
        %3635 = vmatprep.subr.mxu0 0.0
        %3636 = vmatpush1.msra.mxu0 0.0
        %3637 = vmatprep.subr.mxu0 0.0
        %3638 = vmatpush1.msra.mxu0 0.0
        %3639 = vmatprep.subr.mxu0 0.0
        %3640 = vmatpush1.msra.mxu0 0.0
        %3641 = vmatprep.subr.mxu0 0.0
        %3642 = vmatpush1.msra.mxu0 0.0
        %3643 = vmatprep.subr.mxu0 0.0
        %3644 = vmatpush1.msra.mxu0 0.0
        %3645 = vmatprep.subr.mxu0 0.0
        %3646 = vmatpush1.msra.mxu0 0.0
        %3647 = vmatprep.subr.mxu0 0.0
        %3648 = vmatpush1.msra.mxu0 0.0
        %3649 = vmatprep.subr.mxu0 0.0
        %3650 = vmatpush1.msra.mxu0 0.0
        %3651 = vmatprep.subr.mxu0 0.0
        %3652 = vmatpush1.msra.mxu0 0.0
        %3653 = vmatprep.subr.mxu0 0.0
        %3654 = vmatpush1.msra.mxu0 0.0
        %3655 = vmatprep.subr.mxu0 0.0
        %3656 = vmatpush1.msra.mxu0 0.0
        %3657 = vmatprep.subr.mxu0 0.0
        %3658 = vmatpush1.msra.mxu0 0.0
        %3659 = vmatprep.subr.mxu0 0.0
        %3660 = vmatpush1.msra.mxu0 0.0
        %3661 = vmatprep.subr.mxu0 0.0
        %3662 = vmatpush1.msra.mxu0 0.0
        %3663 = vmatprep.subr.mxu0 0.0
        %3664 = vmatpush1.msra.mxu0 0.0
        %3665 = vmatprep.subr.mxu0 0.0
        %3666 = vmatpush1.msra.mxu0 0.0
        %3667 = vmatprep.subr.mxu0 0.0
        %3668 = vmatpush1.msra.mxu0 0.0
        %3669 = vmatprep.subr.mxu0 0.0
        %3670 = vmatpush1.msra.mxu0 0.0
        %3671 = vmatprep.subr.mxu0 0.0
        %3672 = vmatpush1.msra.mxu0 0.0
        %3673 = vmatprep.subr.mxu0 0.0
        %3674 = vmatpush1.msra.mxu0 0.0
        %3675 = vmatprep.subr.mxu0 0.0
        %3676 = vmatpush1.msra.mxu0 0.0
        %3677 = vmatprep.mubr.f32.mxu0 0.0
        %3678 = vmatmul.mubr.f32.gmra.mrb[0].mxu0 %v3518
        %v3679 = vpop.f32.mrb[0].mxu0
        %v3680 = vadd.f32 %v3514, %v3679
        %v3681 = vpop.f32.mrb[0].mxu0
        %3682 = vmatprep.mubr.f32.mxu0 0.0
        %3683 = vmatmul.mubr.f32.gmra.mrb[0].mxu0 %v3521
        %v3684 = vpop.f32.mrb[0].mxu0
        %v3685 = vadd.f32 %v3514, %v3684
        %v3686 = vpop.f32.mrb[0].mxu0
        %3687 = vmatprep.mubr.f32.mxu0 0.0
        %3688 = vmatmul.mubr.f32.gmra.mrb[0].mxu0 %v3524
        %v3689 = vpop.f32.mrb[0].mxu0
        %v3690 = vadd.f32 %v3514, %v3689
        %v3691 = vpop.f32.mrb[0].mxu0
        %3692 = vmatprep.mubr.f32.mxu0 0.0
        %3693 = vmatmul.mubr.f32.gmra.mrb[0].mxu0 %v3527
        %v3694 = vpop.f32.mrb[0].mxu0
        %v3695 = vadd.f32 %v3514, %v3694
        %v3696 = vpop.f32.mrb[0].mxu0
        %3697 = vmatprep.mubr.f32.mxu0 0.0
        %3698 = vmatmul.mubr.f32.gmra.mrb[0].mxu0 %v3530
        %v3699 = vpop.f32.mrb[0].mxu0
        %v3700 = vadd.f32 %v3514, %v3699
        %v3701 = vpop.f32.mrb[0].mxu0
        %3702 = vmatprep.mubr.f32.mxu0 0.0
        %3703 = vmatmul.mubr.f32.gmra.mrb[0].mxu0 %v3533
        %v3704 = vpop.f32.mrb[0].mxu0
        %v3705 = vadd.f32 %v3514, %v3704
        %v3706 = vpop.f32.mrb[0].mxu0
        %3707 = vmatprep.mubr.f32.mxu0 0.0
        %3708 = vmatmul.mubr.f32.gmra.mrb[0].mxu0 %v3536
        %v3709 = vpop.f32.mrb[0].mxu0
        %v3710 = vadd.f32 %v3514, %v3709
        %v3711 = vpop.f32.mrb[0].mxu0
        %3712 = vmatprep.mubr.f32.mxu0 0.0
        %3713 = vmatmul.mubr.f32.gmra.mrb[0].mxu0 %v3539
        %v3714 = vpop.f32.mrb[0].mxu0
        %v3715 = vadd.f32 %v3514, %v3714
        %v3716 = vpop.f32.mrb[0].mxu0
        %3717 = vmatprep.mubr.f32.mxu0 0.0
        %3718 = vmatmul.mubr.f32.gmra.mrb[0].mxu0 %v3542
        %v3719 = vpop.f32.mrb[0].mxu0
        %v3720 = vadd.f32 %v3514, %v3719
        %v3721 = vpop.f32.mrb[0].mxu0
        %3722 = vmatprep.mubr.f32.mxu0 0.0
        %3723 = vmatmul.mubr.f32.gmra.mrb[0].mxu0 %v3545
        %v3724 = vpop.f32.mrb[0].mxu0
        %v3725 = vadd.f32 %v3514, %v3724
        %v3726 = vpop.f32.mrb[0].mxu0
        %3727 = vmatprep.mubr.f32.mxu0 0.0
        %3728 = vmatmul.mubr.f32.gmra.mrb[0].mxu0 %v3548
        %v3729 = vpop.f32.mrb[0].mxu0
        %v3730 = vadd.f32 %v3514, %v3729
        %v3731 = vpop.f32.mrb[0].mxu0
        %3732 = vmatprep.mubr.f32.mxu0 0.0
        %3733 = vmatmul.mubr.f32.gmra.mrb[0].mxu0 %v3551
        %v3734 = vpop.f32.mrb[0].mxu0
        %v3735 = vadd.f32 %v3514, %v3734
        %v3736 = vpop.f32.mrb[0].mxu0
        %3737 = vmatprep.mubr.f32.mxu0 0.0
        %3738 = vmatmul.mubr.f32.gmra.mrb[0].mxu0 %v3554
        %v3739 = vpop.f32.mrb[0].mxu0
        %v3740 = vadd.f32 %v3514, %v3739
        %v3741 = vpop.f32.mrb[0].mxu0
        %3742 = vmatprep.mubr.f32.mxu0 0.0
        %3743 = vmatmul.mubr.f32.gmra.mrb[0].mxu0 %v3557
        %v3744 = vpop.f32.mrb[0].mxu0
        %v3745 = vadd.f32 %v3514, %v3744
        %v3746 = vpop.f32.mrb[0].mxu0
        %3747 = vmatprep.mubr.f32.mxu0 0.0
        %3748 = vmatmul.mubr.f32.gmra.mrb[0].mxu0 %v3560
        %v3749 = vpop.f32.mrb[0].mxu0
        %v3750 = vadd.f32 %v3514, %v3749
        %v3751 = vpop.f32.mrb[0].mxu0
        %3752 = vmatprep.mubr.f32.mxu0 0.0
        %3753 = vmatmul.mubr.f32.gmra.mrb[0].mxu0 %v3563
        %v3754 = vpop.f32.mrb[0].mxu0
        %v3755 = vadd.f32 %v3514, %v3754
        %v3756 = vpop.f32.mrb[0].mxu0
        %3757 = vmatprep.mubr.f32.mxu0 0.0
        %3758 = vmatmul.mubr.f32.gmra.mrb[0].mxu0 %v3566
        %v3759 = vpop.f32.mrb[0].mxu0
        %v3760 = vadd.f32 %v3514, %v3759
        %v3761 = vpop.f32.mrb[0].mxu0
        %3762 = vmatprep.mubr.f32.mxu0 0.0
        %3763 = vmatmul.mubr.f32.gmra.mrb[0].mxu0 %v3569
        %v3764 = vpop.f32.mrb[0].mxu0
        %v3765 = vadd.f32 %v3514, %v3764
        %v3766 = vpop.f32.mrb[0].mxu0
        %3767 = vmatprep.mubr.f32.mxu0 0.0
        %3768 = vmatmul.mubr.f32.gmra.mrb[0].mxu0 %v3572
        %v3769 = vpop.f32.mrb[0].mxu0
        %v3770 = vadd.f32 %v3514, %v3769
        %v3771 = vpop.f32.mrb[0].mxu0
        %3772 = vmatprep.mubr.f32.mxu0 0.0
        %3773 = vmatmul.mubr.f32.gmra.mrb[0].mxu0 %v3575
        %v3774 = vpop.f32.mrb[0].mxu0
        %v3775 = vadd.f32 %v3514, %v3774
        %v3776 = vpop.f32.mrb[0].mxu0
        %3777 = vmatprep.mubr.f32.mxu0 0.0
        %3778 = vmatmul.mubr.f32.gmra.mrb[0].mxu0 %v3578
        %v3779 = vpop.f32.mrb[0].mxu0
        %v3780 = vadd.f32 %v3514, %v3779
        %v3781 = vpop.f32.mrb[0].mxu0
        %3782 = vmatprep.mubr.f32.mxu0 0.0
        %3783 = vmatmul.mubr.f32.gmra.mrb[0].mxu0 %v3581
        %v3784 = vpop.f32.mrb[0].mxu0
        %v3785 = vadd.f32 %v3514, %v3784
        %v3786 = vpop.f32.mrb[0].mxu0
        %3787 = vmatprep.mubr.f32.mxu0 0.0
        %3788 = vmatmul.mubr.f32.gmra.mrb[0].mxu0 %v3584
        %v3789 = vpop.f32.mrb[0].mxu0
        %v3790 = vadd.f32 %v3514, %v3789
        %v3791 = vpop.f32.mrb[0].mxu0
        %3792 = vmatprep.mubr.f32.mxu0 0.0
        %3793 = vmatmul.mubr.f32.gmra.mrb[0].mxu0 %v3587
        %v3794 = vpop.f32.mrb[0].mxu0
        %v3795 = vadd.f32 %v3514, %v3794
        %v3796 = vpop.f32.mrb[0].mxu0
        %3797 = vmatprep.mubr.f32.mxu0 0.0
        %3798 = vmatmul.mubr.f32.gmra.mrb[0].mxu0 %v3590
        %v3799 = vpop.f32.mrb[0].mxu0
        %v3800 = vadd.f32 %v3514, %v3799
        %v3801 = vpop.f32.mrb[0].mxu0
        %3802 = vmatprep.mubr.f32.mxu0 0.0
        %3803 = vmatmul.mubr.f32.gmra.mrb[0].mxu0 %v3593
        %v3804 = vpop.f32.mrb[0].mxu0
        %v3805 = vadd.f32 %v3514, %v3804
        %v3806 = vpop.f32.mrb[0].mxu0
        %3807 = vmatprep.mubr.f32.mxu0 0.0
        %3808 = vmatmul.mubr.f32.gmra.mrb[0].mxu0 %v3596
        %v3809 = vpop.f32.mrb[0].mxu0
        %v3810 = vadd.f32 %v3514, %v3809
        %v3811 = vpop.f32.mrb[0].mxu0
        %3812 = vmatprep.mubr.f32.mxu0 0.0
        %3813 = vmatmul.mubr.f32.gmra.mrb[0].mxu0 %v3599
        %v3814 = vpop.f32.mrb[0].mxu0
        %v3815 = vadd.f32 %v3514, %v3814
        %v3816 = vpop.f32.mrb[0].mxu0
        %3817 = vmatprep.mubr.f32.mxu0 0.0
        %3818 = vmatmul.mubr.f32.gmra.mrb[0].mxu0 %v3602
        %v3819 = vpop.f32.mrb[0].mxu0
        %v3820 = vadd.f32 %v3514, %v3819
        %v3821 = vpop.f32.mrb[0].mxu0
        %3822 = vmatprep.mubr.f32.mxu0 0.0
        %3823 = vmatmul.mubr.f32.gmra.mrb[0].mxu0 %v3605
        %v3824 = vpop.f32.mrb[0].mxu0
        %v3825 = vadd.f32 %v3514, %v3824
        %v3826 = vpop.f32.mrb[0].mxu0
        %3827 = vmatprep.mubr.f32.mxu0 0.0
        %3828 = vmatmul.mubr.f32.gmra.mrb[0].mxu0 %v3608
        %v3829 = vpop.f32.mrb[0].mxu0
        %v3830 = vadd.f32 %v3514, %v3829
        %v3831 = vpop.f32.mrb[0].mxu0
        %3832 = vmatprep.mubr.f32.mxu0 0.0
        %3833 = vmatmul.mubr.f32.gmra.mrb[0].mxu0 %v3611
        %v3834 = vpop.f32.mrb[0].mxu0
        %v3835 = vadd.f32 %v3514, %v3834
        %v3836 = vpop.f32.mrb[0].mxu0
        %3837 = vdwg.mxu0
        %v3838 = vmax.f32 %v3680, 0.0
        %v3839 = vmax.f32 %v3685, 0.0
        %v3840 = vmax.f32 %v3690, 0.0
        %v3841 = vmax.f32 %v3695, 0.0
        %v3842 = vmax.f32 %v3700, 0.0
        %v3843 = vmax.f32 %v3705, 0.0
        %v3844 = vmax.f32 %v3710, 0.0
        %v3845 = vmax.f32 %v3715, 0.0
        %v3846 = vmax.f32 %v3720, 0.0
        %v3847 = vmax.f32 %v3725, 0.0
        %v3848 = vmax.f32 %v3730, 0.0
        %v3849 = vmax.f32 %v3735, 0.0
        %v3850 = vmax.f32 %v3740, 0.0
        %v3851 = vmax.f32 %v3745, 0.0
        %v3852 = vmax.f32 %v3750, 0.0
        %v3853 = vmax.f32 %v3755, 0.0
        %v3854 = vmax.f32 %v3760, 0.0
        %v3855 = vmax.f32 %v3765, 0.0
        %v3856 = vmax.f32 %v3770, 0.0
        %v3857 = vmax.f32 %v3775, 0.0
        %v3858 = vmax.f32 %v3780, 0.0
        %v3859 = vmax.f32 %v3785, 0.0
        %v3860 = vmax.f32 %v3790, 0.0
        %v3861 = vmax.f32 %v3795, 0.0
        %v3862 = vmax.f32 %v3800, 0.0
        %v3863 = vmax.f32 %v3805, 0.0
        %v3864 = vmax.f32 %v3810, 0.0
        %v3865 = vmax.f32 %v3815, 0.0
        %v3866 = vmax.f32 %v3820, 0.0
        %v3867 = vmax.f32 %v3825, 0.0
        %v3868 = vmax.f32 %v3830, 0.0
        %v3869 = vmax.f32 %v3835, 0.0
        %3870 = vst.msk [vmem:[#allocation4] sm:$0xff] %vm1656, %v1260
        %3871 = vst.msk [vmem:[#allocation4 + $0x8] sm:$0xff] %vm1656, %v1261
        %3872 = vst.msk [vmem:[#allocation4 + $0x10] sm:$0xff] %vm1656, %v1262
        %3873 = vst.msk [vmem:[#allocation4 + $0x18] sm:$0xff] %vm1656, %v1263
        %3874 = vst.msk [vmem:[#allocation4 + $0x20] sm:$0xff] %vm1656, %v1264
        %3875 = vst.msk [vmem:[#allocation4 + $0x28] sm:$0xff] %vm1656, %v1265
        %3876 = vst.msk [vmem:[#allocation4 + $0x30] sm:$0xff] %vm1656, %v1266
        %3877 = vst.msk [vmem:[#allocation4 + $0x38] sm:$0xff] %vm1656, %v1267
        %3878 = vst.msk [vmem:[#allocation4 + $0x40] sm:$0xff] %vm1656, %v1268
        %3879 = vst.msk [vmem:[#allocation4 + $0x48] sm:$0xff] %vm1656, %v1269
        %3880 = vst.msk [vmem:[#allocation4 + $0x50] sm:$0xff] %vm1656, %v1270
        %3881 = vst.msk [vmem:[#allocation4 + $0x58] sm:$0xff] %vm1656, %v1271
        %3882 = vst.msk [vmem:[#allocation4 + $0x60] sm:$0xff] %vm1656, %v1272
        %3883 = vst.msk [vmem:[#allocation4 + $0x68] sm:$0xff] %vm1656, %v1273
        %3884 = vst.msk [vmem:[#allocation4 + $0x70] sm:$0xff] %vm1656, %v1274
        %3885 = vst.msk [vmem:[#allocation4 + $0x78] sm:$0xff] %vm1656, %v1275
        %3886 = vst.msk [vmem:[#allocation4 + $0x80] sm:$0xff] %vm1656, %v1276
        %3887 = vst.msk [vmem:[#allocation4 + $0x88] sm:$0xff] %vm1656, %v1277
        %3888 = vst.msk [vmem:[#allocation4 + $0x90] sm:$0xff] %vm1656, %v1278
        %3889 = vst.msk [vmem:[#allocation4 + $0x98] sm:$0xff] %vm1656, %v1279
        %3890 = vst.msk [vmem:[#allocation4 + $0xa0] sm:$0xff] %vm1656, %v1280
        %3891 = vst.msk [vmem:[#allocation4 + $0xa8] sm:$0xff] %vm1656, %v1281
        %3892 = vst.msk [vmem:[#allocation4 + $0xb0] sm:$0xff] %vm1656, %v1282
        %3893 = vst.msk [vmem:[#allocation4 + $0xb8] sm:$0xff] %vm1656, %v1283
        %3894 = vst.msk [vmem:[#allocation4 + $0xc0] sm:$0xff] %vm1656, %v1284
        %3895 = vst.msk [vmem:[#allocation4 + $0xc8] sm:$0xff] %vm1656, %v1285
        %3896 = vst.msk [vmem:[#allocation4 + $0xd0] sm:$0xff] %vm1656, %v1286
        %3897 = vst.msk [vmem:[#allocation4 + $0xd8] sm:$0xff] %vm1656, %v1287
        %3898 = vst.msk [vmem:[#allocation4 + $0xe0] sm:$0xff] %vm1656, %v1288
        %3899 = vst.msk [vmem:[#allocation4 + $0xe8] sm:$0xff] %vm1656, %v1289
        %3900 = vst.msk [vmem:[#allocation4 + $0xf0] sm:$0xff] %vm1656, %v1290
        %3901 = vst.msk [vmem:[#allocation4 + $0xf8] sm:$0xff] %vm1656, %v1291
        %3934 = vrot.lane.b32.xlu0 %v3838, 8
        %v3935 = vpop.permute.xlu0 %3934
        %3936 = vrot.lane.b32.xlu0 %v3839, 8
        %v3937 = vpop.permute.xlu0 %3936
        %3938 = vrot.lane.b32.xlu0 %v3840, 8
        %v3939 = vpop.permute.xlu0 %3938
        %3940 = vrot.lane.b32.xlu0 %v3841, 8
        %v3941 = vpop.permute.xlu0 %3940
        %3942 = vrot.lane.b32.xlu0 %v3842, 8
        %v3943 = vpop.permute.xlu0 %3942
        %3944 = vrot.lane.b32.xlu0 %v3843, 8
        %v3945 = vpop.permute.xlu0 %3944
        %3946 = vrot.lane.b32.xlu0 %v3844, 8
        %v3947 = vpop.permute.xlu0 %3946
        %3948 = vrot.lane.b32.xlu0 %v3845, 8
        %v3949 = vpop.permute.xlu0 %3948
        %3950 = vrot.lane.b32.xlu0 %v3846, 8
        %v3951 = vpop.permute.xlu0 %3950
        %3952 = vrot.lane.b32.xlu0 %v3847, 8
        %v3953 = vpop.permute.xlu0 %3952
        %3954 = vrot.lane.b32.xlu0 %v3848, 8
        %v3955 = vpop.permute.xlu0 %3954
        %3956 = vrot.lane.b32.xlu0 %v3849, 8
        %v3957 = vpop.permute.xlu0 %3956
        %3958 = vrot.lane.b32.xlu0 %v3850, 8
        %v3959 = vpop.permute.xlu0 %3958
        %3960 = vrot.lane.b32.xlu0 %v3851, 8
        %v3961 = vpop.permute.xlu0 %3960
        %3962 = vrot.lane.b32.xlu0 %v3852, 8
        %v3963 = vpop.permute.xlu0 %3962
        %3964 = vrot.lane.b32.xlu0 %v3853, 8
        %v3965 = vpop.permute.xlu0 %3964
        %3966 = vrot.lane.b32.xlu0 %v3854, 8
        %v3967 = vpop.permute.xlu0 %3966
        %3968 = vrot.lane.b32.xlu0 %v3855, 8
        %v3969 = vpop.permute.xlu0 %3968
        %3970 = vrot.lane.b32.xlu0 %v3856, 8
        %v3971 = vpop.permute.xlu0 %3970
        %3972 = vrot.lane.b32.xlu0 %v3857, 8
        %v3973 = vpop.permute.xlu0 %3972
        %3974 = vrot.lane.b32.xlu0 %v3858, 8
        %v3975 = vpop.permute.xlu0 %3974
        %3976 = vrot.lane.b32.xlu0 %v3859, 8
        %v3977 = vpop.permute.xlu0 %3976
        %3978 = vrot.lane.b32.xlu0 %v3860, 8
        %v3979 = vpop.permute.xlu0 %3978
        %3980 = vrot.lane.b32.xlu0 %v3861, 8
        %v3981 = vpop.permute.xlu0 %3980
        %3982 = vrot.lane.b32.xlu0 %v3862, 8
        %v3983 = vpop.permute.xlu0 %3982
        %3984 = vrot.lane.b32.xlu0 %v3863, 8
        %v3985 = vpop.permute.xlu0 %3984
        %3986 = vrot.lane.b32.xlu0 %v3864, 8
        %v3987 = vpop.permute.xlu0 %3986
        %3988 = vrot.lane.b32.xlu0 %v3865, 8
        %v3989 = vpop.permute.xlu0 %3988
        %3990 = vrot.lane.b32.xlu0 %v3866, 8
        %v3991 = vpop.permute.xlu0 %3990
        %3992 = vrot.lane.b32.xlu0 %v3867, 8
        %v3993 = vpop.permute.xlu0 %3992
        %3994 = vrot.lane.b32.xlu0 %v3868, 8
        %v3995 = vpop.permute.xlu0 %3994
        %3996 = vrot.lane.b32.xlu0 %v3869, 8
        %v3997 = vpop.permute.xlu0 %3996
        %vm4030 = vcmask 195648
        %4031 = vst.msk [vmem:[#allocation4] sm:$0xff] %vm4030, %v3935
        %4032 = vst.msk [vmem:[#allocation4 + $0x8] sm:$0xff] %vm4030, %v3937
        %4033 = vst.msk [vmem:[#allocation4 + $0x10] sm:$0xff] %vm4030, %v3939
        %4034 = vst.msk [vmem:[#allocation4 + $0x18] sm:$0xff] %vm4030, %v3941
        %4035 = vst.msk [vmem:[#allocation4 + $0x20] sm:$0xff] %vm4030, %v3943
        %4036 = vst.msk [vmem:[#allocation4 + $0x28] sm:$0xff] %vm4030, %v3945
        %4037 = vst.msk [vmem:[#allocation4 + $0x30] sm:$0xff] %vm4030, %v3947
        %4038 = vst.msk [vmem:[#allocation4 + $0x38] sm:$0xff] %vm4030, %v3949
        %4039 = vst.msk [vmem:[#allocation4 + $0x40] sm:$0xff] %vm4030, %v3951
        %4040 = vst.msk [vmem:[#allocation4 + $0x48] sm:$0xff] %vm4030, %v3953
        %4041 = vst.msk [vmem:[#allocation4 + $0x50] sm:$0xff] %vm4030, %v3955
        %4042 = vst.msk [vmem:[#allocation4 + $0x58] sm:$0xff] %vm4030, %v3957
        %4043 = vst.msk [vmem:[#allocation4 + $0x60] sm:$0xff] %vm4030, %v3959
        %4044 = vst.msk [vmem:[#allocation4 + $0x68] sm:$0xff] %vm4030, %v3961
        %4045 = vst.msk [vmem:[#allocation4 + $0x70] sm:$0xff] %vm4030, %v3963
        %4046 = vst.msk [vmem:[#allocation4 + $0x78] sm:$0xff] %vm4030, %v3965
        %4047 = vst.msk [vmem:[#allocation4 + $0x80] sm:$0xff] %vm4030, %v3967
        %4048 = vst.msk [vmem:[#allocation4 + $0x88] sm:$0xff] %vm4030, %v3969
        %4049 = vst.msk [vmem:[#allocation4 + $0x90] sm:$0xff] %vm4030, %v3971
        %4050 = vst.msk [vmem:[#allocation4 + $0x98] sm:$0xff] %vm4030, %v3973
        %4051 = vst.msk [vmem:[#allocation4 + $0xa0] sm:$0xff] %vm4030, %v3975
        %4052 = vst.msk [vmem:[#allocation4 + $0xa8] sm:$0xff] %vm4030, %v3977
        %4053 = vst.msk [vmem:[#allocation4 + $0xb0] sm:$0xff] %vm4030, %v3979
        %4054 = vst.msk [vmem:[#allocation4 + $0xb8] sm:$0xff] %vm4030, %v3981
        %4055 = vst.msk [vmem:[#allocation4 + $0xc0] sm:$0xff] %vm4030, %v3983
        %4056 = vst.msk [vmem:[#allocation4 + $0xc8] sm:$0xff] %vm4030, %v3985
        %4057 = vst.msk [vmem:[#allocation4 + $0xd0] sm:$0xff] %vm4030, %v3987
        %4058 = vst.msk [vmem:[#allocation4 + $0xd8] sm:$0xff] %vm4030, %v3989
        %4059 = vst.msk [vmem:[#allocation4 + $0xe0] sm:$0xff] %vm4030, %v3991
        %4060 = vst.msk [vmem:[#allocation4 + $0xe8] sm:$0xff] %vm4030, %v3993
        %4061 = vst.msk [vmem:[#allocation4 + $0xf0] sm:$0xff] %vm4030, %v3995
        %4062 = vst.msk [vmem:[#allocation4 + $0xf8] sm:$0xff] %vm4030, %v3997
        %4095 = vrot.lane.b32.xlu0 %v1624, 24
        %v4096 = vpop.permute.xlu0 %4095
        %4097 = vrot.lane.b32.xlu0 %v1625, 24
        %v4098 = vpop.permute.xlu0 %4097
        %4099 = vrot.lane.b32.xlu0 %v1626, 24
        %v4100 = vpop.permute.xlu0 %4099
        %4101 = vrot.lane.b32.xlu0 %v1627, 24
        %v4102 = vpop.permute.xlu0 %4101
        %4103 = vrot.lane.b32.xlu0 %v1628, 24
        %v4104 = vpop.permute.xlu0 %4103
        %4105 = vrot.lane.b32.xlu0 %v1629, 24
        %v4106 = vpop.permute.xlu0 %4105
        %4107 = vrot.lane.b32.xlu0 %v1630, 24
        %v4108 = vpop.permute.xlu0 %4107
        %4109 = vrot.lane.b32.xlu0 %v1631, 24
        %v4110 = vpop.permute.xlu0 %4109
        %4111 = vrot.lane.b32.xlu0 %v1632, 24
        %v4112 = vpop.permute.xlu0 %4111
        %4113 = vrot.lane.b32.xlu0 %v1633, 24
        %v4114 = vpop.permute.xlu0 %4113
        %4115 = vrot.lane.b32.xlu0 %v1634, 24
        %v4116 = vpop.permute.xlu0 %4115
        %4117 = vrot.lane.b32.xlu0 %v1635, 24
        %v4118 = vpop.permute.xlu0 %4117
        %4119 = vrot.lane.b32.xlu0 %v1636, 24
        %v4120 = vpop.permute.xlu0 %4119
        %4121 = vrot.lane.b32.xlu0 %v1637, 24
        %v4122 = vpop.permute.xlu0 %4121
        %4123 = vrot.lane.b32.xlu0 %v1638, 24
        %v4124 = vpop.permute.xlu0 %4123
        %4125 = vrot.lane.b32.xlu0 %v1639, 24
        %v4126 = vpop.permute.xlu0 %4125
        %4127 = vrot.lane.b32.xlu0 %v1640, 24
        %v4128 = vpop.permute.xlu0 %4127
        %4129 = vrot.lane.b32.xlu0 %v1641, 24
        %v4130 = vpop.permute.xlu0 %4129
        %4131 = vrot.lane.b32.xlu0 %v1642, 24
        %v4132 = vpop.permute.xlu0 %4131
        %4133 = vrot.lane.b32.xlu0 %v1643, 24
        %v4134 = vpop.permute.xlu0 %4133
        %4135 = vrot.lane.b32.xlu0 %v1644, 24
        %v4136 = vpop.permute.xlu0 %4135
        %4137 = vrot.lane.b32.xlu0 %v1645, 24
        %v4138 = vpop.permute.xlu0 %4137
        %4139 = vrot.lane.b32.xlu0 %v1646, 24
        %v4140 = vpop.permute.xlu0 %4139
        %4141 = vrot.lane.b32.xlu0 %v1647, 24
        %v4142 = vpop.permute.xlu0 %4141
        %4143 = vrot.lane.b32.xlu0 %v1648, 24
        %v4144 = vpop.permute.xlu0 %4143
        %4145 = vrot.lane.b32.xlu0 %v1649, 24
        %v4146 = vpop.permute.xlu0 %4145
        %4147 = vrot.lane.b32.xlu0 %v1650, 24
        %v4148 = vpop.permute.xlu0 %4147
        %4149 = vrot.lane.b32.xlu0 %v1651, 24
        %v4150 = vpop.permute.xlu0 %4149
        %4151 = vrot.lane.b32.xlu0 %v1652, 24
        %v4152 = vpop.permute.xlu0 %4151
        %4153 = vrot.lane.b32.xlu0 %v1653, 24
        %v4154 = vpop.permute.xlu0 %4153
        %4155 = vrot.lane.b32.xlu0 %v1654, 24
        %v4156 = vpop.permute.xlu0 %4155
        %4157 = vrot.lane.b32.xlu0 %v1655, 24
        %v4158 = vpop.permute.xlu0 %4157
        %4191 = vst.msk [vmem:[#allocation4] sm:$0xff] %vm2469, %v4096
        %4192 = vst.msk [vmem:[#allocation4 + $0x8] sm:$0xff] %vm2469, %v4098
        %4193 = vst.msk [vmem:[#allocation4 + $0x10] sm:$0xff] %vm2469, %v4100
        %4194 = vst.msk [vmem:[#allocation4 + $0x18] sm:$0xff] %vm2469, %v4102
        %4195 = vst.msk [vmem:[#allocation4 + $0x20] sm:$0xff] %vm2469, %v4104
        %4196 = vst.msk [vmem:[#allocation4 + $0x28] sm:$0xff] %vm2469, %v4106
        %4197 = vst.msk [vmem:[#allocation4 + $0x30] sm:$0xff] %vm2469, %v4108
        %4198 = vst.msk [vmem:[#allocation4 + $0x38] sm:$0xff] %vm2469, %v4110
        %4199 = vst.msk [vmem:[#allocation4 + $0x40] sm:$0xff] %vm2469, %v4112
        %4200 = vst.msk [vmem:[#allocation4 + $0x48] sm:$0xff] %vm2469, %v4114
        %4201 = vst.msk [vmem:[#allocation4 + $0x50] sm:$0xff] %vm2469, %v4116
        %4202 = vst.msk [vmem:[#allocation4 + $0x58] sm:$0xff] %vm2469, %v4118
        %4203 = vst.msk [vmem:[#allocation4 + $0x60] sm:$0xff] %vm2469, %v4120
        %4204 = vst.msk [vmem:[#allocation4 + $0x68] sm:$0xff] %vm2469, %v4122
        %4205 = vst.msk [vmem:[#allocation4 + $0x70] sm:$0xff] %vm2469, %v4124
        %4206 = vst.msk [vmem:[#allocation4 + $0x78] sm:$0xff] %vm2469, %v4126
        %4207 = vst.msk [vmem:[#allocation4 + $0x80] sm:$0xff] %vm2469, %v4128
        %4208 = vst.msk [vmem:[#allocation4 + $0x88] sm:$0xff] %vm2469, %v4130
        %4209 = vst.msk [vmem:[#allocation4 + $0x90] sm:$0xff] %vm2469, %v4132
        %4210 = vst.msk [vmem:[#allocation4 + $0x98] sm:$0xff] %vm2469, %v4134
        %4211 = vst.msk [vmem:[#allocation4 + $0xa0] sm:$0xff] %vm2469, %v4136
        %4212 = vst.msk [vmem:[#allocation4 + $0xa8] sm:$0xff] %vm2469, %v4138
        %4213 = vst.msk [vmem:[#allocation4 + $0xb0] sm:$0xff] %vm2469, %v4140
        %4214 = vst.msk [vmem:[#allocation4 + $0xb8] sm:$0xff] %vm2469, %v4142
        %4215 = vst.msk [vmem:[#allocation4 + $0xc0] sm:$0xff] %vm2469, %v4144
        %4216 = vst.msk [vmem:[#allocation4 + $0xc8] sm:$0xff] %vm2469, %v4146
        %4217 = vst.msk [vmem:[#allocation4 + $0xd0] sm:$0xff] %vm2469, %v4148
        %4218 = vst.msk [vmem:[#allocation4 + $0xd8] sm:$0xff] %vm2469, %v4150
        %4219 = vst.msk [vmem:[#allocation4 + $0xe0] sm:$0xff] %vm2469, %v4152
        %4220 = vst.msk [vmem:[#allocation4 + $0xe8] sm:$0xff] %vm2469, %v4154
        %4221 = vst.msk [vmem:[#allocation4 + $0xf0] sm:$0xff] %vm2469, %v4156
        %4222 = vst.msk [vmem:[#allocation4 + $0xf8] sm:$0xff] %vm2469, %v4158
        %v4223 = vld [vmem:[#allocation4] sm:$0xff]
        %v4224 = vld [vmem:[#allocation4 + $0x8] sm:$0xff]
        %v4225 = vld [vmem:[#allocation4 + $0x10] sm:$0xff]
        %v4226 = vld [vmem:[#allocation4 + $0x18] sm:$0xff]
        %v4227 = vld [vmem:[#allocation4 + $0x20] sm:$0xff]
        %v4228 = vld [vmem:[#allocation4 + $0x28] sm:$0xff]
        %v4229 = vld [vmem:[#allocation4 + $0x30] sm:$0xff]
        %v4230 = vld [vmem:[#allocation4 + $0x38] sm:$0xff]
        %v4231 = vld [vmem:[#allocation4 + $0x40] sm:$0xff]
        %v4232 = vld [vmem:[#allocation4 + $0x48] sm:$0xff]
        %v4233 = vld [vmem:[#allocation4 + $0x50] sm:$0xff]
        %v4234 = vld [vmem:[#allocation4 + $0x58] sm:$0xff]
        %v4235 = vld [vmem:[#allocation4 + $0x60] sm:$0xff]
        %v4236 = vld [vmem:[#allocation4 + $0x68] sm:$0xff]
        %v4237 = vld [vmem:[#allocation4 + $0x70] sm:$0xff]
        %v4238 = vld [vmem:[#allocation4 + $0x78] sm:$0xff]
        %v4239 = vld [vmem:[#allocation4 + $0x80] sm:$0xff]
        %v4240 = vld [vmem:[#allocation4 + $0x88] sm:$0xff]
        %v4241 = vld [vmem:[#allocation4 + $0x90] sm:$0xff]
        %v4242 = vld [vmem:[#allocation4 + $0x98] sm:$0xff]
        %v4243 = vld [vmem:[#allocation4 + $0xa0] sm:$0xff]
        %v4244 = vld [vmem:[#allocation4 + $0xa8] sm:$0xff]
        %v4245 = vld [vmem:[#allocation4 + $0xb0] sm:$0xff]
        %v4246 = vld [vmem:[#allocation4 + $0xb8] sm:$0xff]
        %v4247 = vld [vmem:[#allocation4 + $0xc0] sm:$0xff]
        %v4248 = vld [vmem:[#allocation4 + $0xc8] sm:$0xff]
        %v4249 = vld [vmem:[#allocation4 + $0xd0] sm:$0xff]
        %v4250 = vld [vmem:[#allocation4 + $0xd8] sm:$0xff]
        %v4251 = vld [vmem:[#allocation4 + $0xe0] sm:$0xff]
        %v4252 = vld [vmem:[#allocation4 + $0xe8] sm:$0xff]
        %v4253 = vld [vmem:[#allocation4 + $0xf0] sm:$0xff]
        %v4254 = vld [vmem:[#allocation4 + $0xf8] sm:$0xff]
        %vm4255 = vcmask 261120
        %v4256 = vsel %vm4255, %v4223, 0.0
        %v4257 = vsel %vm4255, %v4224, 0.0
        %v4258 = vadd.f32 %v4256, %v4257
        %v4259 = vsel %vm4255, %v4225, 0.0
        %v4260 = vadd.f32 %v4258, %v4259
        %v4261 = vsel %vm4255, %v4226, 0.0
        %v4262 = vadd.f32 %v4260, %v4261
        %v4263 = vsel %vm4255, %v4227, 0.0
        %v4264 = vadd.f32 %v4262, %v4263
        %v4265 = vsel %vm4255, %v4228, 0.0
        %v4266 = vadd.f32 %v4264, %v4265
        %v4267 = vsel %vm4255, %v4229, 0.0
        %v4268 = vadd.f32 %v4266, %v4267
        %v4269 = vsel %vm4255, %v4230, 0.0
        %v4270 = vadd.f32 %v4268, %v4269
        %v4271 = vsel %vm4255, %v4231, 0.0
        %v4272 = vadd.f32 %v4270, %v4271
        %v4273 = vsel %vm4255, %v4232, 0.0
        %v4274 = vadd.f32 %v4272, %v4273
        %v4275 = vsel %vm4255, %v4233, 0.0
        %v4276 = vadd.f32 %v4274, %v4275
        %v4277 = vsel %vm4255, %v4234, 0.0
        %v4278 = vadd.f32 %v4276, %v4277
        %v4279 = vsel %vm4255, %v4235, 0.0
        %v4280 = vadd.f32 %v4278, %v4279
        %v4281 = vsel %vm4255, %v4236, 0.0
        %v4282 = vadd.f32 %v4280, %v4281
        %v4283 = vsel %vm4255, %v4237, 0.0
        %v4284 = vadd.f32 %v4282, %v4283
        %v4285 = vsel %vm4255, %v4238, 0.0
        %v4286 = vadd.f32 %v4284, %v4285
        %v4287 = vsel %vm4255, %v4239, 0.0
        %v4288 = vadd.f32 %v4286, %v4287
        %v4289 = vsel %vm4255, %v4240, 0.0
        %v4290 = vadd.f32 %v4288, %v4289
        %v4291 = vsel %vm4255, %v4241, 0.0
        %v4292 = vadd.f32 %v4290, %v4291
        %v4293 = vsel %vm4255, %v4242, 0.0
        %v4294 = vadd.f32 %v4292, %v4293
        %v4295 = vsel %vm4255, %v4243, 0.0
        %v4296 = vadd.f32 %v4294, %v4295
        %v4297 = vsel %vm4255, %v4244, 0.0
        %v4298 = vadd.f32 %v4296, %v4297
        %v4299 = vsel %vm4255, %v4245, 0.0
        %v4300 = vadd.f32 %v4298, %v4299
        %v4301 = vsel %vm4255, %v4246, 0.0
        %v4302 = vadd.f32 %v4300, %v4301
        %v4303 = vsel %vm4255, %v4247, 0.0
        %v4304 = vadd.f32 %v4302, %v4303
        %v4305 = vsel %vm4255, %v4248, 0.0
        %v4306 = vadd.f32 %v4304, %v4305
        %v4307 = vsel %vm4255, %v4249, 0.0
        %v4308 = vadd.f32 %v4306, %v4307
        %v4309 = vsel %vm4255, %v4250, 0.0
        %v4310 = vadd.f32 %v4308, %v4309
        %v4311 = vsel %vm4255, %v4251, 0.0
        %v4312 = vadd.f32 %v4310, %v4311
        %v4313 = vsel %vm4255, %v4252, 0.0
        %v4314 = vadd.f32 %v4312, %v4313
        %v4315 = vsel %vm4255, %v4253, 0.0
        %v4316 = vadd.f32 %v4314, %v4315
        %v4317 = vsel %vm4255, %v4254, 0.0
        %v4318 = vadd.f32 %v4316, %v4317
        %v4319 = vrot.slane %v4318, 4
        %v4320 = vadd.f32 %v4318, %v4319
        %v4321 = vrot.slane %v4320, 2
        %v4322 = vadd.f32 %v4320, %v4321
        %v4323 = vrot.slane %v4322, 1
        %v4324 = vadd.f32 %v4322, %v4323
        %v4325 = vrcp.pop 256.0
        %v4326 = vmul.f32 %v4324, %v4325
        %v4327 = vsel %vm4255, %v4223, -inf
        %v4328 = vsel %vm4255, %v4224, -inf
        %v4329 = vsel %vm4255, %v4225, -inf
        %v4330 = vsel %vm4255, %v4226, -inf
        %v4331 = vsel %vm4255, %v4227, -inf
        %v4332 = vmax.f32 %v4327, %v4331
        %v4333 = vsel %vm4255, %v4228, -inf
        %v4334 = vmax.f32 %v4328, %v4333
        %v4335 = vsel %vm4255, %v4229, -inf
        %v4336 = vmax.f32 %v4329, %v4335
        %v4337 = vsel %vm4255, %v4230, -inf
        %v4338 = vmax.f32 %v4330, %v4337
        %v4339 = vsel %vm4255, %v4231, -inf
        %v4340 = vmax.f32 %v4332, %v4339
        %v4341 = vsel %vm4255, %v4232, -inf
        %v4342 = vmax.f32 %v4334, %v4341
        %v4343 = vsel %vm4255, %v4233, -inf
        %v4344 = vmax.f32 %v4336, %v4343
        %v4345 = vsel %vm4255, %v4234, -inf
        %v4346 = vmax.f32 %v4338, %v4345
        %v4347 = vsel %vm4255, %v4235, -inf
        %v4348 = vmax.f32 %v4340, %v4347
        %v4349 = vsel %vm4255, %v4236, -inf
        %v4350 = vmax.f32 %v4342, %v4349
        %v4351 = vsel %vm4255, %v4237, -inf
        %v4352 = vmax.f32 %v4344, %v4351
        %v4353 = vsel %vm4255, %v4238, -inf
        %v4354 = vmax.f32 %v4346, %v4353
        %v4355 = vsel %vm4255, %v4239, -inf
        %v4356 = vmax.f32 %v4348, %v4355
        %v4357 = vsel %vm4255, %v4240, -inf
        %v4358 = vmax.f32 %v4350, %v4357
        %v4359 = vsel %vm4255, %v4241, -inf
        %v4360 = vmax.f32 %v4352, %v4359
        %v4361 = vsel %vm4255, %v4242, -inf
        %v4362 = vmax.f32 %v4354, %v4361
        %v4363 = vsel %vm4255, %v4243, -inf
        %v4364 = vmax.f32 %v4356, %v4363
        %v4365 = vsel %vm4255, %v4244, -inf
        %v4366 = vmax.f32 %v4358, %v4365
        %v4367 = vsel %vm4255, %v4245, -inf
        %v4368 = vmax.f32 %v4360, %v4367
        %v4369 = vsel %vm4255, %v4246, -inf
        %v4370 = vmax.f32 %v4362, %v4369
        %v4371 = vsel %vm4255, %v4247, -inf
        %v4372 = vmax.f32 %v4364, %v4371
        %v4373 = vsel %vm4255, %v4248, -inf
        %v4374 = vmax.f32 %v4366, %v4373
        %v4375 = vsel %vm4255, %v4249, -inf
        %v4376 = vmax.f32 %v4368, %v4375
        %v4377 = vsel %vm4255, %v4250, -inf
        %v4378 = vmax.f32 %v4370, %v4377
        %v4379 = vsel %vm4255, %v4251, -inf
        %v4380 = vmax.f32 %v4372, %v4379
        %v4381 = vsel %vm4255, %v4252, -inf
        %v4382 = vmax.f32 %v4374, %v4381
        %v4383 = vsel %vm4255, %v4253, -inf
        %v4384 = vmax.f32 %v4376, %v4383
        %v4385 = vsel %vm4255, %v4254, -inf
        %v4386 = vmax.f32 %v4378, %v4385
        %v4387 = vmax.f32 %v4380, %v4382
        %v4388 = vmax.f32 %v4384, %v4386
        %v4389 = vmax.f32 %v4387, %v4388
        %v4390 = vrot.slane %v4389, 4
        %v4391 = vmax.f32 %v4389, %v4390
        %v4392 = vrot.slane %v4391, 2
        %v4393 = vmax.f32 %v4391, %v4392
        %v4394 = vrot.slane %v4393, 1
        %v4395 = vmax.f32 %v4393, %v4394
        %v4396 = vsel %vm640, %v4326, %v4395
        %v4397 = vld [vmem:[#allocation18] sm:$0xff]
        %v4398 = vld [vmem:[#allocation18 + $0x8] sm:$0xff]
        %v4399 = vld [vmem:[#allocation18 + $0x10] sm:$0xff]
        %v4400 = vld [vmem:[#allocation18 + $0x18] sm:$0xff]
        %v4401 = vld [vmem:[#allocation20] sm:$0x1]
        %v4403 = vlaneseq
        %v4404 = vshrl.u32 %v4403, 7
        %v4405 = vsub.s32 0, %v4404
        %v4406 = vrot.slane %v4401, %v4405
        %v4409 = vsel %vm4255, %v4396, 0
        %4411 = vmatprep.subr.mxu0 0.0
        %4412 = vmatpush1.msra.mxu0 %v4397
        %4413 = vmatprep.subr.mxu0 0.0
        %4414 = vmatpush1.msra.mxu0 %v4398
        %4415 = vmatprep.subr.mxu0 0.0
        %4416 = vmatpush1.msra.mxu0 %v4399
        %4417 = vmatprep.subr.mxu0 0.0
        %4418 = vmatpush1.msra.mxu0 %v4400
        %4419 = vmatprep.subr.mxu0 0.0
        %4420 = vmatpush1.msra.mxu0 0.0
        %4421 = vmatprep.subr.mxu0 0.0
        %4422 = vmatpush1.msra.mxu0 0.0
        %4423 = vmatprep.subr.mxu0 0.0
        %4424 = vmatpush1.msra.mxu0 0.0
        %4425 = vmatprep.subr.mxu0 0.0
        %4426 = vmatpush1.msra.mxu0 0.0
        %4427 = vmatprep.subr.mxu0 0.0
        %4428 = vmatpush1.msra.mxu0 0.0
        %4429 = vmatprep.subr.mxu0 0.0
        %4430 = vmatpush1.msra.mxu0 0.0
        %4431 = vmatprep.subr.mxu0 0.0
        %4432 = vmatpush1.msra.mxu0 0.0
        %4433 = vmatprep.subr.mxu0 0.0
        %4434 = vmatpush1.msra.mxu0 0.0
        %4435 = vmatprep.subr.mxu0 0.0
        %4436 = vmatpush1.msra.mxu0 0.0
        %4437 = vmatprep.subr.mxu0 0.0
        %4438 = vmatpush1.msra.mxu0 0.0
        %4439 = vmatprep.subr.mxu0 0.0
        %4440 = vmatpush1.msra.mxu0 0.0
        %4441 = vmatprep.subr.mxu0 0.0
        %4442 = vmatpush1.msra.mxu0 0.0
        %4443 = vmatprep.subr.mxu0 0.0
        %4444 = vmatpush1.msra.mxu0 0.0
        %4445 = vmatprep.subr.mxu0 0.0
        %4446 = vmatpush1.msra.mxu0 0.0
        %4447 = vmatprep.subr.mxu0 0.0
        %4448 = vmatpush1.msra.mxu0 0.0
        %4449 = vmatprep.subr.mxu0 0.0
        %4450 = vmatpush1.msra.mxu0 0.0
        %4451 = vmatprep.subr.mxu0 0.0
        %4452 = vmatpush1.msra.mxu0 0.0
        %4453 = vmatprep.subr.mxu0 0.0
        %4454 = vmatpush1.msra.mxu0 0.0
        %4455 = vmatprep.subr.mxu0 0.0
        %4456 = vmatpush1.msra.mxu0 0.0
        %4457 = vmatprep.subr.mxu0 0.0
        %4458 = vmatpush1.msra.mxu0 0.0
        %4459 = vmatprep.subr.mxu0 0.0
        %4460 = vmatpush1.msra.mxu0 0.0
        %4461 = vmatprep.subr.mxu0 0.0
        %4462 = vmatpush1.msra.mxu0 0.0
        %4463 = vmatprep.subr.mxu0 0.0
        %4464 = vmatpush1.msra.mxu0 0.0
        %4465 = vmatprep.subr.mxu0 0.0
        %4466 = vmatpush1.msra.mxu0 0.0
        %4467 = vmatprep.subr.mxu0 0.0
        %4468 = vmatpush1.msra.mxu0 0.0
        %4469 = vmatprep.subr.mxu0 0.0
        %4470 = vmatpush1.msra.mxu0 0.0
        %4471 = vmatprep.subr.mxu0 0.0
        %4472 = vmatpush1.msra.mxu0 0.0
        %4473 = vmatprep.subr.mxu0 0.0
        %4474 = vmatpush1.msra.mxu0 0.0
        %4475 = vmatprep.mubr.f32.mxu0 0.0
        %4476 = vmatmul.mubr.f32.gmra.mrb[0].mxu0 %v4409
        %v4477 = vpop.f32.mrb[0].mxu0
        %v4478 = vadd.f32 %v4406, %v4477
        %v4479 = vpop.f32.mrb[0].mxu0
        %4480 = vdwg.mxu0
        %v4481 = vmax.f32 %v4478, 0.0
        %v4482 = vld [vmem:[#allocation21] sm:$0x3]
        %v4483 = vld [vmem:[#allocation23] sm:$0x1]
        %v4485 = vlaneseq
        %v4486 = vshrl.u32 %v4485, 7
        %v4487 = vsub.s32 0, %v4486
        %v4488 = vrot.slane %v4483, %v4487
        %vm4490 = vcmask 15360
        %v4492 = vsel %vm4490, %v4481, 0
        %vm4494 = vcmask 1041408
        %v4496 = vsel %vm4494, %v4482, 0
        %4498 = vmatprep.subr.mxu0 0.0
        %4499 = vmatpush1.msra.mxu0 %v4496
        %4500 = vmatprep.subr.mxu0 0.0
        %4501 = vmatpush1.msra.mxu0 0.0
        %4502 = vmatprep.subr.mxu0 0.0
        %4503 = vmatpush1.msra.mxu0 0.0
        %4504 = vmatprep.subr.mxu0 0.0
        %4505 = vmatpush1.msra.mxu0 0.0
        %4506 = vmatprep.subr.mxu0 0.0
        %4507 = vmatpush1.msra.mxu0 0.0
        %4508 = vmatprep.subr.mxu0 0.0
        %4509 = vmatpush1.msra.mxu0 0.0
        %4510 = vmatprep.subr.mxu0 0.0
        %4511 = vmatpush1.msra.mxu0 0.0
        %4512 = vmatprep.subr.mxu0 0.0
        %4513 = vmatpush1.msra.mxu0 0.0
        %4514 = vmatprep.subr.mxu0 0.0
        %4515 = vmatpush1.msra.mxu0 0.0
        %4516 = vmatprep.subr.mxu0 0.0
        %4517 = vmatpush1.msra.mxu0 0.0
        %4518 = vmatprep.subr.mxu0 0.0
        %4519 = vmatpush1.msra.mxu0 0.0
        %4520 = vmatprep.subr.mxu0 0.0
        %4521 = vmatpush1.msra.mxu0 0.0
        %4522 = vmatprep.subr.mxu0 0.0
        %4523 = vmatpush1.msra.mxu0 0.0
        %4524 = vmatprep.subr.mxu0 0.0
        %4525 = vmatpush1.msra.mxu0 0.0
        %4526 = vmatprep.subr.mxu0 0.0
        %4527 = vmatpush1.msra.mxu0 0.0
        %4528 = vmatprep.subr.mxu0 0.0
        %4529 = vmatpush1.msra.mxu0 0.0
        %4530 = vmatprep.subr.mxu0 0.0
        %4531 = vmatpush1.msra.mxu0 0.0
        %4532 = vmatprep.subr.mxu0 0.0
        %4533 = vmatpush1.msra.mxu0 0.0
        %4534 = vmatprep.subr.mxu0 0.0
        %4535 = vmatpush1.msra.mxu0 0.0
        %4536 = vmatprep.subr.mxu0 0.0
        %4537 = vmatpush1.msra.mxu0 0.0
        %4538 = vmatprep.subr.mxu0 0.0
        %4539 = vmatpush1.msra.mxu0 0.0
        %4540 = vmatprep.subr.mxu0 0.0
        %4541 = vmatpush1.msra.mxu0 0.0
        %4542 = vmatprep.subr.mxu0 0.0
        %4543 = vmatpush1.msra.mxu0 0.0
        %4544 = vmatprep.subr.mxu0 0.0
        %4545 = vmatpush1.msra.mxu0 0.0
        %4546 = vmatprep.subr.mxu0 0.0
        %4547 = vmatpush1.msra.mxu0 0.0
        %4548 = vmatprep.subr.mxu0 0.0
        %4549 = vmatpush1.msra.mxu0 0.0
        %4550 = vmatprep.subr.mxu0 0.0
        %4551 = vmatpush1.msra.mxu0 0.0
        %4552 = vmatprep.subr.mxu0 0.0
        %4553 = vmatpush1.msra.mxu0 0.0
        %4554 = vmatprep.subr.mxu0 0.0
        %4555 = vmatpush1.msra.mxu0 0.0
        %4556 = vmatprep.subr.mxu0 0.0
        %4557 = vmatpush1.msra.mxu0 0.0
        %4558 = vmatprep.subr.mxu0 0.0
        %4559 = vmatpush1.msra.mxu0 0.0
        %4560 = vmatprep.subr.mxu0 0.0
        %4561 = vmatpush1.msra.mxu0 0.0
        %4562 = vmatprep.mubr.f32.mxu0 0.0
        %4563 = vmatmul.mubr.f32.gmra.mrb[0].mxu0 %v4492
        %v4564 = vpop.f32.mrb[0].mxu0
        %v4565 = vadd.f32 %v4488, %v4564
        %v4566 = vpop.f32.mrb[0].mxu0
        %4567 = vdwg.mxu0
        %v4569 = vrot.slane %v4565, 1
        %v4571 = vadd.f32 %v4565, %v4569
        %v4572 = vxor.u32 %v4571, 2147483648
        %v4573 = vmul.f32 %v4572, 1.442695
        %v4574 = vpow.pop %v4573
        %v4575 = vadd.f32 %v4574, 1.0
        %v4576 = vrcp.pop %v4575
        %v4577 = vmul.f32 1.0, %v4576
        %v4578 = vlaneseq
        %v4579 = vshrl.u32 %v4578, 7
        %v4580 = vadd.s32 %v4579, 8
        %v4581 = vadd.s32 %v4579, 16
        %v4582 = vadd.s32 %v4579, 24
        %v4583 = vlaneseq
        %v4584 = vand.u32 %v4583, 127
        %vm4585 = vcmp.eq.s32.totalorder %v4579, %v4584
        %vm4586 = vcmp.eq.s32.totalorder %v4580, %v4584
        %vm4587 = vcmp.eq.s32.totalorder %v4581, %v4584
        %vm4588 = vcmp.eq.s32.totalorder %v4582, %v4584
        %v4589 = vlaneseq
        %v4590 = vshrl.u32 %v4589, 7
        %v4591 = vsub.s32 0, %v4590
        %v4592 = vrot.slane %v4577, %v4591
        %v4593 = vsel %vm4585, %v4592, 0.0
        %v4594 = vsel %vm4586, %v4592, 0.0
        %v4595 = vsel %vm4587, %v4592, 0.0
        %v4596 = vsel %vm4588, %v4592, 0.0
        %v4598 = vsel %vm4255, %v4593, 0
        %v4601 = vsel %vm4255, %v4594, 0
        %v4604 = vsel %vm4255, %v4595, 0
        %v4607 = vsel %vm4255, %v4596, 0
        %v4610 = vsel %vm4255, %v4223, 0
        %v4613 = vsel %vm4255, %v4224, 0
        %v4616 = vsel %vm4255, %v4225, 0
        %v4619 = vsel %vm4255, %v4226, 0
        %v4622 = vsel %vm4255, %v4227, 0
        %v4625 = vsel %vm4255, %v4228, 0
        %v4628 = vsel %vm4255, %v4229, 0
        %v4631 = vsel %vm4255, %v4230, 0
        %v4634 = vsel %vm4255, %v4231, 0
        %v4637 = vsel %vm4255, %v4232, 0
        %v4640 = vsel %vm4255, %v4233, 0
        %v4643 = vsel %vm4255, %v4234, 0
        %v4646 = vsel %vm4255, %v4235, 0
        %v4649 = vsel %vm4255, %v4236, 0
        %v4652 = vsel %vm4255, %v4237, 0
        %v4655 = vsel %vm4255, %v4238, 0
        %v4658 = vsel %vm4255, %v4239, 0
        %v4661 = vsel %vm4255, %v4240, 0
        %v4664 = vsel %vm4255, %v4241, 0
        %v4667 = vsel %vm4255, %v4242, 0
        %v4670 = vsel %vm4255, %v4243, 0
        %v4673 = vsel %vm4255, %v4244, 0
        %v4676 = vsel %vm4255, %v4245, 0
        %v4679 = vsel %vm4255, %v4246, 0
        %v4682 = vsel %vm4255, %v4247, 0
        %v4685 = vsel %vm4255, %v4248, 0
        %v4688 = vsel %vm4255, %v4249, 0
        %v4691 = vsel %vm4255, %v4250, 0
        %v4694 = vsel %vm4255, %v4251, 0
        %v4697 = vsel %vm4255, %v4252, 0
        %v4700 = vsel %vm4255, %v4253, 0
        %v4703 = vsel %vm4255, %v4254, 0
        %4705 = vmatprep.subr.mxu0 0.0
        %4706 = vmatpush1.xpose.msra.mxu0 %v4610
        %4707 = vmatprep.subr.mxu0 0.0
        %4708 = vmatpush1.xpose.msra.mxu0 %v4613
        %4709 = vmatprep.subr.mxu0 0.0
        %4710 = vmatpush1.xpose.msra.mxu0 %v4616
        %4711 = vmatprep.subr.mxu0 0.0
        %4712 = vmatpush1.xpose.msra.mxu0 %v4619
        %4713 = vmatprep.subr.mxu0 0.0
        %4714 = vmatpush1.xpose.msra.mxu0 %v4622
        %4715 = vmatprep.subr.mxu0 0.0
        %4716 = vmatpush1.xpose.msra.mxu0 %v4625
        %4717 = vmatprep.subr.mxu0 0.0
        %4718 = vmatpush1.xpose.msra.mxu0 %v4628
        %4719 = vmatprep.subr.mxu0 0.0
        %4720 = vmatpush1.xpose.msra.mxu0 %v4631
        %4721 = vmatprep.subr.mxu0 0.0
        %4722 = vmatpush1.xpose.msra.mxu0 %v4634
        %4723 = vmatprep.subr.mxu0 0.0
        %4724 = vmatpush1.xpose.msra.mxu0 %v4637
        %4725 = vmatprep.subr.mxu0 0.0
        %4726 = vmatpush1.xpose.msra.mxu0 %v4640
        %4727 = vmatprep.subr.mxu0 0.0
        %4728 = vmatpush1.xpose.msra.mxu0 %v4643
        %4729 = vmatprep.subr.mxu0 0.0
        %4730 = vmatpush1.xpose.msra.mxu0 %v4646
        %4731 = vmatprep.subr.mxu0 0.0
        %4732 = vmatpush1.xpose.msra.mxu0 %v4649
        %4733 = vmatprep.subr.mxu0 0.0
        %4734 = vmatpush1.xpose.msra.mxu0 %v4652
        %4735 = vmatprep.subr.mxu0 0.0
        %4736 = vmatpush1.xpose.msra.mxu0 %v4655
        %4737 = vmatprep.subr.mxu0 0.0
        %4738 = vmatpush1.xpose.msra.mxu0 %v4658
        %4739 = vmatprep.subr.mxu0 0.0
        %4740 = vmatpush1.xpose.msra.mxu0 %v4661
        %4741 = vmatprep.subr.mxu0 0.0
        %4742 = vmatpush1.xpose.msra.mxu0 %v4664
        %4743 = vmatprep.subr.mxu0 0.0
        %4744 = vmatpush1.xpose.msra.mxu0 %v4667
        %4745 = vmatprep.subr.mxu0 0.0
        %4746 = vmatpush1.xpose.msra.mxu0 %v4670
        %4747 = vmatprep.subr.mxu0 0.0
        %4748 = vmatpush1.xpose.msra.mxu0 %v4673
        %4749 = vmatprep.subr.mxu0 0.0
        %4750 = vmatpush1.xpose.msra.mxu0 %v4676
        %4751 = vmatprep.subr.mxu0 0.0
        %4752 = vmatpush1.xpose.msra.mxu0 %v4679
        %4753 = vmatprep.subr.mxu0 0.0
        %4754 = vmatpush1.xpose.msra.mxu0 %v4682
        %4755 = vmatprep.subr.mxu0 0.0
        %4756 = vmatpush1.xpose.msra.mxu0 %v4685
        %4757 = vmatprep.subr.mxu0 0.0
        %4758 = vmatpush1.xpose.msra.mxu0 %v4688
        %4759 = vmatprep.subr.mxu0 0.0
        %4760 = vmatpush1.xpose.msra.mxu0 %v4691
        %4761 = vmatprep.subr.mxu0 0.0
        %4762 = vmatpush1.xpose.msra.mxu0 %v4694
        %4763 = vmatprep.subr.mxu0 0.0
        %4764 = vmatpush1.xpose.msra.mxu0 %v4697
        %4765 = vmatprep.subr.mxu0 0.0
        %4766 = vmatpush1.xpose.msra.mxu0 %v4700
        %4767 = vmatprep.subr.mxu0 0.0
        %4768 = vmatpush1.xpose.msra.mxu0 %v4703
        %4769 = vmatprep.mubr.f32.mxu0 0.0
        %4770 = vmatmul.mubr.f32.gmra.mrb[0].mxu0 %v4598
        %v4771 = vpop.f32.mrb[0].mxu0
        %v4772 = vadd.f32 0.0, %v4771
        %v4773 = vpop.f32.mrb[0].mxu0
        %v4774 = vadd.f32 0.0, %v4773
        %4775 = vmatprep.mubr.f32.mxu0 0.0
        %4776 = vmatmul.mubr.f32.gmra.mrb[0].mxu0 %v4601
        %v4777 = vpop.f32.mrb[0].mxu0
        %v4778 = vadd.f32 0.0, %v4777
        %v4779 = vpop.f32.mrb[0].mxu0
        %v4780 = vadd.f32 0.0, %v4779
        %4781 = vmatprep.mubr.f32.mxu0 0.0
        %4782 = vmatmul.mubr.f32.gmra.mrb[0].mxu0 %v4604
        %v4783 = vpop.f32.mrb[0].mxu0
        %v4784 = vadd.f32 0.0, %v4783
        %v4785 = vpop.f32.mrb[0].mxu0
        %v4786 = vadd.f32 0.0, %v4785
        %4787 = vmatprep.mubr.f32.mxu0 0.0
        %4788 = vmatmul.mubr.f32.gmra.mrb[0].mxu0 %v4607
        %v4789 = vpop.f32.mrb[0].mxu0
        %v4790 = vadd.f32 0.0, %v4789
        %v4791 = vpop.f32.mrb[0].mxu0
        %v4792 = vadd.f32 0.0, %v4791
        %4793 = vdwg.mxu0
        %v4794 = vmax.f32 %v4772, %v4784
        %v4795 = vmax.f32 %v4778, %v4790
        %v4796 = vmax.f32 %v4794, %v4795
        %v4797 = vrot.slane %v4796, 4
        %v4798 = vmax.f32 %v4796, %v4797
        %v4799 = vrot.slane %v4798, 2
        %v4800 = vmax.f32 %v4798, %v4799
        %v4801 = vrot.slane %v4800, 1
        %v4802 = vmax.f32 %v4800, %v4801
        %v4803 = vmax.f32 %v4774, %v4786
        %v4804 = vmax.f32 %v4780, %v4792
        %v4805 = vmax.f32 %v4803, %v4804
        %v4806 = vrot.slane %v4805, 4
        %v4807 = vmax.f32 %v4805, %v4806
        %v4808 = vrot.slane %v4807, 2
        %v4809 = vmax.f32 %v4807, %v4808
        %v4810 = vrot.slane %v4809, 1
        %v4811 = vmax.f32 %v4809, %v4810
        %v4812 = vadd.f32 %v4772, %v4778
        %v4813 = vadd.f32 %v4812, %v4784
        %v4814 = vadd.f32 %v4813, %v4790
        %v4815 = vrot.slane %v4814, 4
        %v4816 = vadd.f32 %v4814, %v4815
        %v4817 = vrot.slane %v4816, 2
        %v4818 = vadd.f32 %v4816, %v4817
        %v4819 = vrot.slane %v4818, 1
        %v4820 = vadd.f32 %v4818, %v4819
        %v4821 = vadd.f32 %v4774, %v4780
        %v4822 = vadd.f32 %v4821, %v4786
        %v4823 = vadd.f32 %v4822, %v4792
        %v4824 = vrot.slane %v4823, 4
        %v4825 = vadd.f32 %v4823, %v4824
        %v4826 = vrot.slane %v4825, 2
        %v4827 = vadd.f32 %v4825, %v4826
        %v4828 = vrot.slane %v4827, 1
        %v4829 = vadd.f32 %v4827, %v4828
        %v4830 = vmul.f32 %v4820, 0.03125
        %v4831 = vmul.f32 %v4829, 0.03125
        %vm4832 = vcmask 179200
        %4833 = vst.msk [vmem:[#allocation5] sm:$0xff] %vm4832, 0.0
        %4834 = vst.msk [vmem:[#allocation5 + $0x8] sm:$0xff] %vm4832, 0.0
        %vm4835 = vcmask 177152
        %4836 = vst.msk [vmem:[#allocation5 + $0x10] sm:$0x3f] %vm4835, 0.0
        %4837 = vst.msk [vmem:[#allocation5 + $0x18] sm:$0xff] %vm4832, 0.0
        %4838 = vst.msk [vmem:[#allocation5 + $0x20] sm:$0xff] %vm4832, 0.0
        %4839 = vst.msk [vmem:[#allocation5 + $0x28] sm:$0x3f] %vm4835, 0.0
        %4841 = vrot.lane.b32.xlu0 %v4802, 112
        %v4842 = vpop.permute.xlu0 %4841
        %4844 = vrot.lane.b32.xlu0 %v4802, 96
        %v4845 = vpop.permute.xlu0 %4844
        %4847 = vrot.lane.b32.xlu0 %v4802, 80
        %v4848 = vpop.permute.xlu0 %4847
        %4850 = vrot.lane.b32.xlu0 %v4802, 64
        %v4851 = vpop.permute.xlu0 %4850
        %4853 = vrot.lane.b32.xlu0 %v4802, 48
        %v4854 = vpop.permute.xlu0 %4853
        %4856 = vrot.lane.b32.xlu0 %v4802, 32
        %v4857 = vpop.permute.xlu0 %4856
        %4859 = vrot.lane.b32.xlu0 %v4802, 16
        %v4860 = vpop.permute.xlu0 %4859
        %4863 = vrot.lane.b32.xlu0 %v4811, 112
        %v4864 = vpop.permute.xlu0 %4863
        %4866 = vrot.lane.b32.xlu0 %v4811, 96
        %v4867 = vpop.permute.xlu0 %4866
        %4869 = vrot.lane.b32.xlu0 %v4811, 80
        %v4870 = vpop.permute.xlu0 %4869
        %4872 = vrot.lane.b32.xlu0 %v4811, 64
        %v4873 = vpop.permute.xlu0 %4872
        %4875 = vrot.lane.b32.xlu0 %v4811, 48
        %v4876 = vpop.permute.xlu0 %4875
        %4878 = vrot.lane.b32.xlu0 %v4811, 32
        %v4879 = vpop.permute.xlu0 %4878
        %4881 = vrot.lane.b32.xlu0 %v4811, 16
        %v4882 = vpop.permute.xlu0 %4881
        %v4884 = vsel %vm640, %v4802, %v4842
        %v4885 = vsel %vm4494, %v4884, %v4845
        %vm4886 = vcmask 1042432
        %v4887 = vsel %vm4886, %v4885, %v4848
        %v4888 = vsel %vm1031, %v4887, %v4851
        %vm4889 = vcmask 1044480
        %v4890 = vsel %vm4889, %v4888, %v4854
        %vm4891 = vcmask 1045504
        %v4892 = vsel %vm4891, %v4890, %v4857
        %v4893 = vsel %vm737, %v4892, %v4860
        %v4894 = vsel %vm640, %v4811, %v4864
        %v4895 = vsel %vm4494, %v4894, %v4867
        %v4896 = vsel %vm4886, %v4895, %v4870
        %v4897 = vsel %vm1031, %v4896, %v4873
        %v4898 = vsel %vm4889, %v4897, %v4876
        %v4899 = vsel %vm4891, %v4898, %v4879
        %v4900 = vsel %vm737, %v4899, %v4882
        %4903 = vrot.lane.b32.xlu0 %v4893, 3
        %v4904 = vpop.permute.xlu0 %4903
        %4905 = vrot.lane.b32.xlu0 %v4900, 3
        %v4906 = vpop.permute.xlu0 %4905
        %vm4909 = vcmask 154648
        %4910 = vst.msk [vmem:[#allocation5 + $0x3] sm:$0xff] %vm4909, %v4904
        %4911 = vst.msk [vmem:[#allocation5 + $0xb] sm:$0xff] %vm4909, %v4906
        %4913 = vrot.lane.b32.xlu0 %v4830, 112
        %v4914 = vpop.permute.xlu0 %4913
        %4916 = vrot.lane.b32.xlu0 %v4830, 96
        %v4917 = vpop.permute.xlu0 %4916
        %4919 = vrot.lane.b32.xlu0 %v4830, 80
        %v4920 = vpop.permute.xlu0 %4919
        %4922 = vrot.lane.b32.xlu0 %v4830, 64
        %v4923 = vpop.permute.xlu0 %4922
        %4925 = vrot.lane.b32.xlu0 %v4830, 48
        %v4926 = vpop.permute.xlu0 %4925
        %4928 = vrot.lane.b32.xlu0 %v4830, 32
        %v4929 = vpop.permute.xlu0 %4928
        %4931 = vrot.lane.b32.xlu0 %v4830, 16
        %v4932 = vpop.permute.xlu0 %4931
        %4935 = vrot.lane.b32.xlu0 %v4831, 112
        %v4936 = vpop.permute.xlu0 %4935
        %4938 = vrot.lane.b32.xlu0 %v4831, 96
        %v4939 = vpop.permute.xlu0 %4938
        %4941 = vrot.lane.b32.xlu0 %v4831, 80
        %v4942 = vpop.permute.xlu0 %4941
        %4944 = vrot.lane.b32.xlu0 %v4831, 64
        %v4945 = vpop.permute.xlu0 %4944
        %4947 = vrot.lane.b32.xlu0 %v4831, 48
        %v4948 = vpop.permute.xlu0 %4947
        %4950 = vrot.lane.b32.xlu0 %v4831, 32
        %v4951 = vpop.permute.xlu0 %4950
        %4953 = vrot.lane.b32.xlu0 %v4831, 16
        %v4954 = vpop.permute.xlu0 %4953
        %v4956 = vsel %vm640, %v4830, %v4914
        %v4957 = vsel %vm4494, %v4956, %v4917
        %v4958 = vsel %vm4886, %v4957, %v4920
        %v4959 = vsel %vm1031, %v4958, %v4923
        %v4960 = vsel %vm4889, %v4959, %v4926
        %v4961 = vsel %vm4891, %v4960, %v4929
        %v4962 = vsel %vm737, %v4961, %v4932
        %v4963 = vsel %vm640, %v4831, %v4936
        %v4964 = vsel %vm4494, %v4963, %v4939
        %v4965 = vsel %vm4886, %v4964, %v4942
        %v4966 = vsel %vm1031, %v4965, %v4945
        %v4967 = vsel %vm4889, %v4966, %v4948
        %v4968 = vsel %vm4891, %v4967, %v4951
        %v4969 = vsel %vm737, %v4968, %v4954
        %4972 = vrot.lane.b32.xlu0 %v4962, 3
        %v4973 = vpop.permute.xlu0 %4972
        %4974 = vrot.lane.b32.xlu0 %v4969, 3
        %v4975 = vpop.permute.xlu0 %4974
        %s4978 = scalar_lea.vmem [#allocation5], 24
        %4979 = vst.msk [vmem:[%s4978 + $0x3] sm:$0xff] %vm4909, %v4973
        %4980 = vst.msk [vmem:[%s4978 + $0xb] sm:$0xff] %vm4909, %v4975
        %v4981 = vld [vmem:[#allocation24] sm:$0xff]
        %v4982 = vld [vmem:[#allocation24 + $0x8] sm:$0xff]
        %v4983 = vld [vmem:[#allocation24 + $0x10] sm:$0xff]
        %v4984 = vld [vmem:[#allocation24 + $0x18] sm:$0xff]
        %v4985 = vld [vmem:[#allocation24 + $0x20] sm:$0xff]
        %v4986 = vld [vmem:[#allocation24 + $0x28] sm:$0xff]
        %v4987 = vld [vmem:[#allocation24 + $0x30] sm:$0xff]
        %v4988 = vld [vmem:[#allocation24 + $0x38] sm:$0xff]
        %v4989 = vld [vmem:[#allocation24 + $0x40] sm:$0xff]
        %v4990 = vld [vmem:[#allocation24 + $0x48] sm:$0xff]
        %v4991 = vld [vmem:[#allocation24 + $0x50] sm:$0xff]
        %v4992 = vld [vmem:[#allocation24 + $0x58] sm:$0xff]
        %v4993 = vld [vmem:[#allocation24 + $0x60] sm:$0x7]
        %v4994 = vld [vmem:[#allocation5] sm:$0xff]
        %v4995 = vld [vmem:[#allocation5 + $0x8] sm:$0xff]
        %v4996 = vlaneseq
        %v4997 = vshrl.u32 %v4996, 7
        %v4998 = vsub.s32 0, %v4997
        %v4999 = vrot.slane %v4981, %v4998
        %v5000 = vmul.f32 %v4994, %v4999
        %v5001 = vmul.f32 %v4995, %v4999
        %v5002 = vadd.f32 %v5000, 0.0
        %v5003 = vadd.f32 %v5001, 0.0
        %v5004 = vld [vmem:[%s4978] sm:$0xff]
        %v5005 = vld [vmem:[%s4978 + $0x8] sm:$0xff]
        %v5006 = vlaneseq
        %v5007 = vshrl.u32 %v5006, 7
        %v5008 = vsub.s32 1, %v5007
        %v5009 = vrot.slane %v4987, %v5008
        %v5010 = vmul.f32 %v5004, %v5009
        %v5011 = vmul.f32 %v5005, %v5009
        %v5012 = vadd.f32 %v5002, %v5010
        %v5013 = vadd.f32 %v5003, %v5011
        %v5014 = vlaneseq
        %v5015 = vshrl.u32 %v5014, 7
        %v5016 = vsub.s32 1, %v5015
        %v5017 = vrot.slane %v4981, %v5016
        %5019 = vrot.lane.b32.xlu0 %v5017, 1
        %v5020 = vpop.permute.xlu0 %5019
        %v5022 = vmul.f32 %v4994, %v5020
        %v5023 = vmul.f32 %v4995, %v5020
        %5026 = vrot.lane.b32.xlu0 %v5022, 127
        %v5027 = vpop.permute.xlu0 %5026
        %5028 = vrot.lane.b32.xlu0 %v5023, 127
        %v5029 = vpop.permute.xlu0 %5028
        %v5032 = vadd.f32 %v5012, %v5027
        %v5033 = vadd.f32 %v5013, %v5029
        %v5034 = vlaneseq
        %v5035 = vshrl.u32 %v5034, 7
        %v5036 = vsub.s32 2, %v5035
        %v5037 = vrot.slane %v4987, %v5036
        %5039 = vrot.lane.b32.xlu0 %v5037, 1
        %v5040 = vpop.permute.xlu0 %5039
        %v5042 = vmul.f32 %v5004, %v5040
        %v5043 = vmul.f32 %v5005, %v5040
        %5046 = vrot.lane.b32.xlu0 %v5042, 127
        %v5047 = vpop.permute.xlu0 %5046
        %5048 = vrot.lane.b32.xlu0 %v5043, 127
        %v5049 = vpop.permute.xlu0 %5048
        %v5052 = vadd.f32 %v5032, %v5047
        %v5053 = vadd.f32 %v5033, %v5049
        %v5054 = vlaneseq
        %v5055 = vshrl.u32 %v5054, 7
        %v5056 = vsub.s32 2, %v5055
        %v5057 = vrot.slane %v4981, %v5056
        %5059 = vrot.lane.b32.xlu0 %v5057, 2
        %v5060 = vpop.permute.xlu0 %5059
        %v5062 = vmul.f32 %v4994, %v5060
        %v5063 = vmul.f32 %v4995, %v5060
        %5066 = vrot.lane.b32.xlu0 %v5062, 126
        %v5067 = vpop.permute.xlu0 %5066
        %5068 = vrot.lane.b32.xlu0 %v5063, 126
        %v5069 = vpop.permute.xlu0 %5068
        %v5072 = vadd.f32 %v5052, %v5067
        %v5073 = vadd.f32 %v5053, %v5069
        %v5074 = vlaneseq
        %v5075 = vshrl.u32 %v5074, 7
        %v5076 = vsub.s32 3, %v5075
        %v5077 = vrot.slane %v4987, %v5076
        %5079 = vrot.lane.b32.xlu0 %v5077, 2
        %v5080 = vpop.permute.xlu0 %5079
        %v5082 = vmul.f32 %v5004, %v5080
        %v5083 = vmul.f32 %v5005, %v5080
        %5086 = vrot.lane.b32.xlu0 %v5082, 126
        %v5087 = vpop.permute.xlu0 %5086
        %5088 = vrot.lane.b32.xlu0 %v5083, 126
        %v5089 = vpop.permute.xlu0 %5088
        %v5092 = vadd.f32 %v5072, %v5087
        %v5093 = vadd.f32 %v5073, %v5089
        %v5094 = vlaneseq
        %v5095 = vshrl.u32 %v5094, 7
        %v5096 = vsub.s32 3, %v5095
        %v5097 = vrot.slane %v4981, %v5096
        %5099 = vrot.lane.b32.xlu0 %v5097, 3
        %v5100 = vpop.permute.xlu0 %5099
        %v5102 = vmul.f32 %v4994, %v5100
        %v5103 = vmul.f32 %v4995, %v5100
        %5106 = vrot.lane.b32.xlu0 %v5102, 125
        %v5107 = vpop.permute.xlu0 %5106
        %5108 = vrot.lane.b32.xlu0 %v5103, 125
        %v5109 = vpop.permute.xlu0 %5108
        %v5112 = vadd.f32 %v5092, %v5107
        %v5113 = vadd.f32 %v5093, %v5109
        %v5114 = vlaneseq
        %v5115 = vshrl.u32 %v5114, 7
        %v5116 = vsub.s32 4, %v5115
        %v5117 = vrot.slane %v4987, %v5116
        %5119 = vrot.lane.b32.xlu0 %v5117, 3
        %v5120 = vpop.permute.xlu0 %5119
        %v5122 = vmul.f32 %v5004, %v5120
        %v5123 = vmul.f32 %v5005, %v5120
        %5126 = vrot.lane.b32.xlu0 %v5122, 125
        %v5127 = vpop.permute.xlu0 %5126
        %5128 = vrot.lane.b32.xlu0 %v5123, 125
        %v5129 = vpop.permute.xlu0 %5128
        %v5132 = vadd.f32 %v5112, %v5127
        %v5133 = vadd.f32 %v5113, %v5129
        %v5134 = vlaneseq
        %v5135 = vshrl.u32 %v5134, 7
        %v5136 = vsub.s32 4, %v5135
        %v5137 = vrot.slane %v4981, %v5136
        %5139 = vrot.lane.b32.xlu0 %v5137, 4
        %v5140 = vpop.permute.xlu0 %5139
        %v5142 = vmul.f32 %v4994, %v5140
        %v5143 = vmul.f32 %v4995, %v5140
        %5146 = vrot.lane.b32.xlu0 %v5142, 124
        %v5147 = vpop.permute.xlu0 %5146
        %5148 = vrot.lane.b32.xlu0 %v5143, 124
        %v5149 = vpop.permute.xlu0 %5148
        %v5152 = vadd.f32 %v5132, %v5147
        %v5153 = vadd.f32 %v5133, %v5149
        %v5154 = vlaneseq
        %v5155 = vshrl.u32 %v5154, 7
        %v5156 = vsub.s32 5, %v5155
        %v5157 = vrot.slane %v4987, %v5156
        %5159 = vrot.lane.b32.xlu0 %v5157, 4
        %v5160 = vpop.permute.xlu0 %5159
        %v5162 = vmul.f32 %v5004, %v5160
        %v5163 = vmul.f32 %v5005, %v5160
        %5166 = vrot.lane.b32.xlu0 %v5162, 124
        %v5167 = vpop.permute.xlu0 %5166
        %5168 = vrot.lane.b32.xlu0 %v5163, 124
        %v5169 = vpop.permute.xlu0 %5168
        %v5172 = vadd.f32 %v5152, %v5167
        %v5173 = vadd.f32 %v5153, %v5169
        %v5174 = vlaneseq
        %v5175 = vshrl.u32 %v5174, 7
        %v5176 = vsub.s32 5, %v5175
        %v5177 = vrot.slane %v4981, %v5176
        %5179 = vrot.lane.b32.xlu0 %v5177, 5
        %v5180 = vpop.permute.xlu0 %5179
        %v5182 = vmul.f32 %v4994, %v5180
        %v5183 = vmul.f32 %v4995, %v5180
        %5186 = vrot.lane.b32.xlu0 %v5182, 123
        %v5187 = vpop.permute.xlu0 %5186
        %5188 = vrot.lane.b32.xlu0 %v5183, 123
        %v5189 = vpop.permute.xlu0 %5188
        %v5192 = vadd.f32 %v5172, %v5187
        %v5193 = vadd.f32 %v5173, %v5189
        %v5194 = vlaneseq
        %v5195 = vshrl.u32 %v5194, 7
        %v5196 = vsub.s32 6, %v5195
        %v5197 = vrot.slane %v4987, %v5196
        %5199 = vrot.lane.b32.xlu0 %v5197, 5
        %v5200 = vpop.permute.xlu0 %5199
        %v5202 = vmul.f32 %v5004, %v5200
        %v5203 = vmul.f32 %v5005, %v5200
        %5206 = vrot.lane.b32.xlu0 %v5202, 123
        %v5207 = vpop.permute.xlu0 %5206
        %5208 = vrot.lane.b32.xlu0 %v5203, 123
        %v5209 = vpop.permute.xlu0 %5208
        %v5212 = vadd.f32 %v5192, %v5207
        %v5213 = vadd.f32 %v5193, %v5209
        %v5214 = vlaneseq
        %v5215 = vshrl.u32 %v5214, 7
        %v5216 = vsub.s32 6, %v5215
        %v5217 = vrot.slane %v4981, %v5216
        %5219 = vrot.lane.b32.xlu0 %v5217, 6
        %v5220 = vpop.permute.xlu0 %5219
        %v5222 = vmul.f32 %v4994, %v5220
        %v5223 = vmul.f32 %v4995, %v5220
        %5226 = vrot.lane.b32.xlu0 %v5222, 122
        %v5227 = vpop.permute.xlu0 %5226
        %5228 = vrot.lane.b32.xlu0 %v5223, 122
        %v5229 = vpop.permute.xlu0 %5228
        %v5232 = vadd.f32 %v5212, %v5227
        %v5233 = vadd.f32 %v5213, %v5229
        %v5234 = vlaneseq
        %v5235 = vshrl.u32 %v5234, 7
        %v5236 = vsub.s32 7, %v5235
        %v5237 = vrot.slane %v4987, %v5236
        %5239 = vrot.lane.b32.xlu0 %v5237, 6
        %v5240 = vpop.permute.xlu0 %5239
        %v5242 = vmul.f32 %v5004, %v5240
        %v5243 = vmul.f32 %v5005, %v5240
        %5246 = vrot.lane.b32.xlu0 %v5242, 122
        %v5247 = vpop.permute.xlu0 %5246
        %5248 = vrot.lane.b32.xlu0 %v5243, 122
        %v5249 = vpop.permute.xlu0 %5248
        %v5252 = vadd.f32 %v5232, %v5247
        %v5253 = vadd.f32 %v5233, %v5249
        %v5254 = vld [vmem:[#allocation5 + $0x1] sm:$0xff]
        %v5255 = vld [vmem:[#allocation5 + $0x9] sm:$0xff]
        %v5256 = vlaneseq
        %v5257 = vshrl.u32 %v5256, 7
        %v5258 = vsub.s32 7, %v5257
        %v5259 = vrot.slane %v4981, %v5258
        %v5260 = vmul.f32 %v5254, %v5259
        %v5261 = vmul.f32 %v5255, %v5259
        %v5262 = vadd.f32 %v5252, %v5260
        %v5263 = vadd.f32 %v5253, %v5261
        %v5264 = vld [vmem:[%s4978 + $0x1] sm:$0xff]
        %v5265 = vld [vmem:[%s4978 + $0x9] sm:$0xff]
        %v5266 = vlaneseq
        %v5267 = vshrl.u32 %v5266, 7
        %v5268 = vsub.s32 0, %v5267
        %v5269 = vrot.slane %v4988, %v5268
        %v5270 = vmul.f32 %v5264, %v5269
        %v5271 = vmul.f32 %v5265, %v5269
        %v5272 = vadd.f32 %v5262, %v5270
        %v5273 = vadd.f32 %v5263, %v5271
        %v5274 = vlaneseq
        %v5275 = vshrl.u32 %v5274, 7
        %v5276 = vsub.s32 0, %v5275
        %v5277 = vrot.slane %v4982, %v5276
        %5279 = vrot.lane.b32.xlu0 %v5277, 1
        %v5280 = vpop.permute.xlu0 %5279
        %v5282 = vmul.f32 %v5254, %v5280
        %v5283 = vmul.f32 %v5255, %v5280
        %5286 = vrot.lane.b32.xlu0 %v5282, 127
        %v5287 = vpop.permute.xlu0 %5286
        %5288 = vrot.lane.b32.xlu0 %v5283, 127
        %v5289 = vpop.permute.xlu0 %5288
        %v5292 = vadd.f32 %v5272, %v5287
        %v5293 = vadd.f32 %v5273, %v5289
        %v5294 = vlaneseq
        %v5295 = vshrl.u32 %v5294, 7
        %v5296 = vsub.s32 1, %v5295
        %v5297 = vrot.slane %v4988, %v5296
        %5299 = vrot.lane.b32.xlu0 %v5297, 1
        %v5300 = vpop.permute.xlu0 %5299
        %v5302 = vmul.f32 %v5264, %v5300
        %v5303 = vmul.f32 %v5265, %v5300
        %5306 = vrot.lane.b32.xlu0 %v5302, 127
        %v5307 = vpop.permute.xlu0 %5306
        %5308 = vrot.lane.b32.xlu0 %v5303, 127
        %v5309 = vpop.permute.xlu0 %5308
        %v5312 = vadd.f32 %v5292, %v5307
        %v5313 = vadd.f32 %v5293, %v5309
        %v5314 = vlaneseq
        %v5315 = vshrl.u32 %v5314, 7
        %v5316 = vsub.s32 1, %v5315
        %v5317 = vrot.slane %v4982, %v5316
        %5319 = vrot.lane.b32.xlu0 %v5317, 2
        %v5320 = vpop.permute.xlu0 %5319
        %v5322 = vmul.f32 %v5254, %v5320
        %v5323 = vmul.f32 %v5255, %v5320
        %5326 = vrot.lane.b32.xlu0 %v5322, 126
        %v5327 = vpop.permute.xlu0 %5326
        %5328 = vrot.lane.b32.xlu0 %v5323, 126
        %v5329 = vpop.permute.xlu0 %5328
        %v5332 = vadd.f32 %v5312, %v5327
        %v5333 = vadd.f32 %v5313, %v5329
        %v5334 = vlaneseq
        %v5335 = vshrl.u32 %v5334, 7
        %v5336 = vsub.s32 2, %v5335
        %v5337 = vrot.slane %v4988, %v5336
        %5339 = vrot.lane.b32.xlu0 %v5337, 2
        %v5340 = vpop.permute.xlu0 %5339
        %v5342 = vmul.f32 %v5264, %v5340
        %v5343 = vmul.f32 %v5265, %v5340
        %5346 = vrot.lane.b32.xlu0 %v5342, 126
        %v5347 = vpop.permute.xlu0 %5346
        %5348 = vrot.lane.b32.xlu0 %v5343, 126
        %v5349 = vpop.permute.xlu0 %5348
        %v5352 = vadd.f32 %v5332, %v5347
        %v5353 = vadd.f32 %v5333, %v5349
        %v5354 = vlaneseq
        %v5355 = vshrl.u32 %v5354, 7
        %v5356 = vsub.s32 2, %v5355
        %v5357 = vrot.slane %v4982, %v5356
        %5359 = vrot.lane.b32.xlu0 %v5357, 3
        %v5360 = vpop.permute.xlu0 %5359
        %v5362 = vmul.f32 %v5254, %v5360
        %v5363 = vmul.f32 %v5255, %v5360
        %5366 = vrot.lane.b32.xlu0 %v5362, 125
        %v5367 = vpop.permute.xlu0 %5366
        %5368 = vrot.lane.b32.xlu0 %v5363, 125
        %v5369 = vpop.permute.xlu0 %5368
        %v5372 = vadd.f32 %v5352, %v5367
        %v5373 = vadd.f32 %v5353, %v5369
        %v5374 = vlaneseq
        %v5375 = vshrl.u32 %v5374, 7
        %v5376 = vsub.s32 3, %v5375
        %v5377 = vrot.slane %v4988, %v5376
        %5379 = vrot.lane.b32.xlu0 %v5377, 3
        %v5380 = vpop.permute.xlu0 %5379
        %v5382 = vmul.f32 %v5264, %v5380
        %v5383 = vmul.f32 %v5265, %v5380
        %5386 = vrot.lane.b32.xlu0 %v5382, 125
        %v5387 = vpop.permute.xlu0 %5386
        %5388 = vrot.lane.b32.xlu0 %v5383, 125
        %v5389 = vpop.permute.xlu0 %5388
        %v5392 = vadd.f32 %v5372, %v5387
        %v5393 = vadd.f32 %v5373, %v5389
        %v5394 = vlaneseq
        %v5395 = vshrl.u32 %v5394, 7
        %v5396 = vsub.s32 3, %v5395
        %v5397 = vrot.slane %v4982, %v5396
        %5399 = vrot.lane.b32.xlu0 %v5397, 4
        %v5400 = vpop.permute.xlu0 %5399
        %v5402 = vmul.f32 %v5254, %v5400
        %v5403 = vmul.f32 %v5255, %v5400
        %5406 = vrot.lane.b32.xlu0 %v5402, 124
        %v5407 = vpop.permute.xlu0 %5406
        %5408 = vrot.lane.b32.xlu0 %v5403, 124
        %v5409 = vpop.permute.xlu0 %5408
        %v5412 = vadd.f32 %v5392, %v5407
        %v5413 = vadd.f32 %v5393, %v5409
        %v5414 = vlaneseq
        %v5415 = vshrl.u32 %v5414, 7
        %v5416 = vsub.s32 4, %v5415
        %v5417 = vrot.slane %v4988, %v5416
        %5419 = vrot.lane.b32.xlu0 %v5417, 4
        %v5420 = vpop.permute.xlu0 %5419
        %v5422 = vmul.f32 %v5264, %v5420
        %v5423 = vmul.f32 %v5265, %v5420
        %5426 = vrot.lane.b32.xlu0 %v5422, 124
        %v5427 = vpop.permute.xlu0 %5426
        %5428 = vrot.lane.b32.xlu0 %v5423, 124
        %v5429 = vpop.permute.xlu0 %5428
        %v5432 = vadd.f32 %v5412, %v5427
        %v5433 = vadd.f32 %v5413, %v5429
        %v5434 = vlaneseq
        %v5435 = vshrl.u32 %v5434, 7
        %v5436 = vsub.s32 4, %v5435
        %v5437 = vrot.slane %v4982, %v5436
        %5439 = vrot.lane.b32.xlu0 %v5437, 5
        %v5440 = vpop.permute.xlu0 %5439
        %v5442 = vmul.f32 %v5254, %v5440
        %v5443 = vmul.f32 %v5255, %v5440
        %5446 = vrot.lane.b32.xlu0 %v5442, 123
        %v5447 = vpop.permute.xlu0 %5446
        %5448 = vrot.lane.b32.xlu0 %v5443, 123
        %v5449 = vpop.permute.xlu0 %5448
        %v5452 = vadd.f32 %v5432, %v5447
        %v5453 = vadd.f32 %v5433, %v5449
        %v5454 = vlaneseq
        %v5455 = vshrl.u32 %v5454, 7
        %v5456 = vsub.s32 5, %v5455
        %v5457 = vrot.slane %v4988, %v5456
        %5459 = vrot.lane.b32.xlu0 %v5457, 5
        %v5460 = vpop.permute.xlu0 %5459
        %v5462 = vmul.f32 %v5264, %v5460
        %v5463 = vmul.f32 %v5265, %v5460
        %5466 = vrot.lane.b32.xlu0 %v5462, 123
        %v5467 = vpop.permute.xlu0 %5466
        %5468 = vrot.lane.b32.xlu0 %v5463, 123
        %v5469 = vpop.permute.xlu0 %5468
        %v5472 = vadd.f32 %v5452, %v5467
        %v5473 = vadd.f32 %v5453, %v5469
        %v5474 = vlaneseq
        %v5475 = vshrl.u32 %v5474, 7
        %v5476 = vsub.s32 5, %v5475
        %v5477 = vrot.slane %v4982, %v5476
        %5479 = vrot.lane.b32.xlu0 %v5477, 6
        %v5480 = vpop.permute.xlu0 %5479
        %v5482 = vmul.f32 %v5254, %v5480
        %v5483 = vmul.f32 %v5255, %v5480
        %5486 = vrot.lane.b32.xlu0 %v5482, 122
        %v5487 = vpop.permute.xlu0 %5486
        %5488 = vrot.lane.b32.xlu0 %v5483, 122
        %v5489 = vpop.permute.xlu0 %5488
        %v5492 = vadd.f32 %v5472, %v5487
        %v5493 = vadd.f32 %v5473, %v5489
        %v5494 = vlaneseq
        %v5495 = vshrl.u32 %v5494, 7
        %v5496 = vsub.s32 6, %v5495
        %v5497 = vrot.slane %v4988, %v5496
        %5499 = vrot.lane.b32.xlu0 %v5497, 6
        %v5500 = vpop.permute.xlu0 %5499
        %v5502 = vmul.f32 %v5264, %v5500
        %v5503 = vmul.f32 %v5265, %v5500
        %5506 = vrot.lane.b32.xlu0 %v5502, 122
        %v5507 = vpop.permute.xlu0 %5506
        %5508 = vrot.lane.b32.xlu0 %v5503, 122
        %v5509 = vpop.permute.xlu0 %5508
        %v5512 = vadd.f32 %v5492, %v5507
        %v5513 = vadd.f32 %v5493, %v5509
        %v5514 = vld [vmem:[#allocation5 + $0x2] sm:$0xff]
        %v5515 = vld [vmem:[#allocation5 + $0xa] sm:$0xff]
        %v5516 = vlaneseq
        %v5517 = vshrl.u32 %v5516, 7
        %v5518 = vsub.s32 6, %v5517
        %v5519 = vrot.slane %v4982, %v5518
        %v5520 = vmul.f32 %v5514, %v5519
        %v5521 = vmul.f32 %v5515, %v5519
        %v5522 = vadd.f32 %v5512, %v5520
        %v5523 = vadd.f32 %v5513, %v5521
        %v5524 = vld [vmem:[%s4978 + $0x2] sm:$0xff]
        %v5525 = vld [vmem:[%s4978 + $0xa] sm:$0xff]
        %v5526 = vlaneseq
        %v5527 = vshrl.u32 %v5526, 7
        %v5528 = vsub.s32 7, %v5527
        %v5529 = vrot.slane %v4988, %v5528
        %v5530 = vmul.f32 %v5524, %v5529
        %v5531 = vmul.f32 %v5525, %v5529
        %v5532 = vadd.f32 %v5522, %v5530
        %v5533 = vadd.f32 %v5523, %v5531
        %v5534 = vlaneseq
        %v5535 = vshrl.u32 %v5534, 7
        %v5536 = vsub.s32 7, %v5535
        %v5537 = vrot.slane %v4982, %v5536
        %5539 = vrot.lane.b32.xlu0 %v5537, 1
        %v5540 = vpop.permute.xlu0 %5539
        %v5542 = vmul.f32 %v5514, %v5540
        %v5543 = vmul.f32 %v5515, %v5540
        %5546 = vrot.lane.b32.xlu0 %v5542, 127
        %v5547 = vpop.permute.xlu0 %5546
        %5548 = vrot.lane.b32.xlu0 %v5543, 127
        %v5549 = vpop.permute.xlu0 %5548
        %v5552 = vadd.f32 %v5532, %v5547
        %v5553 = vadd.f32 %v5533, %v5549
        %v5554 = vlaneseq
        %v5555 = vshrl.u32 %v5554, 7
        %v5556 = vsub.s32 0, %v5555
        %v5557 = vrot.slane %v4989, %v5556
        %5559 = vrot.lane.b32.xlu0 %v5557, 1
        %v5560 = vpop.permute.xlu0 %5559
        %v5562 = vmul.f32 %v5524, %v5560
        %v5563 = vmul.f32 %v5525, %v5560
        %5566 = vrot.lane.b32.xlu0 %v5562, 127
        %v5567 = vpop.permute.xlu0 %5566
        %5568 = vrot.lane.b32.xlu0 %v5563, 127
        %v5569 = vpop.permute.xlu0 %5568
        %v5572 = vadd.f32 %v5552, %v5567
        %v5573 = vadd.f32 %v5553, %v5569
        %v5574 = vlaneseq
        %v5575 = vshrl.u32 %v5574, 7
        %v5576 = vsub.s32 0, %v5575
        %v5577 = vrot.slane %v4983, %v5576
        %5579 = vrot.lane.b32.xlu0 %v5577, 2
        %v5580 = vpop.permute.xlu0 %5579
        %v5582 = vmul.f32 %v5514, %v5580
        %v5583 = vmul.f32 %v5515, %v5580
        %5586 = vrot.lane.b32.xlu0 %v5582, 126
        %v5587 = vpop.permute.xlu0 %5586
        %5588 = vrot.lane.b32.xlu0 %v5583, 126
        %v5589 = vpop.permute.xlu0 %5588
        %v5592 = vadd.f32 %v5572, %v5587
        %v5593 = vadd.f32 %v5573, %v5589
        %v5594 = vlaneseq
        %v5595 = vshrl.u32 %v5594, 7
        %v5596 = vsub.s32 1, %v5595
        %v5597 = vrot.slane %v4989, %v5596
        %5599 = vrot.lane.b32.xlu0 %v5597, 2
        %v5600 = vpop.permute.xlu0 %5599
        %v5602 = vmul.f32 %v5524, %v5600
        %v5603 = vmul.f32 %v5525, %v5600
        %5606 = vrot.lane.b32.xlu0 %v5602, 126
        %v5607 = vpop.permute.xlu0 %5606
        %5608 = vrot.lane.b32.xlu0 %v5603, 126
        %v5609 = vpop.permute.xlu0 %5608
        %v5612 = vadd.f32 %v5592, %v5607
        %v5613 = vadd.f32 %v5593, %v5609
        %v5614 = vlaneseq
        %v5615 = vshrl.u32 %v5614, 7
        %v5616 = vsub.s32 1, %v5615
        %v5617 = vrot.slane %v4983, %v5616
        %5619 = vrot.lane.b32.xlu0 %v5617, 3
        %v5620 = vpop.permute.xlu0 %5619
        %v5622 = vmul.f32 %v5514, %v5620
        %v5623 = vmul.f32 %v5515, %v5620
        %5626 = vrot.lane.b32.xlu0 %v5622, 125
        %v5627 = vpop.permute.xlu0 %5626
        %5628 = vrot.lane.b32.xlu0 %v5623, 125
        %v5629 = vpop.permute.xlu0 %5628
        %v5632 = vadd.f32 %v5612, %v5627
        %v5633 = vadd.f32 %v5613, %v5629
        %v5634 = vlaneseq
        %v5635 = vshrl.u32 %v5634, 7
        %v5636 = vsub.s32 2, %v5635
        %v5637 = vrot.slane %v4989, %v5636
        %5639 = vrot.lane.b32.xlu0 %v5637, 3
        %v5640 = vpop.permute.xlu0 %5639
        %v5642 = vmul.f32 %v5524, %v5640
        %v5643 = vmul.f32 %v5525, %v5640
        %5646 = vrot.lane.b32.xlu0 %v5642, 125
        %v5647 = vpop.permute.xlu0 %5646
        %5648 = vrot.lane.b32.xlu0 %v5643, 125
        %v5649 = vpop.permute.xlu0 %5648
        %v5652 = vadd.f32 %v5632, %v5647
        %v5653 = vadd.f32 %v5633, %v5649
        %v5654 = vlaneseq
        %v5655 = vshrl.u32 %v5654, 7
        %v5656 = vsub.s32 2, %v5655
        %v5657 = vrot.slane %v4983, %v5656
        %5659 = vrot.lane.b32.xlu0 %v5657, 4
        %v5660 = vpop.permute.xlu0 %5659
        %v5662 = vmul.f32 %v5514, %v5660
        %v5663 = vmul.f32 %v5515, %v5660
        %5666 = vrot.lane.b32.xlu0 %v5662, 124
        %v5667 = vpop.permute.xlu0 %5666
        %5668 = vrot.lane.b32.xlu0 %v5663, 124
        %v5669 = vpop.permute.xlu0 %5668
        %v5672 = vadd.f32 %v5652, %v5667
        %v5673 = vadd.f32 %v5653, %v5669
        %v5674 = vlaneseq
        %v5675 = vshrl.u32 %v5674, 7
        %v5676 = vsub.s32 3, %v5675
        %v5677 = vrot.slane %v4989, %v5676
        %5679 = vrot.lane.b32.xlu0 %v5677, 4
        %v5680 = vpop.permute.xlu0 %5679
        %v5682 = vmul.f32 %v5524, %v5680
        %v5683 = vmul.f32 %v5525, %v5680
        %5686 = vrot.lane.b32.xlu0 %v5682, 124
        %v5687 = vpop.permute.xlu0 %5686
        %5688 = vrot.lane.b32.xlu0 %v5683, 124
        %v5689 = vpop.permute.xlu0 %5688
        %v5692 = vadd.f32 %v5672, %v5687
        %v5693 = vadd.f32 %v5673, %v5689
        %v5694 = vlaneseq
        %v5695 = vshrl.u32 %v5694, 7
        %v5696 = vsub.s32 3, %v5695
        %v5697 = vrot.slane %v4983, %v5696
        %5699 = vrot.lane.b32.xlu0 %v5697, 5
        %v5700 = vpop.permute.xlu0 %5699
        %v5702 = vmul.f32 %v5514, %v5700
        %v5703 = vmul.f32 %v5515, %v5700
        %5706 = vrot.lane.b32.xlu0 %v5702, 123
        %v5707 = vpop.permute.xlu0 %5706
        %5708 = vrot.lane.b32.xlu0 %v5703, 123
        %v5709 = vpop.permute.xlu0 %5708
        %v5712 = vadd.f32 %v5692, %v5707
        %v5713 = vadd.f32 %v5693, %v5709
        %v5714 = vlaneseq
        %v5715 = vshrl.u32 %v5714, 7
        %v5716 = vsub.s32 4, %v5715
        %v5717 = vrot.slane %v4989, %v5716
        %5719 = vrot.lane.b32.xlu0 %v5717, 5
        %v5720 = vpop.permute.xlu0 %5719
        %v5722 = vmul.f32 %v5524, %v5720
        %v5723 = vmul.f32 %v5525, %v5720
        %5726 = vrot.lane.b32.xlu0 %v5722, 123
        %v5727 = vpop.permute.xlu0 %5726
        %5728 = vrot.lane.b32.xlu0 %v5723, 123
        %v5729 = vpop.permute.xlu0 %5728
        %v5732 = vadd.f32 %v5712, %v5727
        %v5733 = vadd.f32 %v5713, %v5729
        %v5734 = vlaneseq
        %v5735 = vshrl.u32 %v5734, 7
        %v5736 = vsub.s32 4, %v5735
        %v5737 = vrot.slane %v4983, %v5736
        %5739 = vrot.lane.b32.xlu0 %v5737, 6
        %v5740 = vpop.permute.xlu0 %5739
        %v5742 = vmul.f32 %v5514, %v5740
        %v5743 = vmul.f32 %v5515, %v5740
        %5746 = vrot.lane.b32.xlu0 %v5742, 122
        %v5747 = vpop.permute.xlu0 %5746
        %5748 = vrot.lane.b32.xlu0 %v5743, 122
        %v5749 = vpop.permute.xlu0 %5748
        %v5752 = vadd.f32 %v5732, %v5747
        %v5753 = vadd.f32 %v5733, %v5749
        %v5754 = vlaneseq
        %v5755 = vshrl.u32 %v5754, 7
        %v5756 = vsub.s32 5, %v5755
        %v5757 = vrot.slane %v4989, %v5756
        %5759 = vrot.lane.b32.xlu0 %v5757, 6
        %v5760 = vpop.permute.xlu0 %5759
        %v5762 = vmul.f32 %v5524, %v5760
        %v5763 = vmul.f32 %v5525, %v5760
        %5766 = vrot.lane.b32.xlu0 %v5762, 122
        %v5767 = vpop.permute.xlu0 %5766
        %5768 = vrot.lane.b32.xlu0 %v5763, 122
        %v5769 = vpop.permute.xlu0 %5768
        %v5772 = vadd.f32 %v5752, %v5767
        %v5773 = vadd.f32 %v5753, %v5769
        %v5774 = vld [vmem:[#allocation5 + $0x3] sm:$0xff]
        %v5775 = vld [vmem:[#allocation5 + $0xb] sm:$0xff]
        %v5776 = vlaneseq
        %v5777 = vshrl.u32 %v5776, 7
        %v5778 = vsub.s32 5, %v5777
        %v5779 = vrot.slane %v4983, %v5778
        %v5780 = vmul.f32 %v5774, %v5779
        %v5781 = vmul.f32 %v5775, %v5779
        %v5782 = vadd.f32 %v5772, %v5780
        %v5783 = vadd.f32 %v5773, %v5781
        %v5784 = vld [vmem:[%s4978 + $0x3] sm:$0xff]
        %v5785 = vld [vmem:[%s4978 + $0xb] sm:$0xff]
        %v5786 = vlaneseq
        %v5787 = vshrl.u32 %v5786, 7
        %v5788 = vsub.s32 6, %v5787
        %v5789 = vrot.slane %v4989, %v5788
        %v5790 = vmul.f32 %v5784, %v5789
        %v5791 = vmul.f32 %v5785, %v5789
        %v5792 = vadd.f32 %v5782, %v5790
        %v5793 = vadd.f32 %v5783, %v5791
        %v5794 = vlaneseq
        %v5795 = vshrl.u32 %v5794, 7
        %v5796 = vsub.s32 6, %v5795
        %v5797 = vrot.slane %v4983, %v5796
        %5799 = vrot.lane.b32.xlu0 %v5797, 1
        %v5800 = vpop.permute.xlu0 %5799
        %v5802 = vmul.f32 %v5774, %v5800
        %v5803 = vmul.f32 %v5775, %v5800
        %5806 = vrot.lane.b32.xlu0 %v5802, 127
        %v5807 = vpop.permute.xlu0 %5806
        %5808 = vrot.lane.b32.xlu0 %v5803, 127
        %v5809 = vpop.permute.xlu0 %5808
        %v5812 = vadd.f32 %v5792, %v5807
        %v5813 = vadd.f32 %v5793, %v5809
        %v5814 = vlaneseq
        %v5815 = vshrl.u32 %v5814, 7
        %v5816 = vsub.s32 7, %v5815
        %v5817 = vrot.slane %v4989, %v5816
        %5819 = vrot.lane.b32.xlu0 %v5817, 1
        %v5820 = vpop.permute.xlu0 %5819
        %v5822 = vmul.f32 %v5784, %v5820
        %v5823 = vmul.f32 %v5785, %v5820
        %5826 = vrot.lane.b32.xlu0 %v5822, 127
        %v5827 = vpop.permute.xlu0 %5826
        %5828 = vrot.lane.b32.xlu0 %v5823, 127
        %v5829 = vpop.permute.xlu0 %5828
        %v5832 = vadd.f32 %v5812, %v5827
        %v5833 = vadd.f32 %v5813, %v5829
        %v5834 = vlaneseq
        %v5835 = vshrl.u32 %v5834, 7
        %v5836 = vsub.s32 7, %v5835
        %v5837 = vrot.slane %v4983, %v5836
        %5839 = vrot.lane.b32.xlu0 %v5837, 2
        %v5840 = vpop.permute.xlu0 %5839
        %v5842 = vmul.f32 %v5774, %v5840
        %v5843 = vmul.f32 %v5775, %v5840
        %5846 = vrot.lane.b32.xlu0 %v5842, 126
        %v5847 = vpop.permute.xlu0 %5846
        %5848 = vrot.lane.b32.xlu0 %v5843, 126
        %v5849 = vpop.permute.xlu0 %5848
        %v5852 = vadd.f32 %v5832, %v5847
        %v5853 = vadd.f32 %v5833, %v5849
        %v5854 = vlaneseq
        %v5855 = vshrl.u32 %v5854, 7
        %v5856 = vsub.s32 0, %v5855
        %v5857 = vrot.slane %v4990, %v5856
        %5859 = vrot.lane.b32.xlu0 %v5857, 2
        %v5860 = vpop.permute.xlu0 %5859
        %v5862 = vmul.f32 %v5784, %v5860
        %v5863 = vmul.f32 %v5785, %v5860
        %5866 = vrot.lane.b32.xlu0 %v5862, 126
        %v5867 = vpop.permute.xlu0 %5866
        %5868 = vrot.lane.b32.xlu0 %v5863, 126
        %v5869 = vpop.permute.xlu0 %5868
        %v5872 = vadd.f32 %v5852, %v5867
        %v5873 = vadd.f32 %v5853, %v5869
        %v5874 = vlaneseq
        %v5875 = vshrl.u32 %v5874, 7
        %v5876 = vsub.s32 0, %v5875
        %v5877 = vrot.slane %v4984, %v5876
        %5879 = vrot.lane.b32.xlu0 %v5877, 3
        %v5880 = vpop.permute.xlu0 %5879
        %v5882 = vmul.f32 %v5774, %v5880
        %v5883 = vmul.f32 %v5775, %v5880
        %5886 = vrot.lane.b32.xlu0 %v5882, 125
        %v5887 = vpop.permute.xlu0 %5886
        %5888 = vrot.lane.b32.xlu0 %v5883, 125
        %v5889 = vpop.permute.xlu0 %5888
        %v5892 = vadd.f32 %v5872, %v5887
        %v5893 = vadd.f32 %v5873, %v5889
        %v5894 = vlaneseq
        %v5895 = vshrl.u32 %v5894, 7
        %v5896 = vsub.s32 1, %v5895
        %v5897 = vrot.slane %v4990, %v5896
        %5899 = vrot.lane.b32.xlu0 %v5897, 3
        %v5900 = vpop.permute.xlu0 %5899
        %v5902 = vmul.f32 %v5784, %v5900
        %v5903 = vmul.f32 %v5785, %v5900
        %5906 = vrot.lane.b32.xlu0 %v5902, 125
        %v5907 = vpop.permute.xlu0 %5906
        %5908 = vrot.lane.b32.xlu0 %v5903, 125
        %v5909 = vpop.permute.xlu0 %5908
        %v5912 = vadd.f32 %v5892, %v5907
        %v5913 = vadd.f32 %v5893, %v5909
        %v5914 = vlaneseq
        %v5915 = vshrl.u32 %v5914, 7
        %v5916 = vsub.s32 1, %v5915
        %v5917 = vrot.slane %v4984, %v5916
        %5919 = vrot.lane.b32.xlu0 %v5917, 4
        %v5920 = vpop.permute.xlu0 %5919
        %v5922 = vmul.f32 %v5774, %v5920
        %v5923 = vmul.f32 %v5775, %v5920
        %5926 = vrot.lane.b32.xlu0 %v5922, 124
        %v5927 = vpop.permute.xlu0 %5926
        %5928 = vrot.lane.b32.xlu0 %v5923, 124
        %v5929 = vpop.permute.xlu0 %5928
        %v5932 = vadd.f32 %v5912, %v5927
        %v5933 = vadd.f32 %v5913, %v5929
        %v5934 = vlaneseq
        %v5935 = vshrl.u32 %v5934, 7
        %v5936 = vsub.s32 2, %v5935
        %v5937 = vrot.slane %v4990, %v5936
        %5939 = vrot.lane.b32.xlu0 %v5937, 4
        %v5940 = vpop.permute.xlu0 %5939
        %v5942 = vmul.f32 %v5784, %v5940
        %v5943 = vmul.f32 %v5785, %v5940
        %5946 = vrot.lane.b32.xlu0 %v5942, 124
        %v5947 = vpop.permute.xlu0 %5946
        %5948 = vrot.lane.b32.xlu0 %v5943, 124
        %v5949 = vpop.permute.xlu0 %5948
        %v5952 = vadd.f32 %v5932, %v5947
        %v5953 = vadd.f32 %v5933, %v5949
        %v5954 = vlaneseq
        %v5955 = vshrl.u32 %v5954, 7
        %v5956 = vsub.s32 2, %v5955
        %v5957 = vrot.slane %v4984, %v5956
        %5959 = vrot.lane.b32.xlu0 %v5957, 5
        %v5960 = vpop.permute.xlu0 %5959
        %v5962 = vmul.f32 %v5774, %v5960
        %v5963 = vmul.f32 %v5775, %v5960
        %5966 = vrot.lane.b32.xlu0 %v5962, 123
        %v5967 = vpop.permute.xlu0 %5966
        %5968 = vrot.lane.b32.xlu0 %v5963, 123
        %v5969 = vpop.permute.xlu0 %5968
        %v5972 = vadd.f32 %v5952, %v5967
        %v5973 = vadd.f32 %v5953, %v5969
        %v5974 = vlaneseq
        %v5975 = vshrl.u32 %v5974, 7
        %v5976 = vsub.s32 3, %v5975
        %v5977 = vrot.slane %v4990, %v5976
        %5979 = vrot.lane.b32.xlu0 %v5977, 5
        %v5980 = vpop.permute.xlu0 %5979
        %v5982 = vmul.f32 %v5784, %v5980
        %v5983 = vmul.f32 %v5785, %v5980
        %5986 = vrot.lane.b32.xlu0 %v5982, 123
        %v5987 = vpop.permute.xlu0 %5986
        %5988 = vrot.lane.b32.xlu0 %v5983, 123
        %v5989 = vpop.permute.xlu0 %5988
        %v5992 = vadd.f32 %v5972, %v5987
        %v5993 = vadd.f32 %v5973, %v5989
        %v5994 = vlaneseq
        %v5995 = vshrl.u32 %v5994, 7
        %v5996 = vsub.s32 3, %v5995
        %v5997 = vrot.slane %v4984, %v5996
        %5999 = vrot.lane.b32.xlu0 %v5997, 6
        %v6000 = vpop.permute.xlu0 %5999
        %v6002 = vmul.f32 %v5774, %v6000
        %v6003 = vmul.f32 %v5775, %v6000
        %6006 = vrot.lane.b32.xlu0 %v6002, 122
        %v6007 = vpop.permute.xlu0 %6006
        %6008 = vrot.lane.b32.xlu0 %v6003, 122
        %v6009 = vpop.permute.xlu0 %6008
        %v6012 = vadd.f32 %v5992, %v6007
        %v6013 = vadd.f32 %v5993, %v6009
        %v6014 = vlaneseq
        %v6015 = vshrl.u32 %v6014, 7
        %v6016 = vsub.s32 4, %v6015
        %v6017 = vrot.slane %v4990, %v6016
        %6019 = vrot.lane.b32.xlu0 %v6017, 6
        %v6020 = vpop.permute.xlu0 %6019
        %v6022 = vmul.f32 %v5784, %v6020
        %v6023 = vmul.f32 %v5785, %v6020
        %6026 = vrot.lane.b32.xlu0 %v6022, 122
        %v6027 = vpop.permute.xlu0 %6026
        %6028 = vrot.lane.b32.xlu0 %v6023, 122
        %v6029 = vpop.permute.xlu0 %6028
        %v6032 = vadd.f32 %v6012, %v6027
        %v6033 = vadd.f32 %v6013, %v6029
        %v6034 = vld [vmem:[#allocation5 + $0x4] sm:$0xff]
        %v6035 = vld [vmem:[#allocation5 + $0xc] sm:$0xff]
        %v6036 = vlaneseq
        %v6037 = vshrl.u32 %v6036, 7
        %v6038 = vsub.s32 4, %v6037
        %v6039 = vrot.slane %v4984, %v6038
        %v6040 = vmul.f32 %v6034, %v6039
        %v6041 = vmul.f32 %v6035, %v6039
        %v6042 = vadd.f32 %v6032, %v6040
        %v6043 = vadd.f32 %v6033, %v6041
        %v6044 = vld [vmem:[%s4978 + $0x4] sm:$0xff]
        %v6045 = vld [vmem:[%s4978 + $0xc] sm:$0xff]
        %v6046 = vlaneseq
        %v6047 = vshrl.u32 %v6046, 7
        %v6048 = vsub.s32 5, %v6047
        %v6049 = vrot.slane %v4990, %v6048
        %v6050 = vmul.f32 %v6044, %v6049
        %v6051 = vmul.f32 %v6045, %v6049
        %v6052 = vadd.f32 %v6042, %v6050
        %v6053 = vadd.f32 %v6043, %v6051
        %v6054 = vlaneseq
        %v6055 = vshrl.u32 %v6054, 7
        %v6056 = vsub.s32 5, %v6055
        %v6057 = vrot.slane %v4984, %v6056
        %6059 = vrot.lane.b32.xlu0 %v6057, 1
        %v6060 = vpop.permute.xlu0 %6059
        %v6062 = vmul.f32 %v6034, %v6060
        %v6063 = vmul.f32 %v6035, %v6060
        %6066 = vrot.lane.b32.xlu0 %v6062, 127
        %v6067 = vpop.permute.xlu0 %6066
        %6068 = vrot.lane.b32.xlu0 %v6063, 127
        %v6069 = vpop.permute.xlu0 %6068
        %v6072 = vadd.f32 %v6052, %v6067
        %v6073 = vadd.f32 %v6053, %v6069
        %v6074 = vlaneseq
        %v6075 = vshrl.u32 %v6074, 7
        %v6076 = vsub.s32 6, %v6075
        %v6077 = vrot.slane %v4990, %v6076
        %6079 = vrot.lane.b32.xlu0 %v6077, 1
        %v6080 = vpop.permute.xlu0 %6079
        %v6082 = vmul.f32 %v6044, %v6080
        %v6083 = vmul.f32 %v6045, %v6080
        %6086 = vrot.lane.b32.xlu0 %v6082, 127
        %v6087 = vpop.permute.xlu0 %6086
        %6088 = vrot.lane.b32.xlu0 %v6083, 127
        %v6089 = vpop.permute.xlu0 %6088
        %v6092 = vadd.f32 %v6072, %v6087
        %v6093 = vadd.f32 %v6073, %v6089
        %v6094 = vlaneseq
        %v6095 = vshrl.u32 %v6094, 7
        %v6096 = vsub.s32 6, %v6095
        %v6097 = vrot.slane %v4984, %v6096
        %6099 = vrot.lane.b32.xlu0 %v6097, 2
        %v6100 = vpop.permute.xlu0 %6099
        %v6102 = vmul.f32 %v6034, %v6100
        %v6103 = vmul.f32 %v6035, %v6100
        %6106 = vrot.lane.b32.xlu0 %v6102, 126
        %v6107 = vpop.permute.xlu0 %6106
        %6108 = vrot.lane.b32.xlu0 %v6103, 126
        %v6109 = vpop.permute.xlu0 %6108
        %v6112 = vadd.f32 %v6092, %v6107
        %v6113 = vadd.f32 %v6093, %v6109
        %v6114 = vlaneseq
        %v6115 = vshrl.u32 %v6114, 7
        %v6116 = vsub.s32 7, %v6115
        %v6117 = vrot.slane %v4990, %v6116
        %6119 = vrot.lane.b32.xlu0 %v6117, 2
        %v6120 = vpop.permute.xlu0 %6119
        %v6122 = vmul.f32 %v6044, %v6120
        %v6123 = vmul.f32 %v6045, %v6120
        %6126 = vrot.lane.b32.xlu0 %v6122, 126
        %v6127 = vpop.permute.xlu0 %6126
        %6128 = vrot.lane.b32.xlu0 %v6123, 126
        %v6129 = vpop.permute.xlu0 %6128
        %v6132 = vadd.f32 %v6112, %v6127
        %v6133 = vadd.f32 %v6113, %v6129
        %v6134 = vlaneseq
        %v6135 = vshrl.u32 %v6134, 7
        %v6136 = vsub.s32 7, %v6135
        %v6137 = vrot.slane %v4984, %v6136
        %6139 = vrot.lane.b32.xlu0 %v6137, 3
        %v6140 = vpop.permute.xlu0 %6139
        %v6142 = vmul.f32 %v6034, %v6140
        %v6143 = vmul.f32 %v6035, %v6140
        %6146 = vrot.lane.b32.xlu0 %v6142, 125
        %v6147 = vpop.permute.xlu0 %6146
        %6148 = vrot.lane.b32.xlu0 %v6143, 125
        %v6149 = vpop.permute.xlu0 %6148
        %v6152 = vadd.f32 %v6132, %v6147
        %v6153 = vadd.f32 %v6133, %v6149
        %v6154 = vlaneseq
        %v6155 = vshrl.u32 %v6154, 7
        %v6156 = vsub.s32 0, %v6155
        %v6157 = vrot.slane %v4991, %v6156
        %6159 = vrot.lane.b32.xlu0 %v6157, 3
        %v6160 = vpop.permute.xlu0 %6159
        %v6162 = vmul.f32 %v6044, %v6160
        %v6163 = vmul.f32 %v6045, %v6160
        %6166 = vrot.lane.b32.xlu0 %v6162, 125
        %v6167 = vpop.permute.xlu0 %6166
        %6168 = vrot.lane.b32.xlu0 %v6163, 125
        %v6169 = vpop.permute.xlu0 %6168
        %v6172 = vadd.f32 %v6152, %v6167
        %v6173 = vadd.f32 %v6153, %v6169
        %v6174 = vlaneseq
        %v6175 = vshrl.u32 %v6174, 7
        %v6176 = vsub.s32 0, %v6175
        %v6177 = vrot.slane %v4985, %v6176
        %6179 = vrot.lane.b32.xlu0 %v6177, 4
        %v6180 = vpop.permute.xlu0 %6179
        %v6182 = vmul.f32 %v6034, %v6180
        %v6183 = vmul.f32 %v6035, %v6180
        %6186 = vrot.lane.b32.xlu0 %v6182, 124
        %v6187 = vpop.permute.xlu0 %6186
        %6188 = vrot.lane.b32.xlu0 %v6183, 124
        %v6189 = vpop.permute.xlu0 %6188
        %v6192 = vadd.f32 %v6172, %v6187
        %v6193 = vadd.f32 %v6173, %v6189
        %v6194 = vlaneseq
        %v6195 = vshrl.u32 %v6194, 7
        %v6196 = vsub.s32 1, %v6195
        %v6197 = vrot.slane %v4991, %v6196
        %6199 = vrot.lane.b32.xlu0 %v6197, 4
        %v6200 = vpop.permute.xlu0 %6199
        %v6202 = vmul.f32 %v6044, %v6200
        %v6203 = vmul.f32 %v6045, %v6200
        %6206 = vrot.lane.b32.xlu0 %v6202, 124
        %v6207 = vpop.permute.xlu0 %6206
        %6208 = vrot.lane.b32.xlu0 %v6203, 124
        %v6209 = vpop.permute.xlu0 %6208
        %v6212 = vadd.f32 %v6192, %v6207
        %v6213 = vadd.f32 %v6193, %v6209
        %v6214 = vlaneseq
        %v6215 = vshrl.u32 %v6214, 7
        %v6216 = vsub.s32 1, %v6215
        %v6217 = vrot.slane %v4985, %v6216
        %6219 = vrot.lane.b32.xlu0 %v6217, 5
        %v6220 = vpop.permute.xlu0 %6219
        %v6222 = vmul.f32 %v6034, %v6220
        %v6223 = vmul.f32 %v6035, %v6220
        %6226 = vrot.lane.b32.xlu0 %v6222, 123
        %v6227 = vpop.permute.xlu0 %6226
        %6228 = vrot.lane.b32.xlu0 %v6223, 123
        %v6229 = vpop.permute.xlu0 %6228
        %v6232 = vadd.f32 %v6212, %v6227
        %v6233 = vadd.f32 %v6213, %v6229
        %v6234 = vlaneseq
        %v6235 = vshrl.u32 %v6234, 7
        %v6236 = vsub.s32 2, %v6235
        %v6237 = vrot.slane %v4991, %v6236
        %6239 = vrot.lane.b32.xlu0 %v6237, 5
        %v6240 = vpop.permute.xlu0 %6239
        %v6242 = vmul.f32 %v6044, %v6240
        %v6243 = vmul.f32 %v6045, %v6240
        %6246 = vrot.lane.b32.xlu0 %v6242, 123
        %v6247 = vpop.permute.xlu0 %6246
        %6248 = vrot.lane.b32.xlu0 %v6243, 123
        %v6249 = vpop.permute.xlu0 %6248
        %v6252 = vadd.f32 %v6232, %v6247
        %v6253 = vadd.f32 %v6233, %v6249
        %v6254 = vlaneseq
        %v6255 = vshrl.u32 %v6254, 7
        %v6256 = vsub.s32 2, %v6255
        %v6257 = vrot.slane %v4985, %v6256
        %6259 = vrot.lane.b32.xlu0 %v6257, 6
        %v6260 = vpop.permute.xlu0 %6259
        %v6262 = vmul.f32 %v6034, %v6260
        %v6263 = vmul.f32 %v6035, %v6260
        %6266 = vrot.lane.b32.xlu0 %v6262, 122
        %v6267 = vpop.permute.xlu0 %6266
        %6268 = vrot.lane.b32.xlu0 %v6263, 122
        %v6269 = vpop.permute.xlu0 %6268
        %v6272 = vadd.f32 %v6252, %v6267
        %v6273 = vadd.f32 %v6253, %v6269
        %v6274 = vlaneseq
        %v6275 = vshrl.u32 %v6274, 7
        %v6276 = vsub.s32 3, %v6275
        %v6277 = vrot.slane %v4991, %v6276
        %6279 = vrot.lane.b32.xlu0 %v6277, 6
        %v6280 = vpop.permute.xlu0 %6279
        %v6282 = vmul.f32 %v6044, %v6280
        %v6283 = vmul.f32 %v6045, %v6280
        %6286 = vrot.lane.b32.xlu0 %v6282, 122
        %v6287 = vpop.permute.xlu0 %6286
        %6288 = vrot.lane.b32.xlu0 %v6283, 122
        %v6289 = vpop.permute.xlu0 %6288
        %v6292 = vadd.f32 %v6272, %v6287
        %v6293 = vadd.f32 %v6273, %v6289
        %v6294 = vld [vmem:[#allocation5 + $0x5] sm:$0xff]
        %v6295 = vld [vmem:[#allocation5 + $0xd] sm:$0xff]
        %v6296 = vlaneseq
        %v6297 = vshrl.u32 %v6296, 7
        %v6298 = vsub.s32 3, %v6297
        %v6299 = vrot.slane %v4985, %v6298
        %v6300 = vmul.f32 %v6294, %v6299
        %v6301 = vmul.f32 %v6295, %v6299
        %v6302 = vadd.f32 %v6292, %v6300
        %v6303 = vadd.f32 %v6293, %v6301
        %v6304 = vld [vmem:[%s4978 + $0x5] sm:$0xff]
        %v6305 = vld [vmem:[%s4978 + $0xd] sm:$0xff]
        %v6306 = vlaneseq
        %v6307 = vshrl.u32 %v6306, 7
        %v6308 = vsub.s32 4, %v6307
        %v6309 = vrot.slane %v4991, %v6308
        %v6310 = vmul.f32 %v6304, %v6309
        %v6311 = vmul.f32 %v6305, %v6309
        %v6312 = vadd.f32 %v6302, %v6310
        %v6313 = vadd.f32 %v6303, %v6311
        %v6314 = vlaneseq
        %v6315 = vshrl.u32 %v6314, 7
        %v6316 = vsub.s32 4, %v6315
        %v6317 = vrot.slane %v4985, %v6316
        %6319 = vrot.lane.b32.xlu0 %v6317, 1
        %v6320 = vpop.permute.xlu0 %6319
        %v6322 = vmul.f32 %v6294, %v6320
        %v6323 = vmul.f32 %v6295, %v6320
        %6326 = vrot.lane.b32.xlu0 %v6322, 127
        %v6327 = vpop.permute.xlu0 %6326
        %6328 = vrot.lane.b32.xlu0 %v6323, 127
        %v6329 = vpop.permute.xlu0 %6328
        %v6332 = vadd.f32 %v6312, %v6327
        %v6333 = vadd.f32 %v6313, %v6329
        %v6334 = vlaneseq
        %v6335 = vshrl.u32 %v6334, 7
        %v6336 = vsub.s32 5, %v6335
        %v6337 = vrot.slane %v4991, %v6336
        %6339 = vrot.lane.b32.xlu0 %v6337, 1
        %v6340 = vpop.permute.xlu0 %6339
        %v6342 = vmul.f32 %v6304, %v6340
        %v6343 = vmul.f32 %v6305, %v6340
        %6346 = vrot.lane.b32.xlu0 %v6342, 127
        %v6347 = vpop.permute.xlu0 %6346
        %6348 = vrot.lane.b32.xlu0 %v6343, 127
        %v6349 = vpop.permute.xlu0 %6348
        %v6352 = vadd.f32 %v6332, %v6347
        %v6353 = vadd.f32 %v6333, %v6349
        %v6354 = vlaneseq
        %v6355 = vshrl.u32 %v6354, 7
        %v6356 = vsub.s32 5, %v6355
        %v6357 = vrot.slane %v4985, %v6356
        %6359 = vrot.lane.b32.xlu0 %v6357, 2
        %v6360 = vpop.permute.xlu0 %6359
        %v6362 = vmul.f32 %v6294, %v6360
        %v6363 = vmul.f32 %v6295, %v6360
        %6366 = vrot.lane.b32.xlu0 %v6362, 126
        %v6367 = vpop.permute.xlu0 %6366
        %6368 = vrot.lane.b32.xlu0 %v6363, 126
        %v6369 = vpop.permute.xlu0 %6368
        %v6372 = vadd.f32 %v6352, %v6367
        %v6373 = vadd.f32 %v6353, %v6369
        %v6374 = vlaneseq
        %v6375 = vshrl.u32 %v6374, 7
        %v6376 = vsub.s32 6, %v6375
        %v6377 = vrot.slane %v4991, %v6376
        %6379 = vrot.lane.b32.xlu0 %v6377, 2
        %v6380 = vpop.permute.xlu0 %6379
        %v6382 = vmul.f32 %v6304, %v6380
        %v6383 = vmul.f32 %v6305, %v6380
        %6386 = vrot.lane.b32.xlu0 %v6382, 126
        %v6387 = vpop.permute.xlu0 %6386
        %6388 = vrot.lane.b32.xlu0 %v6383, 126
        %v6389 = vpop.permute.xlu0 %6388
        %v6392 = vadd.f32 %v6372, %v6387
        %v6393 = vadd.f32 %v6373, %v6389
        %v6394 = vlaneseq
        %v6395 = vshrl.u32 %v6394, 7
        %v6396 = vsub.s32 6, %v6395
        %v6397 = vrot.slane %v4985, %v6396
        %6399 = vrot.lane.b32.xlu0 %v6397, 3
        %v6400 = vpop.permute.xlu0 %6399
        %v6402 = vmul.f32 %v6294, %v6400
        %v6403 = vmul.f32 %v6295, %v6400
        %6406 = vrot.lane.b32.xlu0 %v6402, 125
        %v6407 = vpop.permute.xlu0 %6406
        %6408 = vrot.lane.b32.xlu0 %v6403, 125
        %v6409 = vpop.permute.xlu0 %6408
        %v6412 = vadd.f32 %v6392, %v6407
        %v6413 = vadd.f32 %v6393, %v6409
        %v6414 = vlaneseq
        %v6415 = vshrl.u32 %v6414, 7
        %v6416 = vsub.s32 7, %v6415
        %v6417 = vrot.slane %v4991, %v6416
        %6419 = vrot.lane.b32.xlu0 %v6417, 3
        %v6420 = vpop.permute.xlu0 %6419
        %v6422 = vmul.f32 %v6304, %v6420
        %v6423 = vmul.f32 %v6305, %v6420
        %6426 = vrot.lane.b32.xlu0 %v6422, 125
        %v6427 = vpop.permute.xlu0 %6426
        %6428 = vrot.lane.b32.xlu0 %v6423, 125
        %v6429 = vpop.permute.xlu0 %6428
        %v6432 = vadd.f32 %v6412, %v6427
        %v6433 = vadd.f32 %v6413, %v6429
        %v6434 = vlaneseq
        %v6435 = vshrl.u32 %v6434, 7
        %v6436 = vsub.s32 7, %v6435
        %v6437 = vrot.slane %v4985, %v6436
        %6439 = vrot.lane.b32.xlu0 %v6437, 4
        %v6440 = vpop.permute.xlu0 %6439
        %v6442 = vmul.f32 %v6294, %v6440
        %v6443 = vmul.f32 %v6295, %v6440
        %6446 = vrot.lane.b32.xlu0 %v6442, 124
        %v6447 = vpop.permute.xlu0 %6446
        %6448 = vrot.lane.b32.xlu0 %v6443, 124
        %v6449 = vpop.permute.xlu0 %6448
        %v6452 = vadd.f32 %v6432, %v6447
        %v6453 = vadd.f32 %v6433, %v6449
        %v6454 = vlaneseq
        %v6455 = vshrl.u32 %v6454, 7
        %v6456 = vsub.s32 0, %v6455
        %v6457 = vrot.slane %v4992, %v6456
        %6459 = vrot.lane.b32.xlu0 %v6457, 4
        %v6460 = vpop.permute.xlu0 %6459
        %v6462 = vmul.f32 %v6304, %v6460
        %v6463 = vmul.f32 %v6305, %v6460
        %6466 = vrot.lane.b32.xlu0 %v6462, 124
        %v6467 = vpop.permute.xlu0 %6466
        %6468 = vrot.lane.b32.xlu0 %v6463, 124
        %v6469 = vpop.permute.xlu0 %6468
        %v6472 = vadd.f32 %v6452, %v6467
        %v6473 = vadd.f32 %v6453, %v6469
        %v6474 = vlaneseq
        %v6475 = vshrl.u32 %v6474, 7
        %v6476 = vsub.s32 0, %v6475
        %v6477 = vrot.slane %v4986, %v6476
        %6479 = vrot.lane.b32.xlu0 %v6477, 5
        %v6480 = vpop.permute.xlu0 %6479
        %v6482 = vmul.f32 %v6294, %v6480
        %v6483 = vmul.f32 %v6295, %v6480
        %6486 = vrot.lane.b32.xlu0 %v6482, 123
        %v6487 = vpop.permute.xlu0 %6486
        %6488 = vrot.lane.b32.xlu0 %v6483, 123
        %v6489 = vpop.permute.xlu0 %6488
        %v6492 = vadd.f32 %v6472, %v6487
        %v6493 = vadd.f32 %v6473, %v6489
        %v6494 = vlaneseq
        %v6495 = vshrl.u32 %v6494, 7
        %v6496 = vsub.s32 1, %v6495
        %v6497 = vrot.slane %v4992, %v6496
        %6499 = vrot.lane.b32.xlu0 %v6497, 5
        %v6500 = vpop.permute.xlu0 %6499
        %v6502 = vmul.f32 %v6304, %v6500
        %v6503 = vmul.f32 %v6305, %v6500
        %6506 = vrot.lane.b32.xlu0 %v6502, 123
        %v6507 = vpop.permute.xlu0 %6506
        %6508 = vrot.lane.b32.xlu0 %v6503, 123
        %v6509 = vpop.permute.xlu0 %6508
        %v6512 = vadd.f32 %v6492, %v6507
        %v6513 = vadd.f32 %v6493, %v6509
        %v6514 = vlaneseq
        %v6515 = vshrl.u32 %v6514, 7
        %v6516 = vsub.s32 1, %v6515
        %v6517 = vrot.slane %v4986, %v6516
        %6519 = vrot.lane.b32.xlu0 %v6517, 6
        %v6520 = vpop.permute.xlu0 %6519
        %v6522 = vmul.f32 %v6294, %v6520
        %v6523 = vmul.f32 %v6295, %v6520
        %6526 = vrot.lane.b32.xlu0 %v6522, 122
        %v6527 = vpop.permute.xlu0 %6526
        %6528 = vrot.lane.b32.xlu0 %v6523, 122
        %v6529 = vpop.permute.xlu0 %6528
        %v6532 = vadd.f32 %v6512, %v6527
        %v6533 = vadd.f32 %v6513, %v6529
        %v6534 = vlaneseq
        %v6535 = vshrl.u32 %v6534, 7
        %v6536 = vsub.s32 2, %v6535
        %v6537 = vrot.slane %v4992, %v6536
        %6539 = vrot.lane.b32.xlu0 %v6537, 6
        %v6540 = vpop.permute.xlu0 %6539
        %v6542 = vmul.f32 %v6304, %v6540
        %v6543 = vmul.f32 %v6305, %v6540
        %6546 = vrot.lane.b32.xlu0 %v6542, 122
        %v6547 = vpop.permute.xlu0 %6546
        %6548 = vrot.lane.b32.xlu0 %v6543, 122
        %v6549 = vpop.permute.xlu0 %6548
        %v6552 = vadd.f32 %v6532, %v6547
        %v6553 = vadd.f32 %v6533, %v6549
        %v6554 = vld [vmem:[#allocation5 + $0x6] sm:$0xff]
        %v6555 = vld [vmem:[#allocation5 + $0xe] sm:$0xff]
        %v6556 = vlaneseq
        %v6557 = vshrl.u32 %v6556, 7
        %v6558 = vsub.s32 2, %v6557
        %v6559 = vrot.slane %v4986, %v6558
        %v6560 = vmul.f32 %v6554, %v6559
        %v6561 = vmul.f32 %v6555, %v6559
        %v6562 = vadd.f32 %v6552, %v6560
        %v6563 = vadd.f32 %v6553, %v6561
        %v6564 = vld [vmem:[%s4978 + $0x6] sm:$0xff]
        %v6565 = vld [vmem:[%s4978 + $0xe] sm:$0xff]
        %v6566 = vlaneseq
        %v6567 = vshrl.u32 %v6566, 7
        %v6568 = vsub.s32 3, %v6567
        %v6569 = vrot.slane %v4992, %v6568
        %v6570 = vmul.f32 %v6564, %v6569
        %v6571 = vmul.f32 %v6565, %v6569
        %v6572 = vadd.f32 %v6562, %v6570
        %v6573 = vadd.f32 %v6563, %v6571
        %v6574 = vlaneseq
        %v6575 = vshrl.u32 %v6574, 7
        %v6576 = vsub.s32 3, %v6575
        %v6577 = vrot.slane %v4986, %v6576
        %6579 = vrot.lane.b32.xlu0 %v6577, 1
        %v6580 = vpop.permute.xlu0 %6579
        %v6582 = vmul.f32 %v6554, %v6580
        %v6583 = vmul.f32 %v6555, %v6580
        %6586 = vrot.lane.b32.xlu0 %v6582, 127
        %v6587 = vpop.permute.xlu0 %6586
        %6588 = vrot.lane.b32.xlu0 %v6583, 127
        %v6589 = vpop.permute.xlu0 %6588
        %v6592 = vadd.f32 %v6572, %v6587
        %v6593 = vadd.f32 %v6573, %v6589
        %v6594 = vlaneseq
        %v6595 = vshrl.u32 %v6594, 7
        %v6596 = vsub.s32 4, %v6595
        %v6597 = vrot.slane %v4992, %v6596
        %6599 = vrot.lane.b32.xlu0 %v6597, 1
        %v6600 = vpop.permute.xlu0 %6599
        %v6602 = vmul.f32 %v6564, %v6600
        %v6603 = vmul.f32 %v6565, %v6600
        %6606 = vrot.lane.b32.xlu0 %v6602, 127
        %v6607 = vpop.permute.xlu0 %6606
        %6608 = vrot.lane.b32.xlu0 %v6603, 127
        %v6609 = vpop.permute.xlu0 %6608
        %v6612 = vadd.f32 %v6592, %v6607
        %v6613 = vadd.f32 %v6593, %v6609
        %v6614 = vlaneseq
        %v6615 = vshrl.u32 %v6614, 7
        %v6616 = vsub.s32 4, %v6615
        %v6617 = vrot.slane %v4986, %v6616
        %6619 = vrot.lane.b32.xlu0 %v6617, 2
        %v6620 = vpop.permute.xlu0 %6619
        %v6622 = vmul.f32 %v6554, %v6620
        %v6623 = vmul.f32 %v6555, %v6620
        %6626 = vrot.lane.b32.xlu0 %v6622, 126
        %v6627 = vpop.permute.xlu0 %6626
        %6628 = vrot.lane.b32.xlu0 %v6623, 126
        %v6629 = vpop.permute.xlu0 %6628
        %v6632 = vadd.f32 %v6612, %v6627
        %v6633 = vadd.f32 %v6613, %v6629
        %v6634 = vlaneseq
        %v6635 = vshrl.u32 %v6634, 7
        %v6636 = vsub.s32 5, %v6635
        %v6637 = vrot.slane %v4992, %v6636
        %6639 = vrot.lane.b32.xlu0 %v6637, 2
        %v6640 = vpop.permute.xlu0 %6639
        %v6642 = vmul.f32 %v6564, %v6640
        %v6643 = vmul.f32 %v6565, %v6640
        %6646 = vrot.lane.b32.xlu0 %v6642, 126
        %v6647 = vpop.permute.xlu0 %6646
        %6648 = vrot.lane.b32.xlu0 %v6643, 126
        %v6649 = vpop.permute.xlu0 %6648
        %v6652 = vadd.f32 %v6632, %v6647
        %v6653 = vadd.f32 %v6633, %v6649
        %v6654 = vlaneseq
        %v6655 = vshrl.u32 %v6654, 7
        %v6656 = vsub.s32 5, %v6655
        %v6657 = vrot.slane %v4986, %v6656
        %6659 = vrot.lane.b32.xlu0 %v6657, 3
        %v6660 = vpop.permute.xlu0 %6659
        %v6662 = vmul.f32 %v6554, %v6660
        %v6663 = vmul.f32 %v6555, %v6660
        %6666 = vrot.lane.b32.xlu0 %v6662, 125
        %v6667 = vpop.permute.xlu0 %6666
        %6668 = vrot.lane.b32.xlu0 %v6663, 125
        %v6669 = vpop.permute.xlu0 %6668
        %v6672 = vadd.f32 %v6652, %v6667
        %v6673 = vadd.f32 %v6653, %v6669
        %v6674 = vlaneseq
        %v6675 = vshrl.u32 %v6674, 7
        %v6676 = vsub.s32 6, %v6675
        %v6677 = vrot.slane %v4992, %v6676
        %6679 = vrot.lane.b32.xlu0 %v6677, 3
        %v6680 = vpop.permute.xlu0 %6679
        %v6682 = vmul.f32 %v6564, %v6680
        %v6683 = vmul.f32 %v6565, %v6680
        %6686 = vrot.lane.b32.xlu0 %v6682, 125
        %v6687 = vpop.permute.xlu0 %6686
        %6688 = vrot.lane.b32.xlu0 %v6683, 125
        %v6689 = vpop.permute.xlu0 %6688
        %v6692 = vadd.f32 %v6672, %v6687
        %v6693 = vadd.f32 %v6673, %v6689
        %v6694 = vlaneseq
        %v6695 = vshrl.u32 %v6694, 7
        %v6696 = vsub.s32 6, %v6695
        %v6697 = vrot.slane %v4986, %v6696
        %6699 = vrot.lane.b32.xlu0 %v6697, 4
        %v6700 = vpop.permute.xlu0 %6699
        %v6702 = vmul.f32 %v6554, %v6700
        %v6703 = vmul.f32 %v6555, %v6700
        %6706 = vrot.lane.b32.xlu0 %v6702, 124
        %v6707 = vpop.permute.xlu0 %6706
        %6708 = vrot.lane.b32.xlu0 %v6703, 124
        %v6709 = vpop.permute.xlu0 %6708
        %v6712 = vadd.f32 %v6692, %v6707
        %v6713 = vadd.f32 %v6693, %v6709
        %v6714 = vlaneseq
        %v6715 = vshrl.u32 %v6714, 7
        %v6716 = vsub.s32 7, %v6715
        %v6717 = vrot.slane %v4992, %v6716
        %6719 = vrot.lane.b32.xlu0 %v6717, 4
        %v6720 = vpop.permute.xlu0 %6719
        %v6722 = vmul.f32 %v6564, %v6720
        %v6723 = vmul.f32 %v6565, %v6720
        %6726 = vrot.lane.b32.xlu0 %v6722, 124
        %v6727 = vpop.permute.xlu0 %6726
        %6728 = vrot.lane.b32.xlu0 %v6723, 124
        %v6729 = vpop.permute.xlu0 %6728
        %v6732 = vadd.f32 %v6712, %v6727
        %v6733 = vadd.f32 %v6713, %v6729
        %v6734 = vlaneseq
        %v6735 = vshrl.u32 %v6734, 7
        %v6736 = vsub.s32 7, %v6735
        %v6737 = vrot.slane %v4986, %v6736
        %6739 = vrot.lane.b32.xlu0 %v6737, 5
        %v6740 = vpop.permute.xlu0 %6739
        %v6742 = vmul.f32 %v6554, %v6740
        %v6743 = vmul.f32 %v6555, %v6740
        %6746 = vrot.lane.b32.xlu0 %v6742, 123
        %v6747 = vpop.permute.xlu0 %6746
        %6748 = vrot.lane.b32.xlu0 %v6743, 123
        %v6749 = vpop.permute.xlu0 %6748
        %v6752 = vadd.f32 %v6732, %v6747
        %v6753 = vadd.f32 %v6733, %v6749
        %v6754 = vlaneseq
        %v6755 = vshrl.u32 %v6754, 7
        %v6756 = vsub.s32 0, %v6755
        %v6757 = vrot.slane %v4993, %v6756
        %6759 = vrot.lane.b32.xlu0 %v6757, 5
        %v6760 = vpop.permute.xlu0 %6759
        %v6762 = vmul.f32 %v6564, %v6760
        %v6763 = vmul.f32 %v6565, %v6760
        %6766 = vrot.lane.b32.xlu0 %v6762, 123
        %v6767 = vpop.permute.xlu0 %6766
        %6768 = vrot.lane.b32.xlu0 %v6763, 123
        %v6769 = vpop.permute.xlu0 %6768
        %v6772 = vadd.f32 %v6752, %v6767
        %v6773 = vadd.f32 %v6753, %v6769
        %v6774 = vlaneseq
        %v6775 = vshrl.u32 %v6774, 7
        %v6776 = vsub.s32 0, %v6775
        %v6777 = vrot.slane %v4987, %v6776
        %6779 = vrot.lane.b32.xlu0 %v6777, 6
        %v6780 = vpop.permute.xlu0 %6779
        %v6782 = vmul.f32 %v6554, %v6780
        %v6783 = vmul.f32 %v6555, %v6780
        %6786 = vrot.lane.b32.xlu0 %v6782, 122
        %v6787 = vpop.permute.xlu0 %6786
        %6788 = vrot.lane.b32.xlu0 %v6783, 122
        %v6789 = vpop.permute.xlu0 %6788
        %v6792 = vadd.f32 %v6772, %v6787
        %v6793 = vadd.f32 %v6773, %v6789
        %v6794 = vlaneseq
        %v6795 = vshrl.u32 %v6794, 7
        %v6796 = vsub.s32 1, %v6795
        %v6797 = vrot.slane %v4993, %v6796
        %6799 = vrot.lane.b32.xlu0 %v6797, 6
        %v6800 = vpop.permute.xlu0 %6799
        %v6802 = vmul.f32 %v6564, %v6800
        %v6803 = vmul.f32 %v6565, %v6800
        %6806 = vrot.lane.b32.xlu0 %v6802, 122
        %v6807 = vpop.permute.xlu0 %6806
        %6808 = vrot.lane.b32.xlu0 %v6803, 122
        %v6809 = vpop.permute.xlu0 %6808
        %v6812 = vadd.f32 %v6792, %v6807
        %v6813 = vadd.f32 %v6793, %v6809
        %v6814 = vlaneseq
        %v6815 = vshrl.u32 %v6814, 7
        %v6816 = vsub.s32 2, %v6815
        %v6817 = vrot.slane %v4993, %v6816
        %v6818 = vadd.f32 %v6812, %v6817
        %v6819 = vadd.f32 %v6813, %v6817
        %v6821 = vrot.slane %v6818, 1
        %6822 = vrot.lane.b32.xlu0 %v6821, 16
        %v6823 = vpop.permute.xlu0 %6822
        %v6825 = vrot.slane %v6818, 2
        %6826 = vrot.lane.b32.xlu0 %v6825, 32
        %v6827 = vpop.permute.xlu0 %6826
        %v6829 = vrot.slane %v6818, 3
        %6830 = vrot.lane.b32.xlu0 %v6829, 48
        %v6831 = vpop.permute.xlu0 %6830
        %v6833 = vrot.slane %v6818, 4
        %6834 = vrot.lane.b32.xlu0 %v6833, 64
        %v6835 = vpop.permute.xlu0 %6834
        %v6837 = vrot.slane %v6818, 5
        %6838 = vrot.lane.b32.xlu0 %v6837, 80
        %v6839 = vpop.permute.xlu0 %6838
        %v6841 = vrot.slane %v6818, 6
        %6842 = vrot.lane.b32.xlu0 %v6841, 96
        %v6843 = vpop.permute.xlu0 %6842
        %v6845 = vrot.slane %v6818, 7
        %6846 = vrot.lane.b32.xlu0 %v6845, 112
        %v6847 = vpop.permute.xlu0 %6846
        %v6850 = vrot.slane %v6819, 1
        %6851 = vrot.lane.b32.xlu0 %v6850, 16
        %v6852 = vpop.permute.xlu0 %6851
        %v6854 = vrot.slane %v6819, 2
        %6855 = vrot.lane.b32.xlu0 %v6854, 32
        %v6856 = vpop.permute.xlu0 %6855
        %v6858 = vrot.slane %v6819, 3
        %6859 = vrot.lane.b32.xlu0 %v6858, 48
        %v6860 = vpop.permute.xlu0 %6859
        %v6862 = vrot.slane %v6819, 4
        %6863 = vrot.lane.b32.xlu0 %v6862, 64
        %v6864 = vpop.permute.xlu0 %6863
        %v6866 = vrot.slane %v6819, 5
        %6867 = vrot.lane.b32.xlu0 %v6866, 80
        %v6868 = vpop.permute.xlu0 %6867
        %v6870 = vrot.slane %v6819, 6
        %6871 = vrot.lane.b32.xlu0 %v6870, 96
        %v6872 = vpop.permute.xlu0 %6871
        %v6874 = vrot.slane %v6819, 7
        %6875 = vrot.lane.b32.xlu0 %v6874, 112
        %v6876 = vpop.permute.xlu0 %6875
        %vm6878 = vcmask 130048
        %v6879 = vsel %vm6878, %v6818, %v6823
        %v6880 = vsel %vm4255, %v6879, %v6827
        %vm6881 = vcmask 392192
        %v6882 = vsel %vm6881, %v6880, %v6831
        %vm6883 = vcmask 523264
        %v6884 = vsel %vm6883, %v6882, %v6835
        %vm6885 = vcmask 654336
        %v6886 = vsel %vm6885, %v6884, %v6839
        %vm6887 = vcmask 785408
        %v6888 = vsel %vm6887, %v6886, %v6843
        %vm6889 = vcmask 916480
        %v6890 = vsel %vm6889, %v6888, %v6847
        %v6891 = vsel %vm6878, %v6819, %v6852
        %v6892 = vsel %vm4255, %v6891, %v6856
        %v6893 = vsel %vm6881, %v6892, %v6860
        %v6894 = vsel %vm6883, %v6893, %v6864
        %v6895 = vsel %vm6885, %v6894, %v6868
        %v6896 = vsel %vm6887, %v6895, %v6872
        %v6897 = vsel %vm6889, %v6896, %v6876
        %v6898 = vxor.u32 %v6890, 2147483648
        %v6899 = vxor.u32 %v6897, 2147483648
        %v6900 = vmul.f32 %v6898, 1.442695
        %v6901 = vpow.pop %v6900
        %v6902 = vmul.f32 %v6899, 1.442695
        %v6903 = vpow.pop %v6902
        %v6904 = vadd.f32 %v6901, 1.0
        %v6905 = vadd.f32 %v6903, 1.0
        %v6906 = vrcp.pop %v6904
        %v6907 = vmul.f32 1.0, %v6906
        %v6908 = vrcp.pop %v6905
        %v6909 = vmul.f32 1.0, %v6908
        %v6910 = vlaneseq
        %v6911 = vshrl.u32 %v6910, 7
        %v6912 = vsub.s32 0, %v6911
        %v6913 = vrot.slane %v6907, %v6912
        %v6914 = vlaneseq
        %v6915 = vshrl.u32 %v6914, 7
        %v6916 = vsub.s32 0, %v6915
        %v6917 = vrot.slane %v6909, %v6916
        %v6918 = vmul.f32 %v4772, %v6913
        %v6919 = vmul.f32 %v4774, %v6917
        %v6920 = vmul.f32 %v4778, %v6913
        %v6921 = vmul.f32 %v4780, %v6917
        %v6922 = vmul.f32 %v4784, %v6913
        %v6923 = vmul.f32 %v4786, %v6917
        %v6924 = vmul.f32 %v4790, %v6913
        %v6925 = vmul.f32 %v4792, %v6917
        %6926 = vst [vmem:[%s575] sm:$0xff] %v6918
        %6927 = vst [vmem:[%s575 + $0x8] sm:$0xff] %v6919
        %6928 = vst [vmem:[%s575 + $0x10] sm:$0xff] %v6920
        %6929 = vst [vmem:[%s575 + $0x18] sm:$0xff] %v6921
        %6930 = vst [vmem:[%s575 + $0x20] sm:$0xff] %v6922
        %6931 = vst [vmem:[%s575 + $0x28] sm:$0xff] %v6923
        %6932 = vst [vmem:[%s575 + $0x30] sm:$0xff] %v6924
        %6933 = vst [vmem:[%s575 + $0x38] sm:$0xff] %v6925
        %s6934 = sand.u32 %s300, 1
        %s6935 = scalar_lea.sflag [#allocation8], %s6934
        %s6936 = sand.u32 %s300, 1
        %s6937 = smul.addr %s6936, 64
        %s6938 = scalar_lea.vmem [#allocation26], %s6937
        // Predicated region
        $region117: #{_lambda_.1} parent=67 // pred_check
          %p6939 = pneg %p310
        $region118: #{_lambda_.1} parent=67 // pred_check_branch
          %6941 = sbr.rel (%p6939) target = $region120
        $region119: #{_lambda_.1} parent=67 // pred_region
          %s6943 = ssub.s32 1024, 1024
          %6944 = vsyncadd %s6935, %s6943
          %s6945 = smul.addr %s35, 8
          %s6946 = smul.addr %s6945, 128
          %s6947 = scalar_lea.hbm %s12, %s6946
          %s6948 = sshll.u32 %s6938, 4
          %s6949 = int_to_ptr.vmem [resolvable:$true] %s6948
          %6954 = dma.vmem_to_hbm [thread:$0]  %s6949, 1024, %s6947, %s6935, 256, 256, 16
        $region120: #{_lambda_.1} parent=67 // pred_fallthru
          _
      $region68: #{_lambda_.1} parent=5 // pred_fallthru
        _
      %p6955 = scmp.le.s32.totalorder 2, %s30
      // Predicated region
      $region121: #{_lambda_.1} parent=5 // pred_check
        %p6956 = pneg %p6955
      $region122: #{_lambda_.1} parent=5 // pred_check_branch
        %6958 = sbr.rel (%p6956) target = $region124
      $region123: #{_lambda_.1} parent=5 // pred_region
        %s6959 = ssub.s32 %s30, 2
        // Predicated region
        $region125: #{_lambda_.1} parent=123 // pred_check
          %p6960 = pneg %p316
        $region126: #{_lambda_.1} parent=123 // pred_check_branch
          %6962 = sbr.rel (%p6960) target = $region128
        $region127: #{_lambda_.1} parent=123 // pred_region
          %s6963 = sand.u32 %s301, 1
          %s6964 = scalar_lea.sflag [#allocation8], %s6963
          %s6965 = sand.u32 %s301, 1
          %s6966 = smul.addr %s6965, 64
          %s6967 = scalar_lea.vmem [#allocation26], %s6966
          %6968 = dma.done %s6964, 1024
        $region128: #{_lambda_.1} parent=123 // pred_fallthru
          _
      $region124: #{_lambda_.1} parent=5 // pred_fallthru
        _
    $region6: #{_lambda_.1} parent=1 // loop_footer
      %s34 = sadd.s32 1, %s30
    $region7: #{_lambda_.1} parent=1 // loop_footer_branch
      %29 = sbr.rel target = $region3
    $region8: #{_lambda_.1} parent=1 // loop_exit
      _
    %6969 = vsyncpa [#allocation7], 1
    %s6970 = scalar_lea.sflag [#allocation7], 1
    %6971 = vsyncpa %s6970, 1
    %6972 = vsyncpa [#allocation10], 1
    %6973 = vsyncpa [#allocation13], 1
    %6974 = vsyncpa [#allocation16], 1
    %6975 = vsyncpa [#allocation19], 1
    %6976 = vsyncpa [#allocation22], 1
    %6977 = vsyncpa [#allocation25], 1
    %6978 = vsyncpa [#allocation8], 1
    %s6979 = scalar_lea.sflag [#allocation8], 1
    %6980 = vsyncpa %s6979, 1

</llo_original>
